<compile_context>
chip_gen: v7x
topology: tpu7x:2x2x1
jax: 0.10.0
libtpu: 0.0.40
codegen_flags: <defaults>
</compile_context>

<pallas_src>
import math
import functools

import jax
import jax.numpy as jnp
from jax.experimental import pallas as pl
from jax.experimental.pallas import tpu as pltpu

EPS = 1e-6
NEG_INF = -1.0e9


# ----------------------------- kernel helpers -----------------------------

def _layernorm(x, gamma, beta):
    # torch-module formula: a2*(x-mean)/(std+eps)+b2, unbiased std, eps on std.
    d = x.shape[-1]
    mean = jnp.mean(x, axis=-1, keepdims=True)
    diff = x - mean
    var = jnp.sum(diff * diff, axis=-1, keepdims=True) * (1.0 / (d - 1))
    inv = pl.reciprocal(jnp.sqrt(var) + EPS, approx=False)   # exact: LN fidelity (review)
    return gamma * diff * inv + beta


# ------------------------------ Pallas kernel ------------------------------

def encoder_stack_kernel(x_ref, bias_ref,
                         ln1g_ref, ln1b_ref, wqkv_ref, bqkv_ref, wo_ref, bo_ref,
                         ln2g_ref, ln2b_ref, w1_ref, b1_ref, w2_ref, b2_ref,
                         fng_ref, fnb_ref,
                         out_ref, x_scr, *, n_heads):
    l = pl.program_id(1)                       # layer axis ("arbitrary", innermost)
    n_layers = pl.num_programs(1)
    BF, S, D = x_ref.shape                     # BF = folded batch items per block
    Dh = D // n_heads
    M = BF * S
    bf16 = jnp.bfloat16

    # Layer 0: load the input block into the resident f32 activation scratch.
    @pl.when(l == 0)
    def _():
        x_scr[...] = x_ref[...].reshape(M, D)

    x = x_scr[...]                                             # (M, D) f32

    # ---- sublayer 1: pre-norm multi-head self-attention + residual ----
    xn = _layernorm(x, ln1g_ref[0], ln1b_ref[0])
    # Fused lane-dense QKV projection; 1/sqrt(Dh) is pre-folded into the Q weights/bias.
    qkv = jnp.dot(xn.astype(bf16), wqkv_ref[0],
                  preferred_element_type=jnp.float32) + bqkv_ref[0]   # (M, 3D) f32
    qkv = qkv.astype(bf16)        # all remaining uses are bf16 MXU operands

    ctx_rows = []
    for i in range(BF):           # static unroll over folded batch items
        r0 = i * S
        bias_i = bias_ref[i]      # (1, S) additive key-mask bias (0 / -1e9)
        head_ctx = []
        for h in range(n_heads):  # static unroll over heads (slices = XLU-slot relayouts)
            c0 = h * Dh
            q_h = qkv[r0:r0 + S, c0:c0 + Dh]                          # (S, Dh) bf16
            k_h = qkv[r0:r0 + S, D + c0:D + c0 + Dh]
            v_h = qkv[r0:r0 + S, 2 * D + c0:2 * D + c0 + Dh]
            logits = jnp.einsum("qd,kd->qk", q_h, k_h,
                                preferred_element_type=jnp.float32) + bias_i   # (S, S)
            m = jnp.max(logits, axis=-1, keepdims=True)
            e = jnp.exp(logits - m)
            denom = jnp.sum(e, axis=-1, keepdims=True)
            ctx = jnp.dot(e.astype(bf16), v_h,
                          preferred_element_type=jnp.float32)          # (S, Dh) f32
            # Flash-style: normalize the (S,Dh) context, not the (S,S) weights.
            head_ctx.append(ctx * pl.reciprocal(denom, approx=True))
        ctx_rows.append(jnp.concatenate(head_ctx, axis=-1))            # (S, D)
    ctx_all = jnp.concatenate(ctx_rows, axis=0)                        # (M, D)

    # Single accumulating K=D output projection (head reduction happens inside the MXU).
    attn = jnp.dot(ctx_all.astype(bf16), wo_ref[0],
                   preferred_element_type=jnp.float32) + bo_ref[0]
    x = x + attn

    # ---- sublayer 2: pre-norm feed-forward + residual ----
    xn2 = _layernorm(x, ln2g_ref[0], ln2b_ref[0])
    h1 = jnp.dot(xn2.astype(bf16), w1_ref[0],
                 preferred_element_type=jnp.float32) + b1_ref[0]
    h1 = jnp.maximum(h1, 0.0)                                          # ReLU
    ff = jnp.dot(h1.astype(bf16), w2_ref[0],
                 preferred_element_type=jnp.float32) + b2_ref[0]
    x = x + ff

    x_scr[...] = x                                                     # carry to next layer

    # Last layer: fused final LayerNorm + output store.
    @pl.when(l == n_layers - 1)
    def _():
        out_ref[...] = _layernorm(x, fng_ref[...], fnb_ref[...]).reshape(BF, S, D)


# ------------------------------ host wrappers ------------------------------

def prep_params(layer_params, final_g, final_b, n_heads):
    """One-time weight prep (hoisted out of the per-call path):
       stack per-layer params with a leading L axis, concat Wq|Wk|Wv -> (D, 3D),
       fold the 1/sqrt(Dh) attention scale into Wq/bq, cast matmul weights to bf16."""
    D = layer_params[0]["wq"].shape[0]
    scale = 1.0 / math.sqrt(D // n_heads)
    bf = jnp.bfloat16
    stack = lambda f: jnp.stack([f(p) for p in layer_params], axis=0)
    return dict(
        ln1_g=stack(lambda p: p["ln1_g"]), ln1_b=stack(lambda p: p["ln1_b"]),
        wqkv=stack(lambda p: jnp.concatenate(
            [p["wq"] * scale, p["wk"], p["wv"]], axis=1).astype(bf)),   # (L, D, 3D)
        bqkv=stack(lambda p: jnp.concatenate(
            [p["bq"] * scale, p["bk"], p["bv"]], axis=1)),              # (L, 1, 3D)
        wo=stack(lambda p: p["wo"].astype(bf)), bo=stack(lambda p: p["bo"]),
        ln2_g=stack(lambda p: p["ln2_g"]), ln2_b=stack(lambda p: p["ln2_b"]),
        w1=stack(lambda p: p["w1"].astype(bf)), b1=stack(lambda p: p["b1"]),
        w2=stack(lambda p: p["w2"].astype(bf)), b2=stack(lambda p: p["b2"]),
        fin_g=final_g, fin_b=final_b,
    )


def _encoder_pallas(x, bias, pp, n_heads, batch_fold):
    B, S, D = x.shape
    L = pp["wqkv"].shape[0]
    d_ff = pp["w1"].shape[2]
    BF = batch_fold

    def layer_spec(*shape):           # stacked per-layer param, indexed by the layer axis
        n = len(shape)
        return pl.BlockSpec((1,) + shape, lambda b, l, _n=n: (l,) + (0,) * _n)

    in_specs = [
        pl.BlockSpec((BF, S, D), lambda b, l: (b, 0, 0)),    # x (read at l==0 only)
        pl.BlockSpec((BF, 1, S), lambda b, l: (b, 0, 0)),    # additive mask bias
        layer_spec(1, D), layer_spec(1, D),                  # ln1 gamma/beta
        layer_spec(D, 3 * D), layer_spec(1, 3 * D),          # wqkv, bqkv
        layer_spec(D, D), layer_spec(1, D),                  # wo, bo
        layer_spec(1, D), layer_spec(1, D),                  # ln2 gamma/beta
        layer_spec(D, d_ff), layer_spec(1, d_ff),            # w1, b1
        layer_spec(d_ff, D), layer_spec(1, D),               # w2, b2
        pl.BlockSpec((1, D), lambda b, l: (0, 0)),           # final norm gamma
        pl.BlockSpec((1, D), lambda b, l: (0, 0)),           # final norm beta
    ]
    kernel = functools.partial(encoder_stack_kernel, n_heads=n_heads)
    return pl.pallas_call(
        kernel,
        out_shape=jax.ShapeDtypeStruct((B, S, D), jnp.float32),
        grid_spec=pltpu.PrefetchScalarGridSpec(
            num_scalar_prefetch=0,
            grid=(B // BF, L),                               # (batch, layer)
            in_specs=in_specs,
            out_specs=pl.BlockSpec((BF, S, D), lambda b, l: (b, 0, 0)),
            scratch_shapes=[pltpu.VMEM((BF * S, D), jnp.float32)]),   # resident activation
        compiler_params=pltpu.CompilerParams(
            dimension_semantics=("parallel", "arbitrary"),
            vmem_limit_bytes=32 * 1024 * 1024),              # plenty here, headroom on v7x
    )(x, bias,
      pp["ln1_g"], pp["ln1_b"], pp["wqkv"], pp["bqkv"], pp["wo"], pp["bo"],
      pp["ln2_g"], pp["ln2_b"], pp["w1"], pp["b1"], pp["w2"], pp["b2"],
      pp["fin_g"], pp["fin_b"])


@functools.partial(jax.jit, static_argnames=("n_heads",))
def transformer_encoder(x, src_mask, params, n_heads):
    B = x.shape[0]
    bf = 2 if B % 2 == 0 else 1          # fold 2 items -> M=256 rows/matmul (v6e/v7x MXU fill)
    # mask==0 -> -1e9 additive bias, computed once for all layers / heads.
    bias = jnp.where(src_mask == 0, NEG_INF, 0.0).astype(jnp.float32)   # (B, 1, S)
    return _encoder_pallas(x, bias, params, n_heads, bf)


# ------------------------- deterministic parameters ------------------------

def init_params(key, d_model, d_ff, n_layers):
    def lin(k, fan_in, fan_out):
        k1, k2 = jax.random.split(k)
        w = jax.random.normal(k1, (fan_in, fan_out), jnp.float32) / math.sqrt(fan_in)
        b = jax.random.normal(k2, (1, fan_out), jnp.float32) * 0.01
        return w, b

    layers = []
    for _ in range(n_layers):
        key, *ks = jax.random.split(key, 7)
        wq, bq = lin(ks[0], d_model, d_model)
        wk, bk = lin(ks[1], d_model, d_model)
        wv, bv = lin(ks[2], d_model, d_model)
        wo, bo = lin(ks[3], d_model, d_model)
        w1, b1 = lin(ks[4], d_model, d_ff)
        w2, b2 = lin(ks[5], d_ff, d_model)
        layers.append(dict(
            ln1_g=jnp.ones((1, d_model), jnp.float32),
            ln1_b=jnp.zeros((1, d_model), jnp.float32),
            wq=wq, bq=bq, wk=wk, bk=bk, wv=wv, bv=bv, wo=wo, bo=bo,
            ln2_g=jnp.ones((1, d_model), jnp.float32),
            ln2_b=jnp.zeros((1, d_model), jnp.float32),
            w1=w1, b1=b1, w2=w2, b2=b2,
        ))
    final_g = jnp.ones((1, d_model), jnp.float32)
    final_b = jnp.zeros((1, d_model), jnp.float32)
    return layers, final_g, final_b


# ------------------------------ pure-JAX reference --------------------------

def ref_layernorm(x, g, b):
    mean = jnp.mean(x, axis=-1, keepdims=True)
    var = jnp.sum((x - mean) ** 2, axis=-1, keepdims=True) / (x.shape[-1] - 1)
    return g[0] * (x - mean) / (jnp.sqrt(var) + EPS) + b[0]


def ref_forward(x, mask, layers, fg, fb, n_heads, mm_dtype=jnp.float32):
    """Module-semantics reference; mm_dtype selects matmul operand precision."""
    B, S, D = x.shape
    Dh = D // n_heads
    c = lambda t: t.astype(mm_dtype)
    for p in layers:
        save = x
        xn = ref_layernorm(x, p["ln1_g"], p["ln1_b"])
        q = jnp.dot(c(xn), c(p["wq"]), preferred_element_type=jnp.float32) + p["bq"][0]
        k = jnp.dot(c(xn), c(p["wk"]), preferred_element_type=jnp.float32) + p["bk"][0]
        v = jnp.dot(c(xn), c(p["wv"]), preferred_element_type=jnp.float32) + p["bv"][0]
        split = lambda t: t.reshape(B, S, n_heads, Dh).transpose(0, 2, 1, 3)
        qh, kh, vh = split(q), split(k), split(v)
        logits = jnp.einsum("bhsd,bhtd->bhst", c(qh), c(kh),
                            preferred_element_type=jnp.float32) / math.sqrt(Dh)
        logits = jnp.where(mask[:, None, :, :] == 0, NEG_INF, logits)
        w = jax.nn.softmax(logits, axis=-1)
        ctx = jnp.einsum("bhst,bhtd->bhsd", c(w), c(vh),
                         preferred_element_type=jnp.float32)
        ctx = ctx.transpose(0, 2, 1, 3).reshape(B, S, D)
        x = jnp.dot(c(ctx), c(p["wo"]), preferred_element_type=jnp.float32) + p["bo"][0] + save
        save = x
        xn = ref_layernorm(x, p["ln2_g"], p["ln2_b"])
        h1 = jnp.maximum(
            jnp.dot(c(xn), c(p["w1"]), preferred_element_type=jnp.float32) + p["b1"][0], 0.0)
        x = jnp.dot(c(h1), c(p["w2"]), preferred_element_type=jnp.float32) + p["b2"][0] + save
    return ref_layernorm(x, fg, fb)


# ----------------------------------- main -----------------------------------

if __name__ == "__main__":
    # Lane-dense small shapes: D, d_ff multiples of 128; S = 128; B = 4 (folded to 2 blocks).
    B, S, D, D_FF, N_HEADS, N_LAYERS = 4, 128, 128, 256, 4, 2

    key = jax.random.PRNGKey(0)
    kx, kp = jax.random.split(key)
    x = jax.random.normal(kx, (B, S, D), jnp.float32)

    # src_mask: 1 = attend, 0 = padding. Mask the tail of one sequence to exercise it.
    src_mask = jnp.ones((B, 1, S), jnp.float32)
    src_mask = src_mask.at[1, 0, S - 32:].set(0.0)

    layer_params, final_g, final_b = init_params(kp, D, D_FF, N_LAYERS)
    params = prep_params(layer_params, final_g, final_b, N_HEADS)   # one-time prep

    out = transformer_encoder(x, src_mask, params, N_HEADS)
    out = jax.block_until_ready(out)
    assert out.shape == (B, S, D)

    # 1) matched-precision reference (bf16 matmul operands, f32 accumulation): tight.
    ref_bf16 = ref_forward(x, src_mask, layer_params, final_g, final_b,
                           N_HEADS, mm_dtype=jnp.bfloat16)
    err_bf16 = float(jnp.max(jnp.abs(out - ref_bf16)))
    assert jnp.allclose(out, ref_bf16, rtol=3e-2, atol=3e-2), f"max_err={err_bf16}"

    # 2) full-f32 module-semantics reference: looser (bf16 matmul rounding only).
    ref_f32 = ref_forward(x, src_mask, layer_params, final_g, final_b,
                          N_HEADS, mm_dtype=jnp.float32)
    err_f32 = float(jnp.max(jnp.abs(out - ref_f32)))
    assert jnp.allclose(out, ref_f32, rtol=1e-1, atol=1e-1), f"max_err={err_f32}"

    print("KERNEL_OK")
</pallas_src>

<mosaic_0001>
module attributes {stable_mosaic.version = 11 : i64} {
  func.func @encoder_stack_kernel(%arg0: i32, %arg1: i32, %arg2: memref<2x128x128xf32, #tpu.memory_space<vmem>>, %arg3: memref<2x1x128xf32, #tpu.memory_space<vmem>>, %arg4: memref<1x1x128xf32, #tpu.memory_space<vmem>>, %arg5: memref<1x1x128xf32, #tpu.memory_space<vmem>>, %arg6: memref<1x128x384xbf16, #tpu.memory_space<vmem>>, %arg7: memref<1x1x384xf32, #tpu.memory_space<vmem>>, %arg8: memref<1x128x128xbf16, #tpu.memory_space<vmem>>, %arg9: memref<1x1x128xf32, #tpu.memory_space<vmem>>, %arg10: memref<1x1x128xf32, #tpu.memory_space<vmem>>, %arg11: memref<1x1x128xf32, #tpu.memory_space<vmem>>, %arg12: memref<1x128x256xbf16, #tpu.memory_space<vmem>>, %arg13: memref<1x1x256xf32, #tpu.memory_space<vmem>>, %arg14: memref<1x256x128xbf16, #tpu.memory_space<vmem>>, %arg15: memref<1x1x128xf32, #tpu.memory_space<vmem>>, %arg16: memref<1x128xf32, #tpu.memory_space<vmem>>, %arg17: memref<1x128xf32, #tpu.memory_space<vmem>>, %arg18: memref<2x128x128xf32, #tpu.memory_space<vmem>>, %arg19: memref<256x128xf32, #tpu.memory_space<vmem>>) attributes {dimension_semantics = [#tpu.dimension_semantics<parallel>, #tpu.dimension_semantics<arbitrary>], iteration_bounds = array<i64: 2, 2>, scalar_prefetch = 0 : i64, scratch_operands = 1 : i64, tpu.core_type = #tpu.core_type<tc>, window_params = [{transform_indices = @transform_0, window_bounds = array<i64: 2, 128, 128>}, {transform_indices = @transform_1, window_bounds = array<i64: 2, 1, 128>}, {transform_indices = @transform_2, window_bounds = array<i64: 1, 1, 128>}, {transform_indices = @transform_3, window_bounds = array<i64: 1, 1, 128>}, {transform_indices = @transform_4, window_bounds = array<i64: 1, 128, 384>}, {transform_indices = @transform_5, window_bounds = array<i64: 1, 1, 384>}, {transform_indices = @transform_6, window_bounds = array<i64: 1, 128, 128>}, {transform_indices = @transform_7, window_bounds = array<i64: 1, 1, 128>}, {transform_indices = @transform_8, window_bounds = array<i64: 1, 1, 128>}, {transform_indices = @transform_9, window_bounds = array<i64: 1, 1, 128>}, {transform_indices = @transform_10, window_bounds = array<i64: 1, 128, 256>}, {transform_indices = @transform_11, window_bounds = array<i64: 1, 1, 256>}, {transform_indices = @transform_12, window_bounds = array<i64: 1, 256, 128>}, {transform_indices = @transform_13, window_bounds = array<i64: 1, 1, 128>}, {pipeline_mode = #tpu.pipeline_mode<synchronous>, transform_indices = @transform_14, window_bounds = array<i64: 1, 128>}, {pipeline_mode = #tpu.pipeline_mode<synchronous>, transform_indices = @transform_15, window_bounds = array<i64: 1, 128>}, {transform_indices = @transform_16, window_bounds = array<i64: 2, 128, 128>}]} {
    %c0_i32 = arith.constant 0 : i32
    %0 = arith.cmpi eq, %arg1, %c0_i32 : i32
    %1 = arith.extui %0 : i1 to i32
    %c0_i32_0 = arith.constant 0 : i32
    %2 = arith.cmpi ne, %1, %c0_i32_0 : i32
    scf.if %2 {
      %c0_92 = arith.constant 0 : index
      %c0_93 = arith.constant 0 : index
      %c0_94 = arith.constant 0 : index
      %246 = vector.load %arg2[%c0_92, %c0_93, %c0_94] : memref<2x128x128xf32, #tpu.memory_space<vmem>>, vector<2x128x128xf32>
      %247 = vector.shape_cast %246 : vector<2x128x128xf32> to vector<256x128xf32>
      %c0_95 = arith.constant 0 : index
      %c0_96 = arith.constant 0 : index
      %248 = vector.load %arg19[%c0_95, %c0_96] : memref<256x128xf32, #tpu.memory_space<vmem>>, vector<256x128xf32>
      tpu.vector_store %arg19[%c0_95, %c0_96], %247 {strides = array<i32>} : memref<256x128xf32, #tpu.memory_space<vmem>>, vector<256x128xf32>,
    } else {
    }
    %c0 = arith.constant 0 : index
    %c0_1 = arith.constant 0 : index
    %3 = vector.load %arg19[%c0, %c0_1] : memref<256x128xf32, #tpu.memory_space<vmem>>, vector<256x128xf32>
    %c0_2 = arith.constant 0 : index
    %c0_3 = arith.constant 0 : index
    %c0_4 = arith.constant 0 : index
    %4 = vector.load %arg4[%c0_2, %c0_3, %c0_4] : memref<1x1x128xf32, #tpu.memory_space<vmem>>, vector<1x1x128xf32>
    %5 = vector.shape_cast %4 : vector<1x1x128xf32> to vector<1x128xf32>
    %c0_5 = arith.constant 0 : index
    %c0_6 = arith.constant 0 : index
    %c0_7 = arith.constant 0 : index
    %6 = vector.load %arg5[%c0_5, %c0_6, %c0_7] : memref<1x1x128xf32, #tpu.memory_space<vmem>>, vector<1x1x128xf32>
    %7 = vector.shape_cast %6 : vector<1x1x128xf32> to vector<1x128xf32>
    %cst = arith.constant dense<0.000000e+00> : vector<256xf32>
    %8 = vector.multi_reduction <add>, %3, %cst [1] : vector<256x128xf32> to vector<256xf32>
    %9 = vector.shape_cast %8 : vector<256xf32> to vector<256x1xf32>
    %cst_8 = arith.constant 1.280000e+02 : f32
    %10 = vector.broadcast %cst_8 : f32 to vector<256x1xf32>
    %11 = arith.divf %9, %10 : vector<256x1xf32>
    %12 = vector.broadcast %11 : vector<256x1xf32> to vector<256x128xf32>
    %13 = arith.subf %3, %12 : vector<256x128xf32>
    %14 = arith.mulf %13, %13 : vector<256x128xf32>
    %cst_9 = arith.constant dense<0.000000e+00> : vector<256xf32>
    %15 = vector.multi_reduction <add>, %14, %cst_9 [1] : vector<256x128xf32> to vector<256xf32>
    %16 = vector.shape_cast %15 : vector<256xf32> to vector<256x1xf32>
    %cst_10 = arith.constant 0.00787401571 : f32
    %17 = vector.broadcast %cst_10 : f32 to vector<256x1xf32>
    %18 = arith.mulf %16, %17 : vector<256x1xf32>
    %19 = math.sqrt %18 : vector<256x1xf32>
    %cst_11 = arith.constant 9.99999997E-7 : f32
    %20 = vector.broadcast %cst_11 : f32 to vector<256x1xf32>
    %21 = arith.addf %19, %20 : vector<256x1xf32>
    %22 = tpu.reciprocal %21 : vector<256x1xf32> -> vector<256x1xf32>
    %23 = vector.broadcast %5 : vector<1x128xf32> to vector<256x128xf32>
    %24 = arith.mulf %23, %13 : vector<256x128xf32>
    %25 = vector.broadcast %22 : vector<256x1xf32> to vector<256x128xf32>
    %26 = arith.mulf %24, %25 : vector<256x128xf32>
    %27 = vector.broadcast %7 : vector<1x128xf32> to vector<256x128xf32>
    %28 = arith.addf %26, %27 : vector<256x128xf32>
    %29 = arith.truncf %28 : vector<256x128xf32> to vector<256x128xbf16>
    %c0_12 = arith.constant 0 : index
    %c0_13 = arith.constant 0 : index
    %c0_14 = arith.constant 0 : index
    %30 = vector.load %arg6[%c0_12, %c0_13, %c0_14] : memref<1x128x384xbf16, #tpu.memory_space<vmem>>, vector<1x128x384xbf16>
    %31 = vector.shape_cast %30 : vector<1x128x384xbf16> to vector<128x384xbf16>
    %cst_15 = arith.constant dense<0.000000e+00> : vector<256x384xf32>
    %32 = tpu.matmul %29, %31, %cst_15 {dimension_numbers = #tpu.dot_dimension_numbers<[1], [0], [0], [1], [0, 0, 1, 1], [], []>} : vector<256x128xbf16>, vector<128x384xbf16>, vector<256x384xf32> -> vector<256x384xf32>
    %c0_16 = arith.constant 0 : index
    %c0_17 = arith.constant 0 : index
    %c0_18 = arith.constant 0 : index
    %33 = vector.load %arg7[%c0_16, %c0_17, %c0_18] : memref<1x1x384xf32, #tpu.memory_space<vmem>>, vector<1x1x384xf32>
    %34 = vector.shape_cast %33 : vector<1x1x384xf32> to vector<1x384xf32>
    %35 = vector.broadcast %34 : vector<1x384xf32> to vector<256x384xf32>
    %36 = arith.addf %32, %35 : vector<256x384xf32>
    %37 = arith.truncf %36 : vector<256x384xf32> to vector<256x384xbf16>
    %c0_19 = arith.constant 0 : index
    %c0_20 = arith.constant 0 : index
    %c0_21 = arith.constant 0 : index
    %38 = vector.load %arg3[%c0_19, %c0_20, %c0_21] : memref<2x1x128xf32, #tpu.memory_space<vmem>>, vector<1x1x128xf32>
    %39 = vector.shape_cast %38 : vector<1x1x128xf32> to vector<1x128xf32>
    %40 = vector.extract_strided_slice %37 {offsets = [0, 0], sizes = [128, 32], strides = [1, 1]} : vector<256x384xbf16> to vector<128x32xbf16>
    %41 = vector.extract_strided_slice %37 {offsets = [0, 128], sizes = [128, 32], strides = [1, 1]} : vector<256x384xbf16> to vector<128x32xbf16>
    %42 = vector.extract_strided_slice %37 {offsets = [0, 256], sizes = [128, 32], strides = [1, 1]} : vector<256x384xbf16> to vector<128x32xbf16>
    "tpu.trace_start"() <{level = 10 : i32, message = "qd,kd->qk"}> : () -> ()
    %cst_22 = arith.constant dense<0.000000e+00> : vector<128x128xf32>
    %43 = tpu.matmul %40, %41, %cst_22 {dimension_numbers = #tpu.dot_dimension_numbers<[1], [1], [0], [0], [0, 0, 1, 0], [], []>} : vector<128x32xbf16>, vector<128x32xbf16>, vector<128x128xf32> -> vector<128x128xf32>
    "tpu.trace_stop"() : () -> ()
    %44 = vector.broadcast %39 : vector<1x128xf32> to vector<128x128xf32>
    %45 = arith.addf %43, %44 : vector<128x128xf32>
    %cst_23 = arith.constant dense<0xFF800000> : vector<128xf32>
    %46 = vector.multi_reduction <maximumf>, %45, %cst_23 [1] : vector<128x128xf32> to vector<128xf32>
    %47 = vector.shape_cast %46 : vector<128xf32> to vector<128x1xf32>
    %48 = vector.broadcast %47 : vector<128x1xf32> to vector<128x128xf32>
    %49 = arith.subf %45, %48 : vector<128x128xf32>
    %50 = math.exp %49 : vector<128x128xf32>
    %cst_24 = arith.constant dense<0.000000e+00> : vector<128xf32>
    %51 = vector.multi_reduction <add>, %50, %cst_24 [1] : vector<128x128xf32> to vector<128xf32>
    %52 = vector.shape_cast %51 : vector<128xf32> to vector<128x1xf32>
    %53 = arith.truncf %50 : vector<128x128xf32> to vector<128x128xbf16>
    %cst_25 = arith.constant dense<0.000000e+00> : vector<128x32xf32>
    %54 = tpu.matmul %53, %42, %cst_25 {dimension_numbers = #tpu.dot_dimension_numbers<[1], [0], [0], [1], [0, 0, 1, 1], [], []>} : vector<128x128xbf16>, vector<128x32xbf16>, vector<128x32xf32> -> vector<128x32xf32>
    %55 = tpu.reciprocal %52 {approx = true} : vector<128x1xf32> -> vector<128x1xf32>
    %56 = vector.broadcast %55 : vector<128x1xf32> to vector<128x32xf32>
    %57 = arith.mulf %54, %56 : vector<128x32xf32>
    %58 = vector.extract_strided_slice %37 {offsets = [0, 32], sizes = [128, 32], strides = [1, 1]} : vector<256x384xbf16> to vector<128x32xbf16>
    %59 = vector.extract_strided_slice %37 {offsets = [0, 160], sizes = [128, 32], strides = [1, 1]} : vector<256x384xbf16> to vector<128x32xbf16>
    %60 = vector.extract_strided_slice %37 {offsets = [0, 288], sizes = [128, 32], strides = [1, 1]} : vector<256x384xbf16> to vector<128x32xbf16>
    "tpu.trace_start"() <{level = 10 : i32, message = "qd,kd->qk"}> : () -> ()
    %cst_26 = arith.constant dense<0.000000e+00> : vector<128x128xf32>
    %61 = tpu.matmul %58, %59, %cst_26 {dimension_numbers = #tpu.dot_dimension_numbers<[1], [1], [0], [0], [0, 0, 1, 0], [], []>} : vector<128x32xbf16>, vector<128x32xbf16>, vector<128x128xf32> -> vector<128x128xf32>
    "tpu.trace_stop"() : () -> ()
    %62 = vector.broadcast %39 : vector<1x128xf32> to vector<128x128xf32>
    %63 = arith.addf %61, %62 : vector<128x128xf32>
    %cst_27 = arith.constant dense<0xFF800000> : vector<128xf32>
    %64 = vector.multi_reduction <maximumf>, %63, %cst_27 [1] : vector<128x128xf32> to vector<128xf32>
    %65 = vector.shape_cast %64 : vector<128xf32> to vector<128x1xf32>
    %66 = vector.broadcast %65 : vector<128x1xf32> to vector<128x128xf32>
    %67 = arith.subf %63, %66 : vector<128x128xf32>
    %68 = math.exp %67 : vector<128x128xf32>
    %cst_28 = arith.constant dense<0.000000e+00> : vector<128xf32>
    %69 = vector.multi_reduction <add>, %68, %cst_28 [1] : vector<128x128xf32> to vector<128xf32>
    %70 = vector.shape_cast %69 : vector<128xf32> to vector<128x1xf32>
    %71 = arith.truncf %68 : vector<128x128xf32> to vector<128x128xbf16>
    %cst_29 = arith.constant dense<0.000000e+00> : vector<128x32xf32>
    %72 = tpu.matmul %71, %60, %cst_29 {dimension_numbers = #tpu.dot_dimension_numbers<[1], [0], [0], [1], [0, 0, 1, 1], [], []>} : vector<128x128xbf16>, vector<128x32xbf16>, vector<128x32xf32> -> vector<128x32xf32>
    %73 = tpu.reciprocal %70 {approx = true} : vector<128x1xf32> -> vector<128x1xf32>
    %74 = vector.broadcast %73 : vector<128x1xf32> to vector<128x32xf32>
    %75 = arith.mulf %72, %74 : vector<128x32xf32>
    %76 = vector.extract_strided_slice %37 {offsets = [0, 64], sizes = [128, 32], strides = [1, 1]} : vector<256x384xbf16> to vector<128x32xbf16>
    %77 = vector.extract_strided_slice %37 {offsets = [0, 192], sizes = [128, 32], strides = [1, 1]} : vector<256x384xbf16> to vector<128x32xbf16>
    %78 = vector.extract_strided_slice %37 {offsets = [0, 320], sizes = [128, 32], strides = [1, 1]} : vector<256x384xbf16> to vector<128x32xbf16>
    "tpu.trace_start"() <{level = 10 : i32, message = "qd,kd->qk"}> : () -> ()
    %cst_30 = arith.constant dense<0.000000e+00> : vector<128x128xf32>
    %79 = tpu.matmul %76, %77, %cst_30 {dimension_numbers = #tpu.dot_dimension_numbers<[1], [1], [0], [0], [0, 0, 1, 0], [], []>} : vector<128x32xbf16>, vector<128x32xbf16>, vector<128x128xf32> -> vector<128x128xf32>
    "tpu.trace_stop"() : () -> ()
    %80 = vector.broadcast %39 : vector<1x128xf32> to vector<128x128xf32>
    %81 = arith.addf %79, %80 : vector<128x128xf32>
    %cst_31 = arith.constant dense<0xFF800000> : vector<128xf32>
    %82 = vector.multi_reduction <maximumf>, %81, %cst_31 [1] : vector<128x128xf32> to vector<128xf32>
    %83 = vector.shape_cast %82 : vector<128xf32> to vector<128x1xf32>
    %84 = vector.broadcast %83 : vector<128x1xf32> to vector<128x128xf32>
    %85 = arith.subf %81, %84 : vector<128x128xf32>
    %86 = math.exp %85 : vector<128x128xf32>
    %cst_32 = arith.constant dense<0.000000e+00> : vector<128xf32>
    %87 = vector.multi_reduction <add>, %86, %cst_32 [1] : vector<128x128xf32> to vector<128xf32>
    %88 = vector.shape_cast %87 : vector<128xf32> to vector<128x1xf32>
    %89 = arith.truncf %86 : vector<128x128xf32> to vector<128x128xbf16>
    %cst_33 = arith.constant dense<0.000000e+00> : vector<128x32xf32>
    %90 = tpu.matmul %89, %78, %cst_33 {dimension_numbers = #tpu.dot_dimension_numbers<[1], [0], [0], [1], [0, 0, 1, 1], [], []>} : vector<128x128xbf16>, vector<128x32xbf16>, vector<128x32xf32> -> vector<128x32xf32>
    %91 = tpu.reciprocal %88 {approx = true} : vector<128x1xf32> -> vector<128x1xf32>
    %92 = vector.broadcast %91 : vector<128x1xf32> to vector<128x32xf32>
    %93 = arith.mulf %90, %92 : vector<128x32xf32>
    %94 = vector.extract_strided_slice %37 {offsets = [0, 96], sizes = [128, 32], strides = [1, 1]} : vector<256x384xbf16> to vector<128x32xbf16>
    %95 = vector.extract_strided_slice %37 {offsets = [0, 224], sizes = [128, 32], strides = [1, 1]} : vector<256x384xbf16> to vector<128x32xbf16>
    %96 = vector.extract_strided_slice %37 {offsets = [0, 352], sizes = [128, 32], strides = [1, 1]} : vector<256x384xbf16> to vector<128x32xbf16>
    "tpu.trace_start"() <{level = 10 : i32, message = "qd,kd->qk"}> : () -> ()
    %cst_34 = arith.constant dense<0.000000e+00> : vector<128x128xf32>
    %97 = tpu.matmul %94, %95, %cst_34 {dimension_numbers = #tpu.dot_dimension_numbers<[1], [1], [0], [0], [0, 0, 1, 0], [], []>} : vector<128x32xbf16>, vector<128x32xbf16>, vector<128x128xf32> -> vector<128x128xf32>
    "tpu.trace_stop"() : () -> ()
    %98 = vector.broadcast %39 : vector<1x128xf32> to vector<128x128xf32>
    %99 = arith.addf %97, %98 : vector<128x128xf32>
    %cst_35 = arith.constant dense<0xFF800000> : vector<128xf32>
    %100 = vector.multi_reduction <maximumf>, %99, %cst_35 [1] : vector<128x128xf32> to vector<128xf32>
    %101 = vector.shape_cast %100 : vector<128xf32> to vector<128x1xf32>
    %102 = vector.broadcast %101 : vector<128x1xf32> to vector<128x128xf32>
    %103 = arith.subf %99, %102 : vector<128x128xf32>
    %104 = math.exp %103 : vector<128x128xf32>
    %cst_36 = arith.constant dense<0.000000e+00> : vector<128xf32>
    %105 = vector.multi_reduction <add>, %104, %cst_36 [1] : vector<128x128xf32> to vector<128xf32>
    %106 = vector.shape_cast %105 : vector<128xf32> to vector<128x1xf32>
    %107 = arith.truncf %104 : vector<128x128xf32> to vector<128x128xbf16>
    %cst_37 = arith.constant dense<0.000000e+00> : vector<128x32xf32>
    %108 = tpu.matmul %107, %96, %cst_37 {dimension_numbers = #tpu.dot_dimension_numbers<[1], [0], [0], [1], [0, 0, 1, 1], [], []>} : vector<128x128xbf16>, vector<128x32xbf16>, vector<128x32xf32> -> vector<128x32xf32>
    %109 = tpu.reciprocal %106 {approx = true} : vector<128x1xf32> -> vector<128x1xf32>
    %110 = vector.broadcast %109 : vector<128x1xf32> to vector<128x32xf32>
    %111 = arith.mulf %108, %110 : vector<128x32xf32>
    %112 = tpu.concatenate %57, %75, %93, %111 in 1 : vector<128x32xf32>, vector<128x32xf32>, vector<128x32xf32>, vector<128x32xf32> -> vector<128x128xf32>
    %c1 = arith.constant 1 : index
    %c0_38 = arith.constant 0 : index
    %c0_39 = arith.constant 0 : index
    %113 = vector.load %arg3[%c1, %c0_38, %c0_39] : memref<2x1x128xf32, #tpu.memory_space<vmem>>, vector<1x1x128xf32>
    %114 = vector.shape_cast %113 : vector<1x1x128xf32> to vector<1x128xf32>
    %115 = vector.extract_strided_slice %37 {offsets = [128, 0], sizes = [128, 32], strides = [1, 1]} : vector<256x384xbf16> to vector<128x32xbf16>
    %116 = vector.extract_strided_slice %37 {offsets = [128, 128], sizes = [128, 32], strides = [1, 1]} : vector<256x384xbf16> to vector<128x32xbf16>
    %117 = vector.extract_strided_slice %37 {offsets = [128, 256], sizes = [128, 32], strides = [1, 1]} : vector<256x384xbf16> to vector<128x32xbf16>
    "tpu.trace_start"() <{level = 10 : i32, message = "qd,kd->qk"}> : () -> ()
    %cst_40 = arith.constant dense<0.000000e+00> : vector<128x128xf32>
    %118 = tpu.matmul %115, %116, %cst_40 {dimension_numbers = #tpu.dot_dimension_numbers<[1], [1], [0], [0], [0, 0, 1, 0], [], []>} : vector<128x32xbf16>, vector<128x32xbf16>, vector<128x128xf32> -> vector<128x128xf32>
    "tpu.trace_stop"() : () -> ()
    %119 = vector.broadcast %114 : vector<1x128xf32> to vector<128x128xf32>
    %120 = arith.addf %118, %119 : vector<128x128xf32>
    %cst_41 = arith.constant dense<0xFF800000> : vector<128xf32>
    %121 = vector.multi_reduction <maximumf>, %120, %cst_41 [1] : vector<128x128xf32> to vector<128xf32>
    %122 = vector.shape_cast %121 : vector<128xf32> to vector<128x1xf32>
    %123 = vector.broadcast %122 : vector<128x1xf32> to vector<128x128xf32>
    %124 = arith.subf %120, %123 : vector<128x128xf32>
    %125 = math.exp %124 : vector<128x128xf32>
    %cst_42 = arith.constant dense<0.000000e+00> : vector<128xf32>
    %126 = vector.multi_reduction <add>, %125, %cst_42 [1] : vector<128x128xf32> to vector<128xf32>
    %127 = vector.shape_cast %126 : vector<128xf32> to vector<128x1xf32>
    %128 = arith.truncf %125 : vector<128x128xf32> to vector<128x128xbf16>
    %cst_43 = arith.constant dense<0.000000e+00> : vector<128x32xf32>
    %129 = tpu.matmul %128, %117, %cst_43 {dimension_numbers = #tpu.dot_dimension_numbers<[1], [0], [0], [1], [0, 0, 1, 1], [], []>} : vector<128x128xbf16>, vector<128x32xbf16>, vector<128x32xf32> -> vector<128x32xf32>
    %130 = tpu.reciprocal %127 {approx = true} : vector<128x1xf32> -> vector<128x1xf32>
    %131 = vector.broadcast %130 : vector<128x1xf32> to vector<128x32xf32>
    %132 = arith.mulf %129, %131 : vector<128x32xf32>
    %133 = vector.extract_strided_slice %37 {offsets = [128, 32], sizes = [128, 32], strides = [1, 1]} : vector<256x384xbf16> to vector<128x32xbf16>
    %134 = vector.extract_strided_slice %37 {offsets = [128, 160], sizes = [128, 32], strides = [1, 1]} : vector<256x384xbf16> to vector<128x32xbf16>
    %135 = vector.extract_strided_slice %37 {offsets = [128, 288], sizes = [128, 32], strides = [1, 1]} : vector<256x384xbf16> to vector<128x32xbf16>
    "tpu.trace_start"() <{level = 10 : i32, message = "qd,kd->qk"}> : () -> ()
    %cst_44 = arith.constant dense<0.000000e+00> : vector<128x128xf32>
    %136 = tpu.matmul %133, %134, %cst_44 {dimension_numbers = #tpu.dot_dimension_numbers<[1], [1], [0], [0], [0, 0, 1, 0], [], []>} : vector<128x32xbf16>, vector<128x32xbf16>, vector<128x128xf32> -> vector<128x128xf32>
    "tpu.trace_stop"() : () -> ()
    %137 = vector.broadcast %114 : vector<1x128xf32> to vector<128x128xf32>
    %138 = arith.addf %136, %137 : vector<128x128xf32>
    %cst_45 = arith.constant dense<0xFF800000> : vector<128xf32>
    %139 = vector.multi_reduction <maximumf>, %138, %cst_45 [1] : vector<128x128xf32> to vector<128xf32>
    %140 = vector.shape_cast %139 : vector<128xf32> to vector<128x1xf32>
    %141 = vector.broadcast %140 : vector<128x1xf32> to vector<128x128xf32>
    %142 = arith.subf %138, %141 : vector<128x128xf32>
    %143 = math.exp %142 : vector<128x128xf32>
    %cst_46 = arith.constant dense<0.000000e+00> : vector<128xf32>
    %144 = vector.multi_reduction <add>, %143, %cst_46 [1] : vector<128x128xf32> to vector<128xf32>
    %145 = vector.shape_cast %144 : vector<128xf32> to vector<128x1xf32>
    %146 = arith.truncf %143 : vector<128x128xf32> to vector<128x128xbf16>
    %cst_47 = arith.constant dense<0.000000e+00> : vector<128x32xf32>
    %147 = tpu.matmul %146, %135, %cst_47 {dimension_numbers = #tpu.dot_dimension_numbers<[1], [0], [0], [1], [0, 0, 1, 1], [], []>} : vector<128x128xbf16>, vector<128x32xbf16>, vector<128x32xf32> -> vector<128x32xf32>
    %148 = tpu.reciprocal %145 {approx = true} : vector<128x1xf32> -> vector<128x1xf32>
    %149 = vector.broadcast %148 : vector<128x1xf32> to vector<128x32xf32>
    %150 = arith.mulf %147, %149 : vector<128x32xf32>
    %151 = vector.extract_strided_slice %37 {offsets = [128, 64], sizes = [128, 32], strides = [1, 1]} : vector<256x384xbf16> to vector<128x32xbf16>
    %152 = vector.extract_strided_slice %37 {offsets = [128, 192], sizes = [128, 32], strides = [1, 1]} : vector<256x384xbf16> to vector<128x32xbf16>
    %153 = vector.extract_strided_slice %37 {offsets = [128, 320], sizes = [128, 32], strides = [1, 1]} : vector<256x384xbf16> to vector<128x32xbf16>
    "tpu.trace_start"() <{level = 10 : i32, message = "qd,kd->qk"}> : () -> ()
    %cst_48 = arith.constant dense<0.000000e+00> : vector<128x128xf32>
    %154 = tpu.matmul %151, %152, %cst_48 {dimension_numbers = #tpu.dot_dimension_numbers<[1], [1], [0], [0], [0, 0, 1, 0], [], []>} : vector<128x32xbf16>, vector<128x32xbf16>, vector<128x128xf32> -> vector<128x128xf32>
    "tpu.trace_stop"() : () -> ()
    %155 = vector.broadcast %114 : vector<1x128xf32> to vector<128x128xf32>
    %156 = arith.addf %154, %155 : vector<128x128xf32>
    %cst_49 = arith.constant dense<0xFF800000> : vector<128xf32>
    %157 = vector.multi_reduction <maximumf>, %156, %cst_49 [1] : vector<128x128xf32> to vector<128xf32>
    %158 = vector.shape_cast %157 : vector<128xf32> to vector<128x1xf32>
    %159 = vector.broadcast %158 : vector<128x1xf32> to vector<128x128xf32>
    %160 = arith.subf %156, %159 : vector<128x128xf32>
    %161 = math.exp %160 : vector<128x128xf32>
    %cst_50 = arith.constant dense<0.000000e+00> : vector<128xf32>
    %162 = vector.multi_reduction <add>, %161, %cst_50 [1] : vector<128x128xf32> to vector<128xf32>
    %163 = vector.shape_cast %162 : vector<128xf32> to vector<128x1xf32>
    %164 = arith.truncf %161 : vector<128x128xf32> to vector<128x128xbf16>
    %cst_51 = arith.constant dense<0.000000e+00> : vector<128x32xf32>
    %165 = tpu.matmul %164, %153, %cst_51 {dimension_numbers = #tpu.dot_dimension_numbers<[1], [0], [0], [1], [0, 0, 1, 1], [], []>} : vector<128x128xbf16>, vector<128x32xbf16>, vector<128x32xf32> -> vector<128x32xf32>
    %166 = tpu.reciprocal %163 {approx = true} : vector<128x1xf32> -> vector<128x1xf32>
    %167 = vector.broadcast %166 : vector<128x1xf32> to vector<128x32xf32>
    %168 = arith.mulf %165, %167 : vector<128x32xf32>
    %169 = vector.extract_strided_slice %37 {offsets = [128, 96], sizes = [128, 32], strides = [1, 1]} : vector<256x384xbf16> to vector<128x32xbf16>
    %170 = vector.extract_strided_slice %37 {offsets = [128, 224], sizes = [128, 32], strides = [1, 1]} : vector<256x384xbf16> to vector<128x32xbf16>
    %171 = vector.extract_strided_slice %37 {offsets = [128, 352], sizes = [128, 32], strides = [1, 1]} : vector<256x384xbf16> to vector<128x32xbf16>
    "tpu.trace_start"() <{level = 10 : i32, message = "qd,kd->qk"}> : () -> ()
    %cst_52 = arith.constant dense<0.000000e+00> : vector<128x128xf32>
    %172 = tpu.matmul %169, %170, %cst_52 {dimension_numbers = #tpu.dot_dimension_numbers<[1], [1], [0], [0], [0, 0, 1, 0], [], []>} : vector<128x32xbf16>, vector<128x32xbf16>, vector<128x128xf32> -> vector<128x128xf32>
    "tpu.trace_stop"() : () -> ()
    %173 = vector.broadcast %114 : vector<1x128xf32> to vector<128x128xf32>
    %174 = arith.addf %172, %173 : vector<128x128xf32>
    %cst_53 = arith.constant dense<0xFF800000> : vector<128xf32>
    %175 = vector.multi_reduction <maximumf>, %174, %cst_53 [1] : vector<128x128xf32> to vector<128xf32>
    %176 = vector.shape_cast %175 : vector<128xf32> to vector<128x1xf32>
    %177 = vector.broadcast %176 : vector<128x1xf32> to vector<128x128xf32>
    %178 = arith.subf %174, %177 : vector<128x128xf32>
    %179 = math.exp %178 : vector<128x128xf32>
    %cst_54 = arith.constant dense<0.000000e+00> : vector<128xf32>
    %180 = vector.multi_reduction <add>, %179, %cst_54 [1] : vector<128x128xf32> to vector<128xf32>
    %181 = vector.shape_cast %180 : vector<128xf32> to vector<128x1xf32>
    %182 = arith.truncf %179 : vector<128x128xf32> to vector<128x128xbf16>
    %cst_55 = arith.constant dense<0.000000e+00> : vector<128x32xf32>
    %183 = tpu.matmul %182, %171, %cst_55 {dimension_numbers = #tpu.dot_dimension_numbers<[1], [0], [0], [1], [0, 0, 1, 1], [], []>} : vector<128x128xbf16>, vector<128x32xbf16>, vector<128x32xf32> -> vector<128x32xf32>
    %184 = tpu.reciprocal %181 {approx = true} : vector<128x1xf32> -> vector<128x1xf32>
    %185 = vector.broadcast %184 : vector<128x1xf32> to vector<128x32xf32>
    %186 = arith.mulf %183, %185 : vector<128x32xf32>
    %187 = tpu.concatenate %132, %150, %168, %186 in 1 : vector<128x32xf32>, vector<128x32xf32>, vector<128x32xf32>, vector<128x32xf32> -> vector<128x128xf32>
    %188 = tpu.concatenate %112, %187 in 0 : vector<128x128xf32>, vector<128x128xf32> -> vector<256x128xf32>
    %189 = arith.truncf %188 : vector<256x128xf32> to vector<256x128xbf16>
    %c0_56 = arith.constant 0 : index
    %c0_57 = arith.constant 0 : index
    %c0_58 = arith.constant 0 : index
    %190 = vector.load %arg8[%c0_56, %c0_57, %c0_58] : memref<1x128x128xbf16, #tpu.memory_space<vmem>>, vector<1x128x128xbf16>
    %191 = vector.shape_cast %190 : vector<1x128x128xbf16> to vector<128x128xbf16>
    %cst_59 = arith.constant dense<0.000000e+00> : vector<256x128xf32>
    %192 = tpu.matmul %189, %191, %cst_59 {dimension_numbers = #tpu.dot_dimension_numbers<[1], [0], [0], [1], [0, 0, 1, 1], [], []>} : vector<256x128xbf16>, vector<128x128xbf16>, vector<256x128xf32> -> vector<256x128xf32>
    %c0_60 = arith.constant 0 : index
    %c0_61 = arith.constant 0 : index
    %c0_62 = arith.constant 0 : index
    %193 = vector.load %arg9[%c0_60, %c0_61, %c0_62] : memref<1x1x128xf32, #tpu.memory_space<vmem>>, vector<1x1x128xf32>
    %194 = vector.shape_cast %193 : vector<1x1x128xf32> to vector<1x128xf32>
    %195 = vector.broadcast %194 : vector<1x128xf32> to vector<256x128xf32>
    %196 = arith.addf %192, %195 : vector<256x128xf32>
    %197 = arith.addf %3, %196 : vector<256x128xf32>
    %c0_63 = arith.constant 0 : index
    %c0_64 = arith.constant 0 : index
    %c0_65 = arith.constant 0 : index
    %198 = vector.load %arg10[%c0_63, %c0_64, %c0_65] : memref<1x1x128xf32, #tpu.memory_space<vmem>>, vector<1x1x128xf32>
    %199 = vector.shape_cast %198 : vector<1x1x128xf32> to vector<1x128xf32>
    %c0_66 = arith.constant 0 : index
    %c0_67 = arith.constant 0 : index
    %c0_68 = arith.constant 0 : index
    %200 = vector.load %arg11[%c0_66, %c0_67, %c0_68] : memref<1x1x128xf32, #tpu.memory_space<vmem>>, vector<1x1x128xf32>
    %201 = vector.shape_cast %200 : vector<1x1x128xf32> to vector<1x128xf32>
    %cst_69 = arith.constant dense<0.000000e+00> : vector<256xf32>
    %202 = vector.multi_reduction <add>, %197, %cst_69 [1] : vector<256x128xf32> to vector<256xf32>
    %203 = vector.shape_cast %202 : vector<256xf32> to vector<256x1xf32>
    %cst_70 = arith.constant 1.280000e+02 : f32
    %204 = vector.broadcast %cst_70 : f32 to vector<256x1xf32>
    %205 = arith.divf %203, %204 : vector<256x1xf32>
    %206 = vector.broadcast %205 : vector<256x1xf32> to vector<256x128xf32>
    %207 = arith.subf %197, %206 : vector<256x128xf32>
    %208 = arith.mulf %207, %207 : vector<256x128xf32>
    %cst_71 = arith.constant dense<0.000000e+00> : vector<256xf32>
    %209 = vector.multi_reduction <add>, %208, %cst_71 [1] : vector<256x128xf32> to vector<256xf32>
    %210 = vector.shape_cast %209 : vector<256xf32> to vector<256x1xf32>
    %cst_72 = arith.constant 0.00787401571 : f32
    %211 = vector.broadcast %cst_72 : f32 to vector<256x1xf32>
    %212 = arith.mulf %210, %211 : vector<256x1xf32>
    %213 = math.sqrt %212 : vector<256x1xf32>
    %cst_73 = arith.constant 9.99999997E-7 : f32
    %214 = vector.broadcast %cst_73 : f32 to vector<256x1xf32>
    %215 = arith.addf %213, %214 : vector<256x1xf32>
    %216 = tpu.reciprocal %215 : vector<256x1xf32> -> vector<256x1xf32>
    %217 = vector.broadcast %199 : vector<1x128xf32> to vector<256x128xf32>
    %218 = arith.mulf %217, %207 : vector<256x128xf32>
    %219 = vector.broadcast %216 : vector<256x1xf32> to vector<256x128xf32>
    %220 = arith.mulf %218, %219 : vector<256x128xf32>
    %221 = vector.broadcast %201 : vector<1x128xf32> to vector<256x128xf32>
    %222 = arith.addf %220, %221 : vector<256x128xf32>
    %223 = arith.truncf %222 : vector<256x128xf32> to vector<256x128xbf16>
    %c0_74 = arith.constant 0 : index
    %c0_75 = arith.constant 0 : index
    %c0_76 = arith.constant 0 : index
    %224 = vector.load %arg12[%c0_74, %c0_75, %c0_76] : memref<1x128x256xbf16, #tpu.memory_space<vmem>>, vector<1x128x256xbf16>
    %225 = vector.shape_cast %224 : vector<1x128x256xbf16> to vector<128x256xbf16>
    %cst_77 = arith.constant dense<0.000000e+00> : vector<256x256xf32>
    %226 = tpu.matmul %223, %225, %cst_77 {dimension_numbers = #tpu.dot_dimension_numbers<[1], [0], [0], [1], [0, 0, 1, 1], [], []>} : vector<256x128xbf16>, vector<128x256xbf16>, vector<256x256xf32> -> vector<256x256xf32>
    %c0_78 = arith.constant 0 : index
    %c0_79 = arith.constant 0 : index
    %c0_80 = arith.constant 0 : index
    %227 = vector.load %arg13[%c0_78, %c0_79, %c0_80] : memref<1x1x256xf32, #tpu.memory_space<vmem>>, vector<1x1x256xf32>
    %228 = vector.shape_cast %227 : vector<1x1x256xf32> to vector<1x256xf32>
    %229 = vector.broadcast %228 : vector<1x256xf32> to vector<256x256xf32>
    %230 = arith.addf %226, %229 : vector<256x256xf32>
    %cst_81 = arith.constant 0.000000e+00 : f32
    %231 = vector.broadcast %cst_81 : f32 to vector<256x256xf32>
    %232 = arith.maximumf %230, %231 : vector<256x256xf32>
    %233 = arith.truncf %232 : vector<256x256xf32> to vector<256x256xbf16>
    %c0_82 = arith.constant 0 : index
    %c0_83 = arith.constant 0 : index
    %c0_84 = arith.constant 0 : index
    %234 = vector.load %arg14[%c0_82, %c0_83, %c0_84] : memref<1x256x128xbf16, #tpu.memory_space<vmem>>, vector<1x256x128xbf16>
    %235 = vector.shape_cast %234 : vector<1x256x128xbf16> to vector<256x128xbf16>
    %cst_85 = arith.constant dense<0.000000e+00> : vector<256x128xf32>
    %236 = tpu.matmul %233, %235, %cst_85 {dimension_numbers = #tpu.dot_dimension_numbers<[1], [0], [0], [1], [0, 0, 1, 1], [], []>} : vector<256x256xbf16>, vector<256x128xbf16>, vector<256x128xf32> -> vector<256x128xf32>
    %c0_86 = arith.constant 0 : index
    %c0_87 = arith.constant 0 : index
    %c0_88 = arith.constant 0 : index
    %237 = vector.load %arg15[%c0_86, %c0_87, %c0_88] : memref<1x1x128xf32, #tpu.memory_space<vmem>>, vector<1x1x128xf32>
    %238 = vector.shape_cast %237 : vector<1x1x128xf32> to vector<1x128xf32>
    %239 = vector.broadcast %238 : vector<1x128xf32> to vector<256x128xf32>
    %240 = arith.addf %236, %239 : vector<256x128xf32>
    %241 = arith.addf %197, %240 : vector<256x128xf32>
    %c0_89 = arith.constant 0 : index
    %c0_90 = arith.constant 0 : index
    %242 = vector.load %arg19[%c0_89, %c0_90] : memref<256x128xf32, #tpu.memory_space<vmem>>, vector<256x128xf32>
    tpu.vector_store %arg19[%c0_89, %c0_90], %241 {strides = array<i32>} : memref<256x128xf32, #tpu.memory_space<vmem>>, vector<256x128xf32>,
    %c1_i32 = arith.constant 1 : i32
    %243 = arith.cmpi eq, %arg1, %c1_i32 : i32
    %244 = arith.extui %243 : i1 to i32
    %c0_i32_91 = arith.constant 0 : i32
    %245 = arith.cmpi ne, %244, %c0_i32_91 : i32
    scf.if %245 {
      %c0_92 = arith.constant 0 : index
      %c0_93 = arith.constant 0 : index
      %246 = vector.load %arg16[%c0_92, %c0_93] : memref<1x128xf32, #tpu.memory_space<vmem>>, vector<1x128xf32>
      %c0_94 = arith.constant 0 : index
      %c0_95 = arith.constant 0 : index
      %247 = vector.load %arg17[%c0_94, %c0_95] : memref<1x128xf32, #tpu.memory_space<vmem>>, vector<1x128xf32>
      %cst_96 = arith.constant dense<0.000000e+00> : vector<256xf32>
      %248 = vector.multi_reduction <add>, %241, %cst_96 [1] : vector<256x128xf32> to vector<256xf32>
      %249 = vector.shape_cast %248 : vector<256xf32> to vector<256x1xf32>
      %cst_97 = arith.constant 1.280000e+02 : f32
      %250 = vector.broadcast %cst_97 : f32 to vector<256x1xf32>
      %251 = arith.divf %249, %250 : vector<256x1xf32>
      %252 = vector.broadcast %251 : vector<256x1xf32> to vector<256x128xf32>
      %253 = arith.subf %241, %252 : vector<256x128xf32>
      %254 = arith.mulf %253, %253 : vector<256x128xf32>
      %cst_98 = arith.constant dense<0.000000e+00> : vector<256xf32>
      %255 = vector.multi_reduction <add>, %254, %cst_98 [1] : vector<256x128xf32> to vector<256xf32>
      %256 = vector.shape_cast %255 : vector<256xf32> to vector<256x1xf32>
      %cst_99 = arith.constant 0.00787401571 : f32
      %257 = vector.broadcast %cst_99 : f32 to vector<256x1xf32>
      %258 = arith.mulf %256, %257 : vector<256x1xf32>
      %259 = math.sqrt %258 : vector<256x1xf32>
      %cst_100 = arith.constant 9.99999997E-7 : f32
      %260 = vector.broadcast %cst_100 : f32 to vector<256x1xf32>
      %261 = arith.addf %259, %260 : vector<256x1xf32>
      %262 = tpu.reciprocal %261 : vector<256x1xf32> -> vector<256x1xf32>
      %263 = vector.broadcast %246 : vector<1x128xf32> to vector<256x128xf32>
      %264 = arith.mulf %263, %253 : vector<256x128xf32>
      %265 = vector.broadcast %262 : vector<256x1xf32> to vector<256x128xf32>
      %266 = arith.mulf %264, %265 : vector<256x128xf32>
      %267 = vector.broadcast %247 : vector<1x128xf32> to vector<256x128xf32>
      %268 = arith.addf %266, %267 : vector<256x128xf32>
      %269 = vector.shape_cast %268 : vector<256x128xf32> to vector<2x128x128xf32>
      %c0_101 = arith.constant 0 : index
      %c0_102 = arith.constant 0 : index
      %c0_103 = arith.constant 0 : index
      %270 = vector.load %arg18[%c0_101, %c0_102, %c0_103] : memref<2x128x128xf32, #tpu.memory_space<vmem>>, vector<2x128x128xf32>
      tpu.vector_store %arg18[%c0_101, %c0_102, %c0_103], %269 {strides = array<i32>} : memref<2x128x128xf32, #tpu.memory_space<vmem>>, vector<2x128x128xf32>,
    } else {
    }
    return
  }
  func.func @transform_0(%arg0: i32, %arg1: i32) -> (i32, i32, i32) {
    %c0_i32 = arith.constant 0 : i32
    %c0_i32_0 = arith.constant 0 : i32
    %c0_i32_1 = arith.constant 0 : i32
    return %arg0, %c0_i32, %c0_i32_0 : i32, i32, i32
  }
  func.func @transform_1(%arg0: i32, %arg1: i32) -> (i32, i32, i32) {
    %c0_i32 = arith.constant 0 : i32
    %c0_i32_0 = arith.constant 0 : i32
    %c0_i32_1 = arith.constant 0 : i32
    return %arg0, %c0_i32, %c0_i32_0 : i32, i32, i32
  }
  func.func @transform_2(%arg0: i32, %arg1: i32) -> (i32, i32, i32) {
    %c0_i32 = arith.constant 0 : i32
    %c0_i32_0 = arith.constant 0 : i32
    %c0_i32_1 = arith.constant 0 : i32
    return %arg1, %c0_i32, %c0_i32_0 : i32, i32, i32
  }
  func.func @transform_3(%arg0: i32, %arg1: i32) -> (i32, i32, i32) {
    %c0_i32 = arith.constant 0 : i32
    %c0_i32_0 = arith.constant 0 : i32
    %c0_i32_1 = arith.constant 0 : i32
    return %arg1, %c0_i32, %c0_i32_0 : i32, i32, i32
  }
  func.func @transform_4(%arg0: i32, %arg1: i32) -> (i32, i32, i32) {
    %c0_i32 = arith.constant 0 : i32
    %c0_i32_0 = arith.constant 0 : i32
    %c0_i32_1 = arith.constant 0 : i32
    return %arg1, %c0_i32, %c0_i32_0 : i32, i32, i32
  }
  func.func @transform_5(%arg0: i32, %arg1: i32) -> (i32, i32, i32) {
    %c0_i32 = arith.constant 0 : i32
    %c0_i32_0 = arith.constant 0 : i32
    %c0_i32_1 = arith.constant 0 : i32
    return %arg1, %c0_i32, %c0_i32_0 : i32, i32, i32
  }
  func.func @transform_6(%arg0: i32, %arg1: i32) -> (i32, i32, i32) {
    %c0_i32 = arith.constant 0 : i32
    %c0_i32_0 = arith.constant 0 : i32
    %c0_i32_1 = arith.constant 0 : i32
    return %arg1, %c0_i32, %c0_i32_0 : i32, i32, i32
  }
  func.func @transform_7(%arg0: i32, %arg1: i32) -> (i32, i32, i32) {
    %c0_i32 = arith.constant 0 : i32
    %c0_i32_0 = arith.constant 0 : i32
    %c0_i32_1 = arith.constant 0 : i32
    return %arg1, %c0_i32, %c0_i32_0 : i32, i32, i32
  }
  func.func @transform_8(%arg0: i32, %arg1: i32) -> (i32, i32, i32) {
    %c0_i32 = arith.constant 0 : i32
    %c0_i32_0 = arith.constant 0 : i32
    %c0_i32_1 = arith.constant 0 : i32
    return %arg1, %c0_i32, %c0_i32_0 : i32, i32, i32
  }
  func.func @transform_9(%arg0: i32, %arg1: i32) -> (i32, i32, i32) {
    %c0_i32 = arith.constant 0 : i32
    %c0_i32_0 = arith.constant 0 : i32
    %c0_i32_1 = arith.constant 0 : i32
    return %arg1, %c0_i32, %c0_i32_0 : i32, i32, i32
  }
  func.func @transform_10(%arg0: i32, %arg1: i32) -> (i32, i32, i32) {
    %c0_i32 = arith.constant 0 : i32
    %c0_i32_0 = arith.constant 0 : i32
    %c0_i32_1 = arith.constant 0 : i32
    return %arg1, %c0_i32, %c0_i32_0 : i32, i32, i32
  }
  func.func @transform_11(%arg0: i32, %arg1: i32) -> (i32, i32, i32) {
    %c0_i32 = arith.constant 0 : i32
    %c0_i32_0 = arith.constant 0 : i32
    %c0_i32_1 = arith.constant 0 : i32
    return %arg1, %c0_i32, %c0_i32_0 : i32, i32, i32
  }
  func.func @transform_12(%arg0: i32, %arg1: i32) -> (i32, i32, i32) {
    %c0_i32 = arith.constant 0 : i32
    %c0_i32_0 = arith.constant 0 : i32
    %c0_i32_1 = arith.constant 0 : i32
    return %arg1, %c0_i32, %c0_i32_0 : i32, i32, i32
  }
  func.func @transform_13(%arg0: i32, %arg1: i32) -> (i32, i32, i32) {
    %c0_i32 = arith.constant 0 : i32
    %c0_i32_0 = arith.constant 0 : i32
    %c0_i32_1 = arith.constant 0 : i32
    return %arg1, %c0_i32, %c0_i32_0 : i32, i32, i32
  }
  func.func @transform_14(%arg0: i32, %arg1: i32) -> (i32, i32) {
    %c0_i32 = arith.constant 0 : i32
    %c0_i32_0 = arith.constant 0 : i32
    %c0_i32_1 = arith.constant 0 : i32
    return %c0_i32, %c0_i32_0 : i32, i32
  }
  func.func @transform_15(%arg0: i32, %arg1: i32) -> (i32, i32) {
    %c0_i32 = arith.constant 0 : i32
    %c0_i32_0 = arith.constant 0 : i32
    %c0_i32_1 = arith.constant 0 : i32
    return %c0_i32, %c0_i32_0 : i32, i32
  }
  func.func @transform_16(%arg0: i32, %arg1: i32) -> (i32, i32, i32) {
    %c0_i32 = arith.constant 0 : i32
    %c0_i32_0 = arith.constant 0 : i32
    %c0_i32_1 = arith.constant 0 : i32
    return %arg0, %c0_i32, %c0_i32_0 : i32, i32, i32
  }
}

</mosaic_0001>

<llo_original>
// kernel: transformer_encoder.1
$region0: #{transformer_encoder.1}
  #allocation0 [shape = 'u32[]', space=smem, size = 0x4, offset = 0x4, fixed_abs, tag = 'smem constant byte address 0x4 - core index']
  #allocation1 [shape = 'u32[144,128]{1,0:T(1,128)}', space=vmem, size = 0x12000, scoped, tag = 'internal scratch']
  #allocation2 [shape = 'f32[256,128]{1,0:T(8,128)}', space=vmem, size = 0x20000, scoped, tag = 'scratch operand']
  %s0 = inlined_call_operand.hbm [shape: f32[4,128,128], index: 0, kind: input, shape index: {}]
  %s1 = inlined_call_operand.vmem [shape: f32[4,1,128], index: 1, kind: input, shape index: {}]
  %s2 = inlined_call_operand.vmem [shape: f32[2,1,128], index: 2, kind: input, shape index: {}]
  %s3 = inlined_call_operand.vmem [shape: f32[2,1,128], index: 3, kind: input, shape index: {}]
  %s4 = inlined_call_operand.hbm [shape: bf16[2,128,384], index: 4, kind: input, shape index: {}]
  %s5 = inlined_call_operand.vmem [shape: f32[2,1,384], index: 5, kind: input, shape index: {}]
  %s6 = inlined_call_operand.hbm [shape: bf16[2,128,128], index: 6, kind: input, shape index: {}]
  %s7 = inlined_call_operand.vmem [shape: f32[2,1,128], index: 7, kind: input, shape index: {}]
  %s8 = inlined_call_operand.vmem [shape: f32[2,1,128], index: 8, kind: input, shape index: {}]
  %s9 = inlined_call_operand.vmem [shape: f32[2,1,128], index: 9, kind: input, shape index: {}]
  %s10 = inlined_call_operand.hbm [shape: bf16[2,128,256], index: 10, kind: input, shape index: {}]
  %s11 = inlined_call_operand.vmem [shape: f32[2,1,256], index: 11, kind: input, shape index: {}]
  %s12 = inlined_call_operand.hbm [shape: bf16[2,256,128], index: 12, kind: input, shape index: {}]
  %s13 = inlined_call_operand.hbm [shape: f32[2,1,128], index: 13, kind: input, shape index: {}]
  %s14 = inlined_call_operand.vmem [shape: f32[1,128], index: 14, kind: input, shape index: {}]
  %s15 = inlined_call_operand.vmem [shape: f32[1,128], index: 15, kind: input, shape index: {}]
  %s16 = inlined_call_operand.hbm [shape: f32[4,128,128], index: 16, kind: output, shape index: {}]
  %s17 = sld [smem:[#allocation0]]
  $region129: #{transformer_encoder.1} parent=0
    _
  %s19 = ssub.s32 1, %s17
  %s20 = scalar_select 0, %s19, %s17
  $region1: #{transformer_encoder.1} parent=0
    #allocation3 [shape = 'u8[262144]{0}', space=vmem, size = 0x40000, scoped, tag = 'input window, operand 0']
    #allocation4 [shape = 's32[2]{0}', space=sflag, size = 0x8, scoped, tag = 'scoped memory for transformer_encoder.1']
    #allocation5 [shape = 's32[2]{0}', space=sflag, size = 0x8, scoped, tag = 'scoped memory for transformer_encoder.1']
    #allocation6 [shape = 'u8[196608]{0}', space=vmem, size = 0x30000, scoped, tag = 'input window, operand 4']
    #allocation7 [shape = 's32[2]{0}', space=sflag, size = 0x8, scoped, tag = 'scoped memory for transformer_encoder.1']
    #allocation8 [shape = 'u8[65536]{0}', space=vmem, size = 0x10000, scoped, tag = 'input window, operand 6']
    #allocation9 [shape = 'u8[131072]{0}', space=vmem, size = 0x20000, scoped, tag = 'input window, operand 10']
    #allocation10 [shape = 's32[2]{0}', space=sflag, size = 0x8, scoped, tag = 'scoped memory for transformer_encoder.1']
    #allocation11 [shape = 'u8[131072]{0}', space=vmem, size = 0x20000, scoped, tag = 'input window, operand 12']
    #allocation12 [shape = 'u8[1024]{0}', space=vmem, size = 0x400, scoped, tag = 'input window, operand 13']
    #allocation13 [shape = 's32[2]{0}', space=sflag, size = 0x8, scoped, tag = 'scoped memory for transformer_encoder.1']
    #allocation14 [shape = 'u8[262144]{0}', space=vmem, size = 0x40000, scoped, tag = 'output window, operand 0']
    %21 = vsyncpa [#allocation4], 0
    %s22 = scalar_lea.sflag [#allocation4], 1
    %23 = vsyncpa %s22, 0
    %24 = vsyncpa [#allocation7], 0
    %s25 = scalar_lea.sflag [#allocation7], 1
    %26 = vsyncpa %s25, 0
    %27 = vsyncpa [#allocation10], 0
    %s28 = scalar_lea.sflag [#allocation10], 1
    %29 = vsyncpa %s28, 0
    %30 = vsyncpa [#allocation13], 0
    %s31 = scalar_lea.sflag [#allocation13], 1
    %32 = vsyncpa %s31, 0
    %33 = vsyncpa [#allocation5], 0
    %s34 = scalar_lea.sflag [#allocation5], 1
    %35 = vsyncpa %s34, 0
    loop: start=0, step=1, limit=6
    $region2: #{transformer_encoder.1} parent=1 // loop_pre_header
      _
    $region3: #{transformer_encoder.1} parent=1 // loop_header
      %s37 = sphi 0, %s41
      %p38 = scmp.ge.s32.totalorder %s37, 6
      %s44 = sphi 0, %s56
      %s45 = sphi 0, %s52
      %s46 = sphi 0, %s44
      %s47 = sphi 0, %s45
      %s48 = sphi 0, %s46
      %s49 = sphi 0, %s47
      %s59 = sphi 0, %s61
      %s62 = sphi 0, %s59
      %s63 = sphi 0, %s62
      %s79 = sphi 0, %s63
      %s85 = sphi 0, %s87
      %s88 = sphi 0, %s85
      %s89 = sphi 0, %s88
      %s105 = sphi 0, %s89
      %s111 = sphi 0, %s113
      %s114 = sphi 0, %s111
      %s115 = sphi 0, %s114
      %s131 = sphi 0, %s115
      %s137 = sphi 0, %s139
      %s140 = sphi 0, %s137
      %s141 = sphi 0, %s140
      %s157 = sphi 0, %s141
      %s163 = sphi 0, %s165
      %s166 = sphi 0, %s163
      %s167 = sphi 0, %s166
      %s183 = sphi 0, %s167
      %s189 = sphi 0, %s191
      %s192 = sphi 0, %s189
      %s193 = sphi 0, %s192
      %s209 = sphi 0, %s193
      %s215 = sphi 0, %s217
      %s218 = sphi 0, %s215
      %s219 = sphi 0, %s218
      %s235 = sphi 0, %s219
      %s241 = sphi 0, %s243
      %s244 = sphi 0, %s241
      %s245 = sphi 0, %s244
      %s261 = sphi 0, %s245
      %s267 = sphi 0, %s269
      %s270 = sphi 0, %s267
      %s271 = sphi 0, %s270
      %s287 = sphi 0, %s271
      %s293 = sphi 0, %s295
      %s296 = sphi 0, %s293
      %s297 = sphi 0, %s296
      %s313 = sphi 0, %s297
      %s319 = sphi 0, %s321
      %s322 = sphi 0, %s319
      %s323 = sphi 0, %s322
      %s339 = sphi 0, %s323
      %s345 = sphi 0, %s347
      %s348 = sphi 0, %s345
      %s349 = sphi 0, %s348
      %s365 = sphi 0, %s349
      %s371 = sphi 0, %s373
      %s374 = sphi 0, %s371
      %s375 = sphi 0, %s374
      %s391 = sphi 0, %s375
      %s397 = sphi 0, %s399
      %s400 = sphi 0, %s397
      %s401 = sphi 0, %s400
      %s417 = sphi 0, %s401
      %s421 = sphi 0, %s421
      %s423 = sphi 0, %s421
      %s424 = sphi 0, %s423
      %s438 = sphi 0, %s424
      %s442 = sphi 0, %s442
      %s444 = sphi 0, %s442
      %s445 = sphi 0, %s444
      %s459 = sphi 0, %s445
      %s465 = sphi 0, %s467
      %s468 = sphi 0, %s465
      %s469 = sphi 0, %s468
      %s485 = sphi 0, %s469
    $region4: #{transformer_encoder.1} parent=1 // loop_header_branch
      %40 = sbr.rel (%p38) target = $region8
    $region5: #{transformer_encoder.1} parent=1 // loop_body
      %s42 = ssub.s32 %s37, 1
      %s43 = ssub.s32 %s37, 2
      %s50 = sadd.s32 1, %s45
      %p51 = scmp.ge.s32.totalorder %s50, 2
      %s52 = scalar_select %p51, 0, %s50
      %s53 = sadd.s32 1, %s44
      %s54 = scalar_select %p51, %s53, %s44
      %p55 = scmp.ge.s32.totalorder %s54, 2
      %s56 = scalar_select %p55, 0, %s54
      %s57 = ssub.s32 %s44, %s56
      %p58 = scmp.eq.s32.totalorder %s57, 0
      %s60 = sadd.s32 %s59, 1
      %s61 = scalar_select %p58, %s59, %s60
      %p64 = pneg %p58
      %p65 = scmp.eq.s32.totalorder %s37, 3
      %p66 = por %p64, %p65
      %p67 = scmp.ne.s32.totalorder %s59, %s62
      %p68 = scmp.eq.s32.totalorder %s37, 0
      %p69 = por %p67, %p68
      %p70 = scmp.ne.s32.totalorder %s59, %s62
      %p71 = scmp.eq.s32.totalorder %s42, 3
      %p72 = por %p70, %p71
      %p73 = scmp.ne.s32.totalorder %s62, %s63
      %p74 = scmp.eq.s32.totalorder %s42, 0
      %p75 = por %p73, %p74
      %p76 = scmp.ne.s32.totalorder %s62, %s63
      %p77 = scmp.eq.s32.totalorder %s43, 3
      %p78 = por %p76, %p77
      %p80 = scmp.ne.s32.totalorder %s63, %s79
      %p81 = scmp.eq.s32.totalorder %s43, 0
      %p82 = por %p80, %p81
      %s83 = ssub.s32 %s44, %s56
      %p84 = scmp.eq.s32.totalorder %s83, 0
      %s86 = sadd.s32 %s85, 1
      %s87 = scalar_select %p84, %s85, %s86
      %p90 = pneg %p84
      %p91 = scmp.eq.s32.totalorder %s37, 3
      %p92 = por %p90, %p91
      %p93 = scmp.ne.s32.totalorder %s85, %s88
      %p94 = scmp.eq.s32.totalorder %s37, 0
      %p95 = por %p93, %p94
      %p96 = scmp.ne.s32.totalorder %s85, %s88
      %p97 = scmp.eq.s32.totalorder %s42, 3
      %p98 = por %p96, %p97
      %p99 = scmp.ne.s32.totalorder %s88, %s89
      %p100 = scmp.eq.s32.totalorder %s42, 0
      %p101 = por %p99, %p100
      %p102 = scmp.ne.s32.totalorder %s88, %s89
      %p103 = scmp.eq.s32.totalorder %s43, 3
      %p104 = por %p102, %p103
      %p106 = scmp.ne.s32.totalorder %s89, %s105
      %p107 = scmp.eq.s32.totalorder %s43, 0
      %p108 = por %p106, %p107
      %s109 = ssub.s32 %s45, %s52
      %p110 = scmp.eq.s32.totalorder %s109, 0
      %s112 = sadd.s32 %s111, 1
      %s113 = scalar_select %p110, %s111, %s112
      %p116 = pneg %p110
      %p117 = scmp.eq.s32.totalorder %s37, 3
      %p118 = por %p116, %p117
      %p119 = scmp.ne.s32.totalorder %s111, %s114
      %p120 = scmp.eq.s32.totalorder %s37, 0
      %p121 = por %p119, %p120
      %p122 = scmp.ne.s32.totalorder %s111, %s114
      %p123 = scmp.eq.s32.totalorder %s42, 3
      %p124 = por %p122, %p123
      %p125 = scmp.ne.s32.totalorder %s114, %s115
      %p126 = scmp.eq.s32.totalorder %s42, 0
      %p127 = por %p125, %p126
      %p128 = scmp.ne.s32.totalorder %s114, %s115
      %p129 = scmp.eq.s32.totalorder %s43, 3
      %p130 = por %p128, %p129
      %p132 = scmp.ne.s32.totalorder %s115, %s131
      %p133 = scmp.eq.s32.totalorder %s43, 0
      %p134 = por %p132, %p133
      %s135 = ssub.s32 %s45, %s52
      %p136 = scmp.eq.s32.totalorder %s135, 0
      %s138 = sadd.s32 %s137, 1
      %s139 = scalar_select %p136, %s137, %s138
      %p142 = pneg %p136
      %p143 = scmp.eq.s32.totalorder %s37, 3
      %p144 = por %p142, %p143
      %p145 = scmp.ne.s32.totalorder %s137, %s140
      %p146 = scmp.eq.s32.totalorder %s37, 0
      %p147 = por %p145, %p146
      %p148 = scmp.ne.s32.totalorder %s137, %s140
      %p149 = scmp.eq.s32.totalorder %s42, 3
      %p150 = por %p148, %p149
      %p151 = scmp.ne.s32.totalorder %s140, %s141
      %p152 = scmp.eq.s32.totalorder %s42, 0
      %p153 = por %p151, %p152
      %p154 = scmp.ne.s32.totalorder %s140, %s141
      %p155 = scmp.eq.s32.totalorder %s43, 3
      %p156 = por %p154, %p155
      %p158 = scmp.ne.s32.totalorder %s141, %s157
      %p159 = scmp.eq.s32.totalorder %s43, 0
      %p160 = por %p158, %p159
      %s161 = ssub.s32 %s45, %s52
      %p162 = scmp.eq.s32.totalorder %s161, 0
      %s164 = sadd.s32 %s163, 1
      %s165 = scalar_select %p162, %s163, %s164
      %p168 = pneg %p162
      %p169 = scmp.eq.s32.totalorder %s37, 3
      %p170 = por %p168, %p169
      %p171 = scmp.ne.s32.totalorder %s163, %s166
      %p172 = scmp.eq.s32.totalorder %s37, 0
      %p173 = por %p171, %p172
      %p174 = scmp.ne.s32.totalorder %s163, %s166
      %p175 = scmp.eq.s32.totalorder %s42, 3
      %p176 = por %p174, %p175
      %p177 = scmp.ne.s32.totalorder %s166, %s167
      %p178 = scmp.eq.s32.totalorder %s42, 0
      %p179 = por %p177, %p178
      %p180 = scmp.ne.s32.totalorder %s166, %s167
      %p181 = scmp.eq.s32.totalorder %s43, 3
      %p182 = por %p180, %p181
      %p184 = scmp.ne.s32.totalorder %s167, %s183
      %p185 = scmp.eq.s32.totalorder %s43, 0
      %p186 = por %p184, %p185
      %s187 = ssub.s32 %s45, %s52
      %p188 = scmp.eq.s32.totalorder %s187, 0
      %s190 = sadd.s32 %s189, 1
      %s191 = scalar_select %p188, %s189, %s190
      %p194 = pneg %p188
      %p195 = scmp.eq.s32.totalorder %s37, 3
      %p196 = por %p194, %p195
      %p197 = scmp.ne.s32.totalorder %s189, %s192
      %p198 = scmp.eq.s32.totalorder %s37, 0
      %p199 = por %p197, %p198
      %p200 = scmp.ne.s32.totalorder %s189, %s192
      %p201 = scmp.eq.s32.totalorder %s42, 3
      %p202 = por %p200, %p201
      %p203 = scmp.ne.s32.totalorder %s192, %s193
      %p204 = scmp.eq.s32.totalorder %s42, 0
      %p205 = por %p203, %p204
      %p206 = scmp.ne.s32.totalorder %s192, %s193
      %p207 = scmp.eq.s32.totalorder %s43, 3
      %p208 = por %p206, %p207
      %p210 = scmp.ne.s32.totalorder %s193, %s209
      %p211 = scmp.eq.s32.totalorder %s43, 0
      %p212 = por %p210, %p211
      %s213 = ssub.s32 %s45, %s52
      %p214 = scmp.eq.s32.totalorder %s213, 0
      %s216 = sadd.s32 %s215, 1
      %s217 = scalar_select %p214, %s215, %s216
      %p220 = pneg %p214
      %p221 = scmp.eq.s32.totalorder %s37, 3
      %p222 = por %p220, %p221
      %p223 = scmp.ne.s32.totalorder %s215, %s218
      %p224 = scmp.eq.s32.totalorder %s37, 0
      %p225 = por %p223, %p224
      %p226 = scmp.ne.s32.totalorder %s215, %s218
      %p227 = scmp.eq.s32.totalorder %s42, 3
      %p228 = por %p226, %p227
      %p229 = scmp.ne.s32.totalorder %s218, %s219
      %p230 = scmp.eq.s32.totalorder %s42, 0
      %p231 = por %p229, %p230
      %p232 = scmp.ne.s32.totalorder %s218, %s219
      %p233 = scmp.eq.s32.totalorder %s43, 3
      %p234 = por %p232, %p233
      %p236 = scmp.ne.s32.totalorder %s219, %s235
      %p237 = scmp.eq.s32.totalorder %s43, 0
      %p238 = por %p236, %p237
      %s239 = ssub.s32 %s45, %s52
      %p240 = scmp.eq.s32.totalorder %s239, 0
      %s242 = sadd.s32 %s241, 1
      %s243 = scalar_select %p240, %s241, %s242
      %p246 = pneg %p240
      %p247 = scmp.eq.s32.totalorder %s37, 3
      %p248 = por %p246, %p247
      %p249 = scmp.ne.s32.totalorder %s241, %s244
      %p250 = scmp.eq.s32.totalorder %s37, 0
      %p251 = por %p249, %p250
      %p252 = scmp.ne.s32.totalorder %s241, %s244
      %p253 = scmp.eq.s32.totalorder %s42, 3
      %p254 = por %p252, %p253
      %p255 = scmp.ne.s32.totalorder %s244, %s245
      %p256 = scmp.eq.s32.totalorder %s42, 0
      %p257 = por %p255, %p256
      %p258 = scmp.ne.s32.totalorder %s244, %s245
      %p259 = scmp.eq.s32.totalorder %s43, 3
      %p260 = por %p258, %p259
      %p262 = scmp.ne.s32.totalorder %s245, %s261
      %p263 = scmp.eq.s32.totalorder %s43, 0
      %p264 = por %p262, %p263
      %s265 = ssub.s32 %s45, %s52
      %p266 = scmp.eq.s32.totalorder %s265, 0
      %s268 = sadd.s32 %s267, 1
      %s269 = scalar_select %p266, %s267, %s268
      %p272 = pneg %p266
      %p273 = scmp.eq.s32.totalorder %s37, 3
      %p274 = por %p272, %p273
      %p275 = scmp.ne.s32.totalorder %s267, %s270
      %p276 = scmp.eq.s32.totalorder %s37, 0
      %p277 = por %p275, %p276
      %p278 = scmp.ne.s32.totalorder %s267, %s270
      %p279 = scmp.eq.s32.totalorder %s42, 3
      %p280 = por %p278, %p279
      %p281 = scmp.ne.s32.totalorder %s270, %s271
      %p282 = scmp.eq.s32.totalorder %s42, 0
      %p283 = por %p281, %p282
      %p284 = scmp.ne.s32.totalorder %s270, %s271
      %p285 = scmp.eq.s32.totalorder %s43, 3
      %p286 = por %p284, %p285
      %p288 = scmp.ne.s32.totalorder %s271, %s287
      %p289 = scmp.eq.s32.totalorder %s43, 0
      %p290 = por %p288, %p289
      %s291 = ssub.s32 %s45, %s52
      %p292 = scmp.eq.s32.totalorder %s291, 0
      %s294 = sadd.s32 %s293, 1
      %s295 = scalar_select %p292, %s293, %s294
      %p298 = pneg %p292
      %p299 = scmp.eq.s32.totalorder %s37, 3
      %p300 = por %p298, %p299
      %p301 = scmp.ne.s32.totalorder %s293, %s296
      %p302 = scmp.eq.s32.totalorder %s37, 0
      %p303 = por %p301, %p302
      %p304 = scmp.ne.s32.totalorder %s293, %s296
      %p305 = scmp.eq.s32.totalorder %s42, 3
      %p306 = por %p304, %p305
      %p307 = scmp.ne.s32.totalorder %s296, %s297
      %p308 = scmp.eq.s32.totalorder %s42, 0
      %p309 = por %p307, %p308
      %p310 = scmp.ne.s32.totalorder %s296, %s297
      %p311 = scmp.eq.s32.totalorder %s43, 3
      %p312 = por %p310, %p311
      %p314 = scmp.ne.s32.totalorder %s297, %s313
      %p315 = scmp.eq.s32.totalorder %s43, 0
      %p316 = por %p314, %p315
      %s317 = ssub.s32 %s45, %s52
      %p318 = scmp.eq.s32.totalorder %s317, 0
      %s320 = sadd.s32 %s319, 1
      %s321 = scalar_select %p318, %s319, %s320
      %p324 = pneg %p318
      %p325 = scmp.eq.s32.totalorder %s37, 3
      %p326 = por %p324, %p325
      %p327 = scmp.ne.s32.totalorder %s319, %s322
      %p328 = scmp.eq.s32.totalorder %s37, 0
      %p329 = por %p327, %p328
      %p330 = scmp.ne.s32.totalorder %s319, %s322
      %p331 = scmp.eq.s32.totalorder %s42, 3
      %p332 = por %p330, %p331
      %p333 = scmp.ne.s32.totalorder %s322, %s323
      %p334 = scmp.eq.s32.totalorder %s42, 0
      %p335 = por %p333, %p334
      %p336 = scmp.ne.s32.totalorder %s322, %s323
      %p337 = scmp.eq.s32.totalorder %s43, 3
      %p338 = por %p336, %p337
      %p340 = scmp.ne.s32.totalorder %s323, %s339
      %p341 = scmp.eq.s32.totalorder %s43, 0
      %p342 = por %p340, %p341
      %s343 = ssub.s32 %s45, %s52
      %p344 = scmp.eq.s32.totalorder %s343, 0
      %s346 = sadd.s32 %s345, 1
      %s347 = scalar_select %p344, %s345, %s346
      %p350 = pneg %p344
      %p351 = scmp.eq.s32.totalorder %s37, 3
      %p352 = por %p350, %p351
      %p353 = scmp.ne.s32.totalorder %s345, %s348
      %p354 = scmp.eq.s32.totalorder %s37, 0
      %p355 = por %p353, %p354
      %p356 = scmp.ne.s32.totalorder %s345, %s348
      %p357 = scmp.eq.s32.totalorder %s42, 3
      %p358 = por %p356, %p357
      %p359 = scmp.ne.s32.totalorder %s348, %s349
      %p360 = scmp.eq.s32.totalorder %s42, 0
      %p361 = por %p359, %p360
      %p362 = scmp.ne.s32.totalorder %s348, %s349
      %p363 = scmp.eq.s32.totalorder %s43, 3
      %p364 = por %p362, %p363
      %p366 = scmp.ne.s32.totalorder %s349, %s365
      %p367 = scmp.eq.s32.totalorder %s43, 0
      %p368 = por %p366, %p367
      %s369 = ssub.s32 %s45, %s52
      %p370 = scmp.eq.s32.totalorder %s369, 0
      %s372 = sadd.s32 %s371, 1
      %s373 = scalar_select %p370, %s371, %s372
      %p376 = pneg %p370
      %p377 = scmp.eq.s32.totalorder %s37, 3
      %p378 = por %p376, %p377
      %p379 = scmp.ne.s32.totalorder %s371, %s374
      %p380 = scmp.eq.s32.totalorder %s37, 0
      %p381 = por %p379, %p380
      %p382 = scmp.ne.s32.totalorder %s371, %s374
      %p383 = scmp.eq.s32.totalorder %s42, 3
      %p384 = por %p382, %p383
      %p385 = scmp.ne.s32.totalorder %s374, %s375
      %p386 = scmp.eq.s32.totalorder %s42, 0
      %p387 = por %p385, %p386
      %p388 = scmp.ne.s32.totalorder %s374, %s375
      %p389 = scmp.eq.s32.totalorder %s43, 3
      %p390 = por %p388, %p389
      %p392 = scmp.ne.s32.totalorder %s375, %s391
      %p393 = scmp.eq.s32.totalorder %s43, 0
      %p394 = por %p392, %p393
      %s395 = ssub.s32 %s45, %s52
      %p396 = scmp.eq.s32.totalorder %s395, 0
      %s398 = sadd.s32 %s397, 1
      %s399 = scalar_select %p396, %s397, %s398
      %p402 = pneg %p396
      %p403 = scmp.eq.s32.totalorder %s37, 3
      %p404 = por %p402, %p403
      %p405 = scmp.ne.s32.totalorder %s397, %s400
      %p406 = scmp.eq.s32.totalorder %s37, 0
      %p407 = por %p405, %p406
      %p408 = scmp.ne.s32.totalorder %s397, %s400
      %p409 = scmp.eq.s32.totalorder %s42, 3
      %p410 = por %p408, %p409
      %p411 = scmp.ne.s32.totalorder %s400, %s401
      %p412 = scmp.eq.s32.totalorder %s42, 0
      %p413 = por %p411, %p412
      %p414 = scmp.ne.s32.totalorder %s400, %s401
      %p415 = scmp.eq.s32.totalorder %s43, 3
      %p416 = por %p414, %p415
      %p418 = scmp.ne.s32.totalorder %s401, %s417
      %p419 = scmp.eq.s32.totalorder %s43, 0
      %p420 = por %p418, %p419
      %s422 = sadd.s32 %s421, 1
      %p425 = scmp.eq.s32.totalorder %s37, 3
      %p426 = scmp.ne.s32.totalorder %s421, %s423
      %p427 = scmp.eq.s32.totalorder %s37, 0
      %p428 = por %p426, %p427
      %p429 = scmp.ne.s32.totalorder %s421, %s423
      %p430 = scmp.eq.s32.totalorder %s42, 3
      %p431 = por %p429, %p430
      %p432 = scmp.ne.s32.totalorder %s423, %s424
      %p433 = scmp.eq.s32.totalorder %s42, 0
      %p434 = por %p432, %p433
      %p435 = scmp.ne.s32.totalorder %s423, %s424
      %p436 = scmp.eq.s32.totalorder %s43, 3
      %p437 = por %p435, %p436
      %p439 = scmp.ne.s32.totalorder %s424, %s438
      %p440 = scmp.eq.s32.totalorder %s43, 0
      %p441 = por %p439, %p440
      %s443 = sadd.s32 %s442, 1
      %p446 = scmp.eq.s32.totalorder %s37, 3
      %p447 = scmp.ne.s32.totalorder %s442, %s444
      %p448 = scmp.eq.s32.totalorder %s37, 0
      %p449 = por %p447, %p448
      %p450 = scmp.ne.s32.totalorder %s442, %s444
      %p451 = scmp.eq.s32.totalorder %s42, 3
      %p452 = por %p450, %p451
      %p453 = scmp.ne.s32.totalorder %s444, %s445
      %p454 = scmp.eq.s32.totalorder %s42, 0
      %p455 = por %p453, %p454
      %p456 = scmp.ne.s32.totalorder %s444, %s445
      %p457 = scmp.eq.s32.totalorder %s43, 3
      %p458 = por %p456, %p457
      %p460 = scmp.ne.s32.totalorder %s445, %s459
      %p461 = scmp.eq.s32.totalorder %s43, 0
      %p462 = por %p460, %p461
      %s463 = ssub.s32 %s44, %s56
      %p464 = scmp.eq.s32.totalorder %s463, 0
      %s466 = sadd.s32 %s465, 1
      %s467 = scalar_select %p464, %s465, %s466
      %p470 = pneg %p464
      %p471 = scmp.eq.s32.totalorder %s37, 3
      %p472 = por %p470, %p471
      %p473 = scmp.ne.s32.totalorder %s465, %s468
      %p474 = scmp.eq.s32.totalorder %s37, 0
      %p475 = por %p473, %p474
      %p476 = scmp.ne.s32.totalorder %s465, %s468
      %p477 = scmp.eq.s32.totalorder %s42, 3
      %p478 = por %p476, %p477
      %p479 = scmp.ne.s32.totalorder %s468, %s469
      %p480 = scmp.eq.s32.totalorder %s42, 0
      %p481 = por %p479, %p480
      %p482 = scmp.ne.s32.totalorder %s468, %s469
      %p483 = scmp.eq.s32.totalorder %s43, 3
      %p484 = por %p482, %p483
      %p486 = scmp.ne.s32.totalorder %s469, %s485
      %p487 = scmp.eq.s32.totalorder %s43, 0
      %p488 = por %p486, %p487
      %p489 = scmp.le.s32.totalorder 1, %s37
      %p490 = scmp.lt.s32.totalorder %s37, 5
      %p491 = pnand %p489, %p490
      %p492 = pneg %p491
      // Predicated region
      $region9: #{transformer_encoder.1} parent=5 // pred_check
        _
      $region10: #{transformer_encoder.1} parent=5 // pred_check_branch
        %494 = sbr.rel (%p491) target = $region12
      $region11: #{transformer_encoder.1} parent=5 // pred_region
        %s495 = ssub.s32 %s37, 1
        // Predicated region
        $region13: #{transformer_encoder.1} parent=11 // pred_check
          %p496 = pneg %p434
        $region14: #{transformer_encoder.1} parent=11 // pred_check_branch
          %498 = sbr.rel (%p496) target = $region16
        $region15: #{transformer_encoder.1} parent=11 // pred_region
          _
        $region16: #{transformer_encoder.1} parent=11 // pred_fallthru
          _
        // Predicated region
        $region17: #{transformer_encoder.1} parent=11 // pred_check
          %p499 = pneg %p455
        $region18: #{transformer_encoder.1} parent=11 // pred_check_branch
          %501 = sbr.rel (%p499) target = $region20
        $region19: #{transformer_encoder.1} parent=11 // pred_region
          _
        $region20: #{transformer_encoder.1} parent=11 // pred_fallthru
          _
      $region12: #{transformer_encoder.1} parent=5 // pred_fallthru
        _
      %p502 = scmp.lt.s32.totalorder %s37, 4
      // Predicated region
      $region21: #{transformer_encoder.1} parent=5 // pred_check
        %p503 = pneg %p502
      $region22: #{transformer_encoder.1} parent=5 // pred_check_branch
        %505 = sbr.rel (%p503) target = $region24
      $region23: #{transformer_encoder.1} parent=5 // pred_region
        // Predicated region
        $region25: #{transformer_encoder.1} parent=23 // pred_check
          %p506 = pneg %p69
        $region26: #{transformer_encoder.1} parent=23 // pred_check_branch
          %508 = sbr.rel (%p506) target = $region28
        $region27: #{transformer_encoder.1} parent=23 // pred_region
          %s509 = sand.u32 %s59, 1
          %s510 = scalar_lea.sflag [#allocation4], %s509
          %s511 = sand.u32 %s59, 1
          %s512 = smul.addr %s511, 256
          %s513 = scalar_lea.vmem [#allocation3], %s512
          %s514 = smul.u32 2, %s44
          %s516 = ssub.s32 4096, 4096
          %517 = vsyncadd %s510, %s516
          %s518 = smul.addr %s514, 16
          %s519 = smul.addr %s518, 128
          %s520 = scalar_lea.hbm %s0, %s519
          %s521 = sshll.u32 %s513, 4
          %s522 = int_to_ptr.vmem [resolvable:$true] %s521
          %527 = dma.hbm_to_vmem [thread:$0]  %s520, 4096, %s522, %s510, 128, 128, 8
        $region28: #{transformer_encoder.1} parent=23 // pred_fallthru
          _
        // Predicated region
        $region29: #{transformer_encoder.1} parent=23 // pred_check
          %p528 = pneg %p95
        $region30: #{transformer_encoder.1} parent=23 // pred_check_branch
          %530 = sbr.rel (%p528) target = $region32
        $region31: #{transformer_encoder.1} parent=23 // pred_region
          %s531 = smul.u32 2, %s44
          %p532 = scmp.lt.s32.totalorder %s531, 3
          %s533 = scalar_select %p532, %s531, 3
          %s534 = scalar_lea.vmem %s1, %s533
          %s535 = smul.u32 2, %s44
        $region32: #{transformer_encoder.1} parent=23 // pred_fallthru
          _
        // Predicated region
        $region33: #{transformer_encoder.1} parent=23 // pred_check
          %p536 = pneg %p121
        $region34: #{transformer_encoder.1} parent=23 // pred_check_branch
          %538 = sbr.rel (%p536) target = $region36
        $region35: #{transformer_encoder.1} parent=23 // pred_region
          %p539 = scmp.lt.s32.totalorder %s45, 1
          %s540 = scalar_select %p539, %s45, 1
          %s541 = scalar_lea.vmem %s2, %s540
        $region36: #{transformer_encoder.1} parent=23 // pred_fallthru
          _
        // Predicated region
        $region37: #{transformer_encoder.1} parent=23 // pred_check
          %p542 = pneg %p147
        $region38: #{transformer_encoder.1} parent=23 // pred_check_branch
          %544 = sbr.rel (%p542) target = $region40
        $region39: #{transformer_encoder.1} parent=23 // pred_region
          %p545 = scmp.lt.s32.totalorder %s45, 1
          %s546 = scalar_select %p545, %s45, 1
          %s547 = scalar_lea.vmem %s3, %s546
        $region40: #{transformer_encoder.1} parent=23 // pred_fallthru
          _
        // Predicated region
        $region41: #{transformer_encoder.1} parent=23 // pred_check
          %p548 = pneg %p173
        $region42: #{transformer_encoder.1} parent=23 // pred_check_branch
          %550 = sbr.rel (%p548) target = $region44
        $region43: #{transformer_encoder.1} parent=23 // pred_region
          %s551 = sand.u32 %s37, 1
          %s552 = scalar_lea.sflag [#allocation7], %s551
          %s553 = sand.u32 %s163, 1
          %s554 = smul.addr %s553, 192
          %s555 = scalar_lea.vmem [#allocation6], %s554
          %s557 = ssub.s32 3072, 3072
          %558 = vsyncadd %s552, %s557
          %s559 = smul.addr %s45, 48
          %s560 = smul.addr %s559, 64
          %s561 = scalar_lea.hbm %s4, %s560
          %s562 = sshll.u32 %s555, 4
          %s563 = int_to_ptr.vmem [resolvable:$true] %s562
          %568 = dma.hbm_to_vmem [thread:$0]  %s561, 3072, %s563, %s552, 192, 192, 12
        $region44: #{transformer_encoder.1} parent=23 // pred_fallthru
          _
        // Predicated region
        $region45: #{transformer_encoder.1} parent=23 // pred_check
          %p569 = pneg %p199
        $region46: #{transformer_encoder.1} parent=23 // pred_check_branch
          %571 = sbr.rel (%p569) target = $region48
        $region47: #{transformer_encoder.1} parent=23 // pred_region
          %p572 = scmp.lt.s32.totalorder %s45, 1
          %s573 = scalar_select %p572, %s45, 1
          %s574 = smul.addr %s573, 3
          %s575 = scalar_lea.vmem %s5, %s574
        $region48: #{transformer_encoder.1} parent=23 // pred_fallthru
          _
        // Predicated region
        $region49: #{transformer_encoder.1} parent=23 // pred_check
          %p576 = pneg %p225
        $region50: #{transformer_encoder.1} parent=23 // pred_check_branch
          %578 = sbr.rel (%p576) target = $region52
        $region51: #{transformer_encoder.1} parent=23 // pred_region
          %s579 = sand.u32 %s37, 1
          %s580 = scalar_lea.sflag [#allocation7], %s579
          %s581 = sand.u32 %s215, 1
          %s582 = smul.addr %s581, 64
          %s583 = scalar_lea.vmem [#allocation8], %s582
          %s585 = ssub.s32 1024, 1024
          %586 = vsyncadd %s580, %s585
          %s587 = smul.addr %s45, 16
          %s588 = smul.addr %s587, 64
          %s589 = scalar_lea.hbm %s6, %s588
          %s590 = sshll.u32 %s583, 4
          %s591 = int_to_ptr.vmem [resolvable:$true] %s590
          %596 = dma.hbm_to_vmem [thread:$0]  %s589, 1024, %s591, %s580, 64, 64, 4
        $region52: #{transformer_encoder.1} parent=23 // pred_fallthru
          _
        // Predicated region
        $region53: #{transformer_encoder.1} parent=23 // pred_check
          %p597 = pneg %p251
        $region54: #{transformer_encoder.1} parent=23 // pred_check_branch
          %599 = sbr.rel (%p597) target = $region56
        $region55: #{transformer_encoder.1} parent=23 // pred_region
          %p600 = scmp.lt.s32.totalorder %s45, 1
          %s601 = scalar_select %p600, %s45, 1
          %s602 = scalar_lea.vmem %s7, %s601
        $region56: #{transformer_encoder.1} parent=23 // pred_fallthru
          _
        // Predicated region
        $region57: #{transformer_encoder.1} parent=23 // pred_check
          %p603 = pneg %p277
        $region58: #{transformer_encoder.1} parent=23 // pred_check_branch
          %605 = sbr.rel (%p603) target = $region60
        $region59: #{transformer_encoder.1} parent=23 // pred_region
          %p606 = scmp.lt.s32.totalorder %s45, 1
          %s607 = scalar_select %p606, %s45, 1
          %s608 = scalar_lea.vmem %s8, %s607
        $region60: #{transformer_encoder.1} parent=23 // pred_fallthru
          _
        // Predicated region
        $region61: #{transformer_encoder.1} parent=23 // pred_check
          %p609 = pneg %p303
        $region62: #{transformer_encoder.1} parent=23 // pred_check_branch
          %611 = sbr.rel (%p609) target = $region64
        $region63: #{transformer_encoder.1} parent=23 // pred_region
          %p612 = scmp.lt.s32.totalorder %s45, 1
          %s613 = scalar_select %p612, %s45, 1
          %s614 = scalar_lea.vmem %s9, %s613
        $region64: #{transformer_encoder.1} parent=23 // pred_fallthru
          _
        // Predicated region
        $region65: #{transformer_encoder.1} parent=23 // pred_check
          %p615 = pneg %p329
        $region66: #{transformer_encoder.1} parent=23 // pred_check_branch
          %617 = sbr.rel (%p615) target = $region68
        $region67: #{transformer_encoder.1} parent=23 // pred_region
          %s618 = sand.u32 %s37, 1
          %s619 = scalar_lea.sflag [#allocation10], %s618
          %s620 = sand.u32 %s319, 1
          %s621 = smul.addr %s620, 128
          %s622 = scalar_lea.vmem [#allocation9], %s621
          %s624 = ssub.s32 2048, 2048
          %625 = vsyncadd %s619, %s624
          %s626 = smul.addr %s45, 32
          %s627 = smul.addr %s626, 64
          %s628 = scalar_lea.hbm %s10, %s627
          %s629 = sshll.u32 %s622, 4
          %s630 = int_to_ptr.vmem [resolvable:$true] %s629
          %635 = dma.hbm_to_vmem [thread:$0]  %s628, 2048, %s630, %s619, 128, 128, 8
        $region68: #{transformer_encoder.1} parent=23 // pred_fallthru
          _
        // Predicated region
        $region69: #{transformer_encoder.1} parent=23 // pred_check
          %p636 = pneg %p355
        $region70: #{transformer_encoder.1} parent=23 // pred_check_branch
          %638 = sbr.rel (%p636) target = $region72
        $region71: #{transformer_encoder.1} parent=23 // pred_region
          %p639 = scmp.lt.s32.totalorder %s45, 1
          %s640 = scalar_select %p639, %s45, 1
          %s641 = smul.addr %s640, 2
          %s642 = scalar_lea.vmem %s11, %s641
        $region72: #{transformer_encoder.1} parent=23 // pred_fallthru
          _
        // Predicated region
        $region73: #{transformer_encoder.1} parent=23 // pred_check
          %p643 = pneg %p381
        $region74: #{transformer_encoder.1} parent=23 // pred_check_branch
          %645 = sbr.rel (%p643) target = $region76
        $region75: #{transformer_encoder.1} parent=23 // pred_region
          %s646 = sand.u32 %s37, 1
          %s647 = scalar_lea.sflag [#allocation10], %s646
          %s648 = sand.u32 %s371, 1
          %s649 = smul.addr %s648, 128
          %s650 = scalar_lea.vmem [#allocation11], %s649
          %s652 = ssub.s32 2048, 2048
          %653 = vsyncadd %s647, %s652
          %s654 = smul.addr %s45, 32
          %s655 = smul.addr %s654, 64
          %s656 = scalar_lea.hbm %s12, %s655
          %s657 = sshll.u32 %s650, 4
          %s658 = int_to_ptr.vmem [resolvable:$true] %s657
          %663 = dma.hbm_to_vmem [thread:$0]  %s656, 2048, %s658, %s647, 64, 64, 4
        $region76: #{transformer_encoder.1} parent=23 // pred_fallthru
          _
        // Predicated region
        $region77: #{transformer_encoder.1} parent=23 // pred_check
          %p664 = pneg %p407
        $region78: #{transformer_encoder.1} parent=23 // pred_check_branch
          %666 = sbr.rel (%p664) target = $region80
        $region79: #{transformer_encoder.1} parent=23 // pred_region
          %s667 = sand.u32 %s397, 1
          %s668 = scalar_lea.sflag [#allocation13], %s667
          %s669 = sand.u32 %s397, 1
          %s670 = scalar_lea.vmem [#allocation12], %s669
          %s672 = ssub.s32 16, 16
          %673 = vsyncadd %s668, %s672
          %s674 = smul.addr %s45, 16
          %s675 = scalar_lea.hbm %s13, %s674
          %s677 = sshll.u32 %s670, 4
          %s678 = int_to_ptr.vmem [resolvable:$true] %s677
          %680 = dma.hbm_to_vmem [thread:$0]  %s675, 16, %s678, %s668
        $region80: #{transformer_encoder.1} parent=23 // pred_fallthru
          _
      $region24: #{transformer_encoder.1} parent=5 // pred_fallthru
        _
      %p681 = scmp.le.s32.totalorder 1, %s37
      %p682 = scmp.lt.s32.totalorder %s37, 5
      %p683 = pnand %p681, %p682
      %p684 = pneg %p683
      // Predicated region
      $region81: #{transformer_encoder.1} parent=5 // pred_check
        _
      $region82: #{transformer_encoder.1} parent=5 // pred_check_branch
        %686 = sbr.rel (%p683) target = $region84
      $region83: #{transformer_encoder.1} parent=5 // pred_region
        %s687 = ssub.s32 %s37, 1
        %s688 = sand.u32 %s62, 1
        %s689 = scalar_lea.sflag [#allocation4], %s688
        %s690 = sand.u32 %s62, 1
        %s691 = smul.addr %s690, 256
        %s692 = scalar_lea.vmem [#allocation3], %s691
        // Predicated region
        $region85: #{transformer_encoder.1} parent=83 // pred_check
          %p693 = pneg %p75
        $region86: #{transformer_encoder.1} parent=83 // pred_check_branch
          %695 = sbr.rel (%p693) target = $region88
        $region87: #{transformer_encoder.1} parent=83 // pred_region
          %696 = dma.done %s689, 4096
        $region88: #{transformer_encoder.1} parent=83 // pred_fallthru
          _
        %s697 = sand.u32 %s42, 1
        %s698 = scalar_lea.sflag [#allocation7], %s697
        %s699 = sand.u32 %s166, 1
        %s700 = smul.addr %s699, 192
        %s701 = scalar_lea.vmem [#allocation6], %s700
        // Predicated region
        $region89: #{transformer_encoder.1} parent=83 // pred_check
          %p702 = pneg %p179
        $region90: #{transformer_encoder.1} parent=83 // pred_check_branch
          %704 = sbr.rel (%p702) target = $region92
        $region91: #{transformer_encoder.1} parent=83 // pred_region
          %705 = dma.done %s698, 3072
        $region92: #{transformer_encoder.1} parent=83 // pred_fallthru
          _
        %s706 = sand.u32 %s42, 1
        %s707 = scalar_lea.sflag [#allocation7], %s706
        %s708 = sand.u32 %s218, 1
        %s709 = smul.addr %s708, 64
        %s710 = scalar_lea.vmem [#allocation8], %s709
        // Predicated region
        $region93: #{transformer_encoder.1} parent=83 // pred_check
          %p711 = pneg %p231
        $region94: #{transformer_encoder.1} parent=83 // pred_check_branch
          %713 = sbr.rel (%p711) target = $region96
        $region95: #{transformer_encoder.1} parent=83 // pred_region
          %714 = dma.done %s707, 1024
        $region96: #{transformer_encoder.1} parent=83 // pred_fallthru
          _
        %s715 = sand.u32 %s42, 1
        %s716 = scalar_lea.sflag [#allocation10], %s715
        %s717 = sand.u32 %s322, 1
        %s718 = smul.addr %s717, 128
        %s719 = scalar_lea.vmem [#allocation9], %s718
        // Predicated region
        $region97: #{transformer_encoder.1} parent=83 // pred_check
          %p720 = pneg %p335
        $region98: #{transformer_encoder.1} parent=83 // pred_check_branch
          %722 = sbr.rel (%p720) target = $region100
        $region99: #{transformer_encoder.1} parent=83 // pred_region
          %723 = dma.done %s716, 2048
        $region100: #{transformer_encoder.1} parent=83 // pred_fallthru
          _
        %s724 = sand.u32 %s42, 1
        %s725 = scalar_lea.sflag [#allocation10], %s724
        %s726 = sand.u32 %s374, 1
        %s727 = smul.addr %s726, 128
        %s728 = scalar_lea.vmem [#allocation11], %s727
        // Predicated region
        $region101: #{transformer_encoder.1} parent=83 // pred_check
          %p729 = pneg %p387
        $region102: #{transformer_encoder.1} parent=83 // pred_check_branch
          %731 = sbr.rel (%p729) target = $region104
        $region103: #{transformer_encoder.1} parent=83 // pred_region
          %732 = dma.done %s725, 2048
        $region104: #{transformer_encoder.1} parent=83 // pred_fallthru
          _
        %s733 = sand.u32 %s400, 1
        %s734 = scalar_lea.sflag [#allocation13], %s733
        %s735 = sand.u32 %s400, 1
        %s736 = scalar_lea.vmem [#allocation12], %s735
        // Predicated region
        $region105: #{transformer_encoder.1} parent=83 // pred_check
          %p737 = pneg %p413
        $region106: #{transformer_encoder.1} parent=83 // pred_check_branch
          %739 = sbr.rel (%p737) target = $region108
        $region107: #{transformer_encoder.1} parent=83 // pred_region
          %740 = dma.done %s734, 16
        $region108: #{transformer_encoder.1} parent=83 // pred_fallthru
          _
        %s741 = sand.u32 %s62, 1
        %s742 = scalar_lea.sflag [#allocation4], %s741
        %s743 = sand.u32 %s62, 1
        %s744 = smul.addr %s743, 256
        %s745 = scalar_lea.vmem [#allocation3], %s744
        %p746 = pneg %p75
        %p747 = pneg %p72
        %s748 = smul.u32 2, %s46
        %p749 = scmp.lt.s32.totalorder %s748, 3
        %s750 = scalar_select %p749, %s748, 3
        %s751 = scalar_lea.vmem %s1, %s750
        %p752 = pneg %p101
        %p753 = pneg %p98
        %p754 = scmp.lt.s32.totalorder %s47, 1
        %s755 = scalar_select %p754, %s47, 1
        %s756 = scalar_lea.vmem %s2, %s755
        %p757 = pneg %p127
        %p758 = pneg %p124
        %p759 = scmp.lt.s32.totalorder %s47, 1
        %s760 = scalar_select %p759, %s47, 1
        %s761 = scalar_lea.vmem %s3, %s760
        %p762 = pneg %p153
        %p763 = pneg %p150
        %s764 = sand.u32 %s42, 1
        %s765 = scalar_lea.sflag [#allocation7], %s764
        %s766 = sand.u32 %s166, 1
        %s767 = smul.addr %s766, 192
        %s768 = scalar_lea.vmem [#allocation6], %s767
        %p769 = pneg %p179
        %p770 = pneg %p176
        %p771 = scmp.lt.s32.totalorder %s47, 1
        %s772 = scalar_select %p771, %s47, 1
        %s773 = smul.addr %s772, 3
        %s774 = scalar_lea.vmem %s5, %s773
        %p775 = pneg %p205
        %p776 = pneg %p202
        %s777 = sand.u32 %s42, 1
        %s778 = scalar_lea.sflag [#allocation7], %s777
        %s779 = sand.u32 %s218, 1
        %s780 = smul.addr %s779, 64
        %s781 = scalar_lea.vmem [#allocation8], %s780
        %p782 = pneg %p231
        %p783 = pneg %p228
        %p784 = scmp.lt.s32.totalorder %s47, 1
        %s785 = scalar_select %p784, %s47, 1
        %s786 = scalar_lea.vmem %s7, %s785
        %p787 = pneg %p257
        %p788 = pneg %p254
        %p789 = scmp.lt.s32.totalorder %s47, 1
        %s790 = scalar_select %p789, %s47, 1
        %s791 = scalar_lea.vmem %s8, %s790
        %p792 = pneg %p283
        %p793 = pneg %p280
        %p794 = scmp.lt.s32.totalorder %s47, 1
        %s795 = scalar_select %p794, %s47, 1
        %s796 = scalar_lea.vmem %s9, %s795
        %p797 = pneg %p309
        %p798 = pneg %p306
        %s799 = sand.u32 %s42, 1
        %s800 = scalar_lea.sflag [#allocation10], %s799
        %s801 = sand.u32 %s322, 1
        %s802 = smul.addr %s801, 128
        %s803 = scalar_lea.vmem [#allocation9], %s802
        %p804 = pneg %p335
        %p805 = pneg %p332
        %p806 = scmp.lt.s32.totalorder %s47, 1
        %s807 = scalar_select %p806, %s47, 1
        %s808 = smul.addr %s807, 2
        %s809 = scalar_lea.vmem %s11, %s808
        %p810 = pneg %p361
        %p811 = pneg %p358
        %s812 = sand.u32 %s42, 1
        %s813 = scalar_lea.sflag [#allocation10], %s812
        %s814 = sand.u32 %s374, 1
        %s815 = smul.addr %s814, 128
        %s816 = scalar_lea.vmem [#allocation11], %s815
        %p817 = pneg %p387
        %p818 = pneg %p384
        %s819 = sand.u32 %s400, 1
        %s820 = scalar_lea.sflag [#allocation13], %s819
        %s821 = sand.u32 %s400, 1
        %s822 = scalar_lea.vmem [#allocation12], %s821
        %p823 = pneg %p413
        %p824 = pneg %p410
        %p825 = pneg %p434
        %p826 = pneg %p431
        %p827 = pneg %p455
        %p828 = pneg %p452
        %p829 = pneg %p481
        %p830 = pneg %p478
        %s831 = sand.u32 %s468, 1
        %s832 = scalar_lea.sflag [#allocation5], %s831
        %s833 = sand.u32 %s468, 1
        %s834 = smul.addr %s833, 256
        %s835 = scalar_lea.vmem [#allocation14], %s834
        %s836 = smul.u32 2, %s46
        %s837 = smul.u32 2, %s46
        %p838 = scmp.lt.s32.totalorder %s837, 3
        %s839 = scalar_select %p838, %s837, 3
        %s840 = scalar_lea.vmem %s1, %s839
        %s841 = smul.u32 2, %s46
        %p842 = scmp.lt.s32.totalorder %s47, 1
        %s843 = scalar_select %p842, %s47, 1
        %s844 = scalar_lea.vmem %s2, %s843
        %p845 = scmp.lt.s32.totalorder %s47, 1
        %s846 = scalar_select %p845, %s47, 1
        %s847 = scalar_lea.vmem %s3, %s846
        %p848 = scmp.lt.s32.totalorder %s47, 1
        %s849 = scalar_select %p848, %s47, 1
        %s850 = smul.addr %s849, 3
        %s851 = scalar_lea.vmem %s5, %s850
        %p852 = scmp.lt.s32.totalorder %s47, 1
        %s853 = scalar_select %p852, %s47, 1
        %s854 = scalar_lea.vmem %s7, %s853
        %p855 = scmp.lt.s32.totalorder %s47, 1
        %s856 = scalar_select %p855, %s47, 1
        %s857 = scalar_lea.vmem %s8, %s856
        %p858 = scmp.lt.s32.totalorder %s47, 1
        %s859 = scalar_select %p858, %s47, 1
        %s860 = scalar_lea.vmem %s9, %s859
        %p861 = scmp.lt.s32.totalorder %s47, 1
        %s862 = scalar_select %p861, %s47, 1
        %s863 = smul.addr %s862, 2
        %s864 = scalar_lea.vmem %s11, %s863
        %s865 = smul.u32 2, %s46
        %p867 = scmp.eq.s32.totalorder %s47, 0
        // Predicated region
        $region109: #{transformer_encoder.1} parent=83 // pred_check
          %p868 = pneg %p867
        $region110: #{transformer_encoder.1} parent=83 // pred_check_branch
          %870 = sbr.rel (%p868) target = $region112
        $region111: #{transformer_encoder.1} parent=83 // pred_region
          %v871 = vld [vmem:[%s692] sm:$0xff]
          %v872 = vld [vmem:[%s692 + $0x8] sm:$0xff]
          %v873 = vld [vmem:[%s692 + $0x10] sm:$0xff]
          %v874 = vld [vmem:[%s692 + $0x18] sm:$0xff]
          %v875 = vld [vmem:[%s692 + $0x20] sm:$0xff]
          %v876 = vld [vmem:[%s692 + $0x28] sm:$0xff]
          %v877 = vld [vmem:[%s692 + $0x30] sm:$0xff]
          %v878 = vld [vmem:[%s692 + $0x38] sm:$0xff]
          %v879 = vld [vmem:[%s692 + $0x40] sm:$0xff]
          %v880 = vld [vmem:[%s692 + $0x48] sm:$0xff]
          %v881 = vld [vmem:[%s692 + $0x50] sm:$0xff]
          %v882 = vld [vmem:[%s692 + $0x58] sm:$0xff]
          %v883 = vld [vmem:[%s692 + $0x60] sm:$0xff]
          %v884 = vld [vmem:[%s692 + $0x68] sm:$0xff]
          %v885 = vld [vmem:[%s692 + $0x70] sm:$0xff]
          %v886 = vld [vmem:[%s692 + $0x78] sm:$0xff]
          %v887 = vld [vmem:[%s692 + $0x80] sm:$0xff]
          %v888 = vld [vmem:[%s692 + $0x88] sm:$0xff]
          %v889 = vld [vmem:[%s692 + $0x90] sm:$0xff]
          %v890 = vld [vmem:[%s692 + $0x98] sm:$0xff]
          %v891 = vld [vmem:[%s692 + $0xa0] sm:$0xff]
          %v892 = vld [vmem:[%s692 + $0xa8] sm:$0xff]
          %v893 = vld [vmem:[%s692 + $0xb0] sm:$0xff]
          %v894 = vld [vmem:[%s692 + $0xb8] sm:$0xff]
          %v895 = vld [vmem:[%s692 + $0xc0] sm:$0xff]
          %v896 = vld [vmem:[%s692 + $0xc8] sm:$0xff]
          %v897 = vld [vmem:[%s692 + $0xd0] sm:$0xff]
          %v898 = vld [vmem:[%s692 + $0xd8] sm:$0xff]
          %v899 = vld [vmem:[%s692 + $0xe0] sm:$0xff]
          %v900 = vld [vmem:[%s692 + $0xe8] sm:$0xff]
          %v901 = vld [vmem:[%s692 + $0xf0] sm:$0xff]
          %v902 = vld [vmem:[%s692 + $0xf8] sm:$0xff]
          %903 = vst [vmem:[#allocation2] sm:$0xff] %v871
          %904 = vst [vmem:[#allocation2 + $0x8] sm:$0xff] %v872
          %905 = vst [vmem:[#allocation2 + $0x10] sm:$0xff] %v873
          %906 = vst [vmem:[#allocation2 + $0x18] sm:$0xff] %v874
          %907 = vst [vmem:[#allocation2 + $0x20] sm:$0xff] %v875
          %908 = vst [vmem:[#allocation2 + $0x28] sm:$0xff] %v876
          %909 = vst [vmem:[#allocation2 + $0x30] sm:$0xff] %v877
          %910 = vst [vmem:[#allocation2 + $0x38] sm:$0xff] %v878
          %911 = vst [vmem:[#allocation2 + $0x40] sm:$0xff] %v879
          %912 = vst [vmem:[#allocation2 + $0x48] sm:$0xff] %v880
          %913 = vst [vmem:[#allocation2 + $0x50] sm:$0xff] %v881
          %914 = vst [vmem:[#allocation2 + $0x58] sm:$0xff] %v882
          %915 = vst [vmem:[#allocation2 + $0x60] sm:$0xff] %v883
          %916 = vst [vmem:[#allocation2 + $0x68] sm:$0xff] %v884
          %917 = vst [vmem:[#allocation2 + $0x70] sm:$0xff] %v885
          %918 = vst [vmem:[#allocation2 + $0x78] sm:$0xff] %v886
          %919 = vst [vmem:[#allocation2 + $0x80] sm:$0xff] %v887
          %920 = vst [vmem:[#allocation2 + $0x88] sm:$0xff] %v888
          %921 = vst [vmem:[#allocation2 + $0x90] sm:$0xff] %v889
          %922 = vst [vmem:[#allocation2 + $0x98] sm:$0xff] %v890
          %923 = vst [vmem:[#allocation2 + $0xa0] sm:$0xff] %v891
          %924 = vst [vmem:[#allocation2 + $0xa8] sm:$0xff] %v892
          %925 = vst [vmem:[#allocation2 + $0xb0] sm:$0xff] %v893
          %926 = vst [vmem:[#allocation2 + $0xb8] sm:$0xff] %v894
          %927 = vst [vmem:[#allocation2 + $0xc0] sm:$0xff] %v895
          %928 = vst [vmem:[#allocation2 + $0xc8] sm:$0xff] %v896
          %929 = vst [vmem:[#allocation2 + $0xd0] sm:$0xff] %v897
          %930 = vst [vmem:[#allocation2 + $0xd8] sm:$0xff] %v898
          %931 = vst [vmem:[#allocation2 + $0xe0] sm:$0xff] %v899
          %932 = vst [vmem:[#allocation2 + $0xe8] sm:$0xff] %v900
          %933 = vst [vmem:[#allocation2 + $0xf0] sm:$0xff] %v901
          %934 = vst [vmem:[#allocation2 + $0xf8] sm:$0xff] %v902
        $region112: #{transformer_encoder.1} parent=83 // pred_fallthru
          _
        %v935 = vld [vmem:[#allocation2] sm:$0xff]
        %v936 = vld [vmem:[#allocation2 + $0x8] sm:$0xff]
        %v937 = vld [vmem:[#allocation2 + $0x10] sm:$0xff]
        %v938 = vld [vmem:[#allocation2 + $0x18] sm:$0xff]
        %v939 = vld [vmem:[#allocation2 + $0x20] sm:$0xff]
        %v940 = vld [vmem:[#allocation2 + $0x28] sm:$0xff]
        %v941 = vld [vmem:[#allocation2 + $0x30] sm:$0xff]
        %v942 = vld [vmem:[#allocation2 + $0x38] sm:$0xff]
        %v943 = vld [vmem:[#allocation2 + $0x40] sm:$0xff]
        %v944 = vld [vmem:[#allocation2 + $0x48] sm:$0xff]
        %v945 = vld [vmem:[#allocation2 + $0x50] sm:$0xff]
        %v946 = vld [vmem:[#allocation2 + $0x58] sm:$0xff]
        %v947 = vld [vmem:[#allocation2 + $0x60] sm:$0xff]
        %v948 = vld [vmem:[#allocation2 + $0x68] sm:$0xff]
        %v949 = vld [vmem:[#allocation2 + $0x70] sm:$0xff]
        %v950 = vld [vmem:[#allocation2 + $0x78] sm:$0xff]
        %v951 = vld [vmem:[#allocation2 + $0x80] sm:$0xff]
        %v952 = vld [vmem:[#allocation2 + $0x88] sm:$0xff]
        %v953 = vld [vmem:[#allocation2 + $0x90] sm:$0xff]
        %v954 = vld [vmem:[#allocation2 + $0x98] sm:$0xff]
        %v955 = vld [vmem:[#allocation2 + $0xa0] sm:$0xff]
        %v956 = vld [vmem:[#allocation2 + $0xa8] sm:$0xff]
        %v957 = vld [vmem:[#allocation2 + $0xb0] sm:$0xff]
        %v958 = vld [vmem:[#allocation2 + $0xb8] sm:$0xff]
        %v959 = vld [vmem:[#allocation2 + $0xc0] sm:$0xff]
        %v960 = vld [vmem:[#allocation2 + $0xc8] sm:$0xff]
        %v961 = vld [vmem:[#allocation2 + $0xd0] sm:$0xff]
        %v962 = vld [vmem:[#allocation2 + $0xd8] sm:$0xff]
        %v963 = vld [vmem:[#allocation2 + $0xe0] sm:$0xff]
        %v964 = vld [vmem:[#allocation2 + $0xe8] sm:$0xff]
        %v965 = vld [vmem:[#allocation2 + $0xf0] sm:$0xff]
        %v966 = vld [vmem:[#allocation2 + $0xf8] sm:$0xff]
        %v967 = vld [vmem:[%s844] sm:$0x1]
        %v968 = vld [vmem:[%s847] sm:$0x1]
        %969 = vadd.xlane.f32.xlu0 %v935
        %v970 = vpop.xlane.xlu0 %969
        %971 = vadd.xlane.f32.xlu0 %v936
        %v972 = vpop.xlane.xlu0 %971
        %973 = vadd.xlane.f32.xlu0 %v937
        %v974 = vpop.xlane.xlu0 %973
        %975 = vadd.xlane.f32.xlu0 %v938
        %v976 = vpop.xlane.xlu0 %975
        %977 = vadd.xlane.f32.xlu0 %v939
        %v978 = vpop.xlane.xlu0 %977
        %979 = vadd.xlane.f32.xlu0 %v940
        %v980 = vpop.xlane.xlu0 %979
        %981 = vadd.xlane.f32.xlu0 %v941
        %v982 = vpop.xlane.xlu0 %981
        %983 = vadd.xlane.f32.xlu0 %v942
        %v984 = vpop.xlane.xlu0 %983
        %985 = vadd.xlane.f32.xlu0 %v943
        %v986 = vpop.xlane.xlu0 %985
        %987 = vadd.xlane.f32.xlu0 %v944
        %v988 = vpop.xlane.xlu0 %987
        %989 = vadd.xlane.f32.xlu0 %v945
        %v990 = vpop.xlane.xlu0 %989
        %991 = vadd.xlane.f32.xlu0 %v946
        %v992 = vpop.xlane.xlu0 %991
        %993 = vadd.xlane.f32.xlu0 %v947
        %v994 = vpop.xlane.xlu0 %993
        %995 = vadd.xlane.f32.xlu0 %v948
        %v996 = vpop.xlane.xlu0 %995
        %997 = vadd.xlane.f32.xlu0 %v949
        %v998 = vpop.xlane.xlu0 %997
        %999 = vadd.xlane.f32.xlu0 %v950
        %v1000 = vpop.xlane.xlu0 %999
        %1001 = vadd.xlane.f32.xlu0 %v951
        %v1002 = vpop.xlane.xlu0 %1001
        %1003 = vadd.xlane.f32.xlu0 %v952
        %v1004 = vpop.xlane.xlu0 %1003
        %1005 = vadd.xlane.f32.xlu0 %v953
        %v1006 = vpop.xlane.xlu0 %1005
        %1007 = vadd.xlane.f32.xlu0 %v954
        %v1008 = vpop.xlane.xlu0 %1007
        %1009 = vadd.xlane.f32.xlu0 %v955
        %v1010 = vpop.xlane.xlu0 %1009
        %1011 = vadd.xlane.f32.xlu0 %v956
        %v1012 = vpop.xlane.xlu0 %1011
        %1013 = vadd.xlane.f32.xlu0 %v957
        %v1014 = vpop.xlane.xlu0 %1013
        %1015 = vadd.xlane.f32.xlu0 %v958
        %v1016 = vpop.xlane.xlu0 %1015
        %1017 = vadd.xlane.f32.xlu0 %v959
        %v1018 = vpop.xlane.xlu0 %1017
        %1019 = vadd.xlane.f32.xlu0 %v960
        %v1020 = vpop.xlane.xlu0 %1019
        %1021 = vadd.xlane.f32.xlu0 %v961
        %v1022 = vpop.xlane.xlu0 %1021
        %1023 = vadd.xlane.f32.xlu0 %v962
        %v1024 = vpop.xlane.xlu0 %1023
        %1025 = vadd.xlane.f32.xlu0 %v963
        %v1026 = vpop.xlane.xlu0 %1025
        %1027 = vadd.xlane.f32.xlu0 %v964
        %v1028 = vpop.xlane.xlu0 %1027
        %1029 = vadd.xlane.f32.xlu0 %v965
        %v1030 = vpop.xlane.xlu0 %1029
        %1031 = vadd.xlane.f32.xlu0 %v966
        %v1032 = vpop.xlane.xlu0 %1031
        %v1033 = vrcp.pop 128.0
        %v1034 = vmul.f32 %v970, %v1033
        %v1035 = vmul.f32 %v972, %v1033
        %v1036 = vmul.f32 %v974, %v1033
        %v1037 = vmul.f32 %v976, %v1033
        %v1038 = vmul.f32 %v978, %v1033
        %v1039 = vmul.f32 %v980, %v1033
        %v1040 = vmul.f32 %v982, %v1033
        %v1041 = vmul.f32 %v984, %v1033
        %v1042 = vmul.f32 %v986, %v1033
        %v1043 = vmul.f32 %v988, %v1033
        %v1044 = vmul.f32 %v990, %v1033
        %v1045 = vmul.f32 %v992, %v1033
        %v1046 = vmul.f32 %v994, %v1033
        %v1047 = vmul.f32 %v996, %v1033
        %v1048 = vmul.f32 %v998, %v1033
        %v1049 = vmul.f32 %v1000, %v1033
        %v1050 = vmul.f32 %v1002, %v1033
        %v1051 = vmul.f32 %v1004, %v1033
        %v1052 = vmul.f32 %v1006, %v1033
        %v1053 = vmul.f32 %v1008, %v1033
        %v1054 = vmul.f32 %v1010, %v1033
        %v1055 = vmul.f32 %v1012, %v1033
        %v1056 = vmul.f32 %v1014, %v1033
        %v1057 = vmul.f32 %v1016, %v1033
        %v1058 = vmul.f32 %v1018, %v1033
        %v1059 = vmul.f32 %v1020, %v1033
        %v1060 = vmul.f32 %v1022, %v1033
        %v1061 = vmul.f32 %v1024, %v1033
        %v1062 = vmul.f32 %v1026, %v1033
        %v1063 = vmul.f32 %v1028, %v1033
        %v1064 = vmul.f32 %v1030, %v1033
        %v1065 = vmul.f32 %v1032, %v1033
        %v1066 = vsub.f32 %v935, %v1034
        %v1067 = vsub.f32 %v936, %v1035
        %v1068 = vsub.f32 %v937, %v1036
        %v1069 = vsub.f32 %v938, %v1037
        %v1070 = vsub.f32 %v939, %v1038
        %v1071 = vsub.f32 %v940, %v1039
        %v1072 = vsub.f32 %v941, %v1040
        %v1073 = vsub.f32 %v942, %v1041
        %v1074 = vsub.f32 %v943, %v1042
        %v1075 = vsub.f32 %v944, %v1043
        %v1076 = vsub.f32 %v945, %v1044
        %v1077 = vsub.f32 %v946, %v1045
        %v1078 = vsub.f32 %v947, %v1046
        %v1079 = vsub.f32 %v948, %v1047
        %v1080 = vsub.f32 %v949, %v1048
        %v1081 = vsub.f32 %v950, %v1049
        %v1082 = vsub.f32 %v951, %v1050
        %v1083 = vsub.f32 %v952, %v1051
        %v1084 = vsub.f32 %v953, %v1052
        %v1085 = vsub.f32 %v954, %v1053
        %v1086 = vsub.f32 %v955, %v1054
        %v1087 = vsub.f32 %v956, %v1055
        %v1088 = vsub.f32 %v957, %v1056
        %v1089 = vsub.f32 %v958, %v1057
        %v1090 = vsub.f32 %v959, %v1058
        %v1091 = vsub.f32 %v960, %v1059
        %v1092 = vsub.f32 %v961, %v1060
        %v1093 = vsub.f32 %v962, %v1061
        %v1094 = vsub.f32 %v963, %v1062
        %v1095 = vsub.f32 %v964, %v1063
        %v1096 = vsub.f32 %v965, %v1064
        %v1097 = vsub.f32 %v966, %v1065
        %v1098 = vmul.f32 %v1066, %v1066
        %v1099 = vmul.f32 %v1067, %v1067
        %v1100 = vmul.f32 %v1068, %v1068
        %v1101 = vmul.f32 %v1069, %v1069
        %v1102 = vmul.f32 %v1070, %v1070
        %v1103 = vmul.f32 %v1071, %v1071
        %v1104 = vmul.f32 %v1072, %v1072
        %v1105 = vmul.f32 %v1073, %v1073
        %v1106 = vmul.f32 %v1074, %v1074
        %v1107 = vmul.f32 %v1075, %v1075
        %v1108 = vmul.f32 %v1076, %v1076
        %v1109 = vmul.f32 %v1077, %v1077
        %v1110 = vmul.f32 %v1078, %v1078
        %v1111 = vmul.f32 %v1079, %v1079
        %v1112 = vmul.f32 %v1080, %v1080
        %v1113 = vmul.f32 %v1081, %v1081
        %v1114 = vmul.f32 %v1082, %v1082
        %v1115 = vmul.f32 %v1083, %v1083
        %v1116 = vmul.f32 %v1084, %v1084
        %v1117 = vmul.f32 %v1085, %v1085
        %v1118 = vmul.f32 %v1086, %v1086
        %v1119 = vmul.f32 %v1087, %v1087
        %v1120 = vmul.f32 %v1088, %v1088
        %v1121 = vmul.f32 %v1089, %v1089
        %v1122 = vmul.f32 %v1090, %v1090
        %v1123 = vmul.f32 %v1091, %v1091
        %v1124 = vmul.f32 %v1092, %v1092
        %v1125 = vmul.f32 %v1093, %v1093
        %v1126 = vmul.f32 %v1094, %v1094
        %v1127 = vmul.f32 %v1095, %v1095
        %v1128 = vmul.f32 %v1096, %v1096
        %v1129 = vmul.f32 %v1097, %v1097
        %1130 = vadd.xlane.f32.xlu0 %v1098
        %v1131 = vpop.xlane.xlu0 %1130
        %1132 = vadd.xlane.f32.xlu0 %v1099
        %v1133 = vpop.xlane.xlu0 %1132
        %1134 = vadd.xlane.f32.xlu0 %v1100
        %v1135 = vpop.xlane.xlu0 %1134
        %1136 = vadd.xlane.f32.xlu0 %v1101
        %v1137 = vpop.xlane.xlu0 %1136
        %1138 = vadd.xlane.f32.xlu0 %v1102
        %v1139 = vpop.xlane.xlu0 %1138
        %1140 = vadd.xlane.f32.xlu0 %v1103
        %v1141 = vpop.xlane.xlu0 %1140
        %1142 = vadd.xlane.f32.xlu0 %v1104
        %v1143 = vpop.xlane.xlu0 %1142
        %1144 = vadd.xlane.f32.xlu0 %v1105
        %v1145 = vpop.xlane.xlu0 %1144
        %1146 = vadd.xlane.f32.xlu0 %v1106
        %v1147 = vpop.xlane.xlu0 %1146
        %1148 = vadd.xlane.f32.xlu0 %v1107
        %v1149 = vpop.xlane.xlu0 %1148
        %1150 = vadd.xlane.f32.xlu0 %v1108
        %v1151 = vpop.xlane.xlu0 %1150
        %1152 = vadd.xlane.f32.xlu0 %v1109
        %v1153 = vpop.xlane.xlu0 %1152
        %1154 = vadd.xlane.f32.xlu0 %v1110
        %v1155 = vpop.xlane.xlu0 %1154
        %1156 = vadd.xlane.f32.xlu0 %v1111
        %v1157 = vpop.xlane.xlu0 %1156
        %1158 = vadd.xlane.f32.xlu0 %v1112
        %v1159 = vpop.xlane.xlu0 %1158
        %1160 = vadd.xlane.f32.xlu0 %v1113
        %v1161 = vpop.xlane.xlu0 %1160
        %1162 = vadd.xlane.f32.xlu0 %v1114
        %v1163 = vpop.xlane.xlu0 %1162
        %1164 = vadd.xlane.f32.xlu0 %v1115
        %v1165 = vpop.xlane.xlu0 %1164
        %1166 = vadd.xlane.f32.xlu0 %v1116
        %v1167 = vpop.xlane.xlu0 %1166
        %1168 = vadd.xlane.f32.xlu0 %v1117
        %v1169 = vpop.xlane.xlu0 %1168
        %1170 = vadd.xlane.f32.xlu0 %v1118
        %v1171 = vpop.xlane.xlu0 %1170
        %1172 = vadd.xlane.f32.xlu0 %v1119
        %v1173 = vpop.xlane.xlu0 %1172
        %1174 = vadd.xlane.f32.xlu0 %v1120
        %v1175 = vpop.xlane.xlu0 %1174
        %1176 = vadd.xlane.f32.xlu0 %v1121
        %v1177 = vpop.xlane.xlu0 %1176
        %1178 = vadd.xlane.f32.xlu0 %v1122
        %v1179 = vpop.xlane.xlu0 %1178
        %1180 = vadd.xlane.f32.xlu0 %v1123
        %v1181 = vpop.xlane.xlu0 %1180
        %1182 = vadd.xlane.f32.xlu0 %v1124
        %v1183 = vpop.xlane.xlu0 %1182
        %1184 = vadd.xlane.f32.xlu0 %v1125
        %v1185 = vpop.xlane.xlu0 %1184
        %1186 = vadd.xlane.f32.xlu0 %v1126
        %v1187 = vpop.xlane.xlu0 %1186
        %1188 = vadd.xlane.f32.xlu0 %v1127
        %v1189 = vpop.xlane.xlu0 %1188
        %1190 = vadd.xlane.f32.xlu0 %v1128
        %v1191 = vpop.xlane.xlu0 %1190
        %1192 = vadd.xlane.f32.xlu0 %v1129
        %v1193 = vpop.xlane.xlu0 %1192
        %v1194 = vmul.f32 %v1131, 0.007874016
        %v1195 = vmul.f32 %v1133, 0.007874016
        %v1196 = vmul.f32 %v1135, 0.007874016
        %v1197 = vmul.f32 %v1137, 0.007874016
        %v1198 = vmul.f32 %v1139, 0.007874016
        %v1199 = vmul.f32 %v1141, 0.007874016
        %v1200 = vmul.f32 %v1143, 0.007874016
        %v1201 = vmul.f32 %v1145, 0.007874016
        %v1202 = vmul.f32 %v1147, 0.007874016
        %v1203 = vmul.f32 %v1149, 0.007874016
        %v1204 = vmul.f32 %v1151, 0.007874016
        %v1205 = vmul.f32 %v1153, 0.007874016
        %v1206 = vmul.f32 %v1155, 0.007874016
        %v1207 = vmul.f32 %v1157, 0.007874016
        %v1208 = vmul.f32 %v1159, 0.007874016
        %v1209 = vmul.f32 %v1161, 0.007874016
        %v1210 = vmul.f32 %v1163, 0.007874016
        %v1211 = vmul.f32 %v1165, 0.007874016
        %v1212 = vmul.f32 %v1167, 0.007874016
        %v1213 = vmul.f32 %v1169, 0.007874016
        %v1214 = vmul.f32 %v1171, 0.007874016
        %v1215 = vmul.f32 %v1173, 0.007874016
        %v1216 = vmul.f32 %v1175, 0.007874016
        %v1217 = vmul.f32 %v1177, 0.007874016
        %v1218 = vmul.f32 %v1179, 0.007874016
        %v1219 = vmul.f32 %v1181, 0.007874016
        %v1220 = vmul.f32 %v1183, 0.007874016
        %v1221 = vmul.f32 %v1185, 0.007874016
        %v1222 = vmul.f32 %v1187, 0.007874016
        %v1223 = vmul.f32 %v1189, 0.007874016
        %v1224 = vmul.f32 %v1191, 0.007874016
        %v1225 = vmul.f32 %v1193, 0.007874016
        %v1226 = vrsqrt.pop %v1194
        %v1227 = vmul.f32 %v1194, %v1226
        %vm1228 = vcmp.eq.f32.partialorder %v1194, inf
        %v1229 = vsel %vm1228, %v1194, %v1227
        %vm1230 = vcmp.eq.f32.partialorder %v1194, 0.0
        %v1231 = vand.u32 %v1194, 2147483648
        %v1232 = vsel %vm1230, %v1231, %v1229
        %v1233 = vrsqrt.pop %v1195
        %v1234 = vmul.f32 %v1195, %v1233
        %vm1235 = vcmp.eq.f32.partialorder %v1195, inf
        %v1236 = vsel %vm1235, %v1195, %v1234
        %vm1237 = vcmp.eq.f32.partialorder %v1195, 0.0
        %v1238 = vand.u32 %v1195, 2147483648
        %v1239 = vsel %vm1237, %v1238, %v1236
        %v1240 = vrsqrt.pop %v1196
        %v1241 = vmul.f32 %v1196, %v1240
        %vm1242 = vcmp.eq.f32.partialorder %v1196, inf
        %v1243 = vsel %vm1242, %v1196, %v1241
        %vm1244 = vcmp.eq.f32.partialorder %v1196, 0.0
        %v1245 = vand.u32 %v1196, 2147483648
        %v1246 = vsel %vm1244, %v1245, %v1243
        %v1247 = vrsqrt.pop %v1197
        %v1248 = vmul.f32 %v1197, %v1247
        %vm1249 = vcmp.eq.f32.partialorder %v1197, inf
        %v1250 = vsel %vm1249, %v1197, %v1248
        %vm1251 = vcmp.eq.f32.partialorder %v1197, 0.0
        %v1252 = vand.u32 %v1197, 2147483648
        %v1253 = vsel %vm1251, %v1252, %v1250
        %v1254 = vrsqrt.pop %v1198
        %v1255 = vmul.f32 %v1198, %v1254
        %vm1256 = vcmp.eq.f32.partialorder %v1198, inf
        %v1257 = vsel %vm1256, %v1198, %v1255
        %vm1258 = vcmp.eq.f32.partialorder %v1198, 0.0
        %v1259 = vand.u32 %v1198, 2147483648
        %v1260 = vsel %vm1258, %v1259, %v1257
        %v1261 = vrsqrt.pop %v1199
        %v1262 = vmul.f32 %v1199, %v1261
        %vm1263 = vcmp.eq.f32.partialorder %v1199, inf
        %v1264 = vsel %vm1263, %v1199, %v1262
        %vm1265 = vcmp.eq.f32.partialorder %v1199, 0.0
        %v1266 = vand.u32 %v1199, 2147483648
        %v1267 = vsel %vm1265, %v1266, %v1264
        %v1268 = vrsqrt.pop %v1200
        %v1269 = vmul.f32 %v1200, %v1268
        %vm1270 = vcmp.eq.f32.partialorder %v1200, inf
        %v1271 = vsel %vm1270, %v1200, %v1269
        %vm1272 = vcmp.eq.f32.partialorder %v1200, 0.0
        %v1273 = vand.u32 %v1200, 2147483648
        %v1274 = vsel %vm1272, %v1273, %v1271
        %v1275 = vrsqrt.pop %v1201
        %v1276 = vmul.f32 %v1201, %v1275
        %vm1277 = vcmp.eq.f32.partialorder %v1201, inf
        %v1278 = vsel %vm1277, %v1201, %v1276
        %vm1279 = vcmp.eq.f32.partialorder %v1201, 0.0
        %v1280 = vand.u32 %v1201, 2147483648
        %v1281 = vsel %vm1279, %v1280, %v1278
        %v1282 = vrsqrt.pop %v1202
        %v1283 = vmul.f32 %v1202, %v1282
        %vm1284 = vcmp.eq.f32.partialorder %v1202, inf
        %v1285 = vsel %vm1284, %v1202, %v1283
        %vm1286 = vcmp.eq.f32.partialorder %v1202, 0.0
        %v1287 = vand.u32 %v1202, 2147483648
        %v1288 = vsel %vm1286, %v1287, %v1285
        %v1289 = vrsqrt.pop %v1203
        %v1290 = vmul.f32 %v1203, %v1289
        %vm1291 = vcmp.eq.f32.partialorder %v1203, inf
        %v1292 = vsel %vm1291, %v1203, %v1290
        %vm1293 = vcmp.eq.f32.partialorder %v1203, 0.0
        %v1294 = vand.u32 %v1203, 2147483648
        %v1295 = vsel %vm1293, %v1294, %v1292
        %v1296 = vrsqrt.pop %v1204
        %v1297 = vmul.f32 %v1204, %v1296
        %vm1298 = vcmp.eq.f32.partialorder %v1204, inf
        %v1299 = vsel %vm1298, %v1204, %v1297
        %vm1300 = vcmp.eq.f32.partialorder %v1204, 0.0
        %v1301 = vand.u32 %v1204, 2147483648
        %v1302 = vsel %vm1300, %v1301, %v1299
        %v1303 = vrsqrt.pop %v1205
        %v1304 = vmul.f32 %v1205, %v1303
        %vm1305 = vcmp.eq.f32.partialorder %v1205, inf
        %v1306 = vsel %vm1305, %v1205, %v1304
        %vm1307 = vcmp.eq.f32.partialorder %v1205, 0.0
        %v1308 = vand.u32 %v1205, 2147483648
        %v1309 = vsel %vm1307, %v1308, %v1306
        %v1310 = vrsqrt.pop %v1206
        %v1311 = vmul.f32 %v1206, %v1310
        %vm1312 = vcmp.eq.f32.partialorder %v1206, inf
        %v1313 = vsel %vm1312, %v1206, %v1311
        %vm1314 = vcmp.eq.f32.partialorder %v1206, 0.0
        %v1315 = vand.u32 %v1206, 2147483648
        %v1316 = vsel %vm1314, %v1315, %v1313
        %v1317 = vrsqrt.pop %v1207
        %v1318 = vmul.f32 %v1207, %v1317
        %vm1319 = vcmp.eq.f32.partialorder %v1207, inf
        %v1320 = vsel %vm1319, %v1207, %v1318
        %vm1321 = vcmp.eq.f32.partialorder %v1207, 0.0
        %v1322 = vand.u32 %v1207, 2147483648
        %v1323 = vsel %vm1321, %v1322, %v1320
        %v1324 = vrsqrt.pop %v1208
        %v1325 = vmul.f32 %v1208, %v1324
        %vm1326 = vcmp.eq.f32.partialorder %v1208, inf
        %v1327 = vsel %vm1326, %v1208, %v1325
        %vm1328 = vcmp.eq.f32.partialorder %v1208, 0.0
        %v1329 = vand.u32 %v1208, 2147483648
        %v1330 = vsel %vm1328, %v1329, %v1327
        %v1331 = vrsqrt.pop %v1209
        %v1332 = vmul.f32 %v1209, %v1331
        %vm1333 = vcmp.eq.f32.partialorder %v1209, inf
        %v1334 = vsel %vm1333, %v1209, %v1332
        %vm1335 = vcmp.eq.f32.partialorder %v1209, 0.0
        %v1336 = vand.u32 %v1209, 2147483648
        %v1337 = vsel %vm1335, %v1336, %v1334
        %v1338 = vrsqrt.pop %v1210
        %v1339 = vmul.f32 %v1210, %v1338
        %vm1340 = vcmp.eq.f32.partialorder %v1210, inf
        %v1341 = vsel %vm1340, %v1210, %v1339
        %vm1342 = vcmp.eq.f32.partialorder %v1210, 0.0
        %v1343 = vand.u32 %v1210, 2147483648
        %v1344 = vsel %vm1342, %v1343, %v1341
        %v1345 = vrsqrt.pop %v1211
        %v1346 = vmul.f32 %v1211, %v1345
        %vm1347 = vcmp.eq.f32.partialorder %v1211, inf
        %v1348 = vsel %vm1347, %v1211, %v1346
        %vm1349 = vcmp.eq.f32.partialorder %v1211, 0.0
        %v1350 = vand.u32 %v1211, 2147483648
        %v1351 = vsel %vm1349, %v1350, %v1348
        %v1352 = vrsqrt.pop %v1212
        %v1353 = vmul.f32 %v1212, %v1352
        %vm1354 = vcmp.eq.f32.partialorder %v1212, inf
        %v1355 = vsel %vm1354, %v1212, %v1353
        %vm1356 = vcmp.eq.f32.partialorder %v1212, 0.0
        %v1357 = vand.u32 %v1212, 2147483648
        %v1358 = vsel %vm1356, %v1357, %v1355
        %v1359 = vrsqrt.pop %v1213
        %v1360 = vmul.f32 %v1213, %v1359
        %vm1361 = vcmp.eq.f32.partialorder %v1213, inf
        %v1362 = vsel %vm1361, %v1213, %v1360
        %vm1363 = vcmp.eq.f32.partialorder %v1213, 0.0
        %v1364 = vand.u32 %v1213, 2147483648
        %v1365 = vsel %vm1363, %v1364, %v1362
        %v1366 = vrsqrt.pop %v1214
        %v1367 = vmul.f32 %v1214, %v1366
        %vm1368 = vcmp.eq.f32.partialorder %v1214, inf
        %v1369 = vsel %vm1368, %v1214, %v1367
        %vm1370 = vcmp.eq.f32.partialorder %v1214, 0.0
        %v1371 = vand.u32 %v1214, 2147483648
        %v1372 = vsel %vm1370, %v1371, %v1369
        %v1373 = vrsqrt.pop %v1215
        %v1374 = vmul.f32 %v1215, %v1373
        %vm1375 = vcmp.eq.f32.partialorder %v1215, inf
        %v1376 = vsel %vm1375, %v1215, %v1374
        %vm1377 = vcmp.eq.f32.partialorder %v1215, 0.0
        %v1378 = vand.u32 %v1215, 2147483648
        %v1379 = vsel %vm1377, %v1378, %v1376
        %v1380 = vrsqrt.pop %v1216
        %v1381 = vmul.f32 %v1216, %v1380
        %vm1382 = vcmp.eq.f32.partialorder %v1216, inf
        %v1383 = vsel %vm1382, %v1216, %v1381
        %vm1384 = vcmp.eq.f32.partialorder %v1216, 0.0
        %v1385 = vand.u32 %v1216, 2147483648
        %v1386 = vsel %vm1384, %v1385, %v1383
        %v1387 = vrsqrt.pop %v1217
        %v1388 = vmul.f32 %v1217, %v1387
        %vm1389 = vcmp.eq.f32.partialorder %v1217, inf
        %v1390 = vsel %vm1389, %v1217, %v1388
        %vm1391 = vcmp.eq.f32.partialorder %v1217, 0.0
        %v1392 = vand.u32 %v1217, 2147483648
        %v1393 = vsel %vm1391, %v1392, %v1390
        %v1394 = vrsqrt.pop %v1218
        %v1395 = vmul.f32 %v1218, %v1394
        %vm1396 = vcmp.eq.f32.partialorder %v1218, inf
        %v1397 = vsel %vm1396, %v1218, %v1395
        %vm1398 = vcmp.eq.f32.partialorder %v1218, 0.0
        %v1399 = vand.u32 %v1218, 2147483648
        %v1400 = vsel %vm1398, %v1399, %v1397
        %v1401 = vrsqrt.pop %v1219
        %v1402 = vmul.f32 %v1219, %v1401
        %vm1403 = vcmp.eq.f32.partialorder %v1219, inf
        %v1404 = vsel %vm1403, %v1219, %v1402
        %vm1405 = vcmp.eq.f32.partialorder %v1219, 0.0
        %v1406 = vand.u32 %v1219, 2147483648
        %v1407 = vsel %vm1405, %v1406, %v1404
        %v1408 = vrsqrt.pop %v1220
        %v1409 = vmul.f32 %v1220, %v1408
        %vm1410 = vcmp.eq.f32.partialorder %v1220, inf
        %v1411 = vsel %vm1410, %v1220, %v1409
        %vm1412 = vcmp.eq.f32.partialorder %v1220, 0.0
        %v1413 = vand.u32 %v1220, 2147483648
        %v1414 = vsel %vm1412, %v1413, %v1411
        %v1415 = vrsqrt.pop %v1221
        %v1416 = vmul.f32 %v1221, %v1415
        %vm1417 = vcmp.eq.f32.partialorder %v1221, inf
        %v1418 = vsel %vm1417, %v1221, %v1416
        %vm1419 = vcmp.eq.f32.partialorder %v1221, 0.0
        %v1420 = vand.u32 %v1221, 2147483648
        %v1421 = vsel %vm1419, %v1420, %v1418
        %v1422 = vrsqrt.pop %v1222
        %v1423 = vmul.f32 %v1222, %v1422
        %vm1424 = vcmp.eq.f32.partialorder %v1222, inf
        %v1425 = vsel %vm1424, %v1222, %v1423
        %vm1426 = vcmp.eq.f32.partialorder %v1222, 0.0
        %v1427 = vand.u32 %v1222, 2147483648
        %v1428 = vsel %vm1426, %v1427, %v1425
        %v1429 = vrsqrt.pop %v1223
        %v1430 = vmul.f32 %v1223, %v1429
        %vm1431 = vcmp.eq.f32.partialorder %v1223, inf
        %v1432 = vsel %vm1431, %v1223, %v1430
        %vm1433 = vcmp.eq.f32.partialorder %v1223, 0.0
        %v1434 = vand.u32 %v1223, 2147483648
        %v1435 = vsel %vm1433, %v1434, %v1432
        %v1436 = vrsqrt.pop %v1224
        %v1437 = vmul.f32 %v1224, %v1436
        %vm1438 = vcmp.eq.f32.partialorder %v1224, inf
        %v1439 = vsel %vm1438, %v1224, %v1437
        %vm1440 = vcmp.eq.f32.partialorder %v1224, 0.0
        %v1441 = vand.u32 %v1224, 2147483648
        %v1442 = vsel %vm1440, %v1441, %v1439
        %v1443 = vrsqrt.pop %v1225
        %v1444 = vmul.f32 %v1225, %v1443
        %vm1445 = vcmp.eq.f32.partialorder %v1225, inf
        %v1446 = vsel %vm1445, %v1225, %v1444
        %vm1447 = vcmp.eq.f32.partialorder %v1225, 0.0
        %v1448 = vand.u32 %v1225, 2147483648
        %v1449 = vsel %vm1447, %v1448, %v1446
        %v1450 = vadd.f32 %v1232, 1e-06
        %v1451 = vadd.f32 %v1239, 1e-06
        %v1452 = vadd.f32 %v1246, 1e-06
        %v1453 = vadd.f32 %v1253, 1e-06
        %v1454 = vadd.f32 %v1260, 1e-06
        %v1455 = vadd.f32 %v1267, 1e-06
        %v1456 = vadd.f32 %v1274, 1e-06
        %v1457 = vadd.f32 %v1281, 1e-06
        %v1458 = vadd.f32 %v1288, 1e-06
        %v1459 = vadd.f32 %v1295, 1e-06
        %v1460 = vadd.f32 %v1302, 1e-06
        %v1461 = vadd.f32 %v1309, 1e-06
        %v1462 = vadd.f32 %v1316, 1e-06
        %v1463 = vadd.f32 %v1323, 1e-06
        %v1464 = vadd.f32 %v1330, 1e-06
        %v1465 = vadd.f32 %v1337, 1e-06
        %v1466 = vadd.f32 %v1344, 1e-06
        %v1467 = vadd.f32 %v1351, 1e-06
        %v1468 = vadd.f32 %v1358, 1e-06
        %v1469 = vadd.f32 %v1365, 1e-06
        %v1470 = vadd.f32 %v1372, 1e-06
        %v1471 = vadd.f32 %v1379, 1e-06
        %v1472 = vadd.f32 %v1386, 1e-06
        %v1473 = vadd.f32 %v1393, 1e-06
        %v1474 = vadd.f32 %v1400, 1e-06
        %v1475 = vadd.f32 %v1407, 1e-06
        %v1476 = vadd.f32 %v1414, 1e-06
        %v1477 = vadd.f32 %v1421, 1e-06
        %v1478 = vadd.f32 %v1428, 1e-06
        %v1479 = vadd.f32 %v1435, 1e-06
        %v1480 = vadd.f32 %v1442, 1e-06
        %v1481 = vadd.f32 %v1449, 1e-06
        %v1482 = vrcp.pop %v1450
        %v1483 = vrcp.pop %v1451
        %v1484 = vrcp.pop %v1452
        %v1485 = vrcp.pop %v1453
        %v1486 = vrcp.pop %v1454
        %v1487 = vrcp.pop %v1455
        %v1488 = vrcp.pop %v1456
        %v1489 = vrcp.pop %v1457
        %v1490 = vrcp.pop %v1458
        %v1491 = vrcp.pop %v1459
        %v1492 = vrcp.pop %v1460
        %v1493 = vrcp.pop %v1461
        %v1494 = vrcp.pop %v1462
        %v1495 = vrcp.pop %v1463
        %v1496 = vrcp.pop %v1464
        %v1497 = vrcp.pop %v1465
        %v1498 = vrcp.pop %v1466
        %v1499 = vrcp.pop %v1467
        %v1500 = vrcp.pop %v1468
        %v1501 = vrcp.pop %v1469
        %v1502 = vrcp.pop %v1470
        %v1503 = vrcp.pop %v1471
        %v1504 = vrcp.pop %v1472
        %v1505 = vrcp.pop %v1473
        %v1506 = vrcp.pop %v1474
        %v1507 = vrcp.pop %v1475
        %v1508 = vrcp.pop %v1476
        %v1509 = vrcp.pop %v1477
        %v1510 = vrcp.pop %v1478
        %v1511 = vrcp.pop %v1479
        %v1512 = vrcp.pop %v1480
        %v1513 = vrcp.pop %v1481
        %v1515 = vlaneseq
        %v1516 = vshrl.u32 %v1515, 7
        %v1517 = vsub.s32 0, %v1516
        %v1518 = vrot.slane %v967, %v1517
        %v1520 = vmul.f32 %v1518, %v1066
        %v1521 = vmul.f32 %v1518, %v1067
        %v1522 = vmul.f32 %v1518, %v1068
        %v1523 = vmul.f32 %v1518, %v1069
        %v1524 = vmul.f32 %v1518, %v1070
        %v1525 = vmul.f32 %v1518, %v1071
        %v1526 = vmul.f32 %v1518, %v1072
        %v1527 = vmul.f32 %v1518, %v1073
        %v1528 = vmul.f32 %v1518, %v1074
        %v1529 = vmul.f32 %v1518, %v1075
        %v1530 = vmul.f32 %v1518, %v1076
        %v1531 = vmul.f32 %v1518, %v1077
        %v1532 = vmul.f32 %v1518, %v1078
        %v1533 = vmul.f32 %v1518, %v1079
        %v1534 = vmul.f32 %v1518, %v1080
        %v1535 = vmul.f32 %v1518, %v1081
        %v1536 = vmul.f32 %v1518, %v1082
        %v1537 = vmul.f32 %v1518, %v1083
        %v1538 = vmul.f32 %v1518, %v1084
        %v1539 = vmul.f32 %v1518, %v1085
        %v1540 = vmul.f32 %v1518, %v1086
        %v1541 = vmul.f32 %v1518, %v1087
        %v1542 = vmul.f32 %v1518, %v1088
        %v1543 = vmul.f32 %v1518, %v1089
        %v1544 = vmul.f32 %v1518, %v1090
        %v1545 = vmul.f32 %v1518, %v1091
        %v1546 = vmul.f32 %v1518, %v1092
        %v1547 = vmul.f32 %v1518, %v1093
        %v1548 = vmul.f32 %v1518, %v1094
        %v1549 = vmul.f32 %v1518, %v1095
        %v1550 = vmul.f32 %v1518, %v1096
        %v1551 = vmul.f32 %v1518, %v1097
        %v1552 = vmul.f32 %v1520, %v1482
        %v1553 = vmul.f32 %v1521, %v1483
        %v1554 = vmul.f32 %v1522, %v1484
        %v1555 = vmul.f32 %v1523, %v1485
        %v1556 = vmul.f32 %v1524, %v1486
        %v1557 = vmul.f32 %v1525, %v1487
        %v1558 = vmul.f32 %v1526, %v1488
        %v1559 = vmul.f32 %v1527, %v1489
        %v1560 = vmul.f32 %v1528, %v1490
        %v1561 = vmul.f32 %v1529, %v1491
        %v1562 = vmul.f32 %v1530, %v1492
        %v1563 = vmul.f32 %v1531, %v1493
        %v1564 = vmul.f32 %v1532, %v1494
        %v1565 = vmul.f32 %v1533, %v1495
        %v1566 = vmul.f32 %v1534, %v1496
        %v1567 = vmul.f32 %v1535, %v1497
        %v1568 = vmul.f32 %v1536, %v1498
        %v1569 = vmul.f32 %v1537, %v1499
        %v1570 = vmul.f32 %v1538, %v1500
        %v1571 = vmul.f32 %v1539, %v1501
        %v1572 = vmul.f32 %v1540, %v1502
        %v1573 = vmul.f32 %v1541, %v1503
        %v1574 = vmul.f32 %v1542, %v1504
        %v1575 = vmul.f32 %v1543, %v1505
        %v1576 = vmul.f32 %v1544, %v1506
        %v1577 = vmul.f32 %v1545, %v1507
        %v1578 = vmul.f32 %v1546, %v1508
        %v1579 = vmul.f32 %v1547, %v1509
        %v1580 = vmul.f32 %v1548, %v1510
        %v1581 = vmul.f32 %v1549, %v1511
        %v1582 = vmul.f32 %v1550, %v1512
        %v1583 = vmul.f32 %v1551, %v1513
        %v1585 = vlaneseq
        %v1586 = vshrl.u32 %v1585, 7
        %v1587 = vsub.s32 0, %v1586
        %v1588 = vrot.slane %v968, %v1587
        %v1590 = vadd.f32 %v1552, %v1588
        %v1591 = vadd.f32 %v1553, %v1588
        %v1592 = vadd.f32 %v1554, %v1588
        %v1593 = vadd.f32 %v1555, %v1588
        %v1594 = vadd.f32 %v1556, %v1588
        %v1595 = vadd.f32 %v1557, %v1588
        %v1596 = vadd.f32 %v1558, %v1588
        %v1597 = vadd.f32 %v1559, %v1588
        %v1598 = vadd.f32 %v1560, %v1588
        %v1599 = vadd.f32 %v1561, %v1588
        %v1600 = vadd.f32 %v1562, %v1588
        %v1601 = vadd.f32 %v1563, %v1588
        %v1602 = vadd.f32 %v1564, %v1588
        %v1603 = vadd.f32 %v1565, %v1588
        %v1604 = vadd.f32 %v1566, %v1588
        %v1605 = vadd.f32 %v1567, %v1588
        %v1606 = vadd.f32 %v1568, %v1588
        %v1607 = vadd.f32 %v1569, %v1588
        %v1608 = vadd.f32 %v1570, %v1588
        %v1609 = vadd.f32 %v1571, %v1588
        %v1610 = vadd.f32 %v1572, %v1588
        %v1611 = vadd.f32 %v1573, %v1588
        %v1612 = vadd.f32 %v1574, %v1588
        %v1613 = vadd.f32 %v1575, %v1588
        %v1614 = vadd.f32 %v1576, %v1588
        %v1615 = vadd.f32 %v1577, %v1588
        %v1616 = vadd.f32 %v1578, %v1588
        %v1617 = vadd.f32 %v1579, %v1588
        %v1618 = vadd.f32 %v1580, %v1588
        %v1619 = vadd.f32 %v1581, %v1588
        %v1620 = vadd.f32 %v1582, %v1588
        %v1621 = vadd.f32 %v1583, %v1588
        %v1622 = vpack.c.bf16 %v1591, %v1590
        %v1623 = vpack.c.bf16 %v1593, %v1592
        %v1624 = vpack.c.bf16 %v1595, %v1594
        %v1625 = vpack.c.bf16 %v1597, %v1596
        %v1626 = vpack.c.bf16 %v1599, %v1598
        %v1627 = vpack.c.bf16 %v1601, %v1600
        %v1628 = vpack.c.bf16 %v1603, %v1602
        %v1629 = vpack.c.bf16 %v1605, %v1604
        %v1630 = vpack.c.bf16 %v1607, %v1606
        %v1631 = vpack.c.bf16 %v1609, %v1608
        %v1632 = vpack.c.bf16 %v1611, %v1610
        %v1633 = vpack.c.bf16 %v1613, %v1612
        %v1634 = vpack.c.bf16 %v1615, %v1614
        %v1635 = vpack.c.bf16 %v1617, %v1616
        %v1636 = vpack.c.bf16 %v1619, %v1618
        %v1637 = vpack.c.bf16 %v1621, %v1620
        %v1638 = vld [vmem:[%s701] sm:$0xff]
        %v1639 = vld [vmem:[%s701 + $0x8] sm:$0xf]
        %v1640 = vld [vmem:[%s701 + $0xc] sm:$0xff]
        %v1641 = vld [vmem:[%s701 + $0x14] sm:$0xf]
        %v1642 = vld [vmem:[%s701 + $0x18] sm:$0xff]
        %v1643 = vld [vmem:[%s701 + $0x20] sm:$0xf]
        %v1644 = vld [vmem:[%s701 + $0x24] sm:$0xff]
        %v1645 = vld [vmem:[%s701 + $0x2c] sm:$0xf]
        %v1646 = vld [vmem:[%s701 + $0x30] sm:$0xff]
        %v1647 = vld [vmem:[%s701 + $0x38] sm:$0xf]
        %v1648 = vld [vmem:[%s701 + $0x3c] sm:$0xff]
        %v1649 = vld [vmem:[%s701 + $0x44] sm:$0xf]
        %v1650 = vld [vmem:[%s701 + $0x48] sm:$0xff]
        %v1651 = vld [vmem:[%s701 + $0x50] sm:$0xf]
        %v1652 = vld [vmem:[%s701 + $0x54] sm:$0xff]
        %v1653 = vld [vmem:[%s701 + $0x5c] sm:$0xf]
        %v1654 = vld [vmem:[%s701 + $0x60] sm:$0xff]
        %v1655 = vld [vmem:[%s701 + $0x68] sm:$0xf]
        %v1656 = vld [vmem:[%s701 + $0x6c] sm:$0xff]
        %v1657 = vld [vmem:[%s701 + $0x74] sm:$0xf]
        %v1658 = vld [vmem:[%s701 + $0x78] sm:$0xff]
        %v1659 = vld [vmem:[%s701 + $0x80] sm:$0xf]
        %v1660 = vld [vmem:[%s701 + $0x84] sm:$0xff]
        %v1661 = vld [vmem:[%s701 + $0x8c] sm:$0xf]
        %v1662 = vld [vmem:[%s701 + $0x90] sm:$0xff]
        %v1663 = vld [vmem:[%s701 + $0x98] sm:$0xf]
        %v1664 = vld [vmem:[%s701 + $0x9c] sm:$0xff]
        %v1665 = vld [vmem:[%s701 + $0xa4] sm:$0xf]
        %v1666 = vld [vmem:[%s701 + $0xa8] sm:$0xff]
        %v1667 = vld [vmem:[%s701 + $0xb0] sm:$0xf]
        %v1668 = vld [vmem:[%s701 + $0xb4] sm:$0xff]
        %v1669 = vld [vmem:[%s701 + $0xbc] sm:$0xf]
        %v1670 = vld [vmem:[%s851] sm:$0x7]
        %v1672 = vlaneseq
        %v1673 = vshrl.u32 %v1672, 7
        %v1674 = vsub.s32 0, %v1673
        %v1675 = vrot.slane %v1670, %v1674
        %v1676 = vlaneseq
        %v1677 = vshrl.u32 %v1676, 7
        %v1678 = vsub.s32 1, %v1677
        %v1679 = vrot.slane %v1670, %v1678
        %v1680 = vlaneseq
        %v1681 = vshrl.u32 %v1680, 7
        %v1682 = vsub.s32 2, %v1681
        %v1683 = vrot.slane %v1670, %v1682
        %v1719 = vunpack.c.l.b16 %v1638
        %v1720 = vunpack.c.h.b16 %v1638
        %v1721 = vunpack.c.l.b16 %v1639
        %v1722 = vunpack.c.l.b16 %v1640
        %v1723 = vunpack.c.h.b16 %v1640
        %v1724 = vunpack.c.l.b16 %v1641
        %v1725 = vunpack.c.l.b16 %v1642
        %v1726 = vunpack.c.h.b16 %v1642
        %v1727 = vunpack.c.l.b16 %v1643
        %v1728 = vunpack.c.l.b16 %v1644
        %v1729 = vunpack.c.h.b16 %v1644
        %v1730 = vunpack.c.l.b16 %v1645
        %v1731 = vunpack.c.l.b16 %v1646
        %v1732 = vunpack.c.h.b16 %v1646
        %v1733 = vunpack.c.l.b16 %v1647
        %v1734 = vunpack.c.l.b16 %v1648
        %v1735 = vunpack.c.h.b16 %v1648
        %v1736 = vunpack.c.l.b16 %v1649
        %v1737 = vunpack.c.l.b16 %v1650
        %v1738 = vunpack.c.h.b16 %v1650
        %v1739 = vunpack.c.l.b16 %v1651
        %v1740 = vunpack.c.l.b16 %v1652
        %v1741 = vunpack.c.h.b16 %v1652
        %v1742 = vunpack.c.l.b16 %v1653
        %v1743 = vunpack.c.l.b16 %v1654
        %v1744 = vunpack.c.h.b16 %v1654
        %v1745 = vunpack.c.l.b16 %v1655
        %v1746 = vunpack.c.l.b16 %v1656
        %v1747 = vunpack.c.h.b16 %v1656
        %v1748 = vunpack.c.l.b16 %v1657
        %v1749 = vunpack.c.l.b16 %v1658
        %v1750 = vunpack.c.h.b16 %v1658
        %v1751 = vunpack.c.l.b16 %v1659
        %v1752 = vunpack.c.l.b16 %v1660
        %v1753 = vunpack.c.h.b16 %v1660
        %v1754 = vunpack.c.l.b16 %v1661
        %v1755 = vunpack.c.l.b16 %v1662
        %v1756 = vunpack.c.h.b16 %v1662
        %v1757 = vunpack.c.l.b16 %v1663
        %v1758 = vunpack.c.l.b16 %v1664
        %v1759 = vunpack.c.h.b16 %v1664
        %v1760 = vunpack.c.l.b16 %v1665
        %v1761 = vunpack.c.l.b16 %v1666
        %v1762 = vunpack.c.h.b16 %v1666
        %v1763 = vunpack.c.l.b16 %v1667
        %v1764 = vunpack.c.l.b16 %v1668
        %v1765 = vunpack.c.h.b16 %v1668
        %v1766 = vunpack.c.l.b16 %v1669
        %v1767 = vpack.c.b16 %v1722, %v1719
        %v1768 = vpack.c.b16 %v1723, %v1720
        %v1769 = vpack.c.b16 %v1724, %v1721
        %v1770 = vpack.c.b16 %v1728, %v1725
        %v1771 = vpack.c.b16 %v1729, %v1726
        %v1772 = vpack.c.b16 %v1730, %v1727
        %v1773 = vpack.c.b16 %v1734, %v1731
        %v1774 = vpack.c.b16 %v1735, %v1732
        %v1775 = vpack.c.b16 %v1736, %v1733
        %v1776 = vpack.c.b16 %v1740, %v1737
        %v1777 = vpack.c.b16 %v1741, %v1738
        %v1778 = vpack.c.b16 %v1742, %v1739
        %v1779 = vpack.c.b16 %v1746, %v1743
        %v1780 = vpack.c.b16 %v1747, %v1744
        %v1781 = vpack.c.b16 %v1748, %v1745
        %v1782 = vpack.c.b16 %v1752, %v1749
        %v1783 = vpack.c.b16 %v1753, %v1750
        %v1784 = vpack.c.b16 %v1754, %v1751
        %v1785 = vpack.c.b16 %v1758, %v1755
        %v1786 = vpack.c.b16 %v1759, %v1756
        %v1787 = vpack.c.b16 %v1760, %v1757
        %v1788 = vpack.c.b16 %v1764, %v1761
        %v1789 = vpack.c.b16 %v1765, %v1762
        %v1790 = vpack.c.b16 %v1766, %v1763
        %1815 = vmatprep.subr.bf16.mxu0 %v1768
        %1816 = vmatpush1.bf16.msra.mxu0 %v1767
        %1817 = vmatprep.subr.bf16.mxu0 %v1771
        %1818 = vmatpush1.bf16.msra.mxu0 %v1770
        %1819 = vmatprep.subr.bf16.mxu0 %v1774
        %1820 = vmatpush1.bf16.msra.mxu0 %v1773
        %1821 = vmatprep.subr.bf16.mxu0 %v1777
        %1822 = vmatpush1.bf16.msra.mxu0 %v1776
        %1823 = vmatprep.subr.bf16.mxu0 %v1780
        %1824 = vmatpush1.bf16.msra.mxu0 %v1779
        %1825 = vmatprep.subr.bf16.mxu0 %v1783
        %1826 = vmatpush1.bf16.msra.mxu0 %v1782
        %1827 = vmatprep.subr.bf16.mxu0 %v1786
        %1828 = vmatpush1.bf16.msra.mxu0 %v1785
        %1829 = vmatprep.subr.bf16.mxu0 %v1789
        %1830 = vmatpush1.bf16.msra.mxu0 %v1788
        %1831 = vmatprep.subr.bf16.mxu0 0
        %1832 = vmatpush1.bf16.msra.mxu0 0
        %1833 = vmatprep.subr.bf16.mxu0 0
        %1834 = vmatpush1.bf16.msra.mxu0 0
        %1835 = vmatprep.subr.bf16.mxu0 0
        %1836 = vmatpush1.bf16.msra.mxu0 0
        %1837 = vmatprep.subr.bf16.mxu0 0
        %1838 = vmatpush1.bf16.msra.mxu0 0
        %1839 = vmatprep.subr.bf16.mxu0 0
        %1840 = vmatpush1.bf16.msra.mxu0 0
        %1841 = vmatprep.subr.bf16.mxu0 0
        %1842 = vmatpush1.bf16.msra.mxu0 0
        %1843 = vmatprep.subr.bf16.mxu0 0
        %1844 = vmatpush1.bf16.msra.mxu0 0
        %1845 = vmatprep.subr.bf16.mxu0 0
        %1846 = vmatpush1.bf16.msra.mxu0 0
        %1847 = vmatprep.mubr.bf16.mxu0 0
        %1848 = vmatmul.mubr.bf16.gmra.mrb[0].mxu0 %v1622
        %v1849 = vpop.f32.mrb[0].mxu0
        %v1850 = vadd.f32 %v1675, %v1849
        %v1851 = vpop.f32.mrb[0].mxu0
        %v1852 = vadd.f32 %v1679, %v1851
        %v1853 = vpop.f32.mrb[0].mxu0
        %v1854 = vadd.f32 %v1675, %v1853
        %v1855 = vpop.f32.mrb[0].mxu0
        %v1856 = vadd.f32 %v1679, %v1855
        %1857 = vmatprep.mubr.bf16.mxu0 0
        %1858 = vmatmul.mubr.bf16.gmra.mrb[0].mxu0 %v1623
        %v1859 = vpop.f32.mrb[0].mxu0
        %v1860 = vadd.f32 %v1675, %v1859
        %v1861 = vpop.f32.mrb[0].mxu0
        %v1862 = vadd.f32 %v1679, %v1861
        %v1863 = vpop.f32.mrb[0].mxu0
        %v1864 = vadd.f32 %v1675, %v1863
        %v1865 = vpop.f32.mrb[0].mxu0
        %v1866 = vadd.f32 %v1679, %v1865
        %1867 = vmatprep.mubr.bf16.mxu0 0
        %1868 = vmatmul.mubr.bf16.gmra.mrb[0].mxu0 %v1624
        %v1869 = vpop.f32.mrb[0].mxu0
        %v1870 = vadd.f32 %v1675, %v1869
        %v1871 = vpop.f32.mrb[0].mxu0
        %v1872 = vadd.f32 %v1679, %v1871
        %v1873 = vpop.f32.mrb[0].mxu0
        %v1874 = vadd.f32 %v1675, %v1873
        %v1875 = vpop.f32.mrb[0].mxu0
        %v1876 = vadd.f32 %v1679, %v1875
        %1877 = vmatprep.mubr.bf16.mxu0 0
        %1878 = vmatmul.mubr.bf16.gmra.mrb[0].mxu0 %v1625
        %v1879 = vpop.f32.mrb[0].mxu0
        %v1880 = vadd.f32 %v1675, %v1879
        %v1881 = vpop.f32.mrb[0].mxu0
        %v1882 = vadd.f32 %v1679, %v1881
        %v1883 = vpop.f32.mrb[0].mxu0
        %v1884 = vadd.f32 %v1675, %v1883
        %v1885 = vpop.f32.mrb[0].mxu0
        %v1886 = vadd.f32 %v1679, %v1885
        %1887 = vmatprep.mubr.bf16.mxu0 0
        %1888 = vmatmul.mubr.bf16.gmra.mrb[0].mxu0 %v1626
        %v1889 = vpop.f32.mrb[0].mxu0
        %v1890 = vadd.f32 %v1675, %v1889
        %v1891 = vpop.f32.mrb[0].mxu0
        %v1892 = vadd.f32 %v1679, %v1891
        %v1893 = vpop.f32.mrb[0].mxu0
        %v1894 = vadd.f32 %v1675, %v1893
        %v1895 = vpop.f32.mrb[0].mxu0
        %v1896 = vadd.f32 %v1679, %v1895
        %1897 = vmatprep.mubr.bf16.mxu0 0
        %1898 = vmatmul.mubr.bf16.gmra.mrb[0].mxu0 %v1627
        %v1899 = vpop.f32.mrb[0].mxu0
        %v1900 = vadd.f32 %v1675, %v1899
        %v1901 = vpop.f32.mrb[0].mxu0
        %v1902 = vadd.f32 %v1679, %v1901
        %v1903 = vpop.f32.mrb[0].mxu0
        %v1904 = vadd.f32 %v1675, %v1903
        %v1905 = vpop.f32.mrb[0].mxu0
        %v1906 = vadd.f32 %v1679, %v1905
        %1907 = vmatprep.mubr.bf16.mxu0 0
        %1908 = vmatmul.mubr.bf16.gmra.mrb[0].mxu0 %v1628
        %v1909 = vpop.f32.mrb[0].mxu0
        %v1910 = vadd.f32 %v1675, %v1909
        %v1911 = vpop.f32.mrb[0].mxu0
        %v1912 = vadd.f32 %v1679, %v1911
        %v1913 = vpop.f32.mrb[0].mxu0
        %v1914 = vadd.f32 %v1675, %v1913
        %v1915 = vpop.f32.mrb[0].mxu0
        %v1916 = vadd.f32 %v1679, %v1915
        %1917 = vmatprep.mubr.bf16.mxu0 0
        %1918 = vmatmul.mubr.bf16.gmra.mrb[0].mxu0 %v1629
        %v1919 = vpop.f32.mrb[0].mxu0
        %v1920 = vadd.f32 %v1675, %v1919
        %v1921 = vpop.f32.mrb[0].mxu0
        %v1922 = vadd.f32 %v1679, %v1921
        %v1923 = vpop.f32.mrb[0].mxu0
        %v1924 = vadd.f32 %v1675, %v1923
        %v1925 = vpop.f32.mrb[0].mxu0
        %v1926 = vadd.f32 %v1679, %v1925
        %1927 = vmatprep.mubr.bf16.mxu0 0
        %1928 = vmatmul.mubr.bf16.gmra.mrb[0].mxu0 %v1630
        %v1929 = vpop.f32.mrb[0].mxu0
        %v1930 = vadd.f32 %v1675, %v1929
        %v1931 = vpop.f32.mrb[0].mxu0
        %v1932 = vadd.f32 %v1679, %v1931
        %v1933 = vpop.f32.mrb[0].mxu0
        %v1934 = vadd.f32 %v1675, %v1933
        %v1935 = vpop.f32.mrb[0].mxu0
        %v1936 = vadd.f32 %v1679, %v1935
        %1937 = vmatprep.mubr.bf16.mxu0 0
        %1938 = vmatmul.mubr.bf16.gmra.mrb[0].mxu0 %v1631
        %v1939 = vpop.f32.mrb[0].mxu0
        %v1940 = vadd.f32 %v1675, %v1939
        %v1941 = vpop.f32.mrb[0].mxu0
        %v1942 = vadd.f32 %v1679, %v1941
        %v1943 = vpop.f32.mrb[0].mxu0
        %v1944 = vadd.f32 %v1675, %v1943
        %v1945 = vpop.f32.mrb[0].mxu0
        %v1946 = vadd.f32 %v1679, %v1945
        %1947 = vmatprep.mubr.bf16.mxu0 0
        %1948 = vmatmul.mubr.bf16.gmra.mrb[0].mxu0 %v1632
        %v1949 = vpop.f32.mrb[0].mxu0
        %v1950 = vadd.f32 %v1675, %v1949
        %v1951 = vpop.f32.mrb[0].mxu0
        %v1952 = vadd.f32 %v1679, %v1951
        %v1953 = vpop.f32.mrb[0].mxu0
        %v1954 = vadd.f32 %v1675, %v1953
        %v1955 = vpop.f32.mrb[0].mxu0
        %v1956 = vadd.f32 %v1679, %v1955
        %1957 = vmatprep.mubr.bf16.mxu0 0
        %1958 = vmatmul.mubr.bf16.gmra.mrb[0].mxu0 %v1633
        %v1959 = vpop.f32.mrb[0].mxu0
        %v1960 = vadd.f32 %v1675, %v1959
        %v1961 = vpop.f32.mrb[0].mxu0
        %v1962 = vadd.f32 %v1679, %v1961
        %v1963 = vpop.f32.mrb[0].mxu0
        %v1964 = vadd.f32 %v1675, %v1963
        %v1965 = vpop.f32.mrb[0].mxu0
        %v1966 = vadd.f32 %v1679, %v1965
        %1967 = vmatprep.mubr.bf16.mxu0 0
        %1968 = vmatmul.mubr.bf16.gmra.mrb[0].mxu0 %v1634
        %v1969 = vpop.f32.mrb[0].mxu0
        %v1970 = vadd.f32 %v1675, %v1969
        %v1971 = vpop.f32.mrb[0].mxu0
        %v1972 = vadd.f32 %v1679, %v1971
        %v1973 = vpop.f32.mrb[0].mxu0
        %v1974 = vadd.f32 %v1675, %v1973
        %v1975 = vpop.f32.mrb[0].mxu0
        %v1976 = vadd.f32 %v1679, %v1975
        %1977 = vmatprep.mubr.bf16.mxu0 0
        %1978 = vmatmul.mubr.bf16.gmra.mrb[0].mxu0 %v1635
        %v1979 = vpop.f32.mrb[0].mxu0
        %v1980 = vadd.f32 %v1675, %v1979
        %v1981 = vpop.f32.mrb[0].mxu0
        %v1982 = vadd.f32 %v1679, %v1981
        %v1983 = vpop.f32.mrb[0].mxu0
        %v1984 = vadd.f32 %v1675, %v1983
        %v1985 = vpop.f32.mrb[0].mxu0
        %v1986 = vadd.f32 %v1679, %v1985
        %1987 = vmatprep.mubr.bf16.mxu0 0
        %1988 = vmatmul.mubr.bf16.gmra.mrb[0].mxu0 %v1636
        %v1989 = vpop.f32.mrb[0].mxu0
        %v1990 = vadd.f32 %v1675, %v1989
        %v1991 = vpop.f32.mrb[0].mxu0
        %v1992 = vadd.f32 %v1679, %v1991
        %v1993 = vpop.f32.mrb[0].mxu0
        %v1994 = vadd.f32 %v1675, %v1993
        %v1995 = vpop.f32.mrb[0].mxu0
        %v1996 = vadd.f32 %v1679, %v1995
        %1997 = vmatprep.mubr.bf16.mxu0 0
        %1998 = vmatmul.mubr.bf16.gmra.mrb[0].mxu0 %v1637
        %v1999 = vpop.f32.mrb[0].mxu0
        %v2000 = vadd.f32 %v1675, %v1999
        %v2001 = vpop.f32.mrb[0].mxu0
        %v2002 = vadd.f32 %v1679, %v2001
        %v2003 = vpop.f32.mrb[0].mxu0
        %v2004 = vadd.f32 %v1675, %v2003
        %v2005 = vpop.f32.mrb[0].mxu0
        %v2006 = vadd.f32 %v1679, %v2005
        %2007 = vdwg.mxu0
        %2008 = vmatprep.subr.bf16.mxu0 0
        %2009 = vmatpush1.bf16.msra.mxu0 %v1769
        %2010 = vmatprep.subr.bf16.mxu0 0
        %2011 = vmatpush1.bf16.msra.mxu0 %v1772
        %2012 = vmatprep.subr.bf16.mxu0 0
        %2013 = vmatpush1.bf16.msra.mxu0 %v1775
        %2014 = vmatprep.subr.bf16.mxu0 0
        %2015 = vmatpush1.bf16.msra.mxu0 %v1778
        %2016 = vmatprep.subr.bf16.mxu0 0
        %2017 = vmatpush1.bf16.msra.mxu0 %v1781
        %2018 = vmatprep.subr.bf16.mxu0 0
        %2019 = vmatpush1.bf16.msra.mxu0 %v1784
        %2020 = vmatprep.subr.bf16.mxu0 0
        %2021 = vmatpush1.bf16.msra.mxu0 %v1787
        %2022 = vmatprep.subr.bf16.mxu0 0
        %2023 = vmatpush1.bf16.msra.mxu0 %v1790
        %2024 = vmatprep.subr.bf16.mxu0 0
        %2025 = vmatpush1.bf16.msra.mxu0 0
        %2026 = vmatprep.subr.bf16.mxu0 0
        %2027 = vmatpush1.bf16.msra.mxu0 0
        %2028 = vmatprep.subr.bf16.mxu0 0
        %2029 = vmatpush1.bf16.msra.mxu0 0
        %2030 = vmatprep.subr.bf16.mxu0 0
        %2031 = vmatpush1.bf16.msra.mxu0 0
        %2032 = vmatprep.subr.bf16.mxu0 0
        %2033 = vmatpush1.bf16.msra.mxu0 0
        %2034 = vmatprep.subr.bf16.mxu0 0
        %2035 = vmatpush1.bf16.msra.mxu0 0
        %2036 = vmatprep.subr.bf16.mxu0 0
        %2037 = vmatpush1.bf16.msra.mxu0 0
        %2038 = vmatprep.subr.bf16.mxu0 0
        %2039 = vmatpush1.bf16.msra.mxu0 0
        %2040 = vmatprep.mubr.bf16.mxu0 0
        %2041 = vmatmul.mubr.bf16.gmra.mrb[0].mxu0 %v1622
        %v2042 = vpop.f32.mrb[0].mxu0
        %v2043 = vadd.f32 %v1683, %v2042
        %v2044 = vpop.f32.mrb[0].mxu0
        %v2045 = vpop.f32.mrb[0].mxu0
        %v2046 = vadd.f32 %v1683, %v2045
        %v2047 = vpop.f32.mrb[0].mxu0
        %2048 = vmatprep.mubr.bf16.mxu0 0
        %2049 = vmatmul.mubr.bf16.gmra.mrb[0].mxu0 %v1623
        %v2050 = vpop.f32.mrb[0].mxu0
        %v2051 = vadd.f32 %v1683, %v2050
        %v2052 = vpop.f32.mrb[0].mxu0
        %v2053 = vpop.f32.mrb[0].mxu0
        %v2054 = vadd.f32 %v1683, %v2053
        %v2055 = vpop.f32.mrb[0].mxu0
        %2056 = vmatprep.mubr.bf16.mxu0 0
        %2057 = vmatmul.mubr.bf16.gmra.mrb[0].mxu0 %v1624
        %v2058 = vpop.f32.mrb[0].mxu0
        %v2059 = vadd.f32 %v1683, %v2058
        %v2060 = vpop.f32.mrb[0].mxu0
        %v2061 = vpop.f32.mrb[0].mxu0
        %v2062 = vadd.f32 %v1683, %v2061
        %v2063 = vpop.f32.mrb[0].mxu0
        %2064 = vmatprep.mubr.bf16.mxu0 0
        %2065 = vmatmul.mubr.bf16.gmra.mrb[0].mxu0 %v1625
        %v2066 = vpop.f32.mrb[0].mxu0
        %v2067 = vadd.f32 %v1683, %v2066
        %v2068 = vpop.f32.mrb[0].mxu0
        %v2069 = vpop.f32.mrb[0].mxu0
        %v2070 = vadd.f32 %v1683, %v2069
        %v2071 = vpop.f32.mrb[0].mxu0
        %2072 = vmatprep.mubr.bf16.mxu0 0
        %2073 = vmatmul.mubr.bf16.gmra.mrb[0].mxu0 %v1626
        %v2074 = vpop.f32.mrb[0].mxu0
        %v2075 = vadd.f32 %v1683, %v2074
        %v2076 = vpop.f32.mrb[0].mxu0
        %v2077 = vpop.f32.mrb[0].mxu0
        %v2078 = vadd.f32 %v1683, %v2077
        %v2079 = vpop.f32.mrb[0].mxu0
        %2080 = vmatprep.mubr.bf16.mxu0 0
        %2081 = vmatmul.mubr.bf16.gmra.mrb[0].mxu0 %v1627
        %v2082 = vpop.f32.mrb[0].mxu0
        %v2083 = vadd.f32 %v1683, %v2082
        %v2084 = vpop.f32.mrb[0].mxu0
        %v2085 = vpop.f32.mrb[0].mxu0
        %v2086 = vadd.f32 %v1683, %v2085
        %v2087 = vpop.f32.mrb[0].mxu0
        %2088 = vmatprep.mubr.bf16.mxu0 0
        %2089 = vmatmul.mubr.bf16.gmra.mrb[0].mxu0 %v1628
        %v2090 = vpop.f32.mrb[0].mxu0
        %v2091 = vadd.f32 %v1683, %v2090
        %v2092 = vpop.f32.mrb[0].mxu0
        %v2093 = vpop.f32.mrb[0].mxu0
        %v2094 = vadd.f32 %v1683, %v2093
        %v2095 = vpop.f32.mrb[0].mxu0
        %2096 = vmatprep.mubr.bf16.mxu0 0
        %2097 = vmatmul.mubr.bf16.gmra.mrb[0].mxu0 %v1629
        %v2098 = vpop.f32.mrb[0].mxu0
        %v2099 = vadd.f32 %v1683, %v2098
        %v2100 = vpop.f32.mrb[0].mxu0
        %v2101 = vpop.f32.mrb[0].mxu0
        %v2102 = vadd.f32 %v1683, %v2101
        %v2103 = vpop.f32.mrb[0].mxu0
        %2104 = vmatprep.mubr.bf16.mxu0 0
        %2105 = vmatmul.mubr.bf16.gmra.mrb[0].mxu0 %v1630
        %v2106 = vpop.f32.mrb[0].mxu0
        %v2107 = vadd.f32 %v1683, %v2106
        %v2108 = vpop.f32.mrb[0].mxu0
        %v2109 = vpop.f32.mrb[0].mxu0
        %v2110 = vadd.f32 %v1683, %v2109
        %v2111 = vpop.f32.mrb[0].mxu0
        %2112 = vmatprep.mubr.bf16.mxu0 0
        %2113 = vmatmul.mubr.bf16.gmra.mrb[0].mxu0 %v1631
        %v2114 = vpop.f32.mrb[0].mxu0
        %v2115 = vadd.f32 %v1683, %v2114
        %v2116 = vpop.f32.mrb[0].mxu0
        %v2117 = vpop.f32.mrb[0].mxu0
        %v2118 = vadd.f32 %v1683, %v2117
        %v2119 = vpop.f32.mrb[0].mxu0
        %2120 = vmatprep.mubr.bf16.mxu0 0
        %2121 = vmatmul.mubr.bf16.gmra.mrb[0].mxu0 %v1632
        %v2122 = vpop.f32.mrb[0].mxu0
        %v2123 = vadd.f32 %v1683, %v2122
        %v2124 = vpop.f32.mrb[0].mxu0
        %v2125 = vpop.f32.mrb[0].mxu0
        %v2126 = vadd.f32 %v1683, %v2125
        %v2127 = vpop.f32.mrb[0].mxu0
        %2128 = vmatprep.mubr.bf16.mxu0 0
        %2129 = vmatmul.mubr.bf16.gmra.mrb[0].mxu0 %v1633
        %v2130 = vpop.f32.mrb[0].mxu0
        %v2131 = vadd.f32 %v1683, %v2130
        %v2132 = vpop.f32.mrb[0].mxu0
        %v2133 = vpop.f32.mrb[0].mxu0
        %v2134 = vadd.f32 %v1683, %v2133
        %v2135 = vpop.f32.mrb[0].mxu0
        %2136 = vmatprep.mubr.bf16.mxu0 0
        %2137 = vmatmul.mubr.bf16.gmra.mrb[0].mxu0 %v1634
        %v2138 = vpop.f32.mrb[0].mxu0
        %v2139 = vadd.f32 %v1683, %v2138
        %v2140 = vpop.f32.mrb[0].mxu0
        %v2141 = vpop.f32.mrb[0].mxu0
        %v2142 = vadd.f32 %v1683, %v2141
        %v2143 = vpop.f32.mrb[0].mxu0
        %2144 = vmatprep.mubr.bf16.mxu0 0
        %2145 = vmatmul.mubr.bf16.gmra.mrb[0].mxu0 %v1635
        %v2146 = vpop.f32.mrb[0].mxu0
        %v2147 = vadd.f32 %v1683, %v2146
        %v2148 = vpop.f32.mrb[0].mxu0
        %v2149 = vpop.f32.mrb[0].mxu0
        %v2150 = vadd.f32 %v1683, %v2149
        %v2151 = vpop.f32.mrb[0].mxu0
        %2152 = vmatprep.mubr.bf16.mxu0 0
        %2153 = vmatmul.mubr.bf16.gmra.mrb[0].mxu0 %v1636
        %v2154 = vpop.f32.mrb[0].mxu0
        %v2155 = vadd.f32 %v1683, %v2154
        %v2156 = vpop.f32.mrb[0].mxu0
        %v2157 = vpop.f32.mrb[0].mxu0
        %v2158 = vadd.f32 %v1683, %v2157
        %v2159 = vpop.f32.mrb[0].mxu0
        %2160 = vmatprep.mubr.bf16.mxu0 0
        %2161 = vmatmul.mubr.bf16.gmra.mrb[0].mxu0 %v1637
        %v2162 = vpop.f32.mrb[0].mxu0
        %v2163 = vadd.f32 %v1683, %v2162
        %v2164 = vpop.f32.mrb[0].mxu0
        %v2165 = vpop.f32.mrb[0].mxu0
        %v2166 = vadd.f32 %v1683, %v2165
        %v2167 = vpop.f32.mrb[0].mxu0
        %2168 = vdwg.mxu0
        %v2169 = vpack.c.bf16 %v1854, %v1850
        %v2170 = vpack.c.bf16 %v1856, %v1852
        %v2171 = vpack.c.bf16 %v2046, %v2043
        %v2172 = vpack.c.bf16 %v1864, %v1860
        %v2173 = vpack.c.bf16 %v1866, %v1862
        %v2174 = vpack.c.bf16 %v2054, %v2051
        %v2175 = vpack.c.bf16 %v1874, %v1870
        %v2176 = vpack.c.bf16 %v1876, %v1872
        %v2177 = vpack.c.bf16 %v2062, %v2059
        %v2178 = vpack.c.bf16 %v1884, %v1880
        %v2179 = vpack.c.bf16 %v1886, %v1882
        %v2180 = vpack.c.bf16 %v2070, %v2067
        %v2181 = vpack.c.bf16 %v1894, %v1890
        %v2182 = vpack.c.bf16 %v1896, %v1892
        %v2183 = vpack.c.bf16 %v2078, %v2075
        %v2184 = vpack.c.bf16 %v1904, %v1900
        %v2185 = vpack.c.bf16 %v1906, %v1902
        %v2186 = vpack.c.bf16 %v2086, %v2083
        %v2187 = vpack.c.bf16 %v1914, %v1910
        %v2188 = vpack.c.bf16 %v1916, %v1912
        %v2189 = vpack.c.bf16 %v2094, %v2091
        %v2190 = vpack.c.bf16 %v1924, %v1920
        %v2191 = vpack.c.bf16 %v1926, %v1922
        %v2192 = vpack.c.bf16 %v2102, %v2099
        %v2193 = vpack.c.bf16 %v1934, %v1930
        %v2194 = vpack.c.bf16 %v1936, %v1932
        %v2195 = vpack.c.bf16 %v2110, %v2107
        %v2196 = vpack.c.bf16 %v1944, %v1940
        %v2197 = vpack.c.bf16 %v1946, %v1942
        %v2198 = vpack.c.bf16 %v2118, %v2115
        %v2199 = vpack.c.bf16 %v1954, %v1950
        %v2200 = vpack.c.bf16 %v1956, %v1952
        %v2201 = vpack.c.bf16 %v2126, %v2123
        %v2202 = vpack.c.bf16 %v1964, %v1960
        %v2203 = vpack.c.bf16 %v1966, %v1962
        %v2204 = vpack.c.bf16 %v2134, %v2131
        %v2205 = vpack.c.bf16 %v1974, %v1970
        %v2206 = vpack.c.bf16 %v1976, %v1972
        %v2207 = vpack.c.bf16 %v2142, %v2139
        %v2208 = vpack.c.bf16 %v1984, %v1980
        %v2209 = vpack.c.bf16 %v1986, %v1982
        %v2210 = vpack.c.bf16 %v2150, %v2147
        %v2211 = vpack.c.bf16 %v1994, %v1990
        %v2212 = vpack.c.bf16 %v1996, %v1992
        %v2213 = vpack.c.bf16 %v2158, %v2155
        %v2214 = vpack.c.bf16 %v2004, %v2000
        %v2215 = vpack.c.bf16 %v2006, %v2002
        %v2216 = vpack.c.bf16 %v2166, %v2163
        %v2217 = vld [vmem:[%s840] sm:$0x1]
        %v2219 = vlaneseq
        %v2220 = vshrl.u32 %v2219, 7
        %v2221 = vsub.s32 0, %v2220
        %v2222 = vrot.slane %v2217, %v2221
        %vm2224 = vcmask 261120
        %v2226 = vsel %vm2224, %v2169, 0
        %v2229 = vsel %vm2224, %v2172, 0
        %v2232 = vsel %vm2224, %v2175, 0
        %v2235 = vsel %vm2224, %v2178, 0
        %v2238 = vsel %vm2224, %v2181, 0
        %v2241 = vsel %vm2224, %v2184, 0
        %v2244 = vsel %vm2224, %v2187, 0
        %v2247 = vsel %vm2224, %v2190, 0
        %v2250 = vsel %vm2224, %v2170, 0
        %v2253 = vsel %vm2224, %v2173, 0
        %v2256 = vsel %vm2224, %v2176, 0
        %v2259 = vsel %vm2224, %v2179, 0
        %v2262 = vsel %vm2224, %v2182, 0
        %v2265 = vsel %vm2224, %v2185, 0
        %v2268 = vsel %vm2224, %v2188, 0
        %v2271 = vsel %vm2224, %v2191, 0
        %2273 = vmatprep.subr.bf16.mxu0 0
        %2274 = vmatpush1.bf16.xpose.msra.mxu0 %v2250
        %2275 = vmatprep.subr.bf16.mxu0 0
        %2276 = vmatpush1.bf16.xpose.msra.mxu0 %v2253
        %2277 = vmatprep.subr.bf16.mxu0 0
        %2278 = vmatpush1.bf16.xpose.msra.mxu0 %v2256
        %2279 = vmatprep.subr.bf16.mxu0 0
        %2280 = vmatpush1.bf16.xpose.msra.mxu0 %v2259
        %2281 = vmatprep.subr.bf16.mxu0 0
        %2282 = vmatpush1.bf16.xpose.msra.mxu0 %v2262
        %2283 = vmatprep.subr.bf16.mxu0 0
        %2284 = vmatpush1.bf16.xpose.msra.mxu0 %v2265
        %2285 = vmatprep.subr.bf16.mxu0 0
        %2286 = vmatpush1.bf16.xpose.msra.mxu0 %v2268
        %2287 = vmatprep.subr.bf16.mxu0 0
        %2288 = vmatpush1.bf16.xpose.msra.mxu0 %v2271
        %2289 = vmatprep.subr.bf16.mxu0 0
        %2290 = vmatpush1.bf16.xpose.msra.mxu0 0
        %2291 = vmatprep.subr.bf16.mxu0 0
        %2292 = vmatpush1.bf16.xpose.msra.mxu0 0
        %2293 = vmatprep.subr.bf16.mxu0 0
        %2294 = vmatpush1.bf16.xpose.msra.mxu0 0
        %2295 = vmatprep.subr.bf16.mxu0 0
        %2296 = vmatpush1.bf16.xpose.msra.mxu0 0
        %2297 = vmatprep.subr.bf16.mxu0 0
        %2298 = vmatpush1.bf16.xpose.msra.mxu0 0
        %2299 = vmatprep.subr.bf16.mxu0 0
        %2300 = vmatpush1.bf16.xpose.msra.mxu0 0
        %2301 = vmatprep.subr.bf16.mxu0 0
        %2302 = vmatpush1.bf16.xpose.msra.mxu0 0
        %2303 = vmatprep.subr.bf16.mxu0 0
        %2304 = vmatpush1.bf16.xpose.msra.mxu0 0
        %2305 = vmatprep.mubr.bf16.mxu0 0
        %2306 = vmatmul.mubr.bf16.gmra.mrb[0].mxu0 %v2226
        %v2307 = vpop.f32.mrb[0].mxu0
        %v2308 = vadd.f32 %v2222, %v2307
        %v2309 = vpop.f32.mrb[0].mxu0
        %v2310 = vpop.f32.mrb[0].mxu0
        %v2311 = vadd.f32 %v2222, %v2310
        %v2312 = vpop.f32.mrb[0].mxu0
        %2313 = vmatprep.mubr.bf16.mxu0 0
        %2314 = vmatmul.mubr.bf16.gmra.mrb[0].mxu0 %v2229
        %v2315 = vpop.f32.mrb[0].mxu0
        %v2316 = vadd.f32 %v2222, %v2315
        %v2317 = vpop.f32.mrb[0].mxu0
        %v2318 = vpop.f32.mrb[0].mxu0
        %v2319 = vadd.f32 %v2222, %v2318
        %v2320 = vpop.f32.mrb[0].mxu0
        %2321 = vmatprep.mubr.bf16.mxu0 0
        %2322 = vmatmul.mubr.bf16.gmra.mrb[0].mxu0 %v2232
        %v2323 = vpop.f32.mrb[0].mxu0
        %v2324 = vadd.f32 %v2222, %v2323
        %v2325 = vpop.f32.mrb[0].mxu0
        %v2326 = vpop.f32.mrb[0].mxu0
        %v2327 = vadd.f32 %v2222, %v2326
        %v2328 = vpop.f32.mrb[0].mxu0
        %2329 = vmatprep.mubr.bf16.mxu0 0
        %2330 = vmatmul.mubr.bf16.gmra.mrb[0].mxu0 %v2235
        %v2331 = vpop.f32.mrb[0].mxu0
        %v2332 = vadd.f32 %v2222, %v2331
        %v2333 = vpop.f32.mrb[0].mxu0
        %v2334 = vpop.f32.mrb[0].mxu0
        %v2335 = vadd.f32 %v2222, %v2334
        %v2336 = vpop.f32.mrb[0].mxu0
        %2337 = vmatprep.mubr.bf16.mxu0 0
        %2338 = vmatmul.mubr.bf16.gmra.mrb[0].mxu0 %v2238
        %v2339 = vpop.f32.mrb[0].mxu0
        %v2340 = vadd.f32 %v2222, %v2339
        %v2341 = vpop.f32.mrb[0].mxu0
        %v2342 = vpop.f32.mrb[0].mxu0
        %v2343 = vadd.f32 %v2222, %v2342
        %v2344 = vpop.f32.mrb[0].mxu0
        %2345 = vmatprep.mubr.bf16.mxu0 0
        %2346 = vmatmul.mubr.bf16.gmra.mrb[0].mxu0 %v2241
        %v2347 = vpop.f32.mrb[0].mxu0
        %v2348 = vadd.f32 %v2222, %v2347
        %v2349 = vpop.f32.mrb[0].mxu0
        %v2350 = vpop.f32.mrb[0].mxu0
        %v2351 = vadd.f32 %v2222, %v2350
        %v2352 = vpop.f32.mrb[0].mxu0
        %2353 = vmatprep.mubr.bf16.mxu0 0
        %2354 = vmatmul.mubr.bf16.gmra.mrb[0].mxu0 %v2244
        %v2355 = vpop.f32.mrb[0].mxu0
        %v2356 = vadd.f32 %v2222, %v2355
        %v2357 = vpop.f32.mrb[0].mxu0
        %v2358 = vpop.f32.mrb[0].mxu0
        %v2359 = vadd.f32 %v2222, %v2358
        %v2360 = vpop.f32.mrb[0].mxu0
        %2361 = vmatprep.mubr.bf16.mxu0 0
        %2362 = vmatmul.mubr.bf16.gmra.mrb[0].mxu0 %v2247
        %v2363 = vpop.f32.mrb[0].mxu0
        %v2364 = vadd.f32 %v2222, %v2363
        %v2365 = vpop.f32.mrb[0].mxu0
        %v2366 = vpop.f32.mrb[0].mxu0
        %v2367 = vadd.f32 %v2222, %v2366
        %v2368 = vpop.f32.mrb[0].mxu0
        %2369 = vdwg.mxu0
        %2370 = vmax.xlane.f32.xlu0 %v2308
        %v2371 = vpop.xlane.xlu0 %2370
        %2372 = vmax.xlane.f32.xlu0 %v2311
        %v2373 = vpop.xlane.xlu0 %2372
        %2374 = vmax.xlane.f32.xlu0 %v2316
        %v2375 = vpop.xlane.xlu0 %2374
        %2376 = vmax.xlane.f32.xlu0 %v2319
        %v2377 = vpop.xlane.xlu0 %2376
        %2378 = vmax.xlane.f32.xlu0 %v2324
        %v2379 = vpop.xlane.xlu0 %2378
        %2380 = vmax.xlane.f32.xlu0 %v2327
        %v2381 = vpop.xlane.xlu0 %2380
        %2382 = vmax.xlane.f32.xlu0 %v2332
        %v2383 = vpop.xlane.xlu0 %2382
        %2384 = vmax.xlane.f32.xlu0 %v2335
        %v2385 = vpop.xlane.xlu0 %2384
        %2386 = vmax.xlane.f32.xlu0 %v2340
        %v2387 = vpop.xlane.xlu0 %2386
        %2388 = vmax.xlane.f32.xlu0 %v2343
        %v2389 = vpop.xlane.xlu0 %2388
        %2390 = vmax.xlane.f32.xlu0 %v2348
        %v2391 = vpop.xlane.xlu0 %2390
        %2392 = vmax.xlane.f32.xlu0 %v2351
        %v2393 = vpop.xlane.xlu0 %2392
        %2394 = vmax.xlane.f32.xlu0 %v2356
        %v2395 = vpop.xlane.xlu0 %2394
        %2396 = vmax.xlane.f32.xlu0 %v2359
        %v2397 = vpop.xlane.xlu0 %2396
        %2398 = vmax.xlane.f32.xlu0 %v2364
        %v2399 = vpop.xlane.xlu0 %2398
        %2400 = vmax.xlane.f32.xlu0 %v2367
        %v2401 = vpop.xlane.xlu0 %2400
        %v2402 = vsub.f32 %v2308, %v2371
        %v2403 = vsub.f32 %v2311, %v2373
        %v2404 = vsub.f32 %v2316, %v2375
        %v2405 = vsub.f32 %v2319, %v2377
        %v2406 = vsub.f32 %v2324, %v2379
        %v2407 = vsub.f32 %v2327, %v2381
        %v2408 = vsub.f32 %v2332, %v2383
        %v2409 = vsub.f32 %v2335, %v2385
        %v2410 = vsub.f32 %v2340, %v2387
        %v2411 = vsub.f32 %v2343, %v2389
        %v2412 = vsub.f32 %v2348, %v2391
        %v2413 = vsub.f32 %v2351, %v2393
        %v2414 = vsub.f32 %v2356, %v2395
        %v2415 = vsub.f32 %v2359, %v2397
        %v2416 = vsub.f32 %v2364, %v2399
        %v2417 = vsub.f32 %v2367, %v2401
        %v2418 = vmul.f32 %v2402, 1.442695
        %v2419 = vpow.pop %v2418
        %v2420 = vmul.f32 %v2403, 1.442695
        %v2421 = vpow.pop %v2420
        %v2422 = vmul.f32 %v2404, 1.442695
        %v2423 = vpow.pop %v2422
        %v2424 = vmul.f32 %v2405, 1.442695
        %v2425 = vpow.pop %v2424
        %v2426 = vmul.f32 %v2406, 1.442695
        %v2427 = vpow.pop %v2426
        %v2428 = vmul.f32 %v2407, 1.442695
        %v2429 = vpow.pop %v2428
        %v2430 = vmul.f32 %v2408, 1.442695
        %v2431 = vpow.pop %v2430
        %v2432 = vmul.f32 %v2409, 1.442695
        %v2433 = vpow.pop %v2432
        %v2434 = vmul.f32 %v2410, 1.442695
        %v2435 = vpow.pop %v2434
        %v2436 = vmul.f32 %v2411, 1.442695
        %v2437 = vpow.pop %v2436
        %v2438 = vmul.f32 %v2412, 1.442695
        %v2439 = vpow.pop %v2438
        %v2440 = vmul.f32 %v2413, 1.442695
        %v2441 = vpow.pop %v2440
        %v2442 = vmul.f32 %v2414, 1.442695
        %v2443 = vpow.pop %v2442
        %v2444 = vmul.f32 %v2415, 1.442695
        %v2445 = vpow.pop %v2444
        %v2446 = vmul.f32 %v2416, 1.442695
        %v2447 = vpow.pop %v2446
        %v2448 = vmul.f32 %v2417, 1.442695
        %v2449 = vpow.pop %v2448
        %2450 = vadd.xlane.f32.xlu0 %v2419
        %v2451 = vpop.xlane.xlu0 %2450
        %2452 = vadd.xlane.f32.xlu0 %v2421
        %v2453 = vpop.xlane.xlu0 %2452
        %2454 = vadd.xlane.f32.xlu0 %v2423
        %v2455 = vpop.xlane.xlu0 %2454
        %2456 = vadd.xlane.f32.xlu0 %v2425
        %v2457 = vpop.xlane.xlu0 %2456
        %2458 = vadd.xlane.f32.xlu0 %v2427
        %v2459 = vpop.xlane.xlu0 %2458
        %2460 = vadd.xlane.f32.xlu0 %v2429
        %v2461 = vpop.xlane.xlu0 %2460
        %2462 = vadd.xlane.f32.xlu0 %v2431
        %v2463 = vpop.xlane.xlu0 %2462
        %2464 = vadd.xlane.f32.xlu0 %v2433
        %v2465 = vpop.xlane.xlu0 %2464
        %2466 = vadd.xlane.f32.xlu0 %v2435
        %v2467 = vpop.xlane.xlu0 %2466
        %2468 = vadd.xlane.f32.xlu0 %v2437
        %v2469 = vpop.xlane.xlu0 %2468
        %2470 = vadd.xlane.f32.xlu0 %v2439
        %v2471 = vpop.xlane.xlu0 %2470
        %2472 = vadd.xlane.f32.xlu0 %v2441
        %v2473 = vpop.xlane.xlu0 %2472
        %2474 = vadd.xlane.f32.xlu0 %v2443
        %v2475 = vpop.xlane.xlu0 %2474
        %2476 = vadd.xlane.f32.xlu0 %v2445
        %v2477 = vpop.xlane.xlu0 %2476
        %2478 = vadd.xlane.f32.xlu0 %v2447
        %v2479 = vpop.xlane.xlu0 %2478
        %2480 = vadd.xlane.f32.xlu0 %v2449
        %v2481 = vpop.xlane.xlu0 %2480
        %v2482 = vpack.c.bf16 %v2421, %v2419
        %v2483 = vpack.c.bf16 %v2425, %v2423
        %v2484 = vpack.c.bf16 %v2429, %v2427
        %v2485 = vpack.c.bf16 %v2433, %v2431
        %v2486 = vpack.c.bf16 %v2437, %v2435
        %v2487 = vpack.c.bf16 %v2441, %v2439
        %v2488 = vpack.c.bf16 %v2445, %v2443
        %v2489 = vpack.c.bf16 %v2449, %v2447
        %2490 = vmatprep.subr.bf16.mxu0 0
        %2491 = vmatpush1.bf16.msra.mxu0 %v2171
        %2492 = vmatprep.subr.bf16.mxu0 0
        %2493 = vmatpush1.bf16.msra.mxu0 %v2174
        %2494 = vmatprep.subr.bf16.mxu0 0
        %2495 = vmatpush1.bf16.msra.mxu0 %v2177
        %2496 = vmatprep.subr.bf16.mxu0 0
        %2497 = vmatpush1.bf16.msra.mxu0 %v2180
        %2498 = vmatprep.subr.bf16.mxu0 0
        %2499 = vmatpush1.bf16.msra.mxu0 %v2183
        %2500 = vmatprep.subr.bf16.mxu0 0
        %2501 = vmatpush1.bf16.msra.mxu0 %v2186
        %2502 = vmatprep.subr.bf16.mxu0 0
        %2503 = vmatpush1.bf16.msra.mxu0 %v2189
        %2504 = vmatprep.subr.bf16.mxu0 0
        %2505 = vmatpush1.bf16.msra.mxu0 %v2192
        %2506 = vmatprep.subr.bf16.mxu0 0
        %2507 = vmatpush1.bf16.msra.mxu0 0
        %2508 = vmatprep.subr.bf16.mxu0 0
        %2509 = vmatpush1.bf16.msra.mxu0 0
        %2510 = vmatprep.subr.bf16.mxu0 0
        %2511 = vmatpush1.bf16.msra.mxu0 0
        %2512 = vmatprep.subr.bf16.mxu0 0
        %2513 = vmatpush1.bf16.msra.mxu0 0
        %2514 = vmatprep.subr.bf16.mxu0 0
        %2515 = vmatpush1.bf16.msra.mxu0 0
        %2516 = vmatprep.subr.bf16.mxu0 0
        %2517 = vmatpush1.bf16.msra.mxu0 0
        %2518 = vmatprep.subr.bf16.mxu0 0
        %2519 = vmatpush1.bf16.msra.mxu0 0
        %2520 = vmatprep.subr.bf16.mxu0 0
        %2521 = vmatpush1.bf16.msra.mxu0 0
        %2522 = vmatprep.mubr.bf16.mxu0 0
        %2523 = vmatmul.mubr.bf16.gmra.mrb[0].mxu0 %v2482
        %v2524 = vpop.f32.mrb[0].mxu0
        %v2525 = vadd.f32 0.0, %v2524
        %v2526 = vpop.f32.mrb[0].mxu0
        %v2527 = vpop.f32.mrb[0].mxu0
        %v2528 = vadd.f32 0.0, %v2527
        %v2529 = vpop.f32.mrb[0].mxu0
        %2530 = vmatprep.mubr.bf16.mxu0 0
        %2531 = vmatmul.mubr.bf16.gmra.mrb[0].mxu0 %v2483
        %v2532 = vpop.f32.mrb[0].mxu0
        %v2533 = vadd.f32 0.0, %v2532
        %v2534 = vpop.f32.mrb[0].mxu0
        %v2535 = vpop.f32.mrb[0].mxu0
        %v2536 = vadd.f32 0.0, %v2535
        %v2537 = vpop.f32.mrb[0].mxu0
        %2538 = vmatprep.mubr.bf16.mxu0 0
        %2539 = vmatmul.mubr.bf16.gmra.mrb[0].mxu0 %v2484
        %v2540 = vpop.f32.mrb[0].mxu0
        %v2541 = vadd.f32 0.0, %v2540
        %v2542 = vpop.f32.mrb[0].mxu0
        %v2543 = vpop.f32.mrb[0].mxu0
        %v2544 = vadd.f32 0.0, %v2543
        %v2545 = vpop.f32.mrb[0].mxu0
        %2546 = vmatprep.mubr.bf16.mxu0 0
        %2547 = vmatmul.mubr.bf16.gmra.mrb[0].mxu0 %v2485
        %v2548 = vpop.f32.mrb[0].mxu0
        %v2549 = vadd.f32 0.0, %v2548
        %v2550 = vpop.f32.mrb[0].mxu0
        %v2551 = vpop.f32.mrb[0].mxu0
        %v2552 = vadd.f32 0.0, %v2551
        %v2553 = vpop.f32.mrb[0].mxu0
        %2554 = vmatprep.mubr.bf16.mxu0 0
        %2555 = vmatmul.mubr.bf16.gmra.mrb[0].mxu0 %v2486
        %v2556 = vpop.f32.mrb[0].mxu0
        %v2557 = vadd.f32 0.0, %v2556
        %v2558 = vpop.f32.mrb[0].mxu0
        %v2559 = vpop.f32.mrb[0].mxu0
        %v2560 = vadd.f32 0.0, %v2559
        %v2561 = vpop.f32.mrb[0].mxu0
        %2562 = vmatprep.mubr.bf16.mxu0 0
        %2563 = vmatmul.mubr.bf16.gmra.mrb[0].mxu0 %v2487
        %v2564 = vpop.f32.mrb[0].mxu0
        %v2565 = vadd.f32 0.0, %v2564
        %v2566 = vpop.f32.mrb[0].mxu0
        %v2567 = vpop.f32.mrb[0].mxu0
        %v2568 = vadd.f32 0.0, %v2567
        %v2569 = vpop.f32.mrb[0].mxu0
        %2570 = vmatprep.mubr.bf16.mxu0 0
        %2571 = vmatmul.mubr.bf16.gmra.mrb[0].mxu0 %v2488
        %v2572 = vpop.f32.mrb[0].mxu0
        %v2573 = vadd.f32 0.0, %v2572
        %v2574 = vpop.f32.mrb[0].mxu0
        %v2575 = vpop.f32.mrb[0].mxu0
        %v2576 = vadd.f32 0.0, %v2575
        %v2577 = vpop.f32.mrb[0].mxu0
        %2578 = vmatprep.mubr.bf16.mxu0 0
        %2579 = vmatmul.mubr.bf16.gmra.mrb[0].mxu0 %v2489
        %v2580 = vpop.f32.mrb[0].mxu0
        %v2581 = vadd.f32 0.0, %v2580
        %v2582 = vpop.f32.mrb[0].mxu0
        %v2583 = vpop.f32.mrb[0].mxu0
        %v2584 = vadd.f32 0.0, %v2583
        %v2585 = vpop.f32.mrb[0].mxu0
        %2586 = vdwg.mxu0
        %v2587 = vrcp.pop %v2451
        %v2588 = vrcp.pop %v2453
        %v2589 = vrcp.pop %v2455
        %v2590 = vrcp.pop %v2457
        %v2591 = vrcp.pop %v2459
        %v2592 = vrcp.pop %v2461
        %v2593 = vrcp.pop %v2463
        %v2594 = vrcp.pop %v2465
        %v2595 = vrcp.pop %v2467
        %v2596 = vrcp.pop %v2469
        %v2597 = vrcp.pop %v2471
        %v2598 = vrcp.pop %v2473
        %v2599 = vrcp.pop %v2475
        %v2600 = vrcp.pop %v2477
        %v2601 = vrcp.pop %v2479
        %v2602 = vrcp.pop %v2481
        %v2603 = vmul.f32 %v2525, %v2587
        %v2604 = vmul.f32 %v2528, %v2588
        %v2605 = vmul.f32 %v2533, %v2589
        %v2606 = vmul.f32 %v2536, %v2590
        %v2607 = vmul.f32 %v2541, %v2591
        %v2608 = vmul.f32 %v2544, %v2592
        %v2609 = vmul.f32 %v2549, %v2593
        %v2610 = vmul.f32 %v2552, %v2594
        %v2611 = vmul.f32 %v2557, %v2595
        %v2612 = vmul.f32 %v2560, %v2596
        %v2613 = vmul.f32 %v2565, %v2597
        %v2614 = vmul.f32 %v2568, %v2598
        %v2615 = vmul.f32 %v2573, %v2599
        %v2616 = vmul.f32 %v2576, %v2600
        %v2617 = vmul.f32 %v2581, %v2601
        %v2618 = vmul.f32 %v2584, %v2602
        %2627 = vrot.lane.b32.xlu0 %v2169, 96
        %v2628 = vpop.permute.xlu0 %2627
        %2629 = vrot.lane.b32.xlu0 %v2172, 96
        %v2630 = vpop.permute.xlu0 %2629
        %2631 = vrot.lane.b32.xlu0 %v2175, 96
        %v2632 = vpop.permute.xlu0 %2631
        %2633 = vrot.lane.b32.xlu0 %v2178, 96
        %v2634 = vpop.permute.xlu0 %2633
        %2635 = vrot.lane.b32.xlu0 %v2181, 96
        %v2636 = vpop.permute.xlu0 %2635
        %2637 = vrot.lane.b32.xlu0 %v2184, 96
        %v2638 = vpop.permute.xlu0 %2637
        %2639 = vrot.lane.b32.xlu0 %v2187, 96
        %v2640 = vpop.permute.xlu0 %2639
        %2641 = vrot.lane.b32.xlu0 %v2190, 96
        %v2642 = vpop.permute.xlu0 %2641
        %2651 = vrot.lane.b32.xlu0 %v2170, 96
        %v2652 = vpop.permute.xlu0 %2651
        %2653 = vrot.lane.b32.xlu0 %v2173, 96
        %v2654 = vpop.permute.xlu0 %2653
        %2655 = vrot.lane.b32.xlu0 %v2176, 96
        %v2656 = vpop.permute.xlu0 %2655
        %2657 = vrot.lane.b32.xlu0 %v2179, 96
        %v2658 = vpop.permute.xlu0 %2657
        %2659 = vrot.lane.b32.xlu0 %v2182, 96
        %v2660 = vpop.permute.xlu0 %2659
        %2661 = vrot.lane.b32.xlu0 %v2185, 96
        %v2662 = vpop.permute.xlu0 %2661
        %2663 = vrot.lane.b32.xlu0 %v2188, 96
        %v2664 = vpop.permute.xlu0 %2663
        %2665 = vrot.lane.b32.xlu0 %v2191, 96
        %v2666 = vpop.permute.xlu0 %2665
        %v2668 = vsel %vm2224, %v2628, 0
        %v2671 = vsel %vm2224, %v2630, 0
        %v2674 = vsel %vm2224, %v2632, 0
        %v2677 = vsel %vm2224, %v2634, 0
        %v2680 = vsel %vm2224, %v2636, 0
        %v2683 = vsel %vm2224, %v2638, 0
        %v2686 = vsel %vm2224, %v2640, 0
        %v2689 = vsel %vm2224, %v2642, 0
        %v2692 = vsel %vm2224, %v2652, 0
        %v2695 = vsel %vm2224, %v2654, 0
        %v2698 = vsel %vm2224, %v2656, 0
        %v2701 = vsel %vm2224, %v2658, 0
        %v2704 = vsel %vm2224, %v2660, 0
        %v2707 = vsel %vm2224, %v2662, 0
        %v2710 = vsel %vm2224, %v2664, 0
        %v2713 = vsel %vm2224, %v2666, 0
        %2715 = vmatprep.subr.bf16.mxu0 0
        %2716 = vmatpush1.bf16.xpose.msra.mxu0 %v2692
        %2717 = vmatprep.subr.bf16.mxu0 0
        %2718 = vmatpush1.bf16.xpose.msra.mxu0 %v2695
        %2719 = vmatprep.subr.bf16.mxu0 0
        %2720 = vmatpush1.bf16.xpose.msra.mxu0 %v2698
        %2721 = vmatprep.subr.bf16.mxu0 0
        %2722 = vmatpush1.bf16.xpose.msra.mxu0 %v2701
        %2723 = vmatprep.subr.bf16.mxu0 0
        %2724 = vmatpush1.bf16.xpose.msra.mxu0 %v2704
        %2725 = vmatprep.subr.bf16.mxu0 0
        %2726 = vmatpush1.bf16.xpose.msra.mxu0 %v2707
        %2727 = vmatprep.subr.bf16.mxu0 0
        %2728 = vmatpush1.bf16.xpose.msra.mxu0 %v2710
        %2729 = vmatprep.subr.bf16.mxu0 0
        %2730 = vmatpush1.bf16.xpose.msra.mxu0 %v2713
        %2731 = vmatprep.subr.bf16.mxu0 0
        %2732 = vmatpush1.bf16.xpose.msra.mxu0 0
        %2733 = vmatprep.subr.bf16.mxu0 0
        %2734 = vmatpush1.bf16.xpose.msra.mxu0 0
        %2735 = vmatprep.subr.bf16.mxu0 0
        %2736 = vmatpush1.bf16.xpose.msra.mxu0 0
        %2737 = vmatprep.subr.bf16.mxu0 0
        %2738 = vmatpush1.bf16.xpose.msra.mxu0 0
        %2739 = vmatprep.subr.bf16.mxu0 0
        %2740 = vmatpush1.bf16.xpose.msra.mxu0 0
        %2741 = vmatprep.subr.bf16.mxu0 0
        %2742 = vmatpush1.bf16.xpose.msra.mxu0 0
        %2743 = vmatprep.subr.bf16.mxu0 0
        %2744 = vmatpush1.bf16.xpose.msra.mxu0 0
        %2745 = vmatprep.subr.bf16.mxu0 0
        %2746 = vmatpush1.bf16.xpose.msra.mxu0 0
        %2747 = vmatprep.mubr.bf16.mxu0 0
        %2748 = vmatmul.mubr.bf16.gmra.mrb[0].mxu0 %v2668
        %v2749 = vpop.f32.mrb[0].mxu0
        %v2750 = vadd.f32 %v2222, %v2749
        %v2751 = vpop.f32.mrb[0].mxu0
        %v2752 = vpop.f32.mrb[0].mxu0
        %v2753 = vadd.f32 %v2222, %v2752
        %v2754 = vpop.f32.mrb[0].mxu0
        %2755 = vmatprep.mubr.bf16.mxu0 0
        %2756 = vmatmul.mubr.bf16.gmra.mrb[0].mxu0 %v2671
        %v2757 = vpop.f32.mrb[0].mxu0
        %v2758 = vadd.f32 %v2222, %v2757
        %v2759 = vpop.f32.mrb[0].mxu0
        %v2760 = vpop.f32.mrb[0].mxu0
        %v2761 = vadd.f32 %v2222, %v2760
        %v2762 = vpop.f32.mrb[0].mxu0
        %2763 = vmatprep.mubr.bf16.mxu0 0
        %2764 = vmatmul.mubr.bf16.gmra.mrb[0].mxu0 %v2674
        %v2765 = vpop.f32.mrb[0].mxu0
        %v2766 = vadd.f32 %v2222, %v2765
        %v2767 = vpop.f32.mrb[0].mxu0
        %v2768 = vpop.f32.mrb[0].mxu0
        %v2769 = vadd.f32 %v2222, %v2768
        %v2770 = vpop.f32.mrb[0].mxu0
        %2771 = vmatprep.mubr.bf16.mxu0 0
        %2772 = vmatmul.mubr.bf16.gmra.mrb[0].mxu0 %v2677
        %v2773 = vpop.f32.mrb[0].mxu0
        %v2774 = vadd.f32 %v2222, %v2773
        %v2775 = vpop.f32.mrb[0].mxu0
        %v2776 = vpop.f32.mrb[0].mxu0
        %v2777 = vadd.f32 %v2222, %v2776
        %v2778 = vpop.f32.mrb[0].mxu0
        %2779 = vmatprep.mubr.bf16.mxu0 0
        %2780 = vmatmul.mubr.bf16.gmra.mrb[0].mxu0 %v2680
        %v2781 = vpop.f32.mrb[0].mxu0
        %v2782 = vadd.f32 %v2222, %v2781
        %v2783 = vpop.f32.mrb[0].mxu0
        %v2784 = vpop.f32.mrb[0].mxu0
        %v2785 = vadd.f32 %v2222, %v2784
        %v2786 = vpop.f32.mrb[0].mxu0
        %2787 = vmatprep.mubr.bf16.mxu0 0
        %2788 = vmatmul.mubr.bf16.gmra.mrb[0].mxu0 %v2683
        %v2789 = vpop.f32.mrb[0].mxu0
        %v2790 = vadd.f32 %v2222, %v2789
        %v2791 = vpop.f32.mrb[0].mxu0
        %v2792 = vpop.f32.mrb[0].mxu0
        %v2793 = vadd.f32 %v2222, %v2792
        %v2794 = vpop.f32.mrb[0].mxu0
        %2795 = vmatprep.mubr.bf16.mxu0 0
        %2796 = vmatmul.mubr.bf16.gmra.mrb[0].mxu0 %v2686
        %v2797 = vpop.f32.mrb[0].mxu0
        %v2798 = vadd.f32 %v2222, %v2797
        %v2799 = vpop.f32.mrb[0].mxu0
        %v2800 = vpop.f32.mrb[0].mxu0
        %v2801 = vadd.f32 %v2222, %v2800
        %v2802 = vpop.f32.mrb[0].mxu0
        %2803 = vmatprep.mubr.bf16.mxu0 0
        %2804 = vmatmul.mubr.bf16.gmra.mrb[0].mxu0 %v2689
        %v2805 = vpop.f32.mrb[0].mxu0
        %v2806 = vadd.f32 %v2222, %v2805
        %v2807 = vpop.f32.mrb[0].mxu0
        %v2808 = vpop.f32.mrb[0].mxu0
        %v2809 = vadd.f32 %v2222, %v2808
        %v2810 = vpop.f32.mrb[0].mxu0
        %2811 = vdwg.mxu0
        %2812 = vmax.xlane.f32.xlu0 %v2750
        %v2813 = vpop.xlane.xlu0 %2812
        %2814 = vmax.xlane.f32.xlu0 %v2753
        %v2815 = vpop.xlane.xlu0 %2814
        %2816 = vmax.xlane.f32.xlu0 %v2758
        %v2817 = vpop.xlane.xlu0 %2816
        %2818 = vmax.xlane.f32.xlu0 %v2761
        %v2819 = vpop.xlane.xlu0 %2818
        %2820 = vmax.xlane.f32.xlu0 %v2766
        %v2821 = vpop.xlane.xlu0 %2820
        %2822 = vmax.xlane.f32.xlu0 %v2769
        %v2823 = vpop.xlane.xlu0 %2822
        %2824 = vmax.xlane.f32.xlu0 %v2774
        %v2825 = vpop.xlane.xlu0 %2824
        %2826 = vmax.xlane.f32.xlu0 %v2777
        %v2827 = vpop.xlane.xlu0 %2826
        %2828 = vmax.xlane.f32.xlu0 %v2782
        %v2829 = vpop.xlane.xlu0 %2828
        %2830 = vmax.xlane.f32.xlu0 %v2785
        %v2831 = vpop.xlane.xlu0 %2830
        %2832 = vmax.xlane.f32.xlu0 %v2790
        %v2833 = vpop.xlane.xlu0 %2832
        %2834 = vmax.xlane.f32.xlu0 %v2793
        %v2835 = vpop.xlane.xlu0 %2834
        %2836 = vmax.xlane.f32.xlu0 %v2798
        %v2837 = vpop.xlane.xlu0 %2836
        %2838 = vmax.xlane.f32.xlu0 %v2801
        %v2839 = vpop.xlane.xlu0 %2838
        %2840 = vmax.xlane.f32.xlu0 %v2806
        %v2841 = vpop.xlane.xlu0 %2840
        %2842 = vmax.xlane.f32.xlu0 %v2809
        %v2843 = vpop.xlane.xlu0 %2842
        %v2844 = vsub.f32 %v2750, %v2813
        %v2845 = vsub.f32 %v2753, %v2815
        %v2846 = vsub.f32 %v2758, %v2817
        %v2847 = vsub.f32 %v2761, %v2819
        %v2848 = vsub.f32 %v2766, %v2821
        %v2849 = vsub.f32 %v2769, %v2823
        %v2850 = vsub.f32 %v2774, %v2825
        %v2851 = vsub.f32 %v2777, %v2827
        %v2852 = vsub.f32 %v2782, %v2829
        %v2853 = vsub.f32 %v2785, %v2831
        %v2854 = vsub.f32 %v2790, %v2833
        %v2855 = vsub.f32 %v2793, %v2835
        %v2856 = vsub.f32 %v2798, %v2837
        %v2857 = vsub.f32 %v2801, %v2839
        %v2858 = vsub.f32 %v2806, %v2841
        %v2859 = vsub.f32 %v2809, %v2843
        %v2860 = vmul.f32 %v2844, 1.442695
        %v2861 = vpow.pop %v2860
        %v2862 = vmul.f32 %v2845, 1.442695
        %v2863 = vpow.pop %v2862
        %v2864 = vmul.f32 %v2846, 1.442695
        %v2865 = vpow.pop %v2864
        %v2866 = vmul.f32 %v2847, 1.442695
        %v2867 = vpow.pop %v2866
        %v2868 = vmul.f32 %v2848, 1.442695
        %v2869 = vpow.pop %v2868
        %v2870 = vmul.f32 %v2849, 1.442695
        %v2871 = vpow.pop %v2870
        %v2872 = vmul.f32 %v2850, 1.442695
        %v2873 = vpow.pop %v2872
        %v2874 = vmul.f32 %v2851, 1.442695
        %v2875 = vpow.pop %v2874
        %v2876 = vmul.f32 %v2852, 1.442695
        %v2877 = vpow.pop %v2876
        %v2878 = vmul.f32 %v2853, 1.442695
        %v2879 = vpow.pop %v2878
        %v2880 = vmul.f32 %v2854, 1.442695
        %v2881 = vpow.pop %v2880
        %v2882 = vmul.f32 %v2855, 1.442695
        %v2883 = vpow.pop %v2882
        %v2884 = vmul.f32 %v2856, 1.442695
        %v2885 = vpow.pop %v2884
        %v2886 = vmul.f32 %v2857, 1.442695
        %v2887 = vpow.pop %v2886
        %v2888 = vmul.f32 %v2858, 1.442695
        %v2889 = vpow.pop %v2888
        %v2890 = vmul.f32 %v2859, 1.442695
        %v2891 = vpow.pop %v2890
        %2892 = vadd.xlane.f32.xlu0 %v2861
        %v2893 = vpop.xlane.xlu0 %2892
        %2894 = vadd.xlane.f32.xlu0 %v2863
        %v2895 = vpop.xlane.xlu0 %2894
        %2896 = vadd.xlane.f32.xlu0 %v2865
        %v2897 = vpop.xlane.xlu0 %2896
        %2898 = vadd.xlane.f32.xlu0 %v2867
        %v2899 = vpop.xlane.xlu0 %2898
        %2900 = vadd.xlane.f32.xlu0 %v2869
        %v2901 = vpop.xlane.xlu0 %2900
        %2902 = vadd.xlane.f32.xlu0 %v2871
        %v2903 = vpop.xlane.xlu0 %2902
        %2904 = vadd.xlane.f32.xlu0 %v2873
        %v2905 = vpop.xlane.xlu0 %2904
        %2906 = vadd.xlane.f32.xlu0 %v2875
        %v2907 = vpop.xlane.xlu0 %2906
        %2908 = vadd.xlane.f32.xlu0 %v2877
        %v2909 = vpop.xlane.xlu0 %2908
        %2910 = vadd.xlane.f32.xlu0 %v2879
        %v2911 = vpop.xlane.xlu0 %2910
        %2912 = vadd.xlane.f32.xlu0 %v2881
        %v2913 = vpop.xlane.xlu0 %2912
        %2914 = vadd.xlane.f32.xlu0 %v2883
        %v2915 = vpop.xlane.xlu0 %2914
        %2916 = vadd.xlane.f32.xlu0 %v2885
        %v2917 = vpop.xlane.xlu0 %2916
        %2918 = vadd.xlane.f32.xlu0 %v2887
        %v2919 = vpop.xlane.xlu0 %2918
        %2920 = vadd.xlane.f32.xlu0 %v2889
        %v2921 = vpop.xlane.xlu0 %2920
        %2922 = vadd.xlane.f32.xlu0 %v2891
        %v2923 = vpop.xlane.xlu0 %2922
        %v2924 = vpack.c.bf16 %v2863, %v2861
        %v2925 = vpack.c.bf16 %v2867, %v2865
        %v2926 = vpack.c.bf16 %v2871, %v2869
        %v2927 = vpack.c.bf16 %v2875, %v2873
        %v2928 = vpack.c.bf16 %v2879, %v2877
        %v2929 = vpack.c.bf16 %v2883, %v2881
        %v2930 = vpack.c.bf16 %v2887, %v2885
        %v2931 = vpack.c.bf16 %v2891, %v2889
        %2940 = vrot.lane.b32.xlu0 %v2171, 96
        %v2941 = vpop.permute.xlu0 %2940
        %2942 = vrot.lane.b32.xlu0 %v2174, 96
        %v2943 = vpop.permute.xlu0 %2942
        %2944 = vrot.lane.b32.xlu0 %v2177, 96
        %v2945 = vpop.permute.xlu0 %2944
        %2946 = vrot.lane.b32.xlu0 %v2180, 96
        %v2947 = vpop.permute.xlu0 %2946
        %2948 = vrot.lane.b32.xlu0 %v2183, 96
        %v2949 = vpop.permute.xlu0 %2948
        %2950 = vrot.lane.b32.xlu0 %v2186, 96
        %v2951 = vpop.permute.xlu0 %2950
        %2952 = vrot.lane.b32.xlu0 %v2189, 96
        %v2953 = vpop.permute.xlu0 %2952
        %2954 = vrot.lane.b32.xlu0 %v2192, 96
        %v2955 = vpop.permute.xlu0 %2954
        %2964 = vmatprep.subr.bf16.mxu0 0
        %2965 = vmatpush1.bf16.msra.mxu0 %v2941
        %2966 = vmatprep.subr.bf16.mxu0 0
        %2967 = vmatpush1.bf16.msra.mxu0 %v2943
        %2968 = vmatprep.subr.bf16.mxu0 0
        %2969 = vmatpush1.bf16.msra.mxu0 %v2945
        %2970 = vmatprep.subr.bf16.mxu0 0
        %2971 = vmatpush1.bf16.msra.mxu0 %v2947
        %2972 = vmatprep.subr.bf16.mxu0 0
        %2973 = vmatpush1.bf16.msra.mxu0 %v2949
        %2974 = vmatprep.subr.bf16.mxu0 0
        %2975 = vmatpush1.bf16.msra.mxu0 %v2951
        %2976 = vmatprep.subr.bf16.mxu0 0
        %2977 = vmatpush1.bf16.msra.mxu0 %v2953
        %2978 = vmatprep.subr.bf16.mxu0 0
        %2979 = vmatpush1.bf16.msra.mxu0 %v2955
        %2980 = vmatprep.subr.bf16.mxu0 0
        %2981 = vmatpush1.bf16.msra.mxu0 0
        %2982 = vmatprep.subr.bf16.mxu0 0
        %2983 = vmatpush1.bf16.msra.mxu0 0
        %2984 = vmatprep.subr.bf16.mxu0 0
        %2985 = vmatpush1.bf16.msra.mxu0 0
        %2986 = vmatprep.subr.bf16.mxu0 0
        %2987 = vmatpush1.bf16.msra.mxu0 0
        %2988 = vmatprep.subr.bf16.mxu0 0
        %2989 = vmatpush1.bf16.msra.mxu0 0
        %2990 = vmatprep.subr.bf16.mxu0 0
        %2991 = vmatpush1.bf16.msra.mxu0 0
        %2992 = vmatprep.subr.bf16.mxu0 0
        %2993 = vmatpush1.bf16.msra.mxu0 0
        %2994 = vmatprep.subr.bf16.mxu0 0
        %2995 = vmatpush1.bf16.msra.mxu0 0
        %2996 = vmatprep.mubr.bf16.mxu0 0
        %2997 = vmatmul.mubr.bf16.gmra.mrb[0].mxu0 %v2924
        %v2998 = vpop.f32.mrb[0].mxu0
        %v2999 = vadd.f32 0.0, %v2998
        %v3000 = vpop.f32.mrb[0].mxu0
        %v3001 = vpop.f32.mrb[0].mxu0
        %v3002 = vadd.f32 0.0, %v3001
        %v3003 = vpop.f32.mrb[0].mxu0
        %3004 = vmatprep.mubr.bf16.mxu0 0
        %3005 = vmatmul.mubr.bf16.gmra.mrb[0].mxu0 %v2925
        %v3006 = vpop.f32.mrb[0].mxu0
        %v3007 = vadd.f32 0.0, %v3006
        %v3008 = vpop.f32.mrb[0].mxu0
        %v3009 = vpop.f32.mrb[0].mxu0
        %v3010 = vadd.f32 0.0, %v3009
        %v3011 = vpop.f32.mrb[0].mxu0
        %3012 = vmatprep.mubr.bf16.mxu0 0
        %3013 = vmatmul.mubr.bf16.gmra.mrb[0].mxu0 %v2926
        %v3014 = vpop.f32.mrb[0].mxu0
        %v3015 = vadd.f32 0.0, %v3014
        %v3016 = vpop.f32.mrb[0].mxu0
        %v3017 = vpop.f32.mrb[0].mxu0
        %v3018 = vadd.f32 0.0, %v3017
        %v3019 = vpop.f32.mrb[0].mxu0
        %3020 = vmatprep.mubr.bf16.mxu0 0
        %3021 = vmatmul.mubr.bf16.gmra.mrb[0].mxu0 %v2927
        %v3022 = vpop.f32.mrb[0].mxu0
        %v3023 = vadd.f32 0.0, %v3022
        %v3024 = vpop.f32.mrb[0].mxu0
        %v3025 = vpop.f32.mrb[0].mxu0
        %v3026 = vadd.f32 0.0, %v3025
        %v3027 = vpop.f32.mrb[0].mxu0
        %3028 = vmatprep.mubr.bf16.mxu0 0
        %3029 = vmatmul.mubr.bf16.gmra.mrb[0].mxu0 %v2928
        %v3030 = vpop.f32.mrb[0].mxu0
        %v3031 = vadd.f32 0.0, %v3030
        %v3032 = vpop.f32.mrb[0].mxu0
        %v3033 = vpop.f32.mrb[0].mxu0
        %v3034 = vadd.f32 0.0, %v3033
        %v3035 = vpop.f32.mrb[0].mxu0
        %3036 = vmatprep.mubr.bf16.mxu0 0
        %3037 = vmatmul.mubr.bf16.gmra.mrb[0].mxu0 %v2929
        %v3038 = vpop.f32.mrb[0].mxu0
        %v3039 = vadd.f32 0.0, %v3038
        %v3040 = vpop.f32.mrb[0].mxu0
        %v3041 = vpop.f32.mrb[0].mxu0
        %v3042 = vadd.f32 0.0, %v3041
        %v3043 = vpop.f32.mrb[0].mxu0
        %3044 = vmatprep.mubr.bf16.mxu0 0
        %3045 = vmatmul.mubr.bf16.gmra.mrb[0].mxu0 %v2930
        %v3046 = vpop.f32.mrb[0].mxu0
        %v3047 = vadd.f32 0.0, %v3046
        %v3048 = vpop.f32.mrb[0].mxu0
        %v3049 = vpop.f32.mrb[0].mxu0
        %v3050 = vadd.f32 0.0, %v3049
        %v3051 = vpop.f32.mrb[0].mxu0
        %3052 = vmatprep.mubr.bf16.mxu0 0
        %3053 = vmatmul.mubr.bf16.gmra.mrb[0].mxu0 %v2931
        %v3054 = vpop.f32.mrb[0].mxu0
        %v3055 = vadd.f32 0.0, %v3054
        %v3056 = vpop.f32.mrb[0].mxu0
        %v3057 = vpop.f32.mrb[0].mxu0
        %v3058 = vadd.f32 0.0, %v3057
        %v3059 = vpop.f32.mrb[0].mxu0
        %3060 = vdwg.mxu0
        %v3061 = vrcp.pop %v2893
        %v3062 = vrcp.pop %v2895
        %v3063 = vrcp.pop %v2897
        %v3064 = vrcp.pop %v2899
        %v3065 = vrcp.pop %v2901
        %v3066 = vrcp.pop %v2903
        %v3067 = vrcp.pop %v2905
        %v3068 = vrcp.pop %v2907
        %v3069 = vrcp.pop %v2909
        %v3070 = vrcp.pop %v2911
        %v3071 = vrcp.pop %v2913
        %v3072 = vrcp.pop %v2915
        %v3073 = vrcp.pop %v2917
        %v3074 = vrcp.pop %v2919
        %v3075 = vrcp.pop %v2921
        %v3076 = vrcp.pop %v2923
        %v3077 = vmul.f32 %v2999, %v3061
        %v3078 = vmul.f32 %v3002, %v3062
        %v3079 = vmul.f32 %v3007, %v3063
        %v3080 = vmul.f32 %v3010, %v3064
        %v3081 = vmul.f32 %v3015, %v3065
        %v3082 = vmul.f32 %v3018, %v3066
        %v3083 = vmul.f32 %v3023, %v3067
        %v3084 = vmul.f32 %v3026, %v3068
        %v3085 = vmul.f32 %v3031, %v3069
        %v3086 = vmul.f32 %v3034, %v3070
        %v3087 = vmul.f32 %v3039, %v3071
        %v3088 = vmul.f32 %v3042, %v3072
        %v3089 = vmul.f32 %v3047, %v3073
        %v3090 = vmul.f32 %v3050, %v3074
        %v3091 = vmul.f32 %v3055, %v3075
        %v3092 = vmul.f32 %v3058, %v3076
        %3093 = vrot.lane.b32.xlu0 %v2169, 64
        %v3094 = vpop.permute.xlu0 %3093
        %3095 = vrot.lane.b32.xlu0 %v2172, 64
        %v3096 = vpop.permute.xlu0 %3095
        %3097 = vrot.lane.b32.xlu0 %v2175, 64
        %v3098 = vpop.permute.xlu0 %3097
        %3099 = vrot.lane.b32.xlu0 %v2178, 64
        %v3100 = vpop.permute.xlu0 %3099
        %3101 = vrot.lane.b32.xlu0 %v2181, 64
        %v3102 = vpop.permute.xlu0 %3101
        %3103 = vrot.lane.b32.xlu0 %v2184, 64
        %v3104 = vpop.permute.xlu0 %3103
        %3105 = vrot.lane.b32.xlu0 %v2187, 64
        %v3106 = vpop.permute.xlu0 %3105
        %3107 = vrot.lane.b32.xlu0 %v2190, 64
        %v3108 = vpop.permute.xlu0 %3107
        %3109 = vrot.lane.b32.xlu0 %v2170, 64
        %v3110 = vpop.permute.xlu0 %3109
        %3111 = vrot.lane.b32.xlu0 %v2173, 64
        %v3112 = vpop.permute.xlu0 %3111
        %3113 = vrot.lane.b32.xlu0 %v2176, 64
        %v3114 = vpop.permute.xlu0 %3113
        %3115 = vrot.lane.b32.xlu0 %v2179, 64
        %v3116 = vpop.permute.xlu0 %3115
        %3117 = vrot.lane.b32.xlu0 %v2182, 64
        %v3118 = vpop.permute.xlu0 %3117
        %3119 = vrot.lane.b32.xlu0 %v2185, 64
        %v3120 = vpop.permute.xlu0 %3119
        %3121 = vrot.lane.b32.xlu0 %v2188, 64
        %v3122 = vpop.permute.xlu0 %3121
        %3123 = vrot.lane.b32.xlu0 %v2191, 64
        %v3124 = vpop.permute.xlu0 %3123
        %v3126 = vsel %vm2224, %v3094, 0
        %v3129 = vsel %vm2224, %v3096, 0
        %v3132 = vsel %vm2224, %v3098, 0
        %v3135 = vsel %vm2224, %v3100, 0
        %v3138 = vsel %vm2224, %v3102, 0
        %v3141 = vsel %vm2224, %v3104, 0
        %v3144 = vsel %vm2224, %v3106, 0
        %v3147 = vsel %vm2224, %v3108, 0
        %v3150 = vsel %vm2224, %v3110, 0
        %v3153 = vsel %vm2224, %v3112, 0
        %v3156 = vsel %vm2224, %v3114, 0
        %v3159 = vsel %vm2224, %v3116, 0
        %v3162 = vsel %vm2224, %v3118, 0
        %v3165 = vsel %vm2224, %v3120, 0
        %v3168 = vsel %vm2224, %v3122, 0
        %v3171 = vsel %vm2224, %v3124, 0
        %3173 = vmatprep.subr.bf16.mxu0 0
        %3174 = vmatpush1.bf16.xpose.msra.mxu0 %v3150
        %3175 = vmatprep.subr.bf16.mxu0 0
        %3176 = vmatpush1.bf16.xpose.msra.mxu0 %v3153
        %3177 = vmatprep.subr.bf16.mxu0 0
        %3178 = vmatpush1.bf16.xpose.msra.mxu0 %v3156
        %3179 = vmatprep.subr.bf16.mxu0 0
        %3180 = vmatpush1.bf16.xpose.msra.mxu0 %v3159
        %3181 = vmatprep.subr.bf16.mxu0 0
        %3182 = vmatpush1.bf16.xpose.msra.mxu0 %v3162
        %3183 = vmatprep.subr.bf16.mxu0 0
        %3184 = vmatpush1.bf16.xpose.msra.mxu0 %v3165
        %3185 = vmatprep.subr.bf16.mxu0 0
        %3186 = vmatpush1.bf16.xpose.msra.mxu0 %v3168
        %3187 = vmatprep.subr.bf16.mxu0 0
        %3188 = vmatpush1.bf16.xpose.msra.mxu0 %v3171
        %3189 = vmatprep.subr.bf16.mxu0 0
        %3190 = vmatpush1.bf16.xpose.msra.mxu0 0
        %3191 = vmatprep.subr.bf16.mxu0 0
        %3192 = vmatpush1.bf16.xpose.msra.mxu0 0
        %3193 = vmatprep.subr.bf16.mxu0 0
        %3194 = vmatpush1.bf16.xpose.msra.mxu0 0
        %3195 = vmatprep.subr.bf16.mxu0 0
        %3196 = vmatpush1.bf16.xpose.msra.mxu0 0
        %3197 = vmatprep.subr.bf16.mxu0 0
        %3198 = vmatpush1.bf16.xpose.msra.mxu0 0
        %3199 = vmatprep.subr.bf16.mxu0 0
        %3200 = vmatpush1.bf16.xpose.msra.mxu0 0
        %3201 = vmatprep.subr.bf16.mxu0 0
        %3202 = vmatpush1.bf16.xpose.msra.mxu0 0
        %3203 = vmatprep.subr.bf16.mxu0 0
        %3204 = vmatpush1.bf16.xpose.msra.mxu0 0
        %3205 = vmatprep.mubr.bf16.mxu0 0
        %3206 = vmatmul.mubr.bf16.gmra.mrb[0].mxu0 %v3126
        %v3207 = vpop.f32.mrb[0].mxu0
        %v3208 = vadd.f32 %v2222, %v3207
        %v3209 = vpop.f32.mrb[0].mxu0
        %v3210 = vpop.f32.mrb[0].mxu0
        %v3211 = vadd.f32 %v2222, %v3210
        %v3212 = vpop.f32.mrb[0].mxu0
        %3213 = vmatprep.mubr.bf16.mxu0 0
        %3214 = vmatmul.mubr.bf16.gmra.mrb[0].mxu0 %v3129
        %v3215 = vpop.f32.mrb[0].mxu0
        %v3216 = vadd.f32 %v2222, %v3215
        %v3217 = vpop.f32.mrb[0].mxu0
        %v3218 = vpop.f32.mrb[0].mxu0
        %v3219 = vadd.f32 %v2222, %v3218
        %v3220 = vpop.f32.mrb[0].mxu0
        %3221 = vmatprep.mubr.bf16.mxu0 0
        %3222 = vmatmul.mubr.bf16.gmra.mrb[0].mxu0 %v3132
        %v3223 = vpop.f32.mrb[0].mxu0
        %v3224 = vadd.f32 %v2222, %v3223
        %v3225 = vpop.f32.mrb[0].mxu0
        %v3226 = vpop.f32.mrb[0].mxu0
        %v3227 = vadd.f32 %v2222, %v3226
        %v3228 = vpop.f32.mrb[0].mxu0
        %3229 = vmatprep.mubr.bf16.mxu0 0
        %3230 = vmatmul.mubr.bf16.gmra.mrb[0].mxu0 %v3135
        %v3231 = vpop.f32.mrb[0].mxu0
        %v3232 = vadd.f32 %v2222, %v3231
        %v3233 = vpop.f32.mrb[0].mxu0
        %v3234 = vpop.f32.mrb[0].mxu0
        %v3235 = vadd.f32 %v2222, %v3234
        %v3236 = vpop.f32.mrb[0].mxu0
        %3237 = vmatprep.mubr.bf16.mxu0 0
        %3238 = vmatmul.mubr.bf16.gmra.mrb[0].mxu0 %v3138
        %v3239 = vpop.f32.mrb[0].mxu0
        %v3240 = vadd.f32 %v2222, %v3239
        %v3241 = vpop.f32.mrb[0].mxu0
        %v3242 = vpop.f32.mrb[0].mxu0
        %v3243 = vadd.f32 %v2222, %v3242
        %v3244 = vpop.f32.mrb[0].mxu0
        %3245 = vmatprep.mubr.bf16.mxu0 0
        %3246 = vmatmul.mubr.bf16.gmra.mrb[0].mxu0 %v3141
        %v3247 = vpop.f32.mrb[0].mxu0
        %v3248 = vadd.f32 %v2222, %v3247
        %v3249 = vpop.f32.mrb[0].mxu0
        %v3250 = vpop.f32.mrb[0].mxu0
        %v3251 = vadd.f32 %v2222, %v3250
        %v3252 = vpop.f32.mrb[0].mxu0
        %3253 = vmatprep.mubr.bf16.mxu0 0
        %3254 = vmatmul.mubr.bf16.gmra.mrb[0].mxu0 %v3144
        %v3255 = vpop.f32.mrb[0].mxu0
        %v3256 = vadd.f32 %v2222, %v3255
        %v3257 = vpop.f32.mrb[0].mxu0
        %v3258 = vpop.f32.mrb[0].mxu0
        %v3259 = vadd.f32 %v2222, %v3258
        %v3260 = vpop.f32.mrb[0].mxu0
        %3261 = vmatprep.mubr.bf16.mxu0 0
        %3262 = vmatmul.mubr.bf16.gmra.mrb[0].mxu0 %v3147
        %v3263 = vpop.f32.mrb[0].mxu0
        %v3264 = vadd.f32 %v2222, %v3263
        %v3265 = vpop.f32.mrb[0].mxu0
        %v3266 = vpop.f32.mrb[0].mxu0
        %v3267 = vadd.f32 %v2222, %v3266
        %v3268 = vpop.f32.mrb[0].mxu0
        %3269 = vdwg.mxu0
        %3270 = vmax.xlane.f32.xlu0 %v3208
        %v3271 = vpop.xlane.xlu0 %3270
        %3272 = vmax.xlane.f32.xlu0 %v3211
        %v3273 = vpop.xlane.xlu0 %3272
        %3274 = vmax.xlane.f32.xlu0 %v3216
        %v3275 = vpop.xlane.xlu0 %3274
        %3276 = vmax.xlane.f32.xlu0 %v3219
        %v3277 = vpop.xlane.xlu0 %3276
        %3278 = vmax.xlane.f32.xlu0 %v3224
        %v3279 = vpop.xlane.xlu0 %3278
        %3280 = vmax.xlane.f32.xlu0 %v3227
        %v3281 = vpop.xlane.xlu0 %3280
        %3282 = vmax.xlane.f32.xlu0 %v3232
        %v3283 = vpop.xlane.xlu0 %3282
        %3284 = vmax.xlane.f32.xlu0 %v3235
        %v3285 = vpop.xlane.xlu0 %3284
        %3286 = vmax.xlane.f32.xlu0 %v3240
        %v3287 = vpop.xlane.xlu0 %3286
        %3288 = vmax.xlane.f32.xlu0 %v3243
        %v3289 = vpop.xlane.xlu0 %3288
        %3290 = vmax.xlane.f32.xlu0 %v3248
        %v3291 = vpop.xlane.xlu0 %3290
        %3292 = vmax.xlane.f32.xlu0 %v3251
        %v3293 = vpop.xlane.xlu0 %3292
        %3294 = vmax.xlane.f32.xlu0 %v3256
        %v3295 = vpop.xlane.xlu0 %3294
        %3296 = vmax.xlane.f32.xlu0 %v3259
        %v3297 = vpop.xlane.xlu0 %3296
        %3298 = vmax.xlane.f32.xlu0 %v3264
        %v3299 = vpop.xlane.xlu0 %3298
        %3300 = vmax.xlane.f32.xlu0 %v3267
        %v3301 = vpop.xlane.xlu0 %3300
        %v3302 = vsub.f32 %v3208, %v3271
        %v3303 = vsub.f32 %v3211, %v3273
        %v3304 = vsub.f32 %v3216, %v3275
        %v3305 = vsub.f32 %v3219, %v3277
        %v3306 = vsub.f32 %v3224, %v3279
        %v3307 = vsub.f32 %v3227, %v3281
        %v3308 = vsub.f32 %v3232, %v3283
        %v3309 = vsub.f32 %v3235, %v3285
        %v3310 = vsub.f32 %v3240, %v3287
        %v3311 = vsub.f32 %v3243, %v3289
        %v3312 = vsub.f32 %v3248, %v3291
        %v3313 = vsub.f32 %v3251, %v3293
        %v3314 = vsub.f32 %v3256, %v3295
        %v3315 = vsub.f32 %v3259, %v3297
        %v3316 = vsub.f32 %v3264, %v3299
        %v3317 = vsub.f32 %v3267, %v3301
        %v3318 = vmul.f32 %v3302, 1.442695
        %v3319 = vpow.pop %v3318
        %v3320 = vmul.f32 %v3303, 1.442695
        %v3321 = vpow.pop %v3320
        %v3322 = vmul.f32 %v3304, 1.442695
        %v3323 = vpow.pop %v3322
        %v3324 = vmul.f32 %v3305, 1.442695
        %v3325 = vpow.pop %v3324
        %v3326 = vmul.f32 %v3306, 1.442695
        %v3327 = vpow.pop %v3326
        %v3328 = vmul.f32 %v3307, 1.442695
        %v3329 = vpow.pop %v3328
        %v3330 = vmul.f32 %v3308, 1.442695
        %v3331 = vpow.pop %v3330
        %v3332 = vmul.f32 %v3309, 1.442695
        %v3333 = vpow.pop %v3332
        %v3334 = vmul.f32 %v3310, 1.442695
        %v3335 = vpow.pop %v3334
        %v3336 = vmul.f32 %v3311, 1.442695
        %v3337 = vpow.pop %v3336
        %v3338 = vmul.f32 %v3312, 1.442695
        %v3339 = vpow.pop %v3338
        %v3340 = vmul.f32 %v3313, 1.442695
        %v3341 = vpow.pop %v3340
        %v3342 = vmul.f32 %v3314, 1.442695
        %v3343 = vpow.pop %v3342
        %v3344 = vmul.f32 %v3315, 1.442695
        %v3345 = vpow.pop %v3344
        %v3346 = vmul.f32 %v3316, 1.442695
        %v3347 = vpow.pop %v3346
        %v3348 = vmul.f32 %v3317, 1.442695
        %v3349 = vpow.pop %v3348
        %3350 = vadd.xlane.f32.xlu0 %v3319
        %v3351 = vpop.xlane.xlu0 %3350
        %3352 = vadd.xlane.f32.xlu0 %v3321
        %v3353 = vpop.xlane.xlu0 %3352
        %3354 = vadd.xlane.f32.xlu0 %v3323
        %v3355 = vpop.xlane.xlu0 %3354
        %3356 = vadd.xlane.f32.xlu0 %v3325
        %v3357 = vpop.xlane.xlu0 %3356
        %3358 = vadd.xlane.f32.xlu0 %v3327
        %v3359 = vpop.xlane.xlu0 %3358
        %3360 = vadd.xlane.f32.xlu0 %v3329
        %v3361 = vpop.xlane.xlu0 %3360
        %3362 = vadd.xlane.f32.xlu0 %v3331
        %v3363 = vpop.xlane.xlu0 %3362
        %3364 = vadd.xlane.f32.xlu0 %v3333
        %v3365 = vpop.xlane.xlu0 %3364
        %3366 = vadd.xlane.f32.xlu0 %v3335
        %v3367 = vpop.xlane.xlu0 %3366
        %3368 = vadd.xlane.f32.xlu0 %v3337
        %v3369 = vpop.xlane.xlu0 %3368
        %3370 = vadd.xlane.f32.xlu0 %v3339
        %v3371 = vpop.xlane.xlu0 %3370
        %3372 = vadd.xlane.f32.xlu0 %v3341
        %v3373 = vpop.xlane.xlu0 %3372
        %3374 = vadd.xlane.f32.xlu0 %v3343
        %v3375 = vpop.xlane.xlu0 %3374
        %3376 = vadd.xlane.f32.xlu0 %v3345
        %v3377 = vpop.xlane.xlu0 %3376
        %3378 = vadd.xlane.f32.xlu0 %v3347
        %v3379 = vpop.xlane.xlu0 %3378
        %3380 = vadd.xlane.f32.xlu0 %v3349
        %v3381 = vpop.xlane.xlu0 %3380
        %v3382 = vpack.c.bf16 %v3321, %v3319
        %v3383 = vpack.c.bf16 %v3325, %v3323
        %v3384 = vpack.c.bf16 %v3329, %v3327
        %v3385 = vpack.c.bf16 %v3333, %v3331
        %v3386 = vpack.c.bf16 %v3337, %v3335
        %v3387 = vpack.c.bf16 %v3341, %v3339
        %v3388 = vpack.c.bf16 %v3345, %v3343
        %v3389 = vpack.c.bf16 %v3349, %v3347
        %3390 = vrot.lane.b32.xlu0 %v2171, 64
        %v3391 = vpop.permute.xlu0 %3390
        %3392 = vrot.lane.b32.xlu0 %v2174, 64
        %v3393 = vpop.permute.xlu0 %3392
        %3394 = vrot.lane.b32.xlu0 %v2177, 64
        %v3395 = vpop.permute.xlu0 %3394
        %3396 = vrot.lane.b32.xlu0 %v2180, 64
        %v3397 = vpop.permute.xlu0 %3396
        %3398 = vrot.lane.b32.xlu0 %v2183, 64
        %v3399 = vpop.permute.xlu0 %3398
        %3400 = vrot.lane.b32.xlu0 %v2186, 64
        %v3401 = vpop.permute.xlu0 %3400
        %3402 = vrot.lane.b32.xlu0 %v2189, 64
        %v3403 = vpop.permute.xlu0 %3402
        %3404 = vrot.lane.b32.xlu0 %v2192, 64
        %v3405 = vpop.permute.xlu0 %3404
        %3414 = vmatprep.subr.bf16.mxu0 0
        %3415 = vmatpush1.bf16.msra.mxu0 %v3391
        %3416 = vmatprep.subr.bf16.mxu0 0
        %3417 = vmatpush1.bf16.msra.mxu0 %v3393
        %3418 = vmatprep.subr.bf16.mxu0 0
        %3419 = vmatpush1.bf16.msra.mxu0 %v3395
        %3420 = vmatprep.subr.bf16.mxu0 0
        %3421 = vmatpush1.bf16.msra.mxu0 %v3397
        %3422 = vmatprep.subr.bf16.mxu0 0
        %3423 = vmatpush1.bf16.msra.mxu0 %v3399
        %3424 = vmatprep.subr.bf16.mxu0 0
        %3425 = vmatpush1.bf16.msra.mxu0 %v3401
        %3426 = vmatprep.subr.bf16.mxu0 0
        %3427 = vmatpush1.bf16.msra.mxu0 %v3403
        %3428 = vmatprep.subr.bf16.mxu0 0
        %3429 = vmatpush1.bf16.msra.mxu0 %v3405
        %3430 = vmatprep.subr.bf16.mxu0 0
        %3431 = vmatpush1.bf16.msra.mxu0 0
        %3432 = vmatprep.subr.bf16.mxu0 0
        %3433 = vmatpush1.bf16.msra.mxu0 0
        %3434 = vmatprep.subr.bf16.mxu0 0
        %3435 = vmatpush1.bf16.msra.mxu0 0
        %3436 = vmatprep.subr.bf16.mxu0 0
        %3437 = vmatpush1.bf16.msra.mxu0 0
        %3438 = vmatprep.subr.bf16.mxu0 0
        %3439 = vmatpush1.bf16.msra.mxu0 0
        %3440 = vmatprep.subr.bf16.mxu0 0
        %3441 = vmatpush1.bf16.msra.mxu0 0
        %3442 = vmatprep.subr.bf16.mxu0 0
        %3443 = vmatpush1.bf16.msra.mxu0 0
        %3444 = vmatprep.subr.bf16.mxu0 0
        %3445 = vmatpush1.bf16.msra.mxu0 0
        %3446 = vmatprep.mubr.bf16.mxu0 0
        %3447 = vmatmul.mubr.bf16.gmra.mrb[0].mxu0 %v3382
        %v3448 = vpop.f32.mrb[0].mxu0
        %v3449 = vadd.f32 0.0, %v3448
        %v3450 = vpop.f32.mrb[0].mxu0
        %v3451 = vpop.f32.mrb[0].mxu0
        %v3452 = vadd.f32 0.0, %v3451
        %v3453 = vpop.f32.mrb[0].mxu0
        %3454 = vmatprep.mubr.bf16.mxu0 0
        %3455 = vmatmul.mubr.bf16.gmra.mrb[0].mxu0 %v3383
        %v3456 = vpop.f32.mrb[0].mxu0
        %v3457 = vadd.f32 0.0, %v3456
        %v3458 = vpop.f32.mrb[0].mxu0
        %v3459 = vpop.f32.mrb[0].mxu0
        %v3460 = vadd.f32 0.0, %v3459
        %v3461 = vpop.f32.mrb[0].mxu0
        %3462 = vmatprep.mubr.bf16.mxu0 0
        %3463 = vmatmul.mubr.bf16.gmra.mrb[0].mxu0 %v3384
        %v3464 = vpop.f32.mrb[0].mxu0
        %v3465 = vadd.f32 0.0, %v3464
        %v3466 = vpop.f32.mrb[0].mxu0
        %v3467 = vpop.f32.mrb[0].mxu0
        %v3468 = vadd.f32 0.0, %v3467
        %v3469 = vpop.f32.mrb[0].mxu0
        %3470 = vmatprep.mubr.bf16.mxu0 0
        %3471 = vmatmul.mubr.bf16.gmra.mrb[0].mxu0 %v3385
        %v3472 = vpop.f32.mrb[0].mxu0
        %v3473 = vadd.f32 0.0, %v3472
        %v3474 = vpop.f32.mrb[0].mxu0
        %v3475 = vpop.f32.mrb[0].mxu0
        %v3476 = vadd.f32 0.0, %v3475
        %v3477 = vpop.f32.mrb[0].mxu0
        %3478 = vmatprep.mubr.bf16.mxu0 0
        %3479 = vmatmul.mubr.bf16.gmra.mrb[0].mxu0 %v3386
        %v3480 = vpop.f32.mrb[0].mxu0
        %v3481 = vadd.f32 0.0, %v3480
        %v3482 = vpop.f32.mrb[0].mxu0
        %v3483 = vpop.f32.mrb[0].mxu0
        %v3484 = vadd.f32 0.0, %v3483
        %v3485 = vpop.f32.mrb[0].mxu0
        %3486 = vmatprep.mubr.bf16.mxu0 0
        %3487 = vmatmul.mubr.bf16.gmra.mrb[0].mxu0 %v3387
        %v3488 = vpop.f32.mrb[0].mxu0
        %v3489 = vadd.f32 0.0, %v3488
        %v3490 = vpop.f32.mrb[0].mxu0
        %v3491 = vpop.f32.mrb[0].mxu0
        %v3492 = vadd.f32 0.0, %v3491
        %v3493 = vpop.f32.mrb[0].mxu0
        %3494 = vmatprep.mubr.bf16.mxu0 0
        %3495 = vmatmul.mubr.bf16.gmra.mrb[0].mxu0 %v3388
        %v3496 = vpop.f32.mrb[0].mxu0
        %v3497 = vadd.f32 0.0, %v3496
        %v3498 = vpop.f32.mrb[0].mxu0
        %v3499 = vpop.f32.mrb[0].mxu0
        %v3500 = vadd.f32 0.0, %v3499
        %v3501 = vpop.f32.mrb[0].mxu0
        %3502 = vmatprep.mubr.bf16.mxu0 0
        %3503 = vmatmul.mubr.bf16.gmra.mrb[0].mxu0 %v3389
        %v3504 = vpop.f32.mrb[0].mxu0
        %v3505 = vadd.f32 0.0, %v3504
        %v3506 = vpop.f32.mrb[0].mxu0
        %v3507 = vpop.f32.mrb[0].mxu0
        %v3508 = vadd.f32 0.0, %v3507
        %v3509 = vpop.f32.mrb[0].mxu0
        %3510 = vdwg.mxu0
        %v3511 = vrcp.pop %v3351
        %v3512 = vrcp.pop %v3353
        %v3513 = vrcp.pop %v3355
        %v3514 = vrcp.pop %v3357
        %v3515 = vrcp.pop %v3359
        %v3516 = vrcp.pop %v3361
        %v3517 = vrcp.pop %v3363
        %v3518 = vrcp.pop %v3365
        %v3519 = vrcp.pop %v3367
        %v3520 = vrcp.pop %v3369
        %v3521 = vrcp.pop %v3371
        %v3522 = vrcp.pop %v3373
        %v3523 = vrcp.pop %v3375
        %v3524 = vrcp.pop %v3377
        %v3525 = vrcp.pop %v3379
        %v3526 = vrcp.pop %v3381
        %v3527 = vmul.f32 %v3449, %v3511
        %v3528 = vmul.f32 %v3452, %v3512
        %v3529 = vmul.f32 %v3457, %v3513
        %v3530 = vmul.f32 %v3460, %v3514
        %v3531 = vmul.f32 %v3465, %v3515
        %v3532 = vmul.f32 %v3468, %v3516
        %v3533 = vmul.f32 %v3473, %v3517
        %v3534 = vmul.f32 %v3476, %v3518
        %v3535 = vmul.f32 %v3481, %v3519
        %v3536 = vmul.f32 %v3484, %v3520
        %v3537 = vmul.f32 %v3489, %v3521
        %v3538 = vmul.f32 %v3492, %v3522
        %v3539 = vmul.f32 %v3497, %v3523
        %v3540 = vmul.f32 %v3500, %v3524
        %v3541 = vmul.f32 %v3505, %v3525
        %v3542 = vmul.f32 %v3508, %v3526
        %3543 = vrot.lane.b32.xlu0 %v2169, 32
        %v3544 = vpop.permute.xlu0 %3543
        %3545 = vrot.lane.b32.xlu0 %v2172, 32
        %v3546 = vpop.permute.xlu0 %3545
        %3547 = vrot.lane.b32.xlu0 %v2175, 32
        %v3548 = vpop.permute.xlu0 %3547
        %3549 = vrot.lane.b32.xlu0 %v2178, 32
        %v3550 = vpop.permute.xlu0 %3549
        %3551 = vrot.lane.b32.xlu0 %v2181, 32
        %v3552 = vpop.permute.xlu0 %3551
        %3553 = vrot.lane.b32.xlu0 %v2184, 32
        %v3554 = vpop.permute.xlu0 %3553
        %3555 = vrot.lane.b32.xlu0 %v2187, 32
        %v3556 = vpop.permute.xlu0 %3555
        %3557 = vrot.lane.b32.xlu0 %v2190, 32
        %v3558 = vpop.permute.xlu0 %3557
        %3559 = vrot.lane.b32.xlu0 %v2170, 32
        %v3560 = vpop.permute.xlu0 %3559
        %3561 = vrot.lane.b32.xlu0 %v2173, 32
        %v3562 = vpop.permute.xlu0 %3561
        %3563 = vrot.lane.b32.xlu0 %v2176, 32
        %v3564 = vpop.permute.xlu0 %3563
        %3565 = vrot.lane.b32.xlu0 %v2179, 32
        %v3566 = vpop.permute.xlu0 %3565
        %3567 = vrot.lane.b32.xlu0 %v2182, 32
        %v3568 = vpop.permute.xlu0 %3567
        %3569 = vrot.lane.b32.xlu0 %v2185, 32
        %v3570 = vpop.permute.xlu0 %3569
        %3571 = vrot.lane.b32.xlu0 %v2188, 32
        %v3572 = vpop.permute.xlu0 %3571
        %3573 = vrot.lane.b32.xlu0 %v2191, 32
        %v3574 = vpop.permute.xlu0 %3573
        %v3576 = vsel %vm2224, %v3544, 0
        %v3579 = vsel %vm2224, %v3546, 0
        %v3582 = vsel %vm2224, %v3548, 0
        %v3585 = vsel %vm2224, %v3550, 0
        %v3588 = vsel %vm2224, %v3552, 0
        %v3591 = vsel %vm2224, %v3554, 0
        %v3594 = vsel %vm2224, %v3556, 0
        %v3597 = vsel %vm2224, %v3558, 0
        %v3600 = vsel %vm2224, %v3560, 0
        %v3603 = vsel %vm2224, %v3562, 0
        %v3606 = vsel %vm2224, %v3564, 0
        %v3609 = vsel %vm2224, %v3566, 0
        %v3612 = vsel %vm2224, %v3568, 0
        %v3615 = vsel %vm2224, %v3570, 0
        %v3618 = vsel %vm2224, %v3572, 0
        %v3621 = vsel %vm2224, %v3574, 0
        %3623 = vmatprep.subr.bf16.mxu0 0
        %3624 = vmatpush1.bf16.xpose.msra.mxu0 %v3600
        %3625 = vmatprep.subr.bf16.mxu0 0
        %3626 = vmatpush1.bf16.xpose.msra.mxu0 %v3603
        %3627 = vmatprep.subr.bf16.mxu0 0
        %3628 = vmatpush1.bf16.xpose.msra.mxu0 %v3606
        %3629 = vmatprep.subr.bf16.mxu0 0
        %3630 = vmatpush1.bf16.xpose.msra.mxu0 %v3609
        %3631 = vmatprep.subr.bf16.mxu0 0
        %3632 = vmatpush1.bf16.xpose.msra.mxu0 %v3612
        %3633 = vmatprep.subr.bf16.mxu0 0
        %3634 = vmatpush1.bf16.xpose.msra.mxu0 %v3615
        %3635 = vmatprep.subr.bf16.mxu0 0
        %3636 = vmatpush1.bf16.xpose.msra.mxu0 %v3618
        %3637 = vmatprep.subr.bf16.mxu0 0
        %3638 = vmatpush1.bf16.xpose.msra.mxu0 %v3621
        %3639 = vmatprep.subr.bf16.mxu0 0
        %3640 = vmatpush1.bf16.xpose.msra.mxu0 0
        %3641 = vmatprep.subr.bf16.mxu0 0
        %3642 = vmatpush1.bf16.xpose.msra.mxu0 0
        %3643 = vmatprep.subr.bf16.mxu0 0
        %3644 = vmatpush1.bf16.xpose.msra.mxu0 0
        %3645 = vmatprep.subr.bf16.mxu0 0
        %3646 = vmatpush1.bf16.xpose.msra.mxu0 0
        %3647 = vmatprep.subr.bf16.mxu0 0
        %3648 = vmatpush1.bf16.xpose.msra.mxu0 0
        %3649 = vmatprep.subr.bf16.mxu0 0
        %3650 = vmatpush1.bf16.xpose.msra.mxu0 0
        %3651 = vmatprep.subr.bf16.mxu0 0
        %3652 = vmatpush1.bf16.xpose.msra.mxu0 0
        %3653 = vmatprep.subr.bf16.mxu0 0
        %3654 = vmatpush1.bf16.xpose.msra.mxu0 0
        %3655 = vmatprep.mubr.bf16.mxu0 0
        %3656 = vmatmul.mubr.bf16.gmra.mrb[0].mxu0 %v3576
        %v3657 = vpop.f32.mrb[0].mxu0
        %v3658 = vadd.f32 %v2222, %v3657
        %v3659 = vpop.f32.mrb[0].mxu0
        %v3660 = vpop.f32.mrb[0].mxu0
        %v3661 = vadd.f32 %v2222, %v3660
        %v3662 = vpop.f32.mrb[0].mxu0
        %3663 = vmatprep.mubr.bf16.mxu0 0
        %3664 = vmatmul.mubr.bf16.gmra.mrb[0].mxu0 %v3579
        %v3665 = vpop.f32.mrb[0].mxu0
        %v3666 = vadd.f32 %v2222, %v3665
        %v3667 = vpop.f32.mrb[0].mxu0
        %v3668 = vpop.f32.mrb[0].mxu0
        %v3669 = vadd.f32 %v2222, %v3668
        %v3670 = vpop.f32.mrb[0].mxu0
        %3671 = vmatprep.mubr.bf16.mxu0 0
        %3672 = vmatmul.mubr.bf16.gmra.mrb[0].mxu0 %v3582
        %v3673 = vpop.f32.mrb[0].mxu0
        %v3674 = vadd.f32 %v2222, %v3673
        %v3675 = vpop.f32.mrb[0].mxu0
        %v3676 = vpop.f32.mrb[0].mxu0
        %v3677 = vadd.f32 %v2222, %v3676
        %v3678 = vpop.f32.mrb[0].mxu0
        %3679 = vmatprep.mubr.bf16.mxu0 0
        %3680 = vmatmul.mubr.bf16.gmra.mrb[0].mxu0 %v3585
        %v3681 = vpop.f32.mrb[0].mxu0
        %v3682 = vadd.f32 %v2222, %v3681
        %v3683 = vpop.f32.mrb[0].mxu0
        %v3684 = vpop.f32.mrb[0].mxu0
        %v3685 = vadd.f32 %v2222, %v3684
        %v3686 = vpop.f32.mrb[0].mxu0
        %3687 = vmatprep.mubr.bf16.mxu0 0
        %3688 = vmatmul.mubr.bf16.gmra.mrb[0].mxu0 %v3588
        %v3689 = vpop.f32.mrb[0].mxu0
        %v3690 = vadd.f32 %v2222, %v3689
        %v3691 = vpop.f32.mrb[0].mxu0
        %v3692 = vpop.f32.mrb[0].mxu0
        %v3693 = vadd.f32 %v2222, %v3692
        %v3694 = vpop.f32.mrb[0].mxu0
        %3695 = vmatprep.mubr.bf16.mxu0 0
        %3696 = vmatmul.mubr.bf16.gmra.mrb[0].mxu0 %v3591
        %v3697 = vpop.f32.mrb[0].mxu0
        %v3698 = vadd.f32 %v2222, %v3697
        %v3699 = vpop.f32.mrb[0].mxu0
        %v3700 = vpop.f32.mrb[0].mxu0
        %v3701 = vadd.f32 %v2222, %v3700
        %v3702 = vpop.f32.mrb[0].mxu0
        %3703 = vmatprep.mubr.bf16.mxu0 0
        %3704 = vmatmul.mubr.bf16.gmra.mrb[0].mxu0 %v3594
        %v3705 = vpop.f32.mrb[0].mxu0
        %v3706 = vadd.f32 %v2222, %v3705
        %v3707 = vpop.f32.mrb[0].mxu0
        %v3708 = vpop.f32.mrb[0].mxu0
        %v3709 = vadd.f32 %v2222, %v3708
        %v3710 = vpop.f32.mrb[0].mxu0
        %3711 = vmatprep.mubr.bf16.mxu0 0
        %3712 = vmatmul.mubr.bf16.gmra.mrb[0].mxu0 %v3597
        %v3713 = vpop.f32.mrb[0].mxu0
        %v3714 = vadd.f32 %v2222, %v3713
        %v3715 = vpop.f32.mrb[0].mxu0
        %v3716 = vpop.f32.mrb[0].mxu0
        %v3717 = vadd.f32 %v2222, %v3716
        %v3718 = vpop.f32.mrb[0].mxu0
        %3719 = vdwg.mxu0
        %3720 = vmax.xlane.f32.xlu0 %v3658
        %v3721 = vpop.xlane.xlu0 %3720
        %3722 = vmax.xlane.f32.xlu0 %v3661
        %v3723 = vpop.xlane.xlu0 %3722
        %3724 = vmax.xlane.f32.xlu0 %v3666
        %v3725 = vpop.xlane.xlu0 %3724
        %3726 = vmax.xlane.f32.xlu0 %v3669
        %v3727 = vpop.xlane.xlu0 %3726
        %3728 = vmax.xlane.f32.xlu0 %v3674
        %v3729 = vpop.xlane.xlu0 %3728
        %3730 = vmax.xlane.f32.xlu0 %v3677
        %v3731 = vpop.xlane.xlu0 %3730
        %3732 = vmax.xlane.f32.xlu0 %v3682
        %v3733 = vpop.xlane.xlu0 %3732
        %3734 = vmax.xlane.f32.xlu0 %v3685
        %v3735 = vpop.xlane.xlu0 %3734
        %3736 = vmax.xlane.f32.xlu0 %v3690
        %v3737 = vpop.xlane.xlu0 %3736
        %3738 = vmax.xlane.f32.xlu0 %v3693
        %v3739 = vpop.xlane.xlu0 %3738
        %3740 = vmax.xlane.f32.xlu0 %v3698
        %v3741 = vpop.xlane.xlu0 %3740
        %3742 = vmax.xlane.f32.xlu0 %v3701
        %v3743 = vpop.xlane.xlu0 %3742
        %3744 = vmax.xlane.f32.xlu0 %v3706
        %v3745 = vpop.xlane.xlu0 %3744
        %3746 = vmax.xlane.f32.xlu0 %v3709
        %v3747 = vpop.xlane.xlu0 %3746
        %3748 = vmax.xlane.f32.xlu0 %v3714
        %v3749 = vpop.xlane.xlu0 %3748
        %3750 = vmax.xlane.f32.xlu0 %v3717
        %v3751 = vpop.xlane.xlu0 %3750
        %v3752 = vsub.f32 %v3658, %v3721
        %v3753 = vsub.f32 %v3661, %v3723
        %v3754 = vsub.f32 %v3666, %v3725
        %v3755 = vsub.f32 %v3669, %v3727
        %v3756 = vsub.f32 %v3674, %v3729
        %v3757 = vsub.f32 %v3677, %v3731
        %v3758 = vsub.f32 %v3682, %v3733
        %v3759 = vsub.f32 %v3685, %v3735
        %v3760 = vsub.f32 %v3690, %v3737
        %v3761 = vsub.f32 %v3693, %v3739
        %v3762 = vsub.f32 %v3698, %v3741
        %v3763 = vsub.f32 %v3701, %v3743
        %v3764 = vsub.f32 %v3706, %v3745
        %v3765 = vsub.f32 %v3709, %v3747
        %v3766 = vsub.f32 %v3714, %v3749
        %v3767 = vsub.f32 %v3717, %v3751
        %v3768 = vmul.f32 %v3752, 1.442695
        %v3769 = vpow.pop %v3768
        %v3770 = vmul.f32 %v3753, 1.442695
        %v3771 = vpow.pop %v3770
        %v3772 = vmul.f32 %v3754, 1.442695
        %v3773 = vpow.pop %v3772
        %v3774 = vmul.f32 %v3755, 1.442695
        %v3775 = vpow.pop %v3774
        %v3776 = vmul.f32 %v3756, 1.442695
        %v3777 = vpow.pop %v3776
        %v3778 = vmul.f32 %v3757, 1.442695
        %v3779 = vpow.pop %v3778
        %v3780 = vmul.f32 %v3758, 1.442695
        %v3781 = vpow.pop %v3780
        %v3782 = vmul.f32 %v3759, 1.442695
        %v3783 = vpow.pop %v3782
        %v3784 = vmul.f32 %v3760, 1.442695
        %v3785 = vpow.pop %v3784
        %v3786 = vmul.f32 %v3761, 1.442695
        %v3787 = vpow.pop %v3786
        %v3788 = vmul.f32 %v3762, 1.442695
        %v3789 = vpow.pop %v3788
        %v3790 = vmul.f32 %v3763, 1.442695
        %v3791 = vpow.pop %v3790
        %v3792 = vmul.f32 %v3764, 1.442695
        %v3793 = vpow.pop %v3792
        %v3794 = vmul.f32 %v3765, 1.442695
        %v3795 = vpow.pop %v3794
        %v3796 = vmul.f32 %v3766, 1.442695
        %v3797 = vpow.pop %v3796
        %v3798 = vmul.f32 %v3767, 1.442695
        %v3799 = vpow.pop %v3798
        %3800 = vadd.xlane.f32.xlu0 %v3769
        %v3801 = vpop.xlane.xlu0 %3800
        %3802 = vadd.xlane.f32.xlu0 %v3771
        %v3803 = vpop.xlane.xlu0 %3802
        %3804 = vadd.xlane.f32.xlu0 %v3773
        %v3805 = vpop.xlane.xlu0 %3804
        %3806 = vadd.xlane.f32.xlu0 %v3775
        %v3807 = vpop.xlane.xlu0 %3806
        %3808 = vadd.xlane.f32.xlu0 %v3777
        %v3809 = vpop.xlane.xlu0 %3808
        %3810 = vadd.xlane.f32.xlu0 %v3779
        %v3811 = vpop.xlane.xlu0 %3810
        %3812 = vadd.xlane.f32.xlu0 %v3781
        %v3813 = vpop.xlane.xlu0 %3812
        %3814 = vadd.xlane.f32.xlu0 %v3783
        %v3815 = vpop.xlane.xlu0 %3814
        %3816 = vadd.xlane.f32.xlu0 %v3785
        %v3817 = vpop.xlane.xlu0 %3816
        %3818 = vadd.xlane.f32.xlu0 %v3787
        %v3819 = vpop.xlane.xlu0 %3818
        %3820 = vadd.xlane.f32.xlu0 %v3789
        %v3821 = vpop.xlane.xlu0 %3820
        %3822 = vadd.xlane.f32.xlu0 %v3791
        %v3823 = vpop.xlane.xlu0 %3822
        %3824 = vadd.xlane.f32.xlu0 %v3793
        %v3825 = vpop.xlane.xlu0 %3824
        %3826 = vadd.xlane.f32.xlu0 %v3795
        %v3827 = vpop.xlane.xlu0 %3826
        %3828 = vadd.xlane.f32.xlu0 %v3797
        %v3829 = vpop.xlane.xlu0 %3828
        %3830 = vadd.xlane.f32.xlu0 %v3799
        %v3831 = vpop.xlane.xlu0 %3830
        %v3832 = vpack.c.bf16 %v3771, %v3769
        %v3833 = vpack.c.bf16 %v3775, %v3773
        %v3834 = vpack.c.bf16 %v3779, %v3777
        %v3835 = vpack.c.bf16 %v3783, %v3781
        %v3836 = vpack.c.bf16 %v3787, %v3785
        %v3837 = vpack.c.bf16 %v3791, %v3789
        %v3838 = vpack.c.bf16 %v3795, %v3793
        %v3839 = vpack.c.bf16 %v3799, %v3797
        %3840 = vrot.lane.b32.xlu0 %v2171, 32
        %v3841 = vpop.permute.xlu0 %3840
        %3842 = vrot.lane.b32.xlu0 %v2174, 32
        %v3843 = vpop.permute.xlu0 %3842
        %3844 = vrot.lane.b32.xlu0 %v2177, 32
        %v3845 = vpop.permute.xlu0 %3844
        %3846 = vrot.lane.b32.xlu0 %v2180, 32
        %v3847 = vpop.permute.xlu0 %3846
        %3848 = vrot.lane.b32.xlu0 %v2183, 32
        %v3849 = vpop.permute.xlu0 %3848
        %3850 = vrot.lane.b32.xlu0 %v2186, 32
        %v3851 = vpop.permute.xlu0 %3850
        %3852 = vrot.lane.b32.xlu0 %v2189, 32
        %v3853 = vpop.permute.xlu0 %3852
        %3854 = vrot.lane.b32.xlu0 %v2192, 32
        %v3855 = vpop.permute.xlu0 %3854
        %3864 = vmatprep.subr.bf16.mxu0 0
        %3865 = vmatpush1.bf16.msra.mxu0 %v3841
        %3866 = vmatprep.subr.bf16.mxu0 0
        %3867 = vmatpush1.bf16.msra.mxu0 %v3843
        %3868 = vmatprep.subr.bf16.mxu0 0
        %3869 = vmatpush1.bf16.msra.mxu0 %v3845
        %3870 = vmatprep.subr.bf16.mxu0 0
        %3871 = vmatpush1.bf16.msra.mxu0 %v3847
        %3872 = vmatprep.subr.bf16.mxu0 0
        %3873 = vmatpush1.bf16.msra.mxu0 %v3849
        %3874 = vmatprep.subr.bf16.mxu0 0
        %3875 = vmatpush1.bf16.msra.mxu0 %v3851
        %3876 = vmatprep.subr.bf16.mxu0 0
        %3877 = vmatpush1.bf16.msra.mxu0 %v3853
        %3878 = vmatprep.subr.bf16.mxu0 0
        %3879 = vmatpush1.bf16.msra.mxu0 %v3855
        %3880 = vmatprep.subr.bf16.mxu0 0
        %3881 = vmatpush1.bf16.msra.mxu0 0
        %3882 = vmatprep.subr.bf16.mxu0 0
        %3883 = vmatpush1.bf16.msra.mxu0 0
        %3884 = vmatprep.subr.bf16.mxu0 0
        %3885 = vmatpush1.bf16.msra.mxu0 0
        %3886 = vmatprep.subr.bf16.mxu0 0
        %3887 = vmatpush1.bf16.msra.mxu0 0
        %3888 = vmatprep.subr.bf16.mxu0 0
        %3889 = vmatpush1.bf16.msra.mxu0 0
        %3890 = vmatprep.subr.bf16.mxu0 0
        %3891 = vmatpush1.bf16.msra.mxu0 0
        %3892 = vmatprep.subr.bf16.mxu0 0
        %3893 = vmatpush1.bf16.msra.mxu0 0
        %3894 = vmatprep.subr.bf16.mxu0 0
        %3895 = vmatpush1.bf16.msra.mxu0 0
        %3896 = vmatprep.mubr.bf16.mxu0 0
        %3897 = vmatmul.mubr.bf16.gmra.mrb[0].mxu0 %v3832
        %v3898 = vpop.f32.mrb[0].mxu0
        %v3899 = vadd.f32 0.0, %v3898
        %v3900 = vpop.f32.mrb[0].mxu0
        %v3901 = vpop.f32.mrb[0].mxu0
        %v3902 = vadd.f32 0.0, %v3901
        %v3903 = vpop.f32.mrb[0].mxu0
        %3904 = vmatprep.mubr.bf16.mxu0 0
        %3905 = vmatmul.mubr.bf16.gmra.mrb[0].mxu0 %v3833
        %v3906 = vpop.f32.mrb[0].mxu0
        %v3907 = vadd.f32 0.0, %v3906
        %v3908 = vpop.f32.mrb[0].mxu0
        %v3909 = vpop.f32.mrb[0].mxu0
        %v3910 = vadd.f32 0.0, %v3909
        %v3911 = vpop.f32.mrb[0].mxu0
        %3912 = vmatprep.mubr.bf16.mxu0 0
        %3913 = vmatmul.mubr.bf16.gmra.mrb[0].mxu0 %v3834
        %v3914 = vpop.f32.mrb[0].mxu0
        %v3915 = vadd.f32 0.0, %v3914
        %v3916 = vpop.f32.mrb[0].mxu0
        %v3917 = vpop.f32.mrb[0].mxu0
        %v3918 = vadd.f32 0.0, %v3917
        %v3919 = vpop.f32.mrb[0].mxu0
        %3920 = vmatprep.mubr.bf16.mxu0 0
        %3921 = vmatmul.mubr.bf16.gmra.mrb[0].mxu0 %v3835
        %v3922 = vpop.f32.mrb[0].mxu0
        %v3923 = vadd.f32 0.0, %v3922
        %v3924 = vpop.f32.mrb[0].mxu0
        %v3925 = vpop.f32.mrb[0].mxu0
        %v3926 = vadd.f32 0.0, %v3925
        %v3927 = vpop.f32.mrb[0].mxu0
        %3928 = vmatprep.mubr.bf16.mxu0 0
        %3929 = vmatmul.mubr.bf16.gmra.mrb[0].mxu0 %v3836
        %v3930 = vpop.f32.mrb[0].mxu0
        %v3931 = vadd.f32 0.0, %v3930
        %v3932 = vpop.f32.mrb[0].mxu0
        %v3933 = vpop.f32.mrb[0].mxu0
        %v3934 = vadd.f32 0.0, %v3933
        %v3935 = vpop.f32.mrb[0].mxu0
        %3936 = vmatprep.mubr.bf16.mxu0 0
        %3937 = vmatmul.mubr.bf16.gmra.mrb[0].mxu0 %v3837
        %v3938 = vpop.f32.mrb[0].mxu0
        %v3939 = vadd.f32 0.0, %v3938
        %v3940 = vpop.f32.mrb[0].mxu0
        %v3941 = vpop.f32.mrb[0].mxu0
        %v3942 = vadd.f32 0.0, %v3941
        %v3943 = vpop.f32.mrb[0].mxu0
        %3944 = vmatprep.mubr.bf16.mxu0 0
        %3945 = vmatmul.mubr.bf16.gmra.mrb[0].mxu0 %v3838
        %v3946 = vpop.f32.mrb[0].mxu0
        %v3947 = vadd.f32 0.0, %v3946
        %v3948 = vpop.f32.mrb[0].mxu0
        %v3949 = vpop.f32.mrb[0].mxu0
        %v3950 = vadd.f32 0.0, %v3949
        %v3951 = vpop.f32.mrb[0].mxu0
        %3952 = vmatprep.mubr.bf16.mxu0 0
        %3953 = vmatmul.mubr.bf16.gmra.mrb[0].mxu0 %v3839
        %v3954 = vpop.f32.mrb[0].mxu0
        %v3955 = vadd.f32 0.0, %v3954
        %v3956 = vpop.f32.mrb[0].mxu0
        %v3957 = vpop.f32.mrb[0].mxu0
        %v3958 = vadd.f32 0.0, %v3957
        %v3959 = vpop.f32.mrb[0].mxu0
        %3960 = vdwg.mxu0
        %v3961 = vrcp.pop %v3801
        %v3962 = vrcp.pop %v3803
        %v3963 = vrcp.pop %v3805
        %v3964 = vrcp.pop %v3807
        %v3965 = vrcp.pop %v3809
        %v3966 = vrcp.pop %v3811
        %v3967 = vrcp.pop %v3813
        %v3968 = vrcp.pop %v3815
        %v3969 = vrcp.pop %v3817
        %v3970 = vrcp.pop %v3819
        %v3971 = vrcp.pop %v3821
        %v3972 = vrcp.pop %v3823
        %v3973 = vrcp.pop %v3825
        %v3974 = vrcp.pop %v3827
        %v3975 = vrcp.pop %v3829
        %v3976 = vrcp.pop %v3831
        %v3977 = vmul.f32 %v3899, %v3961
        %v3978 = vmul.f32 %v3902, %v3962
        %v3979 = vmul.f32 %v3907, %v3963
        %v3980 = vmul.f32 %v3910, %v3964
        %v3981 = vmul.f32 %v3915, %v3965
        %v3982 = vmul.f32 %v3918, %v3966
        %v3983 = vmul.f32 %v3923, %v3967
        %v3984 = vmul.f32 %v3926, %v3968
        %v3985 = vmul.f32 %v3931, %v3969
        %v3986 = vmul.f32 %v3934, %v3970
        %v3987 = vmul.f32 %v3939, %v3971
        %v3988 = vmul.f32 %v3942, %v3972
        %v3989 = vmul.f32 %v3947, %v3973
        %v3990 = vmul.f32 %v3950, %v3974
        %v3991 = vmul.f32 %v3955, %v3975
        %v3992 = vmul.f32 %v3958, %v3976
        %4009 = vrot.lane.b32.xlu0 %v3077, 32
        %v4010 = vpop.permute.xlu0 %4009
        %4011 = vrot.lane.b32.xlu0 %v3078, 32
        %v4012 = vpop.permute.xlu0 %4011
        %4013 = vrot.lane.b32.xlu0 %v3079, 32
        %v4014 = vpop.permute.xlu0 %4013
        %4015 = vrot.lane.b32.xlu0 %v3080, 32
        %v4016 = vpop.permute.xlu0 %4015
        %4017 = vrot.lane.b32.xlu0 %v3081, 32
        %v4018 = vpop.permute.xlu0 %4017
        %4019 = vrot.lane.b32.xlu0 %v3082, 32
        %v4020 = vpop.permute.xlu0 %4019
        %4021 = vrot.lane.b32.xlu0 %v3083, 32
        %v4022 = vpop.permute.xlu0 %4021
        %4023 = vrot.lane.b32.xlu0 %v3084, 32
        %v4024 = vpop.permute.xlu0 %4023
        %4025 = vrot.lane.b32.xlu0 %v3085, 32
        %v4026 = vpop.permute.xlu0 %4025
        %4027 = vrot.lane.b32.xlu0 %v3086, 32
        %v4028 = vpop.permute.xlu0 %4027
        %4029 = vrot.lane.b32.xlu0 %v3087, 32
        %v4030 = vpop.permute.xlu0 %4029
        %4031 = vrot.lane.b32.xlu0 %v3088, 32
        %v4032 = vpop.permute.xlu0 %4031
        %4033 = vrot.lane.b32.xlu0 %v3089, 32
        %v4034 = vpop.permute.xlu0 %4033
        %4035 = vrot.lane.b32.xlu0 %v3090, 32
        %v4036 = vpop.permute.xlu0 %4035
        %4037 = vrot.lane.b32.xlu0 %v3091, 32
        %v4038 = vpop.permute.xlu0 %4037
        %4039 = vrot.lane.b32.xlu0 %v3092, 32
        %v4040 = vpop.permute.xlu0 %4039
        %4073 = vrot.lane.b32.xlu0 %v3527, 64
        %v4074 = vpop.permute.xlu0 %4073
        %4075 = vrot.lane.b32.xlu0 %v3528, 64
        %v4076 = vpop.permute.xlu0 %4075
        %4077 = vrot.lane.b32.xlu0 %v3529, 64
        %v4078 = vpop.permute.xlu0 %4077
        %4079 = vrot.lane.b32.xlu0 %v3530, 64
        %v4080 = vpop.permute.xlu0 %4079
        %4081 = vrot.lane.b32.xlu0 %v3531, 64
        %v4082 = vpop.permute.xlu0 %4081
        %4083 = vrot.lane.b32.xlu0 %v3532, 64
        %v4084 = vpop.permute.xlu0 %4083
        %4085 = vrot.lane.b32.xlu0 %v3533, 64
        %v4086 = vpop.permute.xlu0 %4085
        %4087 = vrot.lane.b32.xlu0 %v3534, 64
        %v4088 = vpop.permute.xlu0 %4087
        %4089 = vrot.lane.b32.xlu0 %v3535, 64
        %v4090 = vpop.permute.xlu0 %4089
        %4091 = vrot.lane.b32.xlu0 %v3536, 64
        %v4092 = vpop.permute.xlu0 %4091
        %4093 = vrot.lane.b32.xlu0 %v3537, 64
        %v4094 = vpop.permute.xlu0 %4093
        %4095 = vrot.lane.b32.xlu0 %v3538, 64
        %v4096 = vpop.permute.xlu0 %4095
        %4097 = vrot.lane.b32.xlu0 %v3539, 64
        %v4098 = vpop.permute.xlu0 %4097
        %4099 = vrot.lane.b32.xlu0 %v3540, 64
        %v4100 = vpop.permute.xlu0 %4099
        %4101 = vrot.lane.b32.xlu0 %v3541, 64
        %v4102 = vpop.permute.xlu0 %4101
        %4103 = vrot.lane.b32.xlu0 %v3542, 64
        %v4104 = vpop.permute.xlu0 %4103
        %4137 = vrot.lane.b32.xlu0 %v3977, 96
        %v4138 = vpop.permute.xlu0 %4137
        %4139 = vrot.lane.b32.xlu0 %v3978, 96
        %v4140 = vpop.permute.xlu0 %4139
        %4141 = vrot.lane.b32.xlu0 %v3979, 96
        %v4142 = vpop.permute.xlu0 %4141
        %4143 = vrot.lane.b32.xlu0 %v3980, 96
        %v4144 = vpop.permute.xlu0 %4143
        %4145 = vrot.lane.b32.xlu0 %v3981, 96
        %v4146 = vpop.permute.xlu0 %4145
        %4147 = vrot.lane.b32.xlu0 %v3982, 96
        %v4148 = vpop.permute.xlu0 %4147
        %4149 = vrot.lane.b32.xlu0 %v3983, 96
        %v4150 = vpop.permute.xlu0 %4149
        %4151 = vrot.lane.b32.xlu0 %v3984, 96
        %v4152 = vpop.permute.xlu0 %4151
        %4153 = vrot.lane.b32.xlu0 %v3985, 96
        %v4154 = vpop.permute.xlu0 %4153
        %4155 = vrot.lane.b32.xlu0 %v3986, 96
        %v4156 = vpop.permute.xlu0 %4155
        %4157 = vrot.lane.b32.xlu0 %v3987, 96
        %v4158 = vpop.permute.xlu0 %4157
        %4159 = vrot.lane.b32.xlu0 %v3988, 96
        %v4160 = vpop.permute.xlu0 %4159
        %4161 = vrot.lane.b32.xlu0 %v3989, 96
        %v4162 = vpop.permute.xlu0 %4161
        %4163 = vrot.lane.b32.xlu0 %v3990, 96
        %v4164 = vpop.permute.xlu0 %4163
        %4165 = vrot.lane.b32.xlu0 %v3991, 96
        %v4166 = vpop.permute.xlu0 %4165
        %4167 = vrot.lane.b32.xlu0 %v3992, 96
        %v4168 = vpop.permute.xlu0 %4167
        %v4185 = vsel %vm2224, %v2603, %v4010
        %v4186 = vsel %vm2224, %v2604, %v4012
        %v4187 = vsel %vm2224, %v2605, %v4014
        %v4188 = vsel %vm2224, %v2606, %v4016
        %v4189 = vsel %vm2224, %v2607, %v4018
        %v4190 = vsel %vm2224, %v2608, %v4020
        %v4191 = vsel %vm2224, %v2609, %v4022
        %v4192 = vsel %vm2224, %v2610, %v4024
        %v4193 = vsel %vm2224, %v2611, %v4026
        %v4194 = vsel %vm2224, %v2612, %v4028
        %v4195 = vsel %vm2224, %v2613, %v4030
        %v4196 = vsel %vm2224, %v2614, %v4032
        %v4197 = vsel %vm2224, %v2615, %v4034
        %v4198 = vsel %vm2224, %v2616, %v4036
        %v4199 = vsel %vm2224, %v2617, %v4038
        %v4200 = vsel %vm2224, %v2618, %v4040
        %vm4201 = vcmask 523264
        %v4202 = vsel %vm4201, %v4185, %v4074
        %v4203 = vsel %vm4201, %v4186, %v4076
        %v4204 = vsel %vm4201, %v4187, %v4078
        %v4205 = vsel %vm4201, %v4188, %v4080
        %v4206 = vsel %vm4201, %v4189, %v4082
        %v4207 = vsel %vm4201, %v4190, %v4084
        %v4208 = vsel %vm4201, %v4191, %v4086
        %v4209 = vsel %vm4201, %v4192, %v4088
        %v4210 = vsel %vm4201, %v4193, %v4090
        %v4211 = vsel %vm4201, %v4194, %v4092
        %v4212 = vsel %vm4201, %v4195, %v4094
        %v4213 = vsel %vm4201, %v4196, %v4096
        %v4214 = vsel %vm4201, %v4197, %v4098
        %v4215 = vsel %vm4201, %v4198, %v4100
        %v4216 = vsel %vm4201, %v4199, %v4102
        %v4217 = vsel %vm4201, %v4200, %v4104
        %vm4218 = vcmask 785408
        %v4219 = vsel %vm4218, %v4202, %v4138
        %v4220 = vsel %vm4218, %v4203, %v4140
        %v4221 = vsel %vm4218, %v4204, %v4142
        %v4222 = vsel %vm4218, %v4205, %v4144
        %v4223 = vsel %vm4218, %v4206, %v4146
        %v4224 = vsel %vm4218, %v4207, %v4148
        %v4225 = vsel %vm4218, %v4208, %v4150
        %v4226 = vsel %vm4218, %v4209, %v4152
        %v4227 = vsel %vm4218, %v4210, %v4154
        %v4228 = vsel %vm4218, %v4211, %v4156
        %v4229 = vsel %vm4218, %v4212, %v4158
        %v4230 = vsel %vm4218, %v4213, %v4160
        %v4231 = vsel %vm4218, %v4214, %v4162
        %v4232 = vsel %vm4218, %v4215, %v4164
        %v4233 = vsel %vm4218, %v4216, %v4166
        %v4234 = vsel %vm4218, %v4217, %v4168
        %s4235 = scalar_lea.vmem %s840, 1
        %v4236 = vld [vmem:[%s4235] sm:$0x1]
        %v4238 = vlaneseq
        %v4239 = vshrl.u32 %v4238, 7
        %v4240 = vsub.s32 0, %v4239
        %v4241 = vrot.slane %v4236, %v4240
        %v4244 = vsel %vm2224, %v2193, 0
        %v4247 = vsel %vm2224, %v2196, 0
        %v4250 = vsel %vm2224, %v2199, 0
        %v4253 = vsel %vm2224, %v2202, 0
        %v4256 = vsel %vm2224, %v2205, 0
        %v4259 = vsel %vm2224, %v2208, 0
        %v4262 = vsel %vm2224, %v2211, 0
        %v4265 = vsel %vm2224, %v2214, 0
        %v4268 = vsel %vm2224, %v2194, 0
        %v4271 = vsel %vm2224, %v2197, 0
        %v4274 = vsel %vm2224, %v2200, 0
        %v4277 = vsel %vm2224, %v2203, 0
        %v4280 = vsel %vm2224, %v2206, 0
        %v4283 = vsel %vm2224, %v2209, 0
        %v4286 = vsel %vm2224, %v2212, 0
        %v4289 = vsel %vm2224, %v2215, 0
        %4291 = vmatprep.subr.bf16.mxu0 0
        %4292 = vmatpush1.bf16.xpose.msra.mxu0 %v4268
        %4293 = vmatprep.subr.bf16.mxu0 0
        %4294 = vmatpush1.bf16.xpose.msra.mxu0 %v4271
        %4295 = vmatprep.subr.bf16.mxu0 0
        %4296 = vmatpush1.bf16.xpose.msra.mxu0 %v4274
        %4297 = vmatprep.subr.bf16.mxu0 0
        %4298 = vmatpush1.bf16.xpose.msra.mxu0 %v4277
        %4299 = vmatprep.subr.bf16.mxu0 0
        %4300 = vmatpush1.bf16.xpose.msra.mxu0 %v4280
        %4301 = vmatprep.subr.bf16.mxu0 0
        %4302 = vmatpush1.bf16.xpose.msra.mxu0 %v4283
        %4303 = vmatprep.subr.bf16.mxu0 0
        %4304 = vmatpush1.bf16.xpose.msra.mxu0 %v4286
        %4305 = vmatprep.subr.bf16.mxu0 0
        %4306 = vmatpush1.bf16.xpose.msra.mxu0 %v4289
        %4307 = vmatprep.subr.bf16.mxu0 0
        %4308 = vmatpush1.bf16.xpose.msra.mxu0 0
        %4309 = vmatprep.subr.bf16.mxu0 0
        %4310 = vmatpush1.bf16.xpose.msra.mxu0 0
        %4311 = vmatprep.subr.bf16.mxu0 0
        %4312 = vmatpush1.bf16.xpose.msra.mxu0 0
        %4313 = vmatprep.subr.bf16.mxu0 0
        %4314 = vmatpush1.bf16.xpose.msra.mxu0 0
        %4315 = vmatprep.subr.bf16.mxu0 0
        %4316 = vmatpush1.bf16.xpose.msra.mxu0 0
        %4317 = vmatprep.subr.bf16.mxu0 0
        %4318 = vmatpush1.bf16.xpose.msra.mxu0 0
        %4319 = vmatprep.subr.bf16.mxu0 0
        %4320 = vmatpush1.bf16.xpose.msra.mxu0 0
        %4321 = vmatprep.subr.bf16.mxu0 0
        %4322 = vmatpush1.bf16.xpose.msra.mxu0 0
        %4323 = vmatprep.mubr.bf16.mxu0 0
        %4324 = vmatmul.mubr.bf16.gmra.mrb[0].mxu0 %v4244
        %v4325 = vpop.f32.mrb[0].mxu0
        %v4326 = vadd.f32 %v4241, %v4325
        %v4327 = vpop.f32.mrb[0].mxu0
        %v4328 = vpop.f32.mrb[0].mxu0
        %v4329 = vadd.f32 %v4241, %v4328
        %v4330 = vpop.f32.mrb[0].mxu0
        %4331 = vmatprep.mubr.bf16.mxu0 0
        %4332 = vmatmul.mubr.bf16.gmra.mrb[0].mxu0 %v4247
        %v4333 = vpop.f32.mrb[0].mxu0
        %v4334 = vadd.f32 %v4241, %v4333
        %v4335 = vpop.f32.mrb[0].mxu0
        %v4336 = vpop.f32.mrb[0].mxu0
        %v4337 = vadd.f32 %v4241, %v4336
        %v4338 = vpop.f32.mrb[0].mxu0
        %4339 = vmatprep.mubr.bf16.mxu0 0
        %4340 = vmatmul.mubr.bf16.gmra.mrb[0].mxu0 %v4250
        %v4341 = vpop.f32.mrb[0].mxu0
        %v4342 = vadd.f32 %v4241, %v4341
        %v4343 = vpop.f32.mrb[0].mxu0
        %v4344 = vpop.f32.mrb[0].mxu0
        %v4345 = vadd.f32 %v4241, %v4344
        %v4346 = vpop.f32.mrb[0].mxu0
        %4347 = vmatprep.mubr.bf16.mxu0 0
        %4348 = vmatmul.mubr.bf16.gmra.mrb[0].mxu0 %v4253
        %v4349 = vpop.f32.mrb[0].mxu0
        %v4350 = vadd.f32 %v4241, %v4349
        %v4351 = vpop.f32.mrb[0].mxu0
        %v4352 = vpop.f32.mrb[0].mxu0
        %v4353 = vadd.f32 %v4241, %v4352
        %v4354 = vpop.f32.mrb[0].mxu0
        %4355 = vmatprep.mubr.bf16.mxu0 0
        %4356 = vmatmul.mubr.bf16.gmra.mrb[0].mxu0 %v4256
        %v4357 = vpop.f32.mrb[0].mxu0
        %v4358 = vadd.f32 %v4241, %v4357
        %v4359 = vpop.f32.mrb[0].mxu0
        %v4360 = vpop.f32.mrb[0].mxu0
        %v4361 = vadd.f32 %v4241, %v4360
        %v4362 = vpop.f32.mrb[0].mxu0
        %4363 = vmatprep.mubr.bf16.mxu0 0
        %4364 = vmatmul.mubr.bf16.gmra.mrb[0].mxu0 %v4259
        %v4365 = vpop.f32.mrb[0].mxu0
        %v4366 = vadd.f32 %v4241, %v4365
        %v4367 = vpop.f32.mrb[0].mxu0
        %v4368 = vpop.f32.mrb[0].mxu0
        %v4369 = vadd.f32 %v4241, %v4368
        %v4370 = vpop.f32.mrb[0].mxu0
        %4371 = vmatprep.mubr.bf16.mxu0 0
        %4372 = vmatmul.mubr.bf16.gmra.mrb[0].mxu0 %v4262
        %v4373 = vpop.f32.mrb[0].mxu0
        %v4374 = vadd.f32 %v4241, %v4373
        %v4375 = vpop.f32.mrb[0].mxu0
        %v4376 = vpop.f32.mrb[0].mxu0
        %v4377 = vadd.f32 %v4241, %v4376
        %v4378 = vpop.f32.mrb[0].mxu0
        %4379 = vmatprep.mubr.bf16.mxu0 0
        %4380 = vmatmul.mubr.bf16.gmra.mrb[0].mxu0 %v4265
        %v4381 = vpop.f32.mrb[0].mxu0
        %v4382 = vadd.f32 %v4241, %v4381
        %v4383 = vpop.f32.mrb[0].mxu0
        %v4384 = vpop.f32.mrb[0].mxu0
        %v4385 = vadd.f32 %v4241, %v4384
        %v4386 = vpop.f32.mrb[0].mxu0
        %4387 = vdwg.mxu0
        %4388 = vmax.xlane.f32.xlu0 %v4326
        %v4389 = vpop.xlane.xlu0 %4388
        %4390 = vmax.xlane.f32.xlu0 %v4329
        %v4391 = vpop.xlane.xlu0 %4390
        %4392 = vmax.xlane.f32.xlu0 %v4334
        %v4393 = vpop.xlane.xlu0 %4392
        %4394 = vmax.xlane.f32.xlu0 %v4337
        %v4395 = vpop.xlane.xlu0 %4394
        %4396 = vmax.xlane.f32.xlu0 %v4342
        %v4397 = vpop.xlane.xlu0 %4396
        %4398 = vmax.xlane.f32.xlu0 %v4345
        %v4399 = vpop.xlane.xlu0 %4398
        %4400 = vmax.xlane.f32.xlu0 %v4350
        %v4401 = vpop.xlane.xlu0 %4400
        %4402 = vmax.xlane.f32.xlu0 %v4353
        %v4403 = vpop.xlane.xlu0 %4402
        %4404 = vmax.xlane.f32.xlu0 %v4358
        %v4405 = vpop.xlane.xlu0 %4404
        %4406 = vmax.xlane.f32.xlu0 %v4361
        %v4407 = vpop.xlane.xlu0 %4406
        %4408 = vmax.xlane.f32.xlu0 %v4366
        %v4409 = vpop.xlane.xlu0 %4408
        %4410 = vmax.xlane.f32.xlu0 %v4369
        %v4411 = vpop.xlane.xlu0 %4410
        %4412 = vmax.xlane.f32.xlu0 %v4374
        %v4413 = vpop.xlane.xlu0 %4412
        %4414 = vmax.xlane.f32.xlu0 %v4377
        %v4415 = vpop.xlane.xlu0 %4414
        %4416 = vmax.xlane.f32.xlu0 %v4382
        %v4417 = vpop.xlane.xlu0 %4416
        %4418 = vmax.xlane.f32.xlu0 %v4385
        %v4419 = vpop.xlane.xlu0 %4418
        %v4420 = vsub.f32 %v4326, %v4389
        %v4421 = vsub.f32 %v4329, %v4391
        %v4422 = vsub.f32 %v4334, %v4393
        %v4423 = vsub.f32 %v4337, %v4395
        %v4424 = vsub.f32 %v4342, %v4397
        %v4425 = vsub.f32 %v4345, %v4399
        %v4426 = vsub.f32 %v4350, %v4401
        %v4427 = vsub.f32 %v4353, %v4403
        %v4428 = vsub.f32 %v4358, %v4405
        %v4429 = vsub.f32 %v4361, %v4407
        %v4430 = vsub.f32 %v4366, %v4409
        %v4431 = vsub.f32 %v4369, %v4411
        %v4432 = vsub.f32 %v4374, %v4413
        %v4433 = vsub.f32 %v4377, %v4415
        %v4434 = vsub.f32 %v4382, %v4417
        %v4435 = vsub.f32 %v4385, %v4419
        %v4436 = vmul.f32 %v4420, 1.442695
        %v4437 = vpow.pop %v4436
        %v4438 = vmul.f32 %v4421, 1.442695
        %v4439 = vpow.pop %v4438
        %v4440 = vmul.f32 %v4422, 1.442695
        %v4441 = vpow.pop %v4440
        %v4442 = vmul.f32 %v4423, 1.442695
        %v4443 = vpow.pop %v4442
        %v4444 = vmul.f32 %v4424, 1.442695
        %v4445 = vpow.pop %v4444
        %v4446 = vmul.f32 %v4425, 1.442695
        %v4447 = vpow.pop %v4446
        %v4448 = vmul.f32 %v4426, 1.442695
        %v4449 = vpow.pop %v4448
        %v4450 = vmul.f32 %v4427, 1.442695
        %v4451 = vpow.pop %v4450
        %v4452 = vmul.f32 %v4428, 1.442695
        %v4453 = vpow.pop %v4452
        %v4454 = vmul.f32 %v4429, 1.442695
        %v4455 = vpow.pop %v4454
        %v4456 = vmul.f32 %v4430, 1.442695
        %v4457 = vpow.pop %v4456
        %v4458 = vmul.f32 %v4431, 1.442695
        %v4459 = vpow.pop %v4458
        %v4460 = vmul.f32 %v4432, 1.442695
        %v4461 = vpow.pop %v4460
        %v4462 = vmul.f32 %v4433, 1.442695
        %v4463 = vpow.pop %v4462
        %v4464 = vmul.f32 %v4434, 1.442695
        %v4465 = vpow.pop %v4464
        %v4466 = vmul.f32 %v4435, 1.442695
        %v4467 = vpow.pop %v4466
        %4468 = vadd.xlane.f32.xlu0 %v4437
        %v4469 = vpop.xlane.xlu0 %4468
        %4470 = vadd.xlane.f32.xlu0 %v4439
        %v4471 = vpop.xlane.xlu0 %4470
        %4472 = vadd.xlane.f32.xlu0 %v4441
        %v4473 = vpop.xlane.xlu0 %4472
        %4474 = vadd.xlane.f32.xlu0 %v4443
        %v4475 = vpop.xlane.xlu0 %4474
        %4476 = vadd.xlane.f32.xlu0 %v4445
        %v4477 = vpop.xlane.xlu0 %4476
        %4478 = vadd.xlane.f32.xlu0 %v4447
        %v4479 = vpop.xlane.xlu0 %4478
        %4480 = vadd.xlane.f32.xlu0 %v4449
        %v4481 = vpop.xlane.xlu0 %4480
        %4482 = vadd.xlane.f32.xlu0 %v4451
        %v4483 = vpop.xlane.xlu0 %4482
        %4484 = vadd.xlane.f32.xlu0 %v4453
        %v4485 = vpop.xlane.xlu0 %4484
        %4486 = vadd.xlane.f32.xlu0 %v4455
        %v4487 = vpop.xlane.xlu0 %4486
        %4488 = vadd.xlane.f32.xlu0 %v4457
        %v4489 = vpop.xlane.xlu0 %4488
        %4490 = vadd.xlane.f32.xlu0 %v4459
        %v4491 = vpop.xlane.xlu0 %4490
        %4492 = vadd.xlane.f32.xlu0 %v4461
        %v4493 = vpop.xlane.xlu0 %4492
        %4494 = vadd.xlane.f32.xlu0 %v4463
        %v4495 = vpop.xlane.xlu0 %4494
        %4496 = vadd.xlane.f32.xlu0 %v4465
        %v4497 = vpop.xlane.xlu0 %4496
        %4498 = vadd.xlane.f32.xlu0 %v4467
        %v4499 = vpop.xlane.xlu0 %4498
        %v4500 = vpack.c.bf16 %v4439, %v4437
        %v4501 = vpack.c.bf16 %v4443, %v4441
        %v4502 = vpack.c.bf16 %v4447, %v4445
        %v4503 = vpack.c.bf16 %v4451, %v4449
        %v4504 = vpack.c.bf16 %v4455, %v4453
        %v4505 = vpack.c.bf16 %v4459, %v4457
        %v4506 = vpack.c.bf16 %v4463, %v4461
        %v4507 = vpack.c.bf16 %v4467, %v4465
        %4508 = vmatprep.subr.bf16.mxu0 0
        %4509 = vmatpush1.bf16.msra.mxu0 %v2195
        %4510 = vmatprep.subr.bf16.mxu0 0
        %4511 = vmatpush1.bf16.msra.mxu0 %v2198
        %4512 = vmatprep.subr.bf16.mxu0 0
        %4513 = vmatpush1.bf16.msra.mxu0 %v2201
        %4514 = vmatprep.subr.bf16.mxu0 0
        %4515 = vmatpush1.bf16.msra.mxu0 %v2204
        %4516 = vmatprep.subr.bf16.mxu0 0
        %4517 = vmatpush1.bf16.msra.mxu0 %v2207
        %4518 = vmatprep.subr.bf16.mxu0 0
        %4519 = vmatpush1.bf16.msra.mxu0 %v2210
        %4520 = vmatprep.subr.bf16.mxu0 0
        %4521 = vmatpush1.bf16.msra.mxu0 %v2213
        %4522 = vmatprep.subr.bf16.mxu0 0
        %4523 = vmatpush1.bf16.msra.mxu0 %v2216
        %4524 = vmatprep.subr.bf16.mxu0 0
        %4525 = vmatpush1.bf16.msra.mxu0 0
        %4526 = vmatprep.subr.bf16.mxu0 0
        %4527 = vmatpush1.bf16.msra.mxu0 0
        %4528 = vmatprep.subr.bf16.mxu0 0
        %4529 = vmatpush1.bf16.msra.mxu0 0
        %4530 = vmatprep.subr.bf16.mxu0 0
        %4531 = vmatpush1.bf16.msra.mxu0 0
        %4532 = vmatprep.subr.bf16.mxu0 0
        %4533 = vmatpush1.bf16.msra.mxu0 0
        %4534 = vmatprep.subr.bf16.mxu0 0
        %4535 = vmatpush1.bf16.msra.mxu0 0
        %4536 = vmatprep.subr.bf16.mxu0 0
        %4537 = vmatpush1.bf16.msra.mxu0 0
        %4538 = vmatprep.subr.bf16.mxu0 0
        %4539 = vmatpush1.bf16.msra.mxu0 0
        %4540 = vmatprep.mubr.bf16.mxu0 0
        %4541 = vmatmul.mubr.bf16.gmra.mrb[0].mxu0 %v4500
        %v4542 = vpop.f32.mrb[0].mxu0
        %v4543 = vadd.f32 0.0, %v4542
        %v4544 = vpop.f32.mrb[0].mxu0
        %v4545 = vpop.f32.mrb[0].mxu0
        %v4546 = vadd.f32 0.0, %v4545
        %v4547 = vpop.f32.mrb[0].mxu0
        %4548 = vmatprep.mubr.bf16.mxu0 0
        %4549 = vmatmul.mubr.bf16.gmra.mrb[0].mxu0 %v4501
        %v4550 = vpop.f32.mrb[0].mxu0
        %v4551 = vadd.f32 0.0, %v4550
        %v4552 = vpop.f32.mrb[0].mxu0
        %v4553 = vpop.f32.mrb[0].mxu0
        %v4554 = vadd.f32 0.0, %v4553
        %v4555 = vpop.f32.mrb[0].mxu0
        %4556 = vmatprep.mubr.bf16.mxu0 0
        %4557 = vmatmul.mubr.bf16.gmra.mrb[0].mxu0 %v4502
        %v4558 = vpop.f32.mrb[0].mxu0
        %v4559 = vadd.f32 0.0, %v4558
        %v4560 = vpop.f32.mrb[0].mxu0
        %v4561 = vpop.f32.mrb[0].mxu0
        %v4562 = vadd.f32 0.0, %v4561
        %v4563 = vpop.f32.mrb[0].mxu0
        %4564 = vmatprep.mubr.bf16.mxu0 0
        %4565 = vmatmul.mubr.bf16.gmra.mrb[0].mxu0 %v4503
        %v4566 = vpop.f32.mrb[0].mxu0
        %v4567 = vadd.f32 0.0, %v4566
        %v4568 = vpop.f32.mrb[0].mxu0
        %v4569 = vpop.f32.mrb[0].mxu0
        %v4570 = vadd.f32 0.0, %v4569
        %v4571 = vpop.f32.mrb[0].mxu0
        %4572 = vmatprep.mubr.bf16.mxu0 0
        %4573 = vmatmul.mubr.bf16.gmra.mrb[0].mxu0 %v4504
        %v4574 = vpop.f32.mrb[0].mxu0
        %v4575 = vadd.f32 0.0, %v4574
        %v4576 = vpop.f32.mrb[0].mxu0
        %v4577 = vpop.f32.mrb[0].mxu0
        %v4578 = vadd.f32 0.0, %v4577
        %v4579 = vpop.f32.mrb[0].mxu0
        %4580 = vmatprep.mubr.bf16.mxu0 0
        %4581 = vmatmul.mubr.bf16.gmra.mrb[0].mxu0 %v4505
        %v4582 = vpop.f32.mrb[0].mxu0
        %v4583 = vadd.f32 0.0, %v4582
        %v4584 = vpop.f32.mrb[0].mxu0
        %v4585 = vpop.f32.mrb[0].mxu0
        %v4586 = vadd.f32 0.0, %v4585
        %v4587 = vpop.f32.mrb[0].mxu0
        %4588 = vmatprep.mubr.bf16.mxu0 0
        %4589 = vmatmul.mubr.bf16.gmra.mrb[0].mxu0 %v4506
        %v4590 = vpop.f32.mrb[0].mxu0
        %v4591 = vadd.f32 0.0, %v4590
        %v4592 = vpop.f32.mrb[0].mxu0
        %v4593 = vpop.f32.mrb[0].mxu0
        %v4594 = vadd.f32 0.0, %v4593
        %v4595 = vpop.f32.mrb[0].mxu0
        %4596 = vmatprep.mubr.bf16.mxu0 0
        %4597 = vmatmul.mubr.bf16.gmra.mrb[0].mxu0 %v4507
        %v4598 = vpop.f32.mrb[0].mxu0
        %v4599 = vadd.f32 0.0, %v4598
        %v4600 = vpop.f32.mrb[0].mxu0
        %v4601 = vpop.f32.mrb[0].mxu0
        %v4602 = vadd.f32 0.0, %v4601
        %v4603 = vpop.f32.mrb[0].mxu0
        %4604 = vdwg.mxu0
        %v4605 = vrcp.pop %v4469
        %v4606 = vrcp.pop %v4471
        %v4607 = vrcp.pop %v4473
        %v4608 = vrcp.pop %v4475
        %v4609 = vrcp.pop %v4477
        %v4610 = vrcp.pop %v4479
        %v4611 = vrcp.pop %v4481
        %v4612 = vrcp.pop %v4483
        %v4613 = vrcp.pop %v4485
        %v4614 = vrcp.pop %v4487
        %v4615 = vrcp.pop %v4489
        %v4616 = vrcp.pop %v4491
        %v4617 = vrcp.pop %v4493
        %v4618 = vrcp.pop %v4495
        %v4619 = vrcp.pop %v4497
        %v4620 = vrcp.pop %v4499
        %v4621 = vmul.f32 %v4543, %v4605
        %v4622 = vmul.f32 %v4546, %v4606
        %v4623 = vmul.f32 %v4551, %v4607
        %v4624 = vmul.f32 %v4554, %v4608
        %v4625 = vmul.f32 %v4559, %v4609
        %v4626 = vmul.f32 %v4562, %v4610
        %v4627 = vmul.f32 %v4567, %v4611
        %v4628 = vmul.f32 %v4570, %v4612
        %v4629 = vmul.f32 %v4575, %v4613
        %v4630 = vmul.f32 %v4578, %v4614
        %v4631 = vmul.f32 %v4583, %v4615
        %v4632 = vmul.f32 %v4586, %v4616
        %v4633 = vmul.f32 %v4591, %v4617
        %v4634 = vmul.f32 %v4594, %v4618
        %v4635 = vmul.f32 %v4599, %v4619
        %v4636 = vmul.f32 %v4602, %v4620
        %4645 = vrot.lane.b32.xlu0 %v2193, 96
        %v4646 = vpop.permute.xlu0 %4645
        %4647 = vrot.lane.b32.xlu0 %v2196, 96
        %v4648 = vpop.permute.xlu0 %4647
        %4649 = vrot.lane.b32.xlu0 %v2199, 96
        %v4650 = vpop.permute.xlu0 %4649
        %4651 = vrot.lane.b32.xlu0 %v2202, 96
        %v4652 = vpop.permute.xlu0 %4651
        %4653 = vrot.lane.b32.xlu0 %v2205, 96
        %v4654 = vpop.permute.xlu0 %4653
        %4655 = vrot.lane.b32.xlu0 %v2208, 96
        %v4656 = vpop.permute.xlu0 %4655
        %4657 = vrot.lane.b32.xlu0 %v2211, 96
        %v4658 = vpop.permute.xlu0 %4657
        %4659 = vrot.lane.b32.xlu0 %v2214, 96
        %v4660 = vpop.permute.xlu0 %4659
        %4669 = vrot.lane.b32.xlu0 %v2194, 96
        %v4670 = vpop.permute.xlu0 %4669
        %4671 = vrot.lane.b32.xlu0 %v2197, 96
        %v4672 = vpop.permute.xlu0 %4671
        %4673 = vrot.lane.b32.xlu0 %v2200, 96
        %v4674 = vpop.permute.xlu0 %4673
        %4675 = vrot.lane.b32.xlu0 %v2203, 96
        %v4676 = vpop.permute.xlu0 %4675
        %4677 = vrot.lane.b32.xlu0 %v2206, 96
        %v4678 = vpop.permute.xlu0 %4677
        %4679 = vrot.lane.b32.xlu0 %v2209, 96
        %v4680 = vpop.permute.xlu0 %4679
        %4681 = vrot.lane.b32.xlu0 %v2212, 96
        %v4682 = vpop.permute.xlu0 %4681
        %4683 = vrot.lane.b32.xlu0 %v2215, 96
        %v4684 = vpop.permute.xlu0 %4683
        %v4686 = vsel %vm2224, %v4646, 0
        %v4689 = vsel %vm2224, %v4648, 0
        %v4692 = vsel %vm2224, %v4650, 0
        %v4695 = vsel %vm2224, %v4652, 0
        %v4698 = vsel %vm2224, %v4654, 0
        %v4701 = vsel %vm2224, %v4656, 0
        %v4704 = vsel %vm2224, %v4658, 0
        %v4707 = vsel %vm2224, %v4660, 0
        %v4710 = vsel %vm2224, %v4670, 0
        %v4713 = vsel %vm2224, %v4672, 0
        %v4716 = vsel %vm2224, %v4674, 0
        %v4719 = vsel %vm2224, %v4676, 0
        %v4722 = vsel %vm2224, %v4678, 0
        %v4725 = vsel %vm2224, %v4680, 0
        %v4728 = vsel %vm2224, %v4682, 0
        %v4731 = vsel %vm2224, %v4684, 0
        %4733 = vmatprep.subr.bf16.mxu0 0
        %4734 = vmatpush1.bf16.xpose.msra.mxu0 %v4710
        %4735 = vmatprep.subr.bf16.mxu0 0
        %4736 = vmatpush1.bf16.xpose.msra.mxu0 %v4713
        %4737 = vmatprep.subr.bf16.mxu0 0
        %4738 = vmatpush1.bf16.xpose.msra.mxu0 %v4716
        %4739 = vmatprep.subr.bf16.mxu0 0
        %4740 = vmatpush1.bf16.xpose.msra.mxu0 %v4719
        %4741 = vmatprep.subr.bf16.mxu0 0
        %4742 = vmatpush1.bf16.xpose.msra.mxu0 %v4722
        %4743 = vmatprep.subr.bf16.mxu0 0
        %4744 = vmatpush1.bf16.xpose.msra.mxu0 %v4725
        %4745 = vmatprep.subr.bf16.mxu0 0
        %4746 = vmatpush1.bf16.xpose.msra.mxu0 %v4728
        %4747 = vmatprep.subr.bf16.mxu0 0
        %4748 = vmatpush1.bf16.xpose.msra.mxu0 %v4731
        %4749 = vmatprep.subr.bf16.mxu0 0
        %4750 = vmatpush1.bf16.xpose.msra.mxu0 0
        %4751 = vmatprep.subr.bf16.mxu0 0
        %4752 = vmatpush1.bf16.xpose.msra.mxu0 0
        %4753 = vmatprep.subr.bf16.mxu0 0
        %4754 = vmatpush1.bf16.xpose.msra.mxu0 0
        %4755 = vmatprep.subr.bf16.mxu0 0
        %4756 = vmatpush1.bf16.xpose.msra.mxu0 0
        %4757 = vmatprep.subr.bf16.mxu0 0
        %4758 = vmatpush1.bf16.xpose.msra.mxu0 0
        %4759 = vmatprep.subr.bf16.mxu0 0
        %4760 = vmatpush1.bf16.xpose.msra.mxu0 0
        %4761 = vmatprep.subr.bf16.mxu0 0
        %4762 = vmatpush1.bf16.xpose.msra.mxu0 0
        %4763 = vmatprep.subr.bf16.mxu0 0
        %4764 = vmatpush1.bf16.xpose.msra.mxu0 0
        %4765 = vmatprep.mubr.bf16.mxu0 0
        %4766 = vmatmul.mubr.bf16.gmra.mrb[0].mxu0 %v4686
        %v4767 = vpop.f32.mrb[0].mxu0
        %v4768 = vadd.f32 %v4241, %v4767
        %v4769 = vpop.f32.mrb[0].mxu0
        %v4770 = vpop.f32.mrb[0].mxu0
        %v4771 = vadd.f32 %v4241, %v4770
        %v4772 = vpop.f32.mrb[0].mxu0
        %4773 = vmatprep.mubr.bf16.mxu0 0
        %4774 = vmatmul.mubr.bf16.gmra.mrb[0].mxu0 %v4689
        %v4775 = vpop.f32.mrb[0].mxu0
        %v4776 = vadd.f32 %v4241, %v4775
        %v4777 = vpop.f32.mrb[0].mxu0
        %v4778 = vpop.f32.mrb[0].mxu0
        %v4779 = vadd.f32 %v4241, %v4778
        %v4780 = vpop.f32.mrb[0].mxu0
        %4781 = vmatprep.mubr.bf16.mxu0 0
        %4782 = vmatmul.mubr.bf16.gmra.mrb[0].mxu0 %v4692
        %v4783 = vpop.f32.mrb[0].mxu0
        %v4784 = vadd.f32 %v4241, %v4783
        %v4785 = vpop.f32.mrb[0].mxu0
        %v4786 = vpop.f32.mrb[0].mxu0
        %v4787 = vadd.f32 %v4241, %v4786
        %v4788 = vpop.f32.mrb[0].mxu0
        %4789 = vmatprep.mubr.bf16.mxu0 0
        %4790 = vmatmul.mubr.bf16.gmra.mrb[0].mxu0 %v4695
        %v4791 = vpop.f32.mrb[0].mxu0
        %v4792 = vadd.f32 %v4241, %v4791
        %v4793 = vpop.f32.mrb[0].mxu0
        %v4794 = vpop.f32.mrb[0].mxu0
        %v4795 = vadd.f32 %v4241, %v4794
        %v4796 = vpop.f32.mrb[0].mxu0
        %4797 = vmatprep.mubr.bf16.mxu0 0
        %4798 = vmatmul.mubr.bf16.gmra.mrb[0].mxu0 %v4698
        %v4799 = vpop.f32.mrb[0].mxu0
        %v4800 = vadd.f32 %v4241, %v4799
        %v4801 = vpop.f32.mrb[0].mxu0
        %v4802 = vpop.f32.mrb[0].mxu0
        %v4803 = vadd.f32 %v4241, %v4802
        %v4804 = vpop.f32.mrb[0].mxu0
        %4805 = vmatprep.mubr.bf16.mxu0 0
        %4806 = vmatmul.mubr.bf16.gmra.mrb[0].mxu0 %v4701
        %v4807 = vpop.f32.mrb[0].mxu0
        %v4808 = vadd.f32 %v4241, %v4807
        %v4809 = vpop.f32.mrb[0].mxu0
        %v4810 = vpop.f32.mrb[0].mxu0
        %v4811 = vadd.f32 %v4241, %v4810
        %v4812 = vpop.f32.mrb[0].mxu0
        %4813 = vmatprep.mubr.bf16.mxu0 0
        %4814 = vmatmul.mubr.bf16.gmra.mrb[0].mxu0 %v4704
        %v4815 = vpop.f32.mrb[0].mxu0
        %v4816 = vadd.f32 %v4241, %v4815
        %v4817 = vpop.f32.mrb[0].mxu0
        %v4818 = vpop.f32.mrb[0].mxu0
        %v4819 = vadd.f32 %v4241, %v4818
        %v4820 = vpop.f32.mrb[0].mxu0
        %4821 = vmatprep.mubr.bf16.mxu0 0
        %4822 = vmatmul.mubr.bf16.gmra.mrb[0].mxu0 %v4707
        %v4823 = vpop.f32.mrb[0].mxu0
        %v4824 = vadd.f32 %v4241, %v4823
        %v4825 = vpop.f32.mrb[0].mxu0
        %v4826 = vpop.f32.mrb[0].mxu0
        %v4827 = vadd.f32 %v4241, %v4826
        %v4828 = vpop.f32.mrb[0].mxu0
        %4829 = vdwg.mxu0
        %4830 = vmax.xlane.f32.xlu0 %v4768
        %v4831 = vpop.xlane.xlu0 %4830
        %4832 = vmax.xlane.f32.xlu0 %v4771
        %v4833 = vpop.xlane.xlu0 %4832
        %4834 = vmax.xlane.f32.xlu0 %v4776
        %v4835 = vpop.xlane.xlu0 %4834
        %4836 = vmax.xlane.f32.xlu0 %v4779
        %v4837 = vpop.xlane.xlu0 %4836
        %4838 = vmax.xlane.f32.xlu0 %v4784
        %v4839 = vpop.xlane.xlu0 %4838
        %4840 = vmax.xlane.f32.xlu0 %v4787
        %v4841 = vpop.xlane.xlu0 %4840
        %4842 = vmax.xlane.f32.xlu0 %v4792
        %v4843 = vpop.xlane.xlu0 %4842
        %4844 = vmax.xlane.f32.xlu0 %v4795
        %v4845 = vpop.xlane.xlu0 %4844
        %4846 = vmax.xlane.f32.xlu0 %v4800
        %v4847 = vpop.xlane.xlu0 %4846
        %4848 = vmax.xlane.f32.xlu0 %v4803
        %v4849 = vpop.xlane.xlu0 %4848
        %4850 = vmax.xlane.f32.xlu0 %v4808
        %v4851 = vpop.xlane.xlu0 %4850
        %4852 = vmax.xlane.f32.xlu0 %v4811
        %v4853 = vpop.xlane.xlu0 %4852
        %4854 = vmax.xlane.f32.xlu0 %v4816
        %v4855 = vpop.xlane.xlu0 %4854
        %4856 = vmax.xlane.f32.xlu0 %v4819
        %v4857 = vpop.xlane.xlu0 %4856
        %4858 = vmax.xlane.f32.xlu0 %v4824
        %v4859 = vpop.xlane.xlu0 %4858
        %4860 = vmax.xlane.f32.xlu0 %v4827
        %v4861 = vpop.xlane.xlu0 %4860
        %v4862 = vsub.f32 %v4768, %v4831
        %v4863 = vsub.f32 %v4771, %v4833
        %v4864 = vsub.f32 %v4776, %v4835
        %v4865 = vsub.f32 %v4779, %v4837
        %v4866 = vsub.f32 %v4784, %v4839
        %v4867 = vsub.f32 %v4787, %v4841
        %v4868 = vsub.f32 %v4792, %v4843
        %v4869 = vsub.f32 %v4795, %v4845
        %v4870 = vsub.f32 %v4800, %v4847
        %v4871 = vsub.f32 %v4803, %v4849
        %v4872 = vsub.f32 %v4808, %v4851
        %v4873 = vsub.f32 %v4811, %v4853
        %v4874 = vsub.f32 %v4816, %v4855
        %v4875 = vsub.f32 %v4819, %v4857
        %v4876 = vsub.f32 %v4824, %v4859
        %v4877 = vsub.f32 %v4827, %v4861
        %v4878 = vmul.f32 %v4862, 1.442695
        %v4879 = vpow.pop %v4878
        %v4880 = vmul.f32 %v4863, 1.442695
        %v4881 = vpow.pop %v4880
        %v4882 = vmul.f32 %v4864, 1.442695
        %v4883 = vpow.pop %v4882
        %v4884 = vmul.f32 %v4865, 1.442695
        %v4885 = vpow.pop %v4884
        %v4886 = vmul.f32 %v4866, 1.442695
        %v4887 = vpow.pop %v4886
        %v4888 = vmul.f32 %v4867, 1.442695
        %v4889 = vpow.pop %v4888
        %v4890 = vmul.f32 %v4868, 1.442695
        %v4891 = vpow.pop %v4890
        %v4892 = vmul.f32 %v4869, 1.442695
        %v4893 = vpow.pop %v4892
        %v4894 = vmul.f32 %v4870, 1.442695
        %v4895 = vpow.pop %v4894
        %v4896 = vmul.f32 %v4871, 1.442695
        %v4897 = vpow.pop %v4896
        %v4898 = vmul.f32 %v4872, 1.442695
        %v4899 = vpow.pop %v4898
        %v4900 = vmul.f32 %v4873, 1.442695
        %v4901 = vpow.pop %v4900
        %v4902 = vmul.f32 %v4874, 1.442695
        %v4903 = vpow.pop %v4902
        %v4904 = vmul.f32 %v4875, 1.442695
        %v4905 = vpow.pop %v4904
        %v4906 = vmul.f32 %v4876, 1.442695
        %v4907 = vpow.pop %v4906
        %v4908 = vmul.f32 %v4877, 1.442695
        %v4909 = vpow.pop %v4908
        %4910 = vadd.xlane.f32.xlu0 %v4879
        %v4911 = vpop.xlane.xlu0 %4910
        %4912 = vadd.xlane.f32.xlu0 %v4881
        %v4913 = vpop.xlane.xlu0 %4912
        %4914 = vadd.xlane.f32.xlu0 %v4883
        %v4915 = vpop.xlane.xlu0 %4914
        %4916 = vadd.xlane.f32.xlu0 %v4885
        %v4917 = vpop.xlane.xlu0 %4916
        %4918 = vadd.xlane.f32.xlu0 %v4887
        %v4919 = vpop.xlane.xlu0 %4918
        %4920 = vadd.xlane.f32.xlu0 %v4889
        %v4921 = vpop.xlane.xlu0 %4920
        %4922 = vadd.xlane.f32.xlu0 %v4891
        %v4923 = vpop.xlane.xlu0 %4922
        %4924 = vadd.xlane.f32.xlu0 %v4893
        %v4925 = vpop.xlane.xlu0 %4924
        %4926 = vadd.xlane.f32.xlu0 %v4895
        %v4927 = vpop.xlane.xlu0 %4926
        %4928 = vadd.xlane.f32.xlu0 %v4897
        %v4929 = vpop.xlane.xlu0 %4928
        %4930 = vadd.xlane.f32.xlu0 %v4899
        %v4931 = vpop.xlane.xlu0 %4930
        %4932 = vadd.xlane.f32.xlu0 %v4901
        %v4933 = vpop.xlane.xlu0 %4932
        %4934 = vadd.xlane.f32.xlu0 %v4903
        %v4935 = vpop.xlane.xlu0 %4934
        %4936 = vadd.xlane.f32.xlu0 %v4905
        %v4937 = vpop.xlane.xlu0 %4936
        %4938 = vadd.xlane.f32.xlu0 %v4907
        %v4939 = vpop.xlane.xlu0 %4938
        %4940 = vadd.xlane.f32.xlu0 %v4909
        %v4941 = vpop.xlane.xlu0 %4940
        %v4942 = vpack.c.bf16 %v4881, %v4879
        %v4943 = vpack.c.bf16 %v4885, %v4883
        %v4944 = vpack.c.bf16 %v4889, %v4887
        %v4945 = vpack.c.bf16 %v4893, %v4891
        %v4946 = vpack.c.bf16 %v4897, %v4895
        %v4947 = vpack.c.bf16 %v4901, %v4899
        %v4948 = vpack.c.bf16 %v4905, %v4903
        %v4949 = vpack.c.bf16 %v4909, %v4907
        %4958 = vrot.lane.b32.xlu0 %v2195, 96
        %v4959 = vpop.permute.xlu0 %4958
        %4960 = vrot.lane.b32.xlu0 %v2198, 96
        %v4961 = vpop.permute.xlu0 %4960
        %4962 = vrot.lane.b32.xlu0 %v2201, 96
        %v4963 = vpop.permute.xlu0 %4962
        %4964 = vrot.lane.b32.xlu0 %v2204, 96
        %v4965 = vpop.permute.xlu0 %4964
        %4966 = vrot.lane.b32.xlu0 %v2207, 96
        %v4967 = vpop.permute.xlu0 %4966
        %4968 = vrot.lane.b32.xlu0 %v2210, 96
        %v4969 = vpop.permute.xlu0 %4968
        %4970 = vrot.lane.b32.xlu0 %v2213, 96
        %v4971 = vpop.permute.xlu0 %4970
        %4972 = vrot.lane.b32.xlu0 %v2216, 96
        %v4973 = vpop.permute.xlu0 %4972
        %4982 = vmatprep.subr.bf16.mxu0 0
        %4983 = vmatpush1.bf16.msra.mxu0 %v4959
        %4984 = vmatprep.subr.bf16.mxu0 0
        %4985 = vmatpush1.bf16.msra.mxu0 %v4961
        %4986 = vmatprep.subr.bf16.mxu0 0
        %4987 = vmatpush1.bf16.msra.mxu0 %v4963
        %4988 = vmatprep.subr.bf16.mxu0 0
        %4989 = vmatpush1.bf16.msra.mxu0 %v4965
        %4990 = vmatprep.subr.bf16.mxu0 0
        %4991 = vmatpush1.bf16.msra.mxu0 %v4967
        %4992 = vmatprep.subr.bf16.mxu0 0
        %4993 = vmatpush1.bf16.msra.mxu0 %v4969
        %4994 = vmatprep.subr.bf16.mxu0 0
        %4995 = vmatpush1.bf16.msra.mxu0 %v4971
        %4996 = vmatprep.subr.bf16.mxu0 0
        %4997 = vmatpush1.bf16.msra.mxu0 %v4973
        %4998 = vmatprep.subr.bf16.mxu0 0
        %4999 = vmatpush1.bf16.msra.mxu0 0
        %5000 = vmatprep.subr.bf16.mxu0 0
        %5001 = vmatpush1.bf16.msra.mxu0 0
        %5002 = vmatprep.subr.bf16.mxu0 0
        %5003 = vmatpush1.bf16.msra.mxu0 0
        %5004 = vmatprep.subr.bf16.mxu0 0
        %5005 = vmatpush1.bf16.msra.mxu0 0
        %5006 = vmatprep.subr.bf16.mxu0 0
        %5007 = vmatpush1.bf16.msra.mxu0 0
        %5008 = vmatprep.subr.bf16.mxu0 0
        %5009 = vmatpush1.bf16.msra.mxu0 0
        %5010 = vmatprep.subr.bf16.mxu0 0
        %5011 = vmatpush1.bf16.msra.mxu0 0
        %5012 = vmatprep.subr.bf16.mxu0 0
        %5013 = vmatpush1.bf16.msra.mxu0 0
        %5014 = vmatprep.mubr.bf16.mxu0 0
        %5015 = vmatmul.mubr.bf16.gmra.mrb[0].mxu0 %v4942
        %v5016 = vpop.f32.mrb[0].mxu0
        %v5017 = vadd.f32 0.0, %v5016
        %v5018 = vpop.f32.mrb[0].mxu0
        %v5019 = vpop.f32.mrb[0].mxu0
        %v5020 = vadd.f32 0.0, %v5019
        %v5021 = vpop.f32.mrb[0].mxu0
        %5022 = vmatprep.mubr.bf16.mxu0 0
        %5023 = vmatmul.mubr.bf16.gmra.mrb[0].mxu0 %v4943
        %v5024 = vpop.f32.mrb[0].mxu0
        %v5025 = vadd.f32 0.0, %v5024
        %v5026 = vpop.f32.mrb[0].mxu0
        %v5027 = vpop.f32.mrb[0].mxu0
        %v5028 = vadd.f32 0.0, %v5027
        %v5029 = vpop.f32.mrb[0].mxu0
        %5030 = vmatprep.mubr.bf16.mxu0 0
        %5031 = vmatmul.mubr.bf16.gmra.mrb[0].mxu0 %v4944
        %v5032 = vpop.f32.mrb[0].mxu0
        %v5033 = vadd.f32 0.0, %v5032
        %v5034 = vpop.f32.mrb[0].mxu0
        %v5035 = vpop.f32.mrb[0].mxu0
        %v5036 = vadd.f32 0.0, %v5035
        %v5037 = vpop.f32.mrb[0].mxu0
        %5038 = vmatprep.mubr.bf16.mxu0 0
        %5039 = vmatmul.mubr.bf16.gmra.mrb[0].mxu0 %v4945
        %v5040 = vpop.f32.mrb[0].mxu0
        %v5041 = vadd.f32 0.0, %v5040
        %v5042 = vpop.f32.mrb[0].mxu0
        %v5043 = vpop.f32.mrb[0].mxu0
        %v5044 = vadd.f32 0.0, %v5043
        %v5045 = vpop.f32.mrb[0].mxu0
        %5046 = vmatprep.mubr.bf16.mxu0 0
        %5047 = vmatmul.mubr.bf16.gmra.mrb[0].mxu0 %v4946
        %v5048 = vpop.f32.mrb[0].mxu0
        %v5049 = vadd.f32 0.0, %v5048
        %v5050 = vpop.f32.mrb[0].mxu0
        %v5051 = vpop.f32.mrb[0].mxu0
        %v5052 = vadd.f32 0.0, %v5051
        %v5053 = vpop.f32.mrb[0].mxu0
        %5054 = vmatprep.mubr.bf16.mxu0 0
        %5055 = vmatmul.mubr.bf16.gmra.mrb[0].mxu0 %v4947
        %v5056 = vpop.f32.mrb[0].mxu0
        %v5057 = vadd.f32 0.0, %v5056
        %v5058 = vpop.f32.mrb[0].mxu0
        %v5059 = vpop.f32.mrb[0].mxu0
        %v5060 = vadd.f32 0.0, %v5059
        %v5061 = vpop.f32.mrb[0].mxu0
        %5062 = vmatprep.mubr.bf16.mxu0 0
        %5063 = vmatmul.mubr.bf16.gmra.mrb[0].mxu0 %v4948
        %v5064 = vpop.f32.mrb[0].mxu0
        %v5065 = vadd.f32 0.0, %v5064
        %v5066 = vpop.f32.mrb[0].mxu0
        %v5067 = vpop.f32.mrb[0].mxu0
        %v5068 = vadd.f32 0.0, %v5067
        %v5069 = vpop.f32.mrb[0].mxu0
        %5070 = vmatprep.mubr.bf16.mxu0 0
        %5071 = vmatmul.mubr.bf16.gmra.mrb[0].mxu0 %v4949
        %v5072 = vpop.f32.mrb[0].mxu0
        %v5073 = vadd.f32 0.0, %v5072
        %v5074 = vpop.f32.mrb[0].mxu0
        %v5075 = vpop.f32.mrb[0].mxu0
        %v5076 = vadd.f32 0.0, %v5075
        %v5077 = vpop.f32.mrb[0].mxu0
        %5078 = vdwg.mxu0
        %v5079 = vrcp.pop %v4911
        %v5080 = vrcp.pop %v4913
        %v5081 = vrcp.pop %v4915
        %v5082 = vrcp.pop %v4917
        %v5083 = vrcp.pop %v4919
        %v5084 = vrcp.pop %v4921
        %v5085 = vrcp.pop %v4923
        %v5086 = vrcp.pop %v4925
        %v5087 = vrcp.pop %v4927
        %v5088 = vrcp.pop %v4929
        %v5089 = vrcp.pop %v4931
        %v5090 = vrcp.pop %v4933
        %v5091 = vrcp.pop %v4935
        %v5092 = vrcp.pop %v4937
        %v5093 = vrcp.pop %v4939
        %v5094 = vrcp.pop %v4941
        %v5095 = vmul.f32 %v5017, %v5079
        %v5096 = vmul.f32 %v5020, %v5080
        %v5097 = vmul.f32 %v5025, %v5081
        %v5098 = vmul.f32 %v5028, %v5082
        %v5099 = vmul.f32 %v5033, %v5083
        %v5100 = vmul.f32 %v5036, %v5084
        %v5101 = vmul.f32 %v5041, %v5085
        %v5102 = vmul.f32 %v5044, %v5086
        %v5103 = vmul.f32 %v5049, %v5087
        %v5104 = vmul.f32 %v5052, %v5088
        %v5105 = vmul.f32 %v5057, %v5089
        %v5106 = vmul.f32 %v5060, %v5090
        %v5107 = vmul.f32 %v5065, %v5091
        %v5108 = vmul.f32 %v5068, %v5092
        %v5109 = vmul.f32 %v5073, %v5093
        %v5110 = vmul.f32 %v5076, %v5094
        %5111 = vrot.lane.b32.xlu0 %v2193, 64
        %v5112 = vpop.permute.xlu0 %5111
        %5113 = vrot.lane.b32.xlu0 %v2196, 64
        %v5114 = vpop.permute.xlu0 %5113
        %5115 = vrot.lane.b32.xlu0 %v2199, 64
        %v5116 = vpop.permute.xlu0 %5115
        %5117 = vrot.lane.b32.xlu0 %v2202, 64
        %v5118 = vpop.permute.xlu0 %5117
        %5119 = vrot.lane.b32.xlu0 %v2205, 64
        %v5120 = vpop.permute.xlu0 %5119
        %5121 = vrot.lane.b32.xlu0 %v2208, 64
        %v5122 = vpop.permute.xlu0 %5121
        %5123 = vrot.lane.b32.xlu0 %v2211, 64
        %v5124 = vpop.permute.xlu0 %5123
        %5125 = vrot.lane.b32.xlu0 %v2214, 64
        %v5126 = vpop.permute.xlu0 %5125
        %5127 = vrot.lane.b32.xlu0 %v2194, 64
        %v5128 = vpop.permute.xlu0 %5127
        %5129 = vrot.lane.b32.xlu0 %v2197, 64
        %v5130 = vpop.permute.xlu0 %5129
        %5131 = vrot.lane.b32.xlu0 %v2200, 64
        %v5132 = vpop.permute.xlu0 %5131
        %5133 = vrot.lane.b32.xlu0 %v2203, 64
        %v5134 = vpop.permute.xlu0 %5133
        %5135 = vrot.lane.b32.xlu0 %v2206, 64
        %v5136 = vpop.permute.xlu0 %5135
        %5137 = vrot.lane.b32.xlu0 %v2209, 64
        %v5138 = vpop.permute.xlu0 %5137
        %5139 = vrot.lane.b32.xlu0 %v2212, 64
        %v5140 = vpop.permute.xlu0 %5139
        %5141 = vrot.lane.b32.xlu0 %v2215, 64
        %v5142 = vpop.permute.xlu0 %5141
        %v5144 = vsel %vm2224, %v5112, 0
        %v5147 = vsel %vm2224, %v5114, 0
        %v5150 = vsel %vm2224, %v5116, 0
        %v5153 = vsel %vm2224, %v5118, 0
        %v5156 = vsel %vm2224, %v5120, 0
        %v5159 = vsel %vm2224, %v5122, 0
        %v5162 = vsel %vm2224, %v5124, 0
        %v5165 = vsel %vm2224, %v5126, 0
        %v5168 = vsel %vm2224, %v5128, 0
        %v5171 = vsel %vm2224, %v5130, 0
        %v5174 = vsel %vm2224, %v5132, 0
        %v5177 = vsel %vm2224, %v5134, 0
        %v5180 = vsel %vm2224, %v5136, 0
        %v5183 = vsel %vm2224, %v5138, 0
        %v5186 = vsel %vm2224, %v5140, 0
        %v5189 = vsel %vm2224, %v5142, 0
        %5191 = vmatprep.subr.bf16.mxu0 0
        %5192 = vmatpush1.bf16.xpose.msra.mxu0 %v5168
        %5193 = vmatprep.subr.bf16.mxu0 0
        %5194 = vmatpush1.bf16.xpose.msra.mxu0 %v5171
        %5195 = vmatprep.subr.bf16.mxu0 0
        %5196 = vmatpush1.bf16.xpose.msra.mxu0 %v5174
        %5197 = vmatprep.subr.bf16.mxu0 0
        %5198 = vmatpush1.bf16.xpose.msra.mxu0 %v5177
        %5199 = vmatprep.subr.bf16.mxu0 0
        %5200 = vmatpush1.bf16.xpose.msra.mxu0 %v5180
        %5201 = vmatprep.subr.bf16.mxu0 0
        %5202 = vmatpush1.bf16.xpose.msra.mxu0 %v5183
        %5203 = vmatprep.subr.bf16.mxu0 0
        %5204 = vmatpush1.bf16.xpose.msra.mxu0 %v5186
        %5205 = vmatprep.subr.bf16.mxu0 0
        %5206 = vmatpush1.bf16.xpose.msra.mxu0 %v5189
        %5207 = vmatprep.subr.bf16.mxu0 0
        %5208 = vmatpush1.bf16.xpose.msra.mxu0 0
        %5209 = vmatprep.subr.bf16.mxu0 0
        %5210 = vmatpush1.bf16.xpose.msra.mxu0 0
        %5211 = vmatprep.subr.bf16.mxu0 0
        %5212 = vmatpush1.bf16.xpose.msra.mxu0 0
        %5213 = vmatprep.subr.bf16.mxu0 0
        %5214 = vmatpush1.bf16.xpose.msra.mxu0 0
        %5215 = vmatprep.subr.bf16.mxu0 0
        %5216 = vmatpush1.bf16.xpose.msra.mxu0 0
        %5217 = vmatprep.subr.bf16.mxu0 0
        %5218 = vmatpush1.bf16.xpose.msra.mxu0 0
        %5219 = vmatprep.subr.bf16.mxu0 0
        %5220 = vmatpush1.bf16.xpose.msra.mxu0 0
        %5221 = vmatprep.subr.bf16.mxu0 0
        %5222 = vmatpush1.bf16.xpose.msra.mxu0 0
        %5223 = vmatprep.mubr.bf16.mxu0 0
        %5224 = vmatmul.mubr.bf16.gmra.mrb[0].mxu0 %v5144
        %v5225 = vpop.f32.mrb[0].mxu0
        %v5226 = vadd.f32 %v4241, %v5225
        %v5227 = vpop.f32.mrb[0].mxu0
        %v5228 = vpop.f32.mrb[0].mxu0
        %v5229 = vadd.f32 %v4241, %v5228
        %v5230 = vpop.f32.mrb[0].mxu0
        %5231 = vmatprep.mubr.bf16.mxu0 0
        %5232 = vmatmul.mubr.bf16.gmra.mrb[0].mxu0 %v5147
        %v5233 = vpop.f32.mrb[0].mxu0
        %v5234 = vadd.f32 %v4241, %v5233
        %v5235 = vpop.f32.mrb[0].mxu0
        %v5236 = vpop.f32.mrb[0].mxu0
        %v5237 = vadd.f32 %v4241, %v5236
        %v5238 = vpop.f32.mrb[0].mxu0
        %5239 = vmatprep.mubr.bf16.mxu0 0
        %5240 = vmatmul.mubr.bf16.gmra.mrb[0].mxu0 %v5150
        %v5241 = vpop.f32.mrb[0].mxu0
        %v5242 = vadd.f32 %v4241, %v5241
        %v5243 = vpop.f32.mrb[0].mxu0
        %v5244 = vpop.f32.mrb[0].mxu0
        %v5245 = vadd.f32 %v4241, %v5244
        %v5246 = vpop.f32.mrb[0].mxu0
        %5247 = vmatprep.mubr.bf16.mxu0 0
        %5248 = vmatmul.mubr.bf16.gmra.mrb[0].mxu0 %v5153
        %v5249 = vpop.f32.mrb[0].mxu0
        %v5250 = vadd.f32 %v4241, %v5249
        %v5251 = vpop.f32.mrb[0].mxu0
        %v5252 = vpop.f32.mrb[0].mxu0
        %v5253 = vadd.f32 %v4241, %v5252
        %v5254 = vpop.f32.mrb[0].mxu0
        %5255 = vmatprep.mubr.bf16.mxu0 0
        %5256 = vmatmul.mubr.bf16.gmra.mrb[0].mxu0 %v5156
        %v5257 = vpop.f32.mrb[0].mxu0
        %v5258 = vadd.f32 %v4241, %v5257
        %v5259 = vpop.f32.mrb[0].mxu0
        %v5260 = vpop.f32.mrb[0].mxu0
        %v5261 = vadd.f32 %v4241, %v5260
        %v5262 = vpop.f32.mrb[0].mxu0
        %5263 = vmatprep.mubr.bf16.mxu0 0
        %5264 = vmatmul.mubr.bf16.gmra.mrb[0].mxu0 %v5159
        %v5265 = vpop.f32.mrb[0].mxu0
        %v5266 = vadd.f32 %v4241, %v5265
        %v5267 = vpop.f32.mrb[0].mxu0
        %v5268 = vpop.f32.mrb[0].mxu0
        %v5269 = vadd.f32 %v4241, %v5268
        %v5270 = vpop.f32.mrb[0].mxu0
        %5271 = vmatprep.mubr.bf16.mxu0 0
        %5272 = vmatmul.mubr.bf16.gmra.mrb[0].mxu0 %v5162
        %v5273 = vpop.f32.mrb[0].mxu0
        %v5274 = vadd.f32 %v4241, %v5273
        %v5275 = vpop.f32.mrb[0].mxu0
        %v5276 = vpop.f32.mrb[0].mxu0
        %v5277 = vadd.f32 %v4241, %v5276
        %v5278 = vpop.f32.mrb[0].mxu0
        %5279 = vmatprep.mubr.bf16.mxu0 0
        %5280 = vmatmul.mubr.bf16.gmra.mrb[0].mxu0 %v5165
        %v5281 = vpop.f32.mrb[0].mxu0
        %v5282 = vadd.f32 %v4241, %v5281
        %v5283 = vpop.f32.mrb[0].mxu0
        %v5284 = vpop.f32.mrb[0].mxu0
        %v5285 = vadd.f32 %v4241, %v5284
        %v5286 = vpop.f32.mrb[0].mxu0
        %5287 = vdwg.mxu0
        %5288 = vmax.xlane.f32.xlu0 %v5226
        %v5289 = vpop.xlane.xlu0 %5288
        %5290 = vmax.xlane.f32.xlu0 %v5229
        %v5291 = vpop.xlane.xlu0 %5290
        %5292 = vmax.xlane.f32.xlu0 %v5234
        %v5293 = vpop.xlane.xlu0 %5292
        %5294 = vmax.xlane.f32.xlu0 %v5237
        %v5295 = vpop.xlane.xlu0 %5294
        %5296 = vmax.xlane.f32.xlu0 %v5242
        %v5297 = vpop.xlane.xlu0 %5296
        %5298 = vmax.xlane.f32.xlu0 %v5245
        %v5299 = vpop.xlane.xlu0 %5298
        %5300 = vmax.xlane.f32.xlu0 %v5250
        %v5301 = vpop.xlane.xlu0 %5300
        %5302 = vmax.xlane.f32.xlu0 %v5253
        %v5303 = vpop.xlane.xlu0 %5302
        %5304 = vmax.xlane.f32.xlu0 %v5258
        %v5305 = vpop.xlane.xlu0 %5304
        %5306 = vmax.xlane.f32.xlu0 %v5261
        %v5307 = vpop.xlane.xlu0 %5306
        %5308 = vmax.xlane.f32.xlu0 %v5266
        %v5309 = vpop.xlane.xlu0 %5308
        %5310 = vmax.xlane.f32.xlu0 %v5269
        %v5311 = vpop.xlane.xlu0 %5310
        %5312 = vmax.xlane.f32.xlu0 %v5274
        %v5313 = vpop.xlane.xlu0 %5312
        %5314 = vmax.xlane.f32.xlu0 %v5277
        %v5315 = vpop.xlane.xlu0 %5314
        %5316 = vmax.xlane.f32.xlu0 %v5282
        %v5317 = vpop.xlane.xlu0 %5316
        %5318 = vmax.xlane.f32.xlu0 %v5285
        %v5319 = vpop.xlane.xlu0 %5318
        %v5320 = vsub.f32 %v5226, %v5289
        %v5321 = vsub.f32 %v5229, %v5291
        %v5322 = vsub.f32 %v5234, %v5293
        %v5323 = vsub.f32 %v5237, %v5295
        %v5324 = vsub.f32 %v5242, %v5297
        %v5325 = vsub.f32 %v5245, %v5299
        %v5326 = vsub.f32 %v5250, %v5301
        %v5327 = vsub.f32 %v5253, %v5303
        %v5328 = vsub.f32 %v5258, %v5305
        %v5329 = vsub.f32 %v5261, %v5307
        %v5330 = vsub.f32 %v5266, %v5309
        %v5331 = vsub.f32 %v5269, %v5311
        %v5332 = vsub.f32 %v5274, %v5313
        %v5333 = vsub.f32 %v5277, %v5315
        %v5334 = vsub.f32 %v5282, %v5317
        %v5335 = vsub.f32 %v5285, %v5319
        %v5336 = vmul.f32 %v5320, 1.442695
        %v5337 = vpow.pop %v5336
        %v5338 = vmul.f32 %v5321, 1.442695
        %v5339 = vpow.pop %v5338
        %v5340 = vmul.f32 %v5322, 1.442695
        %v5341 = vpow.pop %v5340
        %v5342 = vmul.f32 %v5323, 1.442695
        %v5343 = vpow.pop %v5342
        %v5344 = vmul.f32 %v5324, 1.442695
        %v5345 = vpow.pop %v5344
        %v5346 = vmul.f32 %v5325, 1.442695
        %v5347 = vpow.pop %v5346
        %v5348 = vmul.f32 %v5326, 1.442695
        %v5349 = vpow.pop %v5348
        %v5350 = vmul.f32 %v5327, 1.442695
        %v5351 = vpow.pop %v5350
        %v5352 = vmul.f32 %v5328, 1.442695
        %v5353 = vpow.pop %v5352
        %v5354 = vmul.f32 %v5329, 1.442695
        %v5355 = vpow.pop %v5354
        %v5356 = vmul.f32 %v5330, 1.442695
        %v5357 = vpow.pop %v5356
        %v5358 = vmul.f32 %v5331, 1.442695
        %v5359 = vpow.pop %v5358
        %v5360 = vmul.f32 %v5332, 1.442695
        %v5361 = vpow.pop %v5360
        %v5362 = vmul.f32 %v5333, 1.442695
        %v5363 = vpow.pop %v5362
        %v5364 = vmul.f32 %v5334, 1.442695
        %v5365 = vpow.pop %v5364
        %v5366 = vmul.f32 %v5335, 1.442695
        %v5367 = vpow.pop %v5366
        %5368 = vadd.xlane.f32.xlu0 %v5337
        %v5369 = vpop.xlane.xlu0 %5368
        %5370 = vadd.xlane.f32.xlu0 %v5339
        %v5371 = vpop.xlane.xlu0 %5370
        %5372 = vadd.xlane.f32.xlu0 %v5341
        %v5373 = vpop.xlane.xlu0 %5372
        %5374 = vadd.xlane.f32.xlu0 %v5343
        %v5375 = vpop.xlane.xlu0 %5374
        %5376 = vadd.xlane.f32.xlu0 %v5345
        %v5377 = vpop.xlane.xlu0 %5376
        %5378 = vadd.xlane.f32.xlu0 %v5347
        %v5379 = vpop.xlane.xlu0 %5378
        %5380 = vadd.xlane.f32.xlu0 %v5349
        %v5381 = vpop.xlane.xlu0 %5380
        %5382 = vadd.xlane.f32.xlu0 %v5351
        %v5383 = vpop.xlane.xlu0 %5382
        %5384 = vadd.xlane.f32.xlu0 %v5353
        %v5385 = vpop.xlane.xlu0 %5384
        %5386 = vadd.xlane.f32.xlu0 %v5355
        %v5387 = vpop.xlane.xlu0 %5386
        %5388 = vadd.xlane.f32.xlu0 %v5357
        %v5389 = vpop.xlane.xlu0 %5388
        %5390 = vadd.xlane.f32.xlu0 %v5359
        %v5391 = vpop.xlane.xlu0 %5390
        %5392 = vadd.xlane.f32.xlu0 %v5361
        %v5393 = vpop.xlane.xlu0 %5392
        %5394 = vadd.xlane.f32.xlu0 %v5363
        %v5395 = vpop.xlane.xlu0 %5394
        %5396 = vadd.xlane.f32.xlu0 %v5365
        %v5397 = vpop.xlane.xlu0 %5396
        %5398 = vadd.xlane.f32.xlu0 %v5367
        %v5399 = vpop.xlane.xlu0 %5398
        %v5400 = vpack.c.bf16 %v5339, %v5337
        %v5401 = vpack.c.bf16 %v5343, %v5341
        %v5402 = vpack.c.bf16 %v5347, %v5345
        %v5403 = vpack.c.bf16 %v5351, %v5349
        %v5404 = vpack.c.bf16 %v5355, %v5353
        %v5405 = vpack.c.bf16 %v5359, %v5357
        %v5406 = vpack.c.bf16 %v5363, %v5361
        %v5407 = vpack.c.bf16 %v5367, %v5365
        %5408 = vrot.lane.b32.xlu0 %v2195, 64
        %v5409 = vpop.permute.xlu0 %5408
        %5410 = vrot.lane.b32.xlu0 %v2198, 64
        %v5411 = vpop.permute.xlu0 %5410
        %5412 = vrot.lane.b32.xlu0 %v2201, 64
        %v5413 = vpop.permute.xlu0 %5412
        %5414 = vrot.lane.b32.xlu0 %v2204, 64
        %v5415 = vpop.permute.xlu0 %5414
        %5416 = vrot.lane.b32.xlu0 %v2207, 64
        %v5417 = vpop.permute.xlu0 %5416
        %5418 = vrot.lane.b32.xlu0 %v2210, 64
        %v5419 = vpop.permute.xlu0 %5418
        %5420 = vrot.lane.b32.xlu0 %v2213, 64
        %v5421 = vpop.permute.xlu0 %5420
        %5422 = vrot.lane.b32.xlu0 %v2216, 64
        %v5423 = vpop.permute.xlu0 %5422
        %5432 = vmatprep.subr.bf16.mxu0 0
        %5433 = vmatpush1.bf16.msra.mxu0 %v5409
        %5434 = vmatprep.subr.bf16.mxu0 0
        %5435 = vmatpush1.bf16.msra.mxu0 %v5411
        %5436 = vmatprep.subr.bf16.mxu0 0
        %5437 = vmatpush1.bf16.msra.mxu0 %v5413
        %5438 = vmatprep.subr.bf16.mxu0 0
        %5439 = vmatpush1.bf16.msra.mxu0 %v5415
        %5440 = vmatprep.subr.bf16.mxu0 0
        %5441 = vmatpush1.bf16.msra.mxu0 %v5417
        %5442 = vmatprep.subr.bf16.mxu0 0
        %5443 = vmatpush1.bf16.msra.mxu0 %v5419
        %5444 = vmatprep.subr.bf16.mxu0 0
        %5445 = vmatpush1.bf16.msra.mxu0 %v5421
        %5446 = vmatprep.subr.bf16.mxu0 0
        %5447 = vmatpush1.bf16.msra.mxu0 %v5423
        %5448 = vmatprep.subr.bf16.mxu0 0
        %5449 = vmatpush1.bf16.msra.mxu0 0
        %5450 = vmatprep.subr.bf16.mxu0 0
        %5451 = vmatpush1.bf16.msra.mxu0 0
        %5452 = vmatprep.subr.bf16.mxu0 0
        %5453 = vmatpush1.bf16.msra.mxu0 0
        %5454 = vmatprep.subr.bf16.mxu0 0
        %5455 = vmatpush1.bf16.msra.mxu0 0
        %5456 = vmatprep.subr.bf16.mxu0 0
        %5457 = vmatpush1.bf16.msra.mxu0 0
        %5458 = vmatprep.subr.bf16.mxu0 0
        %5459 = vmatpush1.bf16.msra.mxu0 0
        %5460 = vmatprep.subr.bf16.mxu0 0
        %5461 = vmatpush1.bf16.msra.mxu0 0
        %5462 = vmatprep.subr.bf16.mxu0 0
        %5463 = vmatpush1.bf16.msra.mxu0 0
        %5464 = vmatprep.mubr.bf16.mxu0 0
        %5465 = vmatmul.mubr.bf16.gmra.mrb[0].mxu0 %v5400
        %v5466 = vpop.f32.mrb[0].mxu0
        %v5467 = vadd.f32 0.0, %v5466
        %v5468 = vpop.f32.mrb[0].mxu0
        %v5469 = vpop.f32.mrb[0].mxu0
        %v5470 = vadd.f32 0.0, %v5469
        %v5471 = vpop.f32.mrb[0].mxu0
        %5472 = vmatprep.mubr.bf16.mxu0 0
        %5473 = vmatmul.mubr.bf16.gmra.mrb[0].mxu0 %v5401
        %v5474 = vpop.f32.mrb[0].mxu0
        %v5475 = vadd.f32 0.0, %v5474
        %v5476 = vpop.f32.mrb[0].mxu0
        %v5477 = vpop.f32.mrb[0].mxu0
        %v5478 = vadd.f32 0.0, %v5477
        %v5479 = vpop.f32.mrb[0].mxu0
        %5480 = vmatprep.mubr.bf16.mxu0 0
        %5481 = vmatmul.mubr.bf16.gmra.mrb[0].mxu0 %v5402
        %v5482 = vpop.f32.mrb[0].mxu0
        %v5483 = vadd.f32 0.0, %v5482
        %v5484 = vpop.f32.mrb[0].mxu0
        %v5485 = vpop.f32.mrb[0].mxu0
        %v5486 = vadd.f32 0.0, %v5485
        %v5487 = vpop.f32.mrb[0].mxu0
        %5488 = vmatprep.mubr.bf16.mxu0 0
        %5489 = vmatmul.mubr.bf16.gmra.mrb[0].mxu0 %v5403
        %v5490 = vpop.f32.mrb[0].mxu0
        %v5491 = vadd.f32 0.0, %v5490
        %v5492 = vpop.f32.mrb[0].mxu0
        %v5493 = vpop.f32.mrb[0].mxu0
        %v5494 = vadd.f32 0.0, %v5493
        %v5495 = vpop.f32.mrb[0].mxu0
        %5496 = vmatprep.mubr.bf16.mxu0 0
        %5497 = vmatmul.mubr.bf16.gmra.mrb[0].mxu0 %v5404
        %v5498 = vpop.f32.mrb[0].mxu0
        %v5499 = vadd.f32 0.0, %v5498
        %v5500 = vpop.f32.mrb[0].mxu0
        %v5501 = vpop.f32.mrb[0].mxu0
        %v5502 = vadd.f32 0.0, %v5501
        %v5503 = vpop.f32.mrb[0].mxu0
        %5504 = vmatprep.mubr.bf16.mxu0 0
        %5505 = vmatmul.mubr.bf16.gmra.mrb[0].mxu0 %v5405
        %v5506 = vpop.f32.mrb[0].mxu0
        %v5507 = vadd.f32 0.0, %v5506
        %v5508 = vpop.f32.mrb[0].mxu0
        %v5509 = vpop.f32.mrb[0].mxu0
        %v5510 = vadd.f32 0.0, %v5509
        %v5511 = vpop.f32.mrb[0].mxu0
        %5512 = vmatprep.mubr.bf16.mxu0 0
        %5513 = vmatmul.mubr.bf16.gmra.mrb[0].mxu0 %v5406
        %v5514 = vpop.f32.mrb[0].mxu0
        %v5515 = vadd.f32 0.0, %v5514
        %v5516 = vpop.f32.mrb[0].mxu0
        %v5517 = vpop.f32.mrb[0].mxu0
        %v5518 = vadd.f32 0.0, %v5517
        %v5519 = vpop.f32.mrb[0].mxu0
        %5520 = vmatprep.mubr.bf16.mxu0 0
        %5521 = vmatmul.mubr.bf16.gmra.mrb[0].mxu0 %v5407
        %v5522 = vpop.f32.mrb[0].mxu0
        %v5523 = vadd.f32 0.0, %v5522
        %v5524 = vpop.f32.mrb[0].mxu0
        %v5525 = vpop.f32.mrb[0].mxu0
        %v5526 = vadd.f32 0.0, %v5525
        %v5527 = vpop.f32.mrb[0].mxu0
        %5528 = vdwg.mxu0
        %v5529 = vrcp.pop %v5369
        %v5530 = vrcp.pop %v5371
        %v5531 = vrcp.pop %v5373
        %v5532 = vrcp.pop %v5375
        %v5533 = vrcp.pop %v5377
        %v5534 = vrcp.pop %v5379
        %v5535 = vrcp.pop %v5381
        %v5536 = vrcp.pop %v5383
        %v5537 = vrcp.pop %v5385
        %v5538 = vrcp.pop %v5387
        %v5539 = vrcp.pop %v5389
        %v5540 = vrcp.pop %v5391
        %v5541 = vrcp.pop %v5393
        %v5542 = vrcp.pop %v5395
        %v5543 = vrcp.pop %v5397
        %v5544 = vrcp.pop %v5399
        %v5545 = vmul.f32 %v5467, %v5529
        %v5546 = vmul.f32 %v5470, %v5530
        %v5547 = vmul.f32 %v5475, %v5531
        %v5548 = vmul.f32 %v5478, %v5532
        %v5549 = vmul.f32 %v5483, %v5533
        %v5550 = vmul.f32 %v5486, %v5534
        %v5551 = vmul.f32 %v5491, %v5535
        %v5552 = vmul.f32 %v5494, %v5536
        %v5553 = vmul.f32 %v5499, %v5537
        %v5554 = vmul.f32 %v5502, %v5538
        %v5555 = vmul.f32 %v5507, %v5539
        %v5556 = vmul.f32 %v5510, %v5540
        %v5557 = vmul.f32 %v5515, %v5541
        %v5558 = vmul.f32 %v5518, %v5542
        %v5559 = vmul.f32 %v5523, %v5543
        %v5560 = vmul.f32 %v5526, %v5544
        %5561 = vrot.lane.b32.xlu0 %v2193, 32
        %v5562 = vpop.permute.xlu0 %5561
        %5563 = vrot.lane.b32.xlu0 %v2196, 32
        %v5564 = vpop.permute.xlu0 %5563
        %5565 = vrot.lane.b32.xlu0 %v2199, 32
        %v5566 = vpop.permute.xlu0 %5565
        %5567 = vrot.lane.b32.xlu0 %v2202, 32
        %v5568 = vpop.permute.xlu0 %5567
        %5569 = vrot.lane.b32.xlu0 %v2205, 32
        %v5570 = vpop.permute.xlu0 %5569
        %5571 = vrot.lane.b32.xlu0 %v2208, 32
        %v5572 = vpop.permute.xlu0 %5571
        %5573 = vrot.lane.b32.xlu0 %v2211, 32
        %v5574 = vpop.permute.xlu0 %5573
        %5575 = vrot.lane.b32.xlu0 %v2214, 32
        %v5576 = vpop.permute.xlu0 %5575
        %5577 = vrot.lane.b32.xlu0 %v2194, 32
        %v5578 = vpop.permute.xlu0 %5577
        %5579 = vrot.lane.b32.xlu0 %v2197, 32
        %v5580 = vpop.permute.xlu0 %5579
        %5581 = vrot.lane.b32.xlu0 %v2200, 32
        %v5582 = vpop.permute.xlu0 %5581
        %5583 = vrot.lane.b32.xlu0 %v2203, 32
        %v5584 = vpop.permute.xlu0 %5583
        %5585 = vrot.lane.b32.xlu0 %v2206, 32
        %v5586 = vpop.permute.xlu0 %5585
        %5587 = vrot.lane.b32.xlu0 %v2209, 32
        %v5588 = vpop.permute.xlu0 %5587
        %5589 = vrot.lane.b32.xlu0 %v2212, 32
        %v5590 = vpop.permute.xlu0 %5589
        %5591 = vrot.lane.b32.xlu0 %v2215, 32
        %v5592 = vpop.permute.xlu0 %5591
        %v5594 = vsel %vm2224, %v5562, 0
        %v5597 = vsel %vm2224, %v5564, 0
        %v5600 = vsel %vm2224, %v5566, 0
        %v5603 = vsel %vm2224, %v5568, 0
        %v5606 = vsel %vm2224, %v5570, 0
        %v5609 = vsel %vm2224, %v5572, 0
        %v5612 = vsel %vm2224, %v5574, 0
        %v5615 = vsel %vm2224, %v5576, 0
        %v5618 = vsel %vm2224, %v5578, 0
        %v5621 = vsel %vm2224, %v5580, 0
        %v5624 = vsel %vm2224, %v5582, 0
        %v5627 = vsel %vm2224, %v5584, 0
        %v5630 = vsel %vm2224, %v5586, 0
        %v5633 = vsel %vm2224, %v5588, 0
        %v5636 = vsel %vm2224, %v5590, 0
        %v5639 = vsel %vm2224, %v5592, 0
        %5641 = vmatprep.subr.bf16.mxu0 0
        %5642 = vmatpush1.bf16.xpose.msra.mxu0 %v5618
        %5643 = vmatprep.subr.bf16.mxu0 0
        %5644 = vmatpush1.bf16.xpose.msra.mxu0 %v5621
        %5645 = vmatprep.subr.bf16.mxu0 0
        %5646 = vmatpush1.bf16.xpose.msra.mxu0 %v5624
        %5647 = vmatprep.subr.bf16.mxu0 0
        %5648 = vmatpush1.bf16.xpose.msra.mxu0 %v5627
        %5649 = vmatprep.subr.bf16.mxu0 0
        %5650 = vmatpush1.bf16.xpose.msra.mxu0 %v5630
        %5651 = vmatprep.subr.bf16.mxu0 0
        %5652 = vmatpush1.bf16.xpose.msra.mxu0 %v5633
        %5653 = vmatprep.subr.bf16.mxu0 0
        %5654 = vmatpush1.bf16.xpose.msra.mxu0 %v5636
        %5655 = vmatprep.subr.bf16.mxu0 0
        %5656 = vmatpush1.bf16.xpose.msra.mxu0 %v5639
        %5657 = vmatprep.subr.bf16.mxu0 0
        %5658 = vmatpush1.bf16.xpose.msra.mxu0 0
        %5659 = vmatprep.subr.bf16.mxu0 0
        %5660 = vmatpush1.bf16.xpose.msra.mxu0 0
        %5661 = vmatprep.subr.bf16.mxu0 0
        %5662 = vmatpush1.bf16.xpose.msra.mxu0 0
        %5663 = vmatprep.subr.bf16.mxu0 0
        %5664 = vmatpush1.bf16.xpose.msra.mxu0 0
        %5665 = vmatprep.subr.bf16.mxu0 0
        %5666 = vmatpush1.bf16.xpose.msra.mxu0 0
        %5667 = vmatprep.subr.bf16.mxu0 0
        %5668 = vmatpush1.bf16.xpose.msra.mxu0 0
        %5669 = vmatprep.subr.bf16.mxu0 0
        %5670 = vmatpush1.bf16.xpose.msra.mxu0 0
        %5671 = vmatprep.subr.bf16.mxu0 0
        %5672 = vmatpush1.bf16.xpose.msra.mxu0 0
        %5673 = vmatprep.mubr.bf16.mxu0 0
        %5674 = vmatmul.mubr.bf16.gmra.mrb[0].mxu0 %v5594
        %v5675 = vpop.f32.mrb[0].mxu0
        %v5676 = vadd.f32 %v4241, %v5675
        %v5677 = vpop.f32.mrb[0].mxu0
        %v5678 = vpop.f32.mrb[0].mxu0
        %v5679 = vadd.f32 %v4241, %v5678
        %v5680 = vpop.f32.mrb[0].mxu0
        %5681 = vmatprep.mubr.bf16.mxu0 0
        %5682 = vmatmul.mubr.bf16.gmra.mrb[0].mxu0 %v5597
        %v5683 = vpop.f32.mrb[0].mxu0
        %v5684 = vadd.f32 %v4241, %v5683
        %v5685 = vpop.f32.mrb[0].mxu0
        %v5686 = vpop.f32.mrb[0].mxu0
        %v5687 = vadd.f32 %v4241, %v5686
        %v5688 = vpop.f32.mrb[0].mxu0
        %5689 = vmatprep.mubr.bf16.mxu0 0
        %5690 = vmatmul.mubr.bf16.gmra.mrb[0].mxu0 %v5600
        %v5691 = vpop.f32.mrb[0].mxu0
        %v5692 = vadd.f32 %v4241, %v5691
        %v5693 = vpop.f32.mrb[0].mxu0
        %v5694 = vpop.f32.mrb[0].mxu0
        %v5695 = vadd.f32 %v4241, %v5694
        %v5696 = vpop.f32.mrb[0].mxu0
        %5697 = vmatprep.mubr.bf16.mxu0 0
        %5698 = vmatmul.mubr.bf16.gmra.mrb[0].mxu0 %v5603
        %v5699 = vpop.f32.mrb[0].mxu0
        %v5700 = vadd.f32 %v4241, %v5699
        %v5701 = vpop.f32.mrb[0].mxu0
        %v5702 = vpop.f32.mrb[0].mxu0
        %v5703 = vadd.f32 %v4241, %v5702
        %v5704 = vpop.f32.mrb[0].mxu0
        %5705 = vmatprep.mubr.bf16.mxu0 0
        %5706 = vmatmul.mubr.bf16.gmra.mrb[0].mxu0 %v5606
        %v5707 = vpop.f32.mrb[0].mxu0
        %v5708 = vadd.f32 %v4241, %v5707
        %v5709 = vpop.f32.mrb[0].mxu0
        %v5710 = vpop.f32.mrb[0].mxu0
        %v5711 = vadd.f32 %v4241, %v5710
        %v5712 = vpop.f32.mrb[0].mxu0
        %5713 = vmatprep.mubr.bf16.mxu0 0
        %5714 = vmatmul.mubr.bf16.gmra.mrb[0].mxu0 %v5609
        %v5715 = vpop.f32.mrb[0].mxu0
        %v5716 = vadd.f32 %v4241, %v5715
        %v5717 = vpop.f32.mrb[0].mxu0
        %v5718 = vpop.f32.mrb[0].mxu0
        %v5719 = vadd.f32 %v4241, %v5718
        %v5720 = vpop.f32.mrb[0].mxu0
        %5721 = vmatprep.mubr.bf16.mxu0 0
        %5722 = vmatmul.mubr.bf16.gmra.mrb[0].mxu0 %v5612
        %v5723 = vpop.f32.mrb[0].mxu0
        %v5724 = vadd.f32 %v4241, %v5723
        %v5725 = vpop.f32.mrb[0].mxu0
        %v5726 = vpop.f32.mrb[0].mxu0
        %v5727 = vadd.f32 %v4241, %v5726
        %v5728 = vpop.f32.mrb[0].mxu0
        %5729 = vmatprep.mubr.bf16.mxu0 0
        %5730 = vmatmul.mubr.bf16.gmra.mrb[0].mxu0 %v5615
        %v5731 = vpop.f32.mrb[0].mxu0
        %v5732 = vadd.f32 %v4241, %v5731
        %v5733 = vpop.f32.mrb[0].mxu0
        %v5734 = vpop.f32.mrb[0].mxu0
        %v5735 = vadd.f32 %v4241, %v5734
        %v5736 = vpop.f32.mrb[0].mxu0
        %5737 = vdwg.mxu0
        %5738 = vmax.xlane.f32.xlu0 %v5676
        %v5739 = vpop.xlane.xlu0 %5738
        %5740 = vmax.xlane.f32.xlu0 %v5679
        %v5741 = vpop.xlane.xlu0 %5740
        %5742 = vmax.xlane.f32.xlu0 %v5684
        %v5743 = vpop.xlane.xlu0 %5742
        %5744 = vmax.xlane.f32.xlu0 %v5687
        %v5745 = vpop.xlane.xlu0 %5744
        %5746 = vmax.xlane.f32.xlu0 %v5692
        %v5747 = vpop.xlane.xlu0 %5746
        %5748 = vmax.xlane.f32.xlu0 %v5695
        %v5749 = vpop.xlane.xlu0 %5748
        %5750 = vmax.xlane.f32.xlu0 %v5700
        %v5751 = vpop.xlane.xlu0 %5750
        %5752 = vmax.xlane.f32.xlu0 %v5703
        %v5753 = vpop.xlane.xlu0 %5752
        %5754 = vmax.xlane.f32.xlu0 %v5708
        %v5755 = vpop.xlane.xlu0 %5754
        %5756 = vmax.xlane.f32.xlu0 %v5711
        %v5757 = vpop.xlane.xlu0 %5756
        %5758 = vmax.xlane.f32.xlu0 %v5716
        %v5759 = vpop.xlane.xlu0 %5758
        %5760 = vmax.xlane.f32.xlu0 %v5719
        %v5761 = vpop.xlane.xlu0 %5760
        %5762 = vmax.xlane.f32.xlu0 %v5724
        %v5763 = vpop.xlane.xlu0 %5762
        %5764 = vmax.xlane.f32.xlu0 %v5727
        %v5765 = vpop.xlane.xlu0 %5764
        %5766 = vmax.xlane.f32.xlu0 %v5732
        %v5767 = vpop.xlane.xlu0 %5766
        %5768 = vmax.xlane.f32.xlu0 %v5735
        %v5769 = vpop.xlane.xlu0 %5768
        %v5770 = vsub.f32 %v5676, %v5739
        %v5771 = vsub.f32 %v5679, %v5741
        %v5772 = vsub.f32 %v5684, %v5743
        %v5773 = vsub.f32 %v5687, %v5745
        %v5774 = vsub.f32 %v5692, %v5747
        %v5775 = vsub.f32 %v5695, %v5749
        %v5776 = vsub.f32 %v5700, %v5751
        %v5777 = vsub.f32 %v5703, %v5753
        %v5778 = vsub.f32 %v5708, %v5755
        %v5779 = vsub.f32 %v5711, %v5757
        %v5780 = vsub.f32 %v5716, %v5759
        %v5781 = vsub.f32 %v5719, %v5761
        %v5782 = vsub.f32 %v5724, %v5763
        %v5783 = vsub.f32 %v5727, %v5765
        %v5784 = vsub.f32 %v5732, %v5767
        %v5785 = vsub.f32 %v5735, %v5769
        %v5786 = vmul.f32 %v5770, 1.442695
        %v5787 = vpow.pop %v5786
        %v5788 = vmul.f32 %v5771, 1.442695
        %v5789 = vpow.pop %v5788
        %v5790 = vmul.f32 %v5772, 1.442695
        %v5791 = vpow.pop %v5790
        %v5792 = vmul.f32 %v5773, 1.442695
        %v5793 = vpow.pop %v5792
        %v5794 = vmul.f32 %v5774, 1.442695
        %v5795 = vpow.pop %v5794
        %v5796 = vmul.f32 %v5775, 1.442695
        %v5797 = vpow.pop %v5796
        %v5798 = vmul.f32 %v5776, 1.442695
        %v5799 = vpow.pop %v5798
        %v5800 = vmul.f32 %v5777, 1.442695
        %v5801 = vpow.pop %v5800
        %v5802 = vmul.f32 %v5778, 1.442695
        %v5803 = vpow.pop %v5802
        %v5804 = vmul.f32 %v5779, 1.442695
        %v5805 = vpow.pop %v5804
        %v5806 = vmul.f32 %v5780, 1.442695
        %v5807 = vpow.pop %v5806
        %v5808 = vmul.f32 %v5781, 1.442695
        %v5809 = vpow.pop %v5808
        %v5810 = vmul.f32 %v5782, 1.442695
        %v5811 = vpow.pop %v5810
        %v5812 = vmul.f32 %v5783, 1.442695
        %v5813 = vpow.pop %v5812
        %v5814 = vmul.f32 %v5784, 1.442695
        %v5815 = vpow.pop %v5814
        %v5816 = vmul.f32 %v5785, 1.442695
        %v5817 = vpow.pop %v5816
        %5818 = vadd.xlane.f32.xlu0 %v5787
        %v5819 = vpop.xlane.xlu0 %5818
        %5820 = vadd.xlane.f32.xlu0 %v5789
        %v5821 = vpop.xlane.xlu0 %5820
        %5822 = vadd.xlane.f32.xlu0 %v5791
        %v5823 = vpop.xlane.xlu0 %5822
        %5824 = vadd.xlane.f32.xlu0 %v5793
        %v5825 = vpop.xlane.xlu0 %5824
        %5826 = vadd.xlane.f32.xlu0 %v5795
        %v5827 = vpop.xlane.xlu0 %5826
        %5828 = vadd.xlane.f32.xlu0 %v5797
        %v5829 = vpop.xlane.xlu0 %5828
        %5830 = vadd.xlane.f32.xlu0 %v5799
        %v5831 = vpop.xlane.xlu0 %5830
        %5832 = vadd.xlane.f32.xlu0 %v5801
        %v5833 = vpop.xlane.xlu0 %5832
        %5834 = vadd.xlane.f32.xlu0 %v5803
        %v5835 = vpop.xlane.xlu0 %5834
        %5836 = vadd.xlane.f32.xlu0 %v5805
        %v5837 = vpop.xlane.xlu0 %5836
        %5838 = vadd.xlane.f32.xlu0 %v5807
        %v5839 = vpop.xlane.xlu0 %5838
        %5840 = vadd.xlane.f32.xlu0 %v5809
        %v5841 = vpop.xlane.xlu0 %5840
        %5842 = vadd.xlane.f32.xlu0 %v5811
        %v5843 = vpop.xlane.xlu0 %5842
        %5844 = vadd.xlane.f32.xlu0 %v5813
        %v5845 = vpop.xlane.xlu0 %5844
        %5846 = vadd.xlane.f32.xlu0 %v5815
        %v5847 = vpop.xlane.xlu0 %5846
        %5848 = vadd.xlane.f32.xlu0 %v5817
        %v5849 = vpop.xlane.xlu0 %5848
        %v5850 = vpack.c.bf16 %v5789, %v5787
        %v5851 = vpack.c.bf16 %v5793, %v5791
        %v5852 = vpack.c.bf16 %v5797, %v5795
        %v5853 = vpack.c.bf16 %v5801, %v5799
        %v5854 = vpack.c.bf16 %v5805, %v5803
        %v5855 = vpack.c.bf16 %v5809, %v5807
        %v5856 = vpack.c.bf16 %v5813, %v5811
        %v5857 = vpack.c.bf16 %v5817, %v5815
        %5858 = vrot.lane.b32.xlu0 %v2195, 32
        %v5859 = vpop.permute.xlu0 %5858
        %5860 = vrot.lane.b32.xlu0 %v2198, 32
        %v5861 = vpop.permute.xlu0 %5860
        %5862 = vrot.lane.b32.xlu0 %v2201, 32
        %v5863 = vpop.permute.xlu0 %5862
        %5864 = vrot.lane.b32.xlu0 %v2204, 32
        %v5865 = vpop.permute.xlu0 %5864
        %5866 = vrot.lane.b32.xlu0 %v2207, 32
        %v5867 = vpop.permute.xlu0 %5866
        %5868 = vrot.lane.b32.xlu0 %v2210, 32
        %v5869 = vpop.permute.xlu0 %5868
        %5870 = vrot.lane.b32.xlu0 %v2213, 32
        %v5871 = vpop.permute.xlu0 %5870
        %5872 = vrot.lane.b32.xlu0 %v2216, 32
        %v5873 = vpop.permute.xlu0 %5872
        %5882 = vmatprep.subr.bf16.mxu0 0
        %5883 = vmatpush1.bf16.msra.mxu0 %v5859
        %5884 = vmatprep.subr.bf16.mxu0 0
        %5885 = vmatpush1.bf16.msra.mxu0 %v5861
        %5886 = vmatprep.subr.bf16.mxu0 0
        %5887 = vmatpush1.bf16.msra.mxu0 %v5863
        %5888 = vmatprep.subr.bf16.mxu0 0
        %5889 = vmatpush1.bf16.msra.mxu0 %v5865
        %5890 = vmatprep.subr.bf16.mxu0 0
        %5891 = vmatpush1.bf16.msra.mxu0 %v5867
        %5892 = vmatprep.subr.bf16.mxu0 0
        %5893 = vmatpush1.bf16.msra.mxu0 %v5869
        %5894 = vmatprep.subr.bf16.mxu0 0
        %5895 = vmatpush1.bf16.msra.mxu0 %v5871
        %5896 = vmatprep.subr.bf16.mxu0 0
        %5897 = vmatpush1.bf16.msra.mxu0 %v5873
        %5898 = vmatprep.subr.bf16.mxu0 0
        %5899 = vmatpush1.bf16.msra.mxu0 0
        %5900 = vmatprep.subr.bf16.mxu0 0
        %5901 = vmatpush1.bf16.msra.mxu0 0
        %5902 = vmatprep.subr.bf16.mxu0 0
        %5903 = vmatpush1.bf16.msra.mxu0 0
        %5904 = vmatprep.subr.bf16.mxu0 0
        %5905 = vmatpush1.bf16.msra.mxu0 0
        %5906 = vmatprep.subr.bf16.mxu0 0
        %5907 = vmatpush1.bf16.msra.mxu0 0
        %5908 = vmatprep.subr.bf16.mxu0 0
        %5909 = vmatpush1.bf16.msra.mxu0 0
        %5910 = vmatprep.subr.bf16.mxu0 0
        %5911 = vmatpush1.bf16.msra.mxu0 0
        %5912 = vmatprep.subr.bf16.mxu0 0
        %5913 = vmatpush1.bf16.msra.mxu0 0
        %5914 = vmatprep.mubr.bf16.mxu0 0
        %5915 = vmatmul.mubr.bf16.gmra.mrb[0].mxu0 %v5850
        %v5916 = vpop.f32.mrb[0].mxu0
        %v5917 = vadd.f32 0.0, %v5916
        %v5918 = vpop.f32.mrb[0].mxu0
        %v5919 = vpop.f32.mrb[0].mxu0
        %v5920 = vadd.f32 0.0, %v5919
        %v5921 = vpop.f32.mrb[0].mxu0
        %5922 = vmatprep.mubr.bf16.mxu0 0
        %5923 = vmatmul.mubr.bf16.gmra.mrb[0].mxu0 %v5851
        %v5924 = vpop.f32.mrb[0].mxu0
        %v5925 = vadd.f32 0.0, %v5924
        %v5926 = vpop.f32.mrb[0].mxu0
        %v5927 = vpop.f32.mrb[0].mxu0
        %v5928 = vadd.f32 0.0, %v5927
        %v5929 = vpop.f32.mrb[0].mxu0
        %5930 = vmatprep.mubr.bf16.mxu0 0
        %5931 = vmatmul.mubr.bf16.gmra.mrb[0].mxu0 %v5852
        %v5932 = vpop.f32.mrb[0].mxu0
        %v5933 = vadd.f32 0.0, %v5932
        %v5934 = vpop.f32.mrb[0].mxu0
        %v5935 = vpop.f32.mrb[0].mxu0
        %v5936 = vadd.f32 0.0, %v5935
        %v5937 = vpop.f32.mrb[0].mxu0
        %5938 = vmatprep.mubr.bf16.mxu0 0
        %5939 = vmatmul.mubr.bf16.gmra.mrb[0].mxu0 %v5853
        %v5940 = vpop.f32.mrb[0].mxu0
        %v5941 = vadd.f32 0.0, %v5940
        %v5942 = vpop.f32.mrb[0].mxu0
        %v5943 = vpop.f32.mrb[0].mxu0
        %v5944 = vadd.f32 0.0, %v5943
        %v5945 = vpop.f32.mrb[0].mxu0
        %5946 = vmatprep.mubr.bf16.mxu0 0
        %5947 = vmatmul.mubr.bf16.gmra.mrb[0].mxu0 %v5854
        %v5948 = vpop.f32.mrb[0].mxu0
        %v5949 = vadd.f32 0.0, %v5948
        %v5950 = vpop.f32.mrb[0].mxu0
        %v5951 = vpop.f32.mrb[0].mxu0
        %v5952 = vadd.f32 0.0, %v5951
        %v5953 = vpop.f32.mrb[0].mxu0
        %5954 = vmatprep.mubr.bf16.mxu0 0
        %5955 = vmatmul.mubr.bf16.gmra.mrb[0].mxu0 %v5855
        %v5956 = vpop.f32.mrb[0].mxu0
        %v5957 = vadd.f32 0.0, %v5956
        %v5958 = vpop.f32.mrb[0].mxu0
        %v5959 = vpop.f32.mrb[0].mxu0
        %v5960 = vadd.f32 0.0, %v5959
        %v5961 = vpop.f32.mrb[0].mxu0
        %5962 = vmatprep.mubr.bf16.mxu0 0
        %5963 = vmatmul.mubr.bf16.gmra.mrb[0].mxu0 %v5856
        %v5964 = vpop.f32.mrb[0].mxu0
        %v5965 = vadd.f32 0.0, %v5964
        %v5966 = vpop.f32.mrb[0].mxu0
        %v5967 = vpop.f32.mrb[0].mxu0
        %v5968 = vadd.f32 0.0, %v5967
        %v5969 = vpop.f32.mrb[0].mxu0
        %5970 = vmatprep.mubr.bf16.mxu0 0
        %5971 = vmatmul.mubr.bf16.gmra.mrb[0].mxu0 %v5857
        %v5972 = vpop.f32.mrb[0].mxu0
        %v5973 = vadd.f32 0.0, %v5972
        %v5974 = vpop.f32.mrb[0].mxu0
        %v5975 = vpop.f32.mrb[0].mxu0
        %v5976 = vadd.f32 0.0, %v5975
        %v5977 = vpop.f32.mrb[0].mxu0
        %5978 = vdwg.mxu0
        %v5979 = vrcp.pop %v5819
        %v5980 = vrcp.pop %v5821
        %v5981 = vrcp.pop %v5823
        %v5982 = vrcp.pop %v5825
        %v5983 = vrcp.pop %v5827
        %v5984 = vrcp.pop %v5829
        %v5985 = vrcp.pop %v5831
        %v5986 = vrcp.pop %v5833
        %v5987 = vrcp.pop %v5835
        %v5988 = vrcp.pop %v5837
        %v5989 = vrcp.pop %v5839
        %v5990 = vrcp.pop %v5841
        %v5991 = vrcp.pop %v5843
        %v5992 = vrcp.pop %v5845
        %v5993 = vrcp.pop %v5847
        %v5994 = vrcp.pop %v5849
        %v5995 = vmul.f32 %v5917, %v5979
        %v5996 = vmul.f32 %v5920, %v5980
        %v5997 = vmul.f32 %v5925, %v5981
        %v5998 = vmul.f32 %v5928, %v5982
        %v5999 = vmul.f32 %v5933, %v5983
        %v6000 = vmul.f32 %v5936, %v5984
        %v6001 = vmul.f32 %v5941, %v5985
        %v6002 = vmul.f32 %v5944, %v5986
        %v6003 = vmul.f32 %v5949, %v5987
        %v6004 = vmul.f32 %v5952, %v5988
        %v6005 = vmul.f32 %v5957, %v5989
        %v6006 = vmul.f32 %v5960, %v5990
        %v6007 = vmul.f32 %v5965, %v5991
        %v6008 = vmul.f32 %v5968, %v5992
        %v6009 = vmul.f32 %v5973, %v5993
        %v6010 = vmul.f32 %v5976, %v5994
        %6027 = vrot.lane.b32.xlu0 %v5095, 32
        %v6028 = vpop.permute.xlu0 %6027
        %6029 = vrot.lane.b32.xlu0 %v5096, 32
        %v6030 = vpop.permute.xlu0 %6029
        %6031 = vrot.lane.b32.xlu0 %v5097, 32
        %v6032 = vpop.permute.xlu0 %6031
        %6033 = vrot.lane.b32.xlu0 %v5098, 32
        %v6034 = vpop.permute.xlu0 %6033
        %6035 = vrot.lane.b32.xlu0 %v5099, 32
        %v6036 = vpop.permute.xlu0 %6035
        %6037 = vrot.lane.b32.xlu0 %v5100, 32
        %v6038 = vpop.permute.xlu0 %6037
        %6039 = vrot.lane.b32.xlu0 %v5101, 32
        %v6040 = vpop.permute.xlu0 %6039
        %6041 = vrot.lane.b32.xlu0 %v5102, 32
        %v6042 = vpop.permute.xlu0 %6041
        %6043 = vrot.lane.b32.xlu0 %v5103, 32
        %v6044 = vpop.permute.xlu0 %6043
        %6045 = vrot.lane.b32.xlu0 %v5104, 32
        %v6046 = vpop.permute.xlu0 %6045
        %6047 = vrot.lane.b32.xlu0 %v5105, 32
        %v6048 = vpop.permute.xlu0 %6047
        %6049 = vrot.lane.b32.xlu0 %v5106, 32
        %v6050 = vpop.permute.xlu0 %6049
        %6051 = vrot.lane.b32.xlu0 %v5107, 32
        %v6052 = vpop.permute.xlu0 %6051
        %6053 = vrot.lane.b32.xlu0 %v5108, 32
        %v6054 = vpop.permute.xlu0 %6053
        %6055 = vrot.lane.b32.xlu0 %v5109, 32
        %v6056 = vpop.permute.xlu0 %6055
        %6057 = vrot.lane.b32.xlu0 %v5110, 32
        %v6058 = vpop.permute.xlu0 %6057
        %6091 = vrot.lane.b32.xlu0 %v5545, 64
        %v6092 = vpop.permute.xlu0 %6091
        %6093 = vrot.lane.b32.xlu0 %v5546, 64
        %v6094 = vpop.permute.xlu0 %6093
        %6095 = vrot.lane.b32.xlu0 %v5547, 64
        %v6096 = vpop.permute.xlu0 %6095
        %6097 = vrot.lane.b32.xlu0 %v5548, 64
        %v6098 = vpop.permute.xlu0 %6097
        %6099 = vrot.lane.b32.xlu0 %v5549, 64
        %v6100 = vpop.permute.xlu0 %6099
        %6101 = vrot.lane.b32.xlu0 %v5550, 64
        %v6102 = vpop.permute.xlu0 %6101
        %6103 = vrot.lane.b32.xlu0 %v5551, 64
        %v6104 = vpop.permute.xlu0 %6103
        %6105 = vrot.lane.b32.xlu0 %v5552, 64
        %v6106 = vpop.permute.xlu0 %6105
        %6107 = vrot.lane.b32.xlu0 %v5553, 64
        %v6108 = vpop.permute.xlu0 %6107
        %6109 = vrot.lane.b32.xlu0 %v5554, 64
        %v6110 = vpop.permute.xlu0 %6109
        %6111 = vrot.lane.b32.xlu0 %v5555, 64
        %v6112 = vpop.permute.xlu0 %6111
        %6113 = vrot.lane.b32.xlu0 %v5556, 64
        %v6114 = vpop.permute.xlu0 %6113
        %6115 = vrot.lane.b32.xlu0 %v5557, 64
        %v6116 = vpop.permute.xlu0 %6115
        %6117 = vrot.lane.b32.xlu0 %v5558, 64
        %v6118 = vpop.permute.xlu0 %6117
        %6119 = vrot.lane.b32.xlu0 %v5559, 64
        %v6120 = vpop.permute.xlu0 %6119
        %6121 = vrot.lane.b32.xlu0 %v5560, 64
        %v6122 = vpop.permute.xlu0 %6121
        %6155 = vrot.lane.b32.xlu0 %v5995, 96
        %v6156 = vpop.permute.xlu0 %6155
        %6157 = vrot.lane.b32.xlu0 %v5996, 96
        %v6158 = vpop.permute.xlu0 %6157
        %6159 = vrot.lane.b32.xlu0 %v5997, 96
        %v6160 = vpop.permute.xlu0 %6159
        %6161 = vrot.lane.b32.xlu0 %v5998, 96
        %v6162 = vpop.permute.xlu0 %6161
        %6163 = vrot.lane.b32.xlu0 %v5999, 96
        %v6164 = vpop.permute.xlu0 %6163
        %6165 = vrot.lane.b32.xlu0 %v6000, 96
        %v6166 = vpop.permute.xlu0 %6165
        %6167 = vrot.lane.b32.xlu0 %v6001, 96
        %v6168 = vpop.permute.xlu0 %6167
        %6169 = vrot.lane.b32.xlu0 %v6002, 96
        %v6170 = vpop.permute.xlu0 %6169
        %6171 = vrot.lane.b32.xlu0 %v6003, 96
        %v6172 = vpop.permute.xlu0 %6171
        %6173 = vrot.lane.b32.xlu0 %v6004, 96
        %v6174 = vpop.permute.xlu0 %6173
        %6175 = vrot.lane.b32.xlu0 %v6005, 96
        %v6176 = vpop.permute.xlu0 %6175
        %6177 = vrot.lane.b32.xlu0 %v6006, 96
        %v6178 = vpop.permute.xlu0 %6177
        %6179 = vrot.lane.b32.xlu0 %v6007, 96
        %v6180 = vpop.permute.xlu0 %6179
        %6181 = vrot.lane.b32.xlu0 %v6008, 96
        %v6182 = vpop.permute.xlu0 %6181
        %6183 = vrot.lane.b32.xlu0 %v6009, 96
        %v6184 = vpop.permute.xlu0 %6183
        %6185 = vrot.lane.b32.xlu0 %v6010, 96
        %v6186 = vpop.permute.xlu0 %6185
        %v6203 = vsel %vm2224, %v4621, %v6028
        %v6204 = vsel %vm2224, %v4622, %v6030
        %v6205 = vsel %vm2224, %v4623, %v6032
        %v6206 = vsel %vm2224, %v4624, %v6034
        %v6207 = vsel %vm2224, %v4625, %v6036
        %v6208 = vsel %vm2224, %v4626, %v6038
        %v6209 = vsel %vm2224, %v4627, %v6040
        %v6210 = vsel %vm2224, %v4628, %v6042
        %v6211 = vsel %vm2224, %v4629, %v6044
        %v6212 = vsel %vm2224, %v4630, %v6046
        %v6213 = vsel %vm2224, %v4631, %v6048
        %v6214 = vsel %vm2224, %v4632, %v6050
        %v6215 = vsel %vm2224, %v4633, %v6052
        %v6216 = vsel %vm2224, %v4634, %v6054
        %v6217 = vsel %vm2224, %v4635, %v6056
        %v6218 = vsel %vm2224, %v4636, %v6058
        %v6219 = vsel %vm4201, %v6203, %v6092
        %v6220 = vsel %vm4201, %v6204, %v6094
        %v6221 = vsel %vm4201, %v6205, %v6096
        %v6222 = vsel %vm4201, %v6206, %v6098
        %v6223 = vsel %vm4201, %v6207, %v6100
        %v6224 = vsel %vm4201, %v6208, %v6102
        %v6225 = vsel %vm4201, %v6209, %v6104
        %v6226 = vsel %vm4201, %v6210, %v6106
        %v6227 = vsel %vm4201, %v6211, %v6108
        %v6228 = vsel %vm4201, %v6212, %v6110
        %v6229 = vsel %vm4201, %v6213, %v6112
        %v6230 = vsel %vm4201, %v6214, %v6114
        %v6231 = vsel %vm4201, %v6215, %v6116
        %v6232 = vsel %vm4201, %v6216, %v6118
        %v6233 = vsel %vm4201, %v6217, %v6120
        %v6234 = vsel %vm4201, %v6218, %v6122
        %v6235 = vsel %vm4218, %v6219, %v6156
        %v6236 = vsel %vm4218, %v6220, %v6158
        %v6237 = vsel %vm4218, %v6221, %v6160
        %v6238 = vsel %vm4218, %v6222, %v6162
        %v6239 = vsel %vm4218, %v6223, %v6164
        %v6240 = vsel %vm4218, %v6224, %v6166
        %v6241 = vsel %vm4218, %v6225, %v6168
        %v6242 = vsel %vm4218, %v6226, %v6170
        %v6243 = vsel %vm4218, %v6227, %v6172
        %v6244 = vsel %vm4218, %v6228, %v6174
        %v6245 = vsel %vm4218, %v6229, %v6176
        %v6246 = vsel %vm4218, %v6230, %v6178
        %v6247 = vsel %vm4218, %v6231, %v6180
        %v6248 = vsel %vm4218, %v6232, %v6182
        %v6249 = vsel %vm4218, %v6233, %v6184
        %v6250 = vsel %vm4218, %v6234, %v6186
        %v6251 = vpack.c.bf16 %v4220, %v4219
        %v6252 = vpack.c.bf16 %v4222, %v4221
        %v6253 = vpack.c.bf16 %v4224, %v4223
        %v6254 = vpack.c.bf16 %v4226, %v4225
        %v6255 = vpack.c.bf16 %v4228, %v4227
        %v6256 = vpack.c.bf16 %v4230, %v4229
        %v6257 = vpack.c.bf16 %v4232, %v4231
        %v6258 = vpack.c.bf16 %v4234, %v4233
        %v6259 = vpack.c.bf16 %v6236, %v6235
        %v6260 = vpack.c.bf16 %v6238, %v6237
        %v6261 = vpack.c.bf16 %v6240, %v6239
        %v6262 = vpack.c.bf16 %v6242, %v6241
        %v6263 = vpack.c.bf16 %v6244, %v6243
        %v6264 = vpack.c.bf16 %v6246, %v6245
        %v6265 = vpack.c.bf16 %v6248, %v6247
        %v6266 = vpack.c.bf16 %v6250, %v6249
        %v6267 = vld [vmem:[%s710] sm:$0xf]
        %v6268 = vld [vmem:[%s710 + $0x4] sm:$0xf]
        %v6269 = vld [vmem:[%s710 + $0x8] sm:$0xf]
        %v6270 = vld [vmem:[%s710 + $0xc] sm:$0xf]
        %v6271 = vld [vmem:[%s710 + $0x10] sm:$0xf]
        %v6272 = vld [vmem:[%s710 + $0x14] sm:$0xf]
        %v6273 = vld [vmem:[%s710 + $0x18] sm:$0xf]
        %v6274 = vld [vmem:[%s710 + $0x1c] sm:$0xf]
        %v6275 = vld [vmem:[%s710 + $0x20] sm:$0xf]
        %v6276 = vld [vmem:[%s710 + $0x24] sm:$0xf]
        %v6277 = vld [vmem:[%s710 + $0x28] sm:$0xf]
        %v6278 = vld [vmem:[%s710 + $0x2c] sm:$0xf]
        %v6279 = vld [vmem:[%s710 + $0x30] sm:$0xf]
        %v6280 = vld [vmem:[%s710 + $0x34] sm:$0xf]
        %v6281 = vld [vmem:[%s710 + $0x38] sm:$0xf]
        %v6282 = vld [vmem:[%s710 + $0x3c] sm:$0xf]
        %v6283 = vld [vmem:[%s854] sm:$0x1]
        %v6285 = vlaneseq
        %v6286 = vshrl.u32 %v6285, 7
        %v6287 = vsub.s32 0, %v6286
        %v6288 = vrot.slane %v6283, %v6287
        %v6306 = vunpack.c.l.b16 %v6267
        %v6307 = vunpack.c.l.b16 %v6268
        %v6308 = vunpack.c.l.b16 %v6269
        %v6309 = vunpack.c.l.b16 %v6270
        %v6310 = vunpack.c.l.b16 %v6271
        %v6311 = vunpack.c.l.b16 %v6272
        %v6312 = vunpack.c.l.b16 %v6273
        %v6313 = vunpack.c.l.b16 %v6274
        %v6314 = vunpack.c.l.b16 %v6275
        %v6315 = vunpack.c.l.b16 %v6276
        %v6316 = vunpack.c.l.b16 %v6277
        %v6317 = vunpack.c.l.b16 %v6278
        %v6318 = vunpack.c.l.b16 %v6279
        %v6319 = vunpack.c.l.b16 %v6280
        %v6320 = vunpack.c.l.b16 %v6281
        %v6321 = vunpack.c.l.b16 %v6282
        %v6322 = vpack.c.b16 %v6307, %v6306
        %v6323 = vpack.c.b16 %v6309, %v6308
        %v6324 = vpack.c.b16 %v6311, %v6310
        %v6325 = vpack.c.b16 %v6313, %v6312
        %v6326 = vpack.c.b16 %v6315, %v6314
        %v6327 = vpack.c.b16 %v6317, %v6316
        %v6328 = vpack.c.b16 %v6319, %v6318
        %v6329 = vpack.c.b16 %v6321, %v6320
        %6338 = vmatprep.subr.bf16.mxu0 0
        %6339 = vmatpush1.bf16.msra.mxu0 %v6322
        %6340 = vmatprep.subr.bf16.mxu0 0
        %6341 = vmatpush1.bf16.msra.mxu0 %v6323
        %6342 = vmatprep.subr.bf16.mxu0 0
        %6343 = vmatpush1.bf16.msra.mxu0 %v6324
        %6344 = vmatprep.subr.bf16.mxu0 0
        %6345 = vmatpush1.bf16.msra.mxu0 %v6325
        %6346 = vmatprep.subr.bf16.mxu0 0
        %6347 = vmatpush1.bf16.msra.mxu0 %v6326
        %6348 = vmatprep.subr.bf16.mxu0 0
        %6349 = vmatpush1.bf16.msra.mxu0 %v6327
        %6350 = vmatprep.subr.bf16.mxu0 0
        %6351 = vmatpush1.bf16.msra.mxu0 %v6328
        %6352 = vmatprep.subr.bf16.mxu0 0
        %6353 = vmatpush1.bf16.msra.mxu0 %v6329
        %6354 = vmatprep.subr.bf16.mxu0 0
        %6355 = vmatpush1.bf16.msra.mxu0 0
        %6356 = vmatprep.subr.bf16.mxu0 0
        %6357 = vmatpush1.bf16.msra.mxu0 0
        %6358 = vmatprep.subr.bf16.mxu0 0
        %6359 = vmatpush1.bf16.msra.mxu0 0
        %6360 = vmatprep.subr.bf16.mxu0 0
        %6361 = vmatpush1.bf16.msra.mxu0 0
        %6362 = vmatprep.subr.bf16.mxu0 0
        %6363 = vmatpush1.bf16.msra.mxu0 0
        %6364 = vmatprep.subr.bf16.mxu0 0
        %6365 = vmatpush1.bf16.msra.mxu0 0
        %6366 = vmatprep.subr.bf16.mxu0 0
        %6367 = vmatpush1.bf16.msra.mxu0 0
        %6368 = vmatprep.subr.bf16.mxu0 0
        %6369 = vmatpush1.bf16.msra.mxu0 0
        %6370 = vmatprep.mubr.bf16.mxu0 0
        %6371 = vmatmul.mubr.bf16.gmra.mrb[0].mxu0 %v6251
        %v6372 = vpop.f32.mrb[0].mxu0
        %v6373 = vadd.f32 %v6288, %v6372
        %v6374 = vpop.f32.mrb[0].mxu0
        %v6375 = vpop.f32.mrb[0].mxu0
        %v6376 = vadd.f32 %v6288, %v6375
        %v6377 = vpop.f32.mrb[0].mxu0
        %6378 = vmatprep.mubr.bf16.mxu0 0
        %6379 = vmatmul.mubr.bf16.gmra.mrb[0].mxu0 %v6252
        %v6380 = vpop.f32.mrb[0].mxu0
        %v6381 = vadd.f32 %v6288, %v6380
        %v6382 = vpop.f32.mrb[0].mxu0
        %v6383 = vpop.f32.mrb[0].mxu0
        %v6384 = vadd.f32 %v6288, %v6383
        %v6385 = vpop.f32.mrb[0].mxu0
        %6386 = vmatprep.mubr.bf16.mxu0 0
        %6387 = vmatmul.mubr.bf16.gmra.mrb[0].mxu0 %v6253
        %v6388 = vpop.f32.mrb[0].mxu0
        %v6389 = vadd.f32 %v6288, %v6388
        %v6390 = vpop.f32.mrb[0].mxu0
        %v6391 = vpop.f32.mrb[0].mxu0
        %v6392 = vadd.f32 %v6288, %v6391
        %v6393 = vpop.f32.mrb[0].mxu0
        %6394 = vmatprep.mubr.bf16.mxu0 0
        %6395 = vmatmul.mubr.bf16.gmra.mrb[0].mxu0 %v6254
        %v6396 = vpop.f32.mrb[0].mxu0
        %v6397 = vadd.f32 %v6288, %v6396
        %v6398 = vpop.f32.mrb[0].mxu0
        %v6399 = vpop.f32.mrb[0].mxu0
        %v6400 = vadd.f32 %v6288, %v6399
        %v6401 = vpop.f32.mrb[0].mxu0
        %6402 = vmatprep.mubr.bf16.mxu0 0
        %6403 = vmatmul.mubr.bf16.gmra.mrb[0].mxu0 %v6255
        %v6404 = vpop.f32.mrb[0].mxu0
        %v6405 = vadd.f32 %v6288, %v6404
        %v6406 = vpop.f32.mrb[0].mxu0
        %v6407 = vpop.f32.mrb[0].mxu0
        %v6408 = vadd.f32 %v6288, %v6407
        %v6409 = vpop.f32.mrb[0].mxu0
        %6410 = vmatprep.mubr.bf16.mxu0 0
        %6411 = vmatmul.mubr.bf16.gmra.mrb[0].mxu0 %v6256
        %v6412 = vpop.f32.mrb[0].mxu0
        %v6413 = vadd.f32 %v6288, %v6412
        %v6414 = vpop.f32.mrb[0].mxu0
        %v6415 = vpop.f32.mrb[0].mxu0
        %v6416 = vadd.f32 %v6288, %v6415
        %v6417 = vpop.f32.mrb[0].mxu0
        %6418 = vmatprep.mubr.bf16.mxu0 0
        %6419 = vmatmul.mubr.bf16.gmra.mrb[0].mxu0 %v6257
        %v6420 = vpop.f32.mrb[0].mxu0
        %v6421 = vadd.f32 %v6288, %v6420
        %v6422 = vpop.f32.mrb[0].mxu0
        %v6423 = vpop.f32.mrb[0].mxu0
        %v6424 = vadd.f32 %v6288, %v6423
        %v6425 = vpop.f32.mrb[0].mxu0
        %6426 = vmatprep.mubr.bf16.mxu0 0
        %6427 = vmatmul.mubr.bf16.gmra.mrb[0].mxu0 %v6258
        %v6428 = vpop.f32.mrb[0].mxu0
        %v6429 = vadd.f32 %v6288, %v6428
        %v6430 = vpop.f32.mrb[0].mxu0
        %v6431 = vpop.f32.mrb[0].mxu0
        %v6432 = vadd.f32 %v6288, %v6431
        %v6433 = vpop.f32.mrb[0].mxu0
        %6434 = vmatprep.mubr.bf16.mxu0 0
        %6435 = vmatmul.mubr.bf16.gmra.mrb[0].mxu0 %v6259
        %v6436 = vpop.f32.mrb[0].mxu0
        %v6437 = vadd.f32 %v6288, %v6436
        %v6438 = vpop.f32.mrb[0].mxu0
        %v6439 = vpop.f32.mrb[0].mxu0
        %v6440 = vadd.f32 %v6288, %v6439
        %v6441 = vpop.f32.mrb[0].mxu0
        %6442 = vmatprep.mubr.bf16.mxu0 0
        %6443 = vmatmul.mubr.bf16.gmra.mrb[0].mxu0 %v6260
        %v6444 = vpop.f32.mrb[0].mxu0
        %v6445 = vadd.f32 %v6288, %v6444
        %v6446 = vpop.f32.mrb[0].mxu0
        %v6447 = vpop.f32.mrb[0].mxu0
        %v6448 = vadd.f32 %v6288, %v6447
        %v6449 = vpop.f32.mrb[0].mxu0
        %6450 = vmatprep.mubr.bf16.mxu0 0
        %6451 = vmatmul.mubr.bf16.gmra.mrb[0].mxu0 %v6261
        %v6452 = vpop.f32.mrb[0].mxu0
        %v6453 = vadd.f32 %v6288, %v6452
        %v6454 = vpop.f32.mrb[0].mxu0
        %v6455 = vpop.f32.mrb[0].mxu0
        %v6456 = vadd.f32 %v6288, %v6455
        %v6457 = vpop.f32.mrb[0].mxu0
        %6458 = vmatprep.mubr.bf16.mxu0 0
        %6459 = vmatmul.mubr.bf16.gmra.mrb[0].mxu0 %v6262
        %v6460 = vpop.f32.mrb[0].mxu0
        %v6461 = vadd.f32 %v6288, %v6460
        %v6462 = vpop.f32.mrb[0].mxu0
        %v6463 = vpop.f32.mrb[0].mxu0
        %v6464 = vadd.f32 %v6288, %v6463
        %v6465 = vpop.f32.mrb[0].mxu0
        %6466 = vmatprep.mubr.bf16.mxu0 0
        %6467 = vmatmul.mubr.bf16.gmra.mrb[0].mxu0 %v6263
        %v6468 = vpop.f32.mrb[0].mxu0
        %v6469 = vadd.f32 %v6288, %v6468
        %v6470 = vpop.f32.mrb[0].mxu0
        %v6471 = vpop.f32.mrb[0].mxu0
        %v6472 = vadd.f32 %v6288, %v6471
        %v6473 = vpop.f32.mrb[0].mxu0
        %6474 = vmatprep.mubr.bf16.mxu0 0
        %6475 = vmatmul.mubr.bf16.gmra.mrb[0].mxu0 %v6264
        %v6476 = vpop.f32.mrb[0].mxu0
        %v6477 = vadd.f32 %v6288, %v6476
        %v6478 = vpop.f32.mrb[0].mxu0
        %v6479 = vpop.f32.mrb[0].mxu0
        %v6480 = vadd.f32 %v6288, %v6479
        %v6481 = vpop.f32.mrb[0].mxu0
        %6482 = vmatprep.mubr.bf16.mxu0 0
        %6483 = vmatmul.mubr.bf16.gmra.mrb[0].mxu0 %v6265
        %v6484 = vpop.f32.mrb[0].mxu0
        %v6485 = vadd.f32 %v6288, %v6484
        %v6486 = vpop.f32.mrb[0].mxu0
        %v6487 = vpop.f32.mrb[0].mxu0
        %v6488 = vadd.f32 %v6288, %v6487
        %v6489 = vpop.f32.mrb[0].mxu0
        %6490 = vmatprep.mubr.bf16.mxu0 0
        %6491 = vmatmul.mubr.bf16.gmra.mrb[0].mxu0 %v6266
        %v6492 = vpop.f32.mrb[0].mxu0
        %v6493 = vadd.f32 %v6288, %v6492
        %v6494 = vpop.f32.mrb[0].mxu0
        %v6495 = vpop.f32.mrb[0].mxu0
        %v6496 = vadd.f32 %v6288, %v6495
        %v6497 = vpop.f32.mrb[0].mxu0
        %6498 = vdwg.mxu0
        %v6499 = vadd.f32 %v935, %v6373
        %v6500 = vadd.f32 %v936, %v6376
        %v6501 = vadd.f32 %v937, %v6381
        %v6502 = vadd.f32 %v938, %v6384
        %v6503 = vadd.f32 %v939, %v6389
        %v6504 = vadd.f32 %v940, %v6392
        %v6505 = vadd.f32 %v941, %v6397
        %v6506 = vadd.f32 %v942, %v6400
        %v6507 = vadd.f32 %v943, %v6405
        %v6508 = vadd.f32 %v944, %v6408
        %v6509 = vadd.f32 %v945, %v6413
        %v6510 = vadd.f32 %v946, %v6416
        %v6511 = vadd.f32 %v947, %v6421
        %v6512 = vadd.f32 %v948, %v6424
        %v6513 = vadd.f32 %v949, %v6429
        %v6514 = vadd.f32 %v950, %v6432
        %v6515 = vadd.f32 %v951, %v6437
        %v6516 = vadd.f32 %v952, %v6440
        %v6517 = vadd.f32 %v953, %v6445
        %v6518 = vadd.f32 %v954, %v6448
        %v6519 = vadd.f32 %v955, %v6453
        %v6520 = vadd.f32 %v956, %v6456
        %v6521 = vadd.f32 %v957, %v6461
        %v6522 = vadd.f32 %v958, %v6464
        %v6523 = vadd.f32 %v959, %v6469
        %v6524 = vadd.f32 %v960, %v6472
        %v6525 = vadd.f32 %v961, %v6477
        %v6526 = vadd.f32 %v962, %v6480
        %v6527 = vadd.f32 %v963, %v6485
        %v6528 = vadd.f32 %v964, %v6488
        %v6529 = vadd.f32 %v965, %v6493
        %v6530 = vadd.f32 %v966, %v6496
        %v6531 = vld [vmem:[%s857] sm:$0x1]
        %v6532 = vld [vmem:[%s860] sm:$0x1]
        %6533 = vadd.xlane.f32.xlu0 %v6499
        %v6534 = vpop.xlane.xlu0 %6533
        %6535 = vadd.xlane.f32.xlu0 %v6500
        %v6536 = vpop.xlane.xlu0 %6535
        %6537 = vadd.xlane.f32.xlu0 %v6501
        %v6538 = vpop.xlane.xlu0 %6537
        %6539 = vadd.xlane.f32.xlu0 %v6502
        %v6540 = vpop.xlane.xlu0 %6539
        %6541 = vadd.xlane.f32.xlu0 %v6503
        %v6542 = vpop.xlane.xlu0 %6541
        %6543 = vadd.xlane.f32.xlu0 %v6504
        %v6544 = vpop.xlane.xlu0 %6543
        %6545 = vadd.xlane.f32.xlu0 %v6505
        %v6546 = vpop.xlane.xlu0 %6545
        %6547 = vadd.xlane.f32.xlu0 %v6506
        %v6548 = vpop.xlane.xlu0 %6547
        %6549 = vadd.xlane.f32.xlu0 %v6507
        %v6550 = vpop.xlane.xlu0 %6549
        %6551 = vadd.xlane.f32.xlu0 %v6508
        %v6552 = vpop.xlane.xlu0 %6551
        %6553 = vadd.xlane.f32.xlu0 %v6509
        %v6554 = vpop.xlane.xlu0 %6553
        %6555 = vadd.xlane.f32.xlu0 %v6510
        %v6556 = vpop.xlane.xlu0 %6555
        %6557 = vadd.xlane.f32.xlu0 %v6511
        %v6558 = vpop.xlane.xlu0 %6557
        %6559 = vadd.xlane.f32.xlu0 %v6512
        %v6560 = vpop.xlane.xlu0 %6559
        %6561 = vadd.xlane.f32.xlu0 %v6513
        %v6562 = vpop.xlane.xlu0 %6561
        %6563 = vadd.xlane.f32.xlu0 %v6514
        %v6564 = vpop.xlane.xlu0 %6563
        %6565 = vadd.xlane.f32.xlu0 %v6515
        %v6566 = vpop.xlane.xlu0 %6565
        %6567 = vadd.xlane.f32.xlu0 %v6516
        %v6568 = vpop.xlane.xlu0 %6567
        %6569 = vadd.xlane.f32.xlu0 %v6517
        %v6570 = vpop.xlane.xlu0 %6569
        %6571 = vadd.xlane.f32.xlu0 %v6518
        %v6572 = vpop.xlane.xlu0 %6571
        %6573 = vadd.xlane.f32.xlu0 %v6519
        %v6574 = vpop.xlane.xlu0 %6573
        %6575 = vadd.xlane.f32.xlu0 %v6520
        %v6576 = vpop.xlane.xlu0 %6575
        %6577 = vadd.xlane.f32.xlu0 %v6521
        %v6578 = vpop.xlane.xlu0 %6577
        %6579 = vadd.xlane.f32.xlu0 %v6522
        %v6580 = vpop.xlane.xlu0 %6579
        %6581 = vadd.xlane.f32.xlu0 %v6523
        %v6582 = vpop.xlane.xlu0 %6581
        %6583 = vadd.xlane.f32.xlu0 %v6524
        %v6584 = vpop.xlane.xlu0 %6583
        %6585 = vadd.xlane.f32.xlu0 %v6525
        %v6586 = vpop.xlane.xlu0 %6585
        %6587 = vadd.xlane.f32.xlu0 %v6526
        %v6588 = vpop.xlane.xlu0 %6587
        %6589 = vadd.xlane.f32.xlu0 %v6527
        %v6590 = vpop.xlane.xlu0 %6589
        %6591 = vadd.xlane.f32.xlu0 %v6528
        %v6592 = vpop.xlane.xlu0 %6591
        %6593 = vadd.xlane.f32.xlu0 %v6529
        %v6594 = vpop.xlane.xlu0 %6593
        %6595 = vadd.xlane.f32.xlu0 %v6530
        %v6596 = vpop.xlane.xlu0 %6595
        %v6597 = vmul.f32 %v6534, %v1033
        %v6598 = vmul.f32 %v6536, %v1033
        %v6599 = vmul.f32 %v6538, %v1033
        %v6600 = vmul.f32 %v6540, %v1033
        %v6601 = vmul.f32 %v6542, %v1033
        %v6602 = vmul.f32 %v6544, %v1033
        %v6603 = vmul.f32 %v6546, %v1033
        %v6604 = vmul.f32 %v6548, %v1033
        %v6605 = vmul.f32 %v6550, %v1033
        %v6606 = vmul.f32 %v6552, %v1033
        %v6607 = vmul.f32 %v6554, %v1033
        %v6608 = vmul.f32 %v6556, %v1033
        %v6609 = vmul.f32 %v6558, %v1033
        %v6610 = vmul.f32 %v6560, %v1033
        %v6611 = vmul.f32 %v6562, %v1033
        %v6612 = vmul.f32 %v6564, %v1033
        %v6613 = vmul.f32 %v6566, %v1033
        %v6614 = vmul.f32 %v6568, %v1033
        %v6615 = vmul.f32 %v6570, %v1033
        %v6616 = vmul.f32 %v6572, %v1033
        %v6617 = vmul.f32 %v6574, %v1033
        %v6618 = vmul.f32 %v6576, %v1033
        %v6619 = vmul.f32 %v6578, %v1033
        %v6620 = vmul.f32 %v6580, %v1033
        %v6621 = vmul.f32 %v6582, %v1033
        %v6622 = vmul.f32 %v6584, %v1033
        %v6623 = vmul.f32 %v6586, %v1033
        %v6624 = vmul.f32 %v6588, %v1033
        %v6625 = vmul.f32 %v6590, %v1033
        %v6626 = vmul.f32 %v6592, %v1033
        %v6627 = vmul.f32 %v6594, %v1033
        %v6628 = vmul.f32 %v6596, %v1033
        %v6629 = vsub.f32 %v6499, %v6597
        %v6630 = vsub.f32 %v6500, %v6598
        %v6631 = vsub.f32 %v6501, %v6599
        %v6632 = vsub.f32 %v6502, %v6600
        %v6633 = vsub.f32 %v6503, %v6601
        %v6634 = vsub.f32 %v6504, %v6602
        %v6635 = vsub.f32 %v6505, %v6603
        %v6636 = vsub.f32 %v6506, %v6604
        %v6637 = vsub.f32 %v6507, %v6605
        %v6638 = vsub.f32 %v6508, %v6606
        %v6639 = vsub.f32 %v6509, %v6607
        %v6640 = vsub.f32 %v6510, %v6608
        %v6641 = vsub.f32 %v6511, %v6609
        %v6642 = vsub.f32 %v6512, %v6610
        %v6643 = vsub.f32 %v6513, %v6611
        %v6644 = vsub.f32 %v6514, %v6612
        %v6645 = vsub.f32 %v6515, %v6613
        %v6646 = vsub.f32 %v6516, %v6614
        %v6647 = vsub.f32 %v6517, %v6615
        %v6648 = vsub.f32 %v6518, %v6616
        %v6649 = vsub.f32 %v6519, %v6617
        %v6650 = vsub.f32 %v6520, %v6618
        %v6651 = vsub.f32 %v6521, %v6619
        %v6652 = vsub.f32 %v6522, %v6620
        %v6653 = vsub.f32 %v6523, %v6621
        %v6654 = vsub.f32 %v6524, %v6622
        %v6655 = vsub.f32 %v6525, %v6623
        %v6656 = vsub.f32 %v6526, %v6624
        %v6657 = vsub.f32 %v6527, %v6625
        %v6658 = vsub.f32 %v6528, %v6626
        %v6659 = vsub.f32 %v6529, %v6627
        %v6660 = vsub.f32 %v6530, %v6628
        %v6661 = vmul.f32 %v6629, %v6629
        %v6662 = vmul.f32 %v6630, %v6630
        %v6663 = vmul.f32 %v6631, %v6631
        %v6664 = vmul.f32 %v6632, %v6632
        %v6665 = vmul.f32 %v6633, %v6633
        %v6666 = vmul.f32 %v6634, %v6634
        %v6667 = vmul.f32 %v6635, %v6635
        %v6668 = vmul.f32 %v6636, %v6636
        %v6669 = vmul.f32 %v6637, %v6637
        %v6670 = vmul.f32 %v6638, %v6638
        %v6671 = vmul.f32 %v6639, %v6639
        %v6672 = vmul.f32 %v6640, %v6640
        %v6673 = vmul.f32 %v6641, %v6641
        %v6674 = vmul.f32 %v6642, %v6642
        %v6675 = vmul.f32 %v6643, %v6643
        %v6676 = vmul.f32 %v6644, %v6644
        %v6677 = vmul.f32 %v6645, %v6645
        %v6678 = vmul.f32 %v6646, %v6646
        %v6679 = vmul.f32 %v6647, %v6647
        %v6680 = vmul.f32 %v6648, %v6648
        %v6681 = vmul.f32 %v6649, %v6649
        %v6682 = vmul.f32 %v6650, %v6650
        %v6683 = vmul.f32 %v6651, %v6651
        %v6684 = vmul.f32 %v6652, %v6652
        %v6685 = vmul.f32 %v6653, %v6653
        %v6686 = vmul.f32 %v6654, %v6654
        %v6687 = vmul.f32 %v6655, %v6655
        %v6688 = vmul.f32 %v6656, %v6656
        %v6689 = vmul.f32 %v6657, %v6657
        %v6690 = vmul.f32 %v6658, %v6658
        %v6691 = vmul.f32 %v6659, %v6659
        %v6692 = vmul.f32 %v6660, %v6660
        %6693 = vadd.xlane.f32.xlu0 %v6661
        %v6694 = vpop.xlane.xlu0 %6693
        %6695 = vadd.xlane.f32.xlu0 %v6662
        %v6696 = vpop.xlane.xlu0 %6695
        %6697 = vadd.xlane.f32.xlu0 %v6663
        %v6698 = vpop.xlane.xlu0 %6697
        %6699 = vadd.xlane.f32.xlu0 %v6664
        %v6700 = vpop.xlane.xlu0 %6699
        %6701 = vadd.xlane.f32.xlu0 %v6665
        %v6702 = vpop.xlane.xlu0 %6701
        %6703 = vadd.xlane.f32.xlu0 %v6666
        %v6704 = vpop.xlane.xlu0 %6703
        %6705 = vadd.xlane.f32.xlu0 %v6667
        %v6706 = vpop.xlane.xlu0 %6705
        %6707 = vadd.xlane.f32.xlu0 %v6668
        %v6708 = vpop.xlane.xlu0 %6707
        %6709 = vadd.xlane.f32.xlu0 %v6669
        %v6710 = vpop.xlane.xlu0 %6709
        %6711 = vadd.xlane.f32.xlu0 %v6670
        %v6712 = vpop.xlane.xlu0 %6711
        %6713 = vadd.xlane.f32.xlu0 %v6671
        %v6714 = vpop.xlane.xlu0 %6713
        %6715 = vadd.xlane.f32.xlu0 %v6672
        %v6716 = vpop.xlane.xlu0 %6715
        %6717 = vadd.xlane.f32.xlu0 %v6673
        %v6718 = vpop.xlane.xlu0 %6717
        %6719 = vadd.xlane.f32.xlu0 %v6674
        %v6720 = vpop.xlane.xlu0 %6719
        %6721 = vadd.xlane.f32.xlu0 %v6675
        %v6722 = vpop.xlane.xlu0 %6721
        %6723 = vadd.xlane.f32.xlu0 %v6676
        %v6724 = vpop.xlane.xlu0 %6723
        %6725 = vadd.xlane.f32.xlu0 %v6677
        %v6726 = vpop.xlane.xlu0 %6725
        %6727 = vadd.xlane.f32.xlu0 %v6678
        %v6728 = vpop.xlane.xlu0 %6727
        %6729 = vadd.xlane.f32.xlu0 %v6679
        %v6730 = vpop.xlane.xlu0 %6729
        %6731 = vadd.xlane.f32.xlu0 %v6680
        %v6732 = vpop.xlane.xlu0 %6731
        %6733 = vadd.xlane.f32.xlu0 %v6681
        %v6734 = vpop.xlane.xlu0 %6733
        %6735 = vadd.xlane.f32.xlu0 %v6682
        %v6736 = vpop.xlane.xlu0 %6735
        %6737 = vadd.xlane.f32.xlu0 %v6683
        %v6738 = vpop.xlane.xlu0 %6737
        %6739 = vadd.xlane.f32.xlu0 %v6684
        %v6740 = vpop.xlane.xlu0 %6739
        %6741 = vadd.xlane.f32.xlu0 %v6685
        %v6742 = vpop.xlane.xlu0 %6741
        %6743 = vadd.xlane.f32.xlu0 %v6686
        %v6744 = vpop.xlane.xlu0 %6743
        %6745 = vadd.xlane.f32.xlu0 %v6687
        %v6746 = vpop.xlane.xlu0 %6745
        %6747 = vadd.xlane.f32.xlu0 %v6688
        %v6748 = vpop.xlane.xlu0 %6747
        %6749 = vadd.xlane.f32.xlu0 %v6689
        %v6750 = vpop.xlane.xlu0 %6749
        %6751 = vadd.xlane.f32.xlu0 %v6690
        %v6752 = vpop.xlane.xlu0 %6751
        %6753 = vadd.xlane.f32.xlu0 %v6691
        %v6754 = vpop.xlane.xlu0 %6753
        %6755 = vadd.xlane.f32.xlu0 %v6692
        %v6756 = vpop.xlane.xlu0 %6755
        %v6757 = vmul.f32 %v6694, 0.007874016
        %v6758 = vmul.f32 %v6696, 0.007874016
        %v6759 = vmul.f32 %v6698, 0.007874016
        %v6760 = vmul.f32 %v6700, 0.007874016
        %v6761 = vmul.f32 %v6702, 0.007874016
        %v6762 = vmul.f32 %v6704, 0.007874016
        %v6763 = vmul.f32 %v6706, 0.007874016
        %v6764 = vmul.f32 %v6708, 0.007874016
        %v6765 = vmul.f32 %v6710, 0.007874016
        %v6766 = vmul.f32 %v6712, 0.007874016
        %v6767 = vmul.f32 %v6714, 0.007874016
        %v6768 = vmul.f32 %v6716, 0.007874016
        %v6769 = vmul.f32 %v6718, 0.007874016
        %v6770 = vmul.f32 %v6720, 0.007874016
        %v6771 = vmul.f32 %v6722, 0.007874016
        %v6772 = vmul.f32 %v6724, 0.007874016
        %v6773 = vmul.f32 %v6726, 0.007874016
        %v6774 = vmul.f32 %v6728, 0.007874016
        %v6775 = vmul.f32 %v6730, 0.007874016
        %v6776 = vmul.f32 %v6732, 0.007874016
        %v6777 = vmul.f32 %v6734, 0.007874016
        %v6778 = vmul.f32 %v6736, 0.007874016
        %v6779 = vmul.f32 %v6738, 0.007874016
        %v6780 = vmul.f32 %v6740, 0.007874016
        %v6781 = vmul.f32 %v6742, 0.007874016
        %v6782 = vmul.f32 %v6744, 0.007874016
        %v6783 = vmul.f32 %v6746, 0.007874016
        %v6784 = vmul.f32 %v6748, 0.007874016
        %v6785 = vmul.f32 %v6750, 0.007874016
        %v6786 = vmul.f32 %v6752, 0.007874016
        %v6787 = vmul.f32 %v6754, 0.007874016
        %v6788 = vmul.f32 %v6756, 0.007874016
        %v6789 = vrsqrt.pop %v6757
        %v6790 = vmul.f32 %v6757, %v6789
        %vm6791 = vcmp.eq.f32.partialorder %v6757, inf
        %v6792 = vsel %vm6791, %v6757, %v6790
        %vm6793 = vcmp.eq.f32.partialorder %v6757, 0.0
        %v6794 = vand.u32 %v6757, 2147483648
        %v6795 = vsel %vm6793, %v6794, %v6792
        %v6796 = vrsqrt.pop %v6758
        %v6797 = vmul.f32 %v6758, %v6796
        %vm6798 = vcmp.eq.f32.partialorder %v6758, inf
        %v6799 = vsel %vm6798, %v6758, %v6797
        %vm6800 = vcmp.eq.f32.partialorder %v6758, 0.0
        %v6801 = vand.u32 %v6758, 2147483648
        %v6802 = vsel %vm6800, %v6801, %v6799
        %v6803 = vrsqrt.pop %v6759
        %v6804 = vmul.f32 %v6759, %v6803
        %vm6805 = vcmp.eq.f32.partialorder %v6759, inf
        %v6806 = vsel %vm6805, %v6759, %v6804
        %vm6807 = vcmp.eq.f32.partialorder %v6759, 0.0
        %v6808 = vand.u32 %v6759, 2147483648
        %v6809 = vsel %vm6807, %v6808, %v6806
        %v6810 = vrsqrt.pop %v6760
        %v6811 = vmul.f32 %v6760, %v6810
        %vm6812 = vcmp.eq.f32.partialorder %v6760, inf
        %v6813 = vsel %vm6812, %v6760, %v6811
        %vm6814 = vcmp.eq.f32.partialorder %v6760, 0.0
        %v6815 = vand.u32 %v6760, 2147483648
        %v6816 = vsel %vm6814, %v6815, %v6813
        %v6817 = vrsqrt.pop %v6761
        %v6818 = vmul.f32 %v6761, %v6817
        %vm6819 = vcmp.eq.f32.partialorder %v6761, inf
        %v6820 = vsel %vm6819, %v6761, %v6818
        %vm6821 = vcmp.eq.f32.partialorder %v6761, 0.0
        %v6822 = vand.u32 %v6761, 2147483648
        %v6823 = vsel %vm6821, %v6822, %v6820
        %v6824 = vrsqrt.pop %v6762
        %v6825 = vmul.f32 %v6762, %v6824
        %vm6826 = vcmp.eq.f32.partialorder %v6762, inf
        %v6827 = vsel %vm6826, %v6762, %v6825
        %vm6828 = vcmp.eq.f32.partialorder %v6762, 0.0
        %v6829 = vand.u32 %v6762, 2147483648
        %v6830 = vsel %vm6828, %v6829, %v6827
        %v6831 = vrsqrt.pop %v6763
        %v6832 = vmul.f32 %v6763, %v6831
        %vm6833 = vcmp.eq.f32.partialorder %v6763, inf
        %v6834 = vsel %vm6833, %v6763, %v6832
        %vm6835 = vcmp.eq.f32.partialorder %v6763, 0.0
        %v6836 = vand.u32 %v6763, 2147483648
        %v6837 = vsel %vm6835, %v6836, %v6834
        %v6838 = vrsqrt.pop %v6764
        %v6839 = vmul.f32 %v6764, %v6838
        %vm6840 = vcmp.eq.f32.partialorder %v6764, inf
        %v6841 = vsel %vm6840, %v6764, %v6839
        %vm6842 = vcmp.eq.f32.partialorder %v6764, 0.0
        %v6843 = vand.u32 %v6764, 2147483648
        %v6844 = vsel %vm6842, %v6843, %v6841
        %v6845 = vrsqrt.pop %v6765
        %v6846 = vmul.f32 %v6765, %v6845
        %vm6847 = vcmp.eq.f32.partialorder %v6765, inf
        %v6848 = vsel %vm6847, %v6765, %v6846
        %vm6849 = vcmp.eq.f32.partialorder %v6765, 0.0
        %v6850 = vand.u32 %v6765, 2147483648
        %v6851 = vsel %vm6849, %v6850, %v6848
        %v6852 = vrsqrt.pop %v6766
        %v6853 = vmul.f32 %v6766, %v6852
        %vm6854 = vcmp.eq.f32.partialorder %v6766, inf
        %v6855 = vsel %vm6854, %v6766, %v6853
        %vm6856 = vcmp.eq.f32.partialorder %v6766, 0.0
        %v6857 = vand.u32 %v6766, 2147483648
        %v6858 = vsel %vm6856, %v6857, %v6855
        %v6859 = vrsqrt.pop %v6767
        %v6860 = vmul.f32 %v6767, %v6859
        %vm6861 = vcmp.eq.f32.partialorder %v6767, inf
        %v6862 = vsel %vm6861, %v6767, %v6860
        %vm6863 = vcmp.eq.f32.partialorder %v6767, 0.0
        %v6864 = vand.u32 %v6767, 2147483648
        %v6865 = vsel %vm6863, %v6864, %v6862
        %v6866 = vrsqrt.pop %v6768
        %v6867 = vmul.f32 %v6768, %v6866
        %vm6868 = vcmp.eq.f32.partialorder %v6768, inf
        %v6869 = vsel %vm6868, %v6768, %v6867
        %vm6870 = vcmp.eq.f32.partialorder %v6768, 0.0
        %v6871 = vand.u32 %v6768, 2147483648
        %v6872 = vsel %vm6870, %v6871, %v6869
        %v6873 = vrsqrt.pop %v6769
        %v6874 = vmul.f32 %v6769, %v6873
        %vm6875 = vcmp.eq.f32.partialorder %v6769, inf
        %v6876 = vsel %vm6875, %v6769, %v6874
        %vm6877 = vcmp.eq.f32.partialorder %v6769, 0.0
        %v6878 = vand.u32 %v6769, 2147483648
        %v6879 = vsel %vm6877, %v6878, %v6876
        %v6880 = vrsqrt.pop %v6770
        %v6881 = vmul.f32 %v6770, %v6880
        %vm6882 = vcmp.eq.f32.partialorder %v6770, inf
        %v6883 = vsel %vm6882, %v6770, %v6881
        %vm6884 = vcmp.eq.f32.partialorder %v6770, 0.0
        %v6885 = vand.u32 %v6770, 2147483648
        %v6886 = vsel %vm6884, %v6885, %v6883
        %v6887 = vrsqrt.pop %v6771
        %v6888 = vmul.f32 %v6771, %v6887
        %vm6889 = vcmp.eq.f32.partialorder %v6771, inf
        %v6890 = vsel %vm6889, %v6771, %v6888
        %vm6891 = vcmp.eq.f32.partialorder %v6771, 0.0
        %v6892 = vand.u32 %v6771, 2147483648
        %v6893 = vsel %vm6891, %v6892, %v6890
        %v6894 = vrsqrt.pop %v6772
        %v6895 = vmul.f32 %v6772, %v6894
        %vm6896 = vcmp.eq.f32.partialorder %v6772, inf
        %v6897 = vsel %vm6896, %v6772, %v6895
        %vm6898 = vcmp.eq.f32.partialorder %v6772, 0.0
        %v6899 = vand.u32 %v6772, 2147483648
        %v6900 = vsel %vm6898, %v6899, %v6897
        %v6901 = vrsqrt.pop %v6773
        %v6902 = vmul.f32 %v6773, %v6901
        %vm6903 = vcmp.eq.f32.partialorder %v6773, inf
        %v6904 = vsel %vm6903, %v6773, %v6902
        %vm6905 = vcmp.eq.f32.partialorder %v6773, 0.0
        %v6906 = vand.u32 %v6773, 2147483648
        %v6907 = vsel %vm6905, %v6906, %v6904
        %v6908 = vrsqrt.pop %v6774
        %v6909 = vmul.f32 %v6774, %v6908
        %vm6910 = vcmp.eq.f32.partialorder %v6774, inf
        %v6911 = vsel %vm6910, %v6774, %v6909
        %vm6912 = vcmp.eq.f32.partialorder %v6774, 0.0
        %v6913 = vand.u32 %v6774, 2147483648
        %v6914 = vsel %vm6912, %v6913, %v6911
        %v6915 = vrsqrt.pop %v6775
        %v6916 = vmul.f32 %v6775, %v6915
        %vm6917 = vcmp.eq.f32.partialorder %v6775, inf
        %v6918 = vsel %vm6917, %v6775, %v6916
        %vm6919 = vcmp.eq.f32.partialorder %v6775, 0.0
        %v6920 = vand.u32 %v6775, 2147483648
        %v6921 = vsel %vm6919, %v6920, %v6918
        %v6922 = vrsqrt.pop %v6776
        %v6923 = vmul.f32 %v6776, %v6922
        %vm6924 = vcmp.eq.f32.partialorder %v6776, inf
        %v6925 = vsel %vm6924, %v6776, %v6923
        %vm6926 = vcmp.eq.f32.partialorder %v6776, 0.0
        %v6927 = vand.u32 %v6776, 2147483648
        %v6928 = vsel %vm6926, %v6927, %v6925
        %v6929 = vrsqrt.pop %v6777
        %v6930 = vmul.f32 %v6777, %v6929
        %vm6931 = vcmp.eq.f32.partialorder %v6777, inf
        %v6932 = vsel %vm6931, %v6777, %v6930
        %vm6933 = vcmp.eq.f32.partialorder %v6777, 0.0
        %v6934 = vand.u32 %v6777, 2147483648
        %v6935 = vsel %vm6933, %v6934, %v6932
        %v6936 = vrsqrt.pop %v6778
        %v6937 = vmul.f32 %v6778, %v6936
        %vm6938 = vcmp.eq.f32.partialorder %v6778, inf
        %v6939 = vsel %vm6938, %v6778, %v6937
        %vm6940 = vcmp.eq.f32.partialorder %v6778, 0.0
        %v6941 = vand.u32 %v6778, 2147483648
        %v6942 = vsel %vm6940, %v6941, %v6939
        %v6943 = vrsqrt.pop %v6779
        %v6944 = vmul.f32 %v6779, %v6943
        %vm6945 = vcmp.eq.f32.partialorder %v6779, inf
        %v6946 = vsel %vm6945, %v6779, %v6944
        %vm6947 = vcmp.eq.f32.partialorder %v6779, 0.0
        %v6948 = vand.u32 %v6779, 2147483648
        %v6949 = vsel %vm6947, %v6948, %v6946
        %v6950 = vrsqrt.pop %v6780
        %v6951 = vmul.f32 %v6780, %v6950
        %vm6952 = vcmp.eq.f32.partialorder %v6780, inf
        %v6953 = vsel %vm6952, %v6780, %v6951
        %vm6954 = vcmp.eq.f32.partialorder %v6780, 0.0
        %v6955 = vand.u32 %v6780, 2147483648
        %v6956 = vsel %vm6954, %v6955, %v6953
        %v6957 = vrsqrt.pop %v6781
        %v6958 = vmul.f32 %v6781, %v6957
        %vm6959 = vcmp.eq.f32.partialorder %v6781, inf
        %v6960 = vsel %vm6959, %v6781, %v6958
        %vm6961 = vcmp.eq.f32.partialorder %v6781, 0.0
        %v6962 = vand.u32 %v6781, 2147483648
        %v6963 = vsel %vm6961, %v6962, %v6960
        %v6964 = vrsqrt.pop %v6782
        %v6965 = vmul.f32 %v6782, %v6964
        %vm6966 = vcmp.eq.f32.partialorder %v6782, inf
        %v6967 = vsel %vm6966, %v6782, %v6965
        %vm6968 = vcmp.eq.f32.partialorder %v6782, 0.0
        %v6969 = vand.u32 %v6782, 2147483648
        %v6970 = vsel %vm6968, %v6969, %v6967
        %v6971 = vrsqrt.pop %v6783
        %v6972 = vmul.f32 %v6783, %v6971
        %vm6973 = vcmp.eq.f32.partialorder %v6783, inf
        %v6974 = vsel %vm6973, %v6783, %v6972
        %vm6975 = vcmp.eq.f32.partialorder %v6783, 0.0
        %v6976 = vand.u32 %v6783, 2147483648
        %v6977 = vsel %vm6975, %v6976, %v6974
        %v6978 = vrsqrt.pop %v6784
        %v6979 = vmul.f32 %v6784, %v6978
        %vm6980 = vcmp.eq.f32.partialorder %v6784, inf
        %v6981 = vsel %vm6980, %v6784, %v6979
        %vm6982 = vcmp.eq.f32.partialorder %v6784, 0.0
        %v6983 = vand.u32 %v6784, 2147483648
        %v6984 = vsel %vm6982, %v6983, %v6981
        %v6985 = vrsqrt.pop %v6785
        %v6986 = vmul.f32 %v6785, %v6985
        %vm6987 = vcmp.eq.f32.partialorder %v6785, inf
        %v6988 = vsel %vm6987, %v6785, %v6986
        %vm6989 = vcmp.eq.f32.partialorder %v6785, 0.0
        %v6990 = vand.u32 %v6785, 2147483648
        %v6991 = vsel %vm6989, %v6990, %v6988
        %v6992 = vrsqrt.pop %v6786
        %v6993 = vmul.f32 %v6786, %v6992
        %vm6994 = vcmp.eq.f32.partialorder %v6786, inf
        %v6995 = vsel %vm6994, %v6786, %v6993
        %vm6996 = vcmp.eq.f32.partialorder %v6786, 0.0
        %v6997 = vand.u32 %v6786, 2147483648
        %v6998 = vsel %vm6996, %v6997, %v6995
        %v6999 = vrsqrt.pop %v6787
        %v7000 = vmul.f32 %v6787, %v6999
        %vm7001 = vcmp.eq.f32.partialorder %v6787, inf
        %v7002 = vsel %vm7001, %v6787, %v7000
        %vm7003 = vcmp.eq.f32.partialorder %v6787, 0.0
        %v7004 = vand.u32 %v6787, 2147483648
        %v7005 = vsel %vm7003, %v7004, %v7002
        %v7006 = vrsqrt.pop %v6788
        %v7007 = vmul.f32 %v6788, %v7006
        %vm7008 = vcmp.eq.f32.partialorder %v6788, inf
        %v7009 = vsel %vm7008, %v6788, %v7007
        %vm7010 = vcmp.eq.f32.partialorder %v6788, 0.0
        %v7011 = vand.u32 %v6788, 2147483648
        %v7012 = vsel %vm7010, %v7011, %v7009
        %v7013 = vadd.f32 %v6795, 1e-06
        %v7014 = vadd.f32 %v6802, 1e-06
        %v7015 = vadd.f32 %v6809, 1e-06
        %v7016 = vadd.f32 %v6816, 1e-06
        %v7017 = vadd.f32 %v6823, 1e-06
        %v7018 = vadd.f32 %v6830, 1e-06
        %v7019 = vadd.f32 %v6837, 1e-06
        %v7020 = vadd.f32 %v6844, 1e-06
        %v7021 = vadd.f32 %v6851, 1e-06
        %v7022 = vadd.f32 %v6858, 1e-06
        %v7023 = vadd.f32 %v6865, 1e-06
        %v7024 = vadd.f32 %v6872, 1e-06
        %v7025 = vadd.f32 %v6879, 1e-06
        %v7026 = vadd.f32 %v6886, 1e-06
        %v7027 = vadd.f32 %v6893, 1e-06
        %v7028 = vadd.f32 %v6900, 1e-06
        %v7029 = vadd.f32 %v6907, 1e-06
        %v7030 = vadd.f32 %v6914, 1e-06
        %v7031 = vadd.f32 %v6921, 1e-06
        %v7032 = vadd.f32 %v6928, 1e-06
        %v7033 = vadd.f32 %v6935, 1e-06
        %v7034 = vadd.f32 %v6942, 1e-06
        %v7035 = vadd.f32 %v6949, 1e-06
        %v7036 = vadd.f32 %v6956, 1e-06
        %v7037 = vadd.f32 %v6963, 1e-06
        %v7038 = vadd.f32 %v6970, 1e-06
        %v7039 = vadd.f32 %v6977, 1e-06
        %v7040 = vadd.f32 %v6984, 1e-06
        %v7041 = vadd.f32 %v6991, 1e-06
        %v7042 = vadd.f32 %v6998, 1e-06
        %v7043 = vadd.f32 %v7005, 1e-06
        %v7044 = vadd.f32 %v7012, 1e-06
        %v7045 = vrcp.pop %v7013
        %v7046 = vrcp.pop %v7014
        %v7047 = vrcp.pop %v7015
        %v7048 = vrcp.pop %v7016
        %v7049 = vrcp.pop %v7017
        %v7050 = vrcp.pop %v7018
        %v7051 = vrcp.pop %v7019
        %v7052 = vrcp.pop %v7020
        %v7053 = vrcp.pop %v7021
        %v7054 = vrcp.pop %v7022
        %v7055 = vrcp.pop %v7023
        %v7056 = vrcp.pop %v7024
        %v7057 = vrcp.pop %v7025
        %v7058 = vrcp.pop %v7026
        %v7059 = vrcp.pop %v7027
        %v7060 = vrcp.pop %v7028
        %v7061 = vrcp.pop %v7029
        %v7062 = vrcp.pop %v7030
        %v7063 = vrcp.pop %v7031
        %v7064 = vrcp.pop %v7032
        %v7065 = vrcp.pop %v7033
        %v7066 = vrcp.pop %v7034
        %v7067 = vrcp.pop %v7035
        %v7068 = vrcp.pop %v7036
        %v7069 = vrcp.pop %v7037
        %v7070 = vrcp.pop %v7038
        %v7071 = vrcp.pop %v7039
        %v7072 = vrcp.pop %v7040
        %v7073 = vrcp.pop %v7041
        %v7074 = vrcp.pop %v7042
        %v7075 = vrcp.pop %v7043
        %v7076 = vrcp.pop %v7044
        %v7078 = vlaneseq
        %v7079 = vshrl.u32 %v7078, 7
        %v7080 = vsub.s32 0, %v7079
        %v7081 = vrot.slane %v6531, %v7080
        %v7083 = vmul.f32 %v7081, %v6629
        %v7084 = vmul.f32 %v7081, %v6630
        %v7085 = vmul.f32 %v7081, %v6631
        %v7086 = vmul.f32 %v7081, %v6632
        %v7087 = vmul.f32 %v7081, %v6633
        %v7088 = vmul.f32 %v7081, %v6634
        %v7089 = vmul.f32 %v7081, %v6635
        %v7090 = vmul.f32 %v7081, %v6636
        %v7091 = vmul.f32 %v7081, %v6637
        %v7092 = vmul.f32 %v7081, %v6638
        %v7093 = vmul.f32 %v7081, %v6639
        %v7094 = vmul.f32 %v7081, %v6640
        %v7095 = vmul.f32 %v7081, %v6641
        %v7096 = vmul.f32 %v7081, %v6642
        %v7097 = vmul.f32 %v7081, %v6643
        %v7098 = vmul.f32 %v7081, %v6644
        %v7099 = vmul.f32 %v7081, %v6645
        %v7100 = vmul.f32 %v7081, %v6646
        %v7101 = vmul.f32 %v7081, %v6647
        %v7102 = vmul.f32 %v7081, %v6648
        %v7103 = vmul.f32 %v7081, %v6649
        %v7104 = vmul.f32 %v7081, %v6650
        %v7105 = vmul.f32 %v7081, %v6651
        %v7106 = vmul.f32 %v7081, %v6652
        %v7107 = vmul.f32 %v7081, %v6653
        %v7108 = vmul.f32 %v7081, %v6654
        %v7109 = vmul.f32 %v7081, %v6655
        %v7110 = vmul.f32 %v7081, %v6656
        %v7111 = vmul.f32 %v7081, %v6657
        %v7112 = vmul.f32 %v7081, %v6658
        %v7113 = vmul.f32 %v7081, %v6659
        %v7114 = vmul.f32 %v7081, %v6660
        %v7115 = vmul.f32 %v7083, %v7045
        %v7116 = vmul.f32 %v7084, %v7046
        %v7117 = vmul.f32 %v7085, %v7047
        %v7118 = vmul.f32 %v7086, %v7048
        %v7119 = vmul.f32 %v7087, %v7049
        %v7120 = vmul.f32 %v7088, %v7050
        %v7121 = vmul.f32 %v7089, %v7051
        %v7122 = vmul.f32 %v7090, %v7052
        %v7123 = vmul.f32 %v7091, %v7053
        %v7124 = vmul.f32 %v7092, %v7054
        %v7125 = vmul.f32 %v7093, %v7055
        %v7126 = vmul.f32 %v7094, %v7056
        %v7127 = vmul.f32 %v7095, %v7057
        %v7128 = vmul.f32 %v7096, %v7058
        %v7129 = vmul.f32 %v7097, %v7059
        %v7130 = vmul.f32 %v7098, %v7060
        %v7131 = vmul.f32 %v7099, %v7061
        %v7132 = vmul.f32 %v7100, %v7062
        %v7133 = vmul.f32 %v7101, %v7063
        %v7134 = vmul.f32 %v7102, %v7064
        %v7135 = vmul.f32 %v7103, %v7065
        %v7136 = vmul.f32 %v7104, %v7066
        %v7137 = vmul.f32 %v7105, %v7067
        %v7138 = vmul.f32 %v7106, %v7068
        %v7139 = vmul.f32 %v7107, %v7069
        %v7140 = vmul.f32 %v7108, %v7070
        %v7141 = vmul.f32 %v7109, %v7071
        %v7142 = vmul.f32 %v7110, %v7072
        %v7143 = vmul.f32 %v7111, %v7073
        %v7144 = vmul.f32 %v7112, %v7074
        %v7145 = vmul.f32 %v7113, %v7075
        %v7146 = vmul.f32 %v7114, %v7076
        %v7148 = vlaneseq
        %v7149 = vshrl.u32 %v7148, 7
        %v7150 = vsub.s32 0, %v7149
        %v7151 = vrot.slane %v6532, %v7150
        %v7153 = vadd.f32 %v7115, %v7151
        %v7154 = vadd.f32 %v7116, %v7151
        %v7155 = vadd.f32 %v7117, %v7151
        %v7156 = vadd.f32 %v7118, %v7151
        %v7157 = vadd.f32 %v7119, %v7151
        %v7158 = vadd.f32 %v7120, %v7151
        %v7159 = vadd.f32 %v7121, %v7151
        %v7160 = vadd.f32 %v7122, %v7151
        %v7161 = vadd.f32 %v7123, %v7151
        %v7162 = vadd.f32 %v7124, %v7151
        %v7163 = vadd.f32 %v7125, %v7151
        %v7164 = vadd.f32 %v7126, %v7151
        %v7165 = vadd.f32 %v7127, %v7151
        %v7166 = vadd.f32 %v7128, %v7151
        %v7167 = vadd.f32 %v7129, %v7151
        %v7168 = vadd.f32 %v7130, %v7151
        %v7169 = vadd.f32 %v7131, %v7151
        %v7170 = vadd.f32 %v7132, %v7151
        %v7171 = vadd.f32 %v7133, %v7151
        %v7172 = vadd.f32 %v7134, %v7151
        %v7173 = vadd.f32 %v7135, %v7151
        %v7174 = vadd.f32 %v7136, %v7151
        %v7175 = vadd.f32 %v7137, %v7151
        %v7176 = vadd.f32 %v7138, %v7151
        %v7177 = vadd.f32 %v7139, %v7151
        %v7178 = vadd.f32 %v7140, %v7151
        %v7179 = vadd.f32 %v7141, %v7151
        %v7180 = vadd.f32 %v7142, %v7151
        %v7181 = vadd.f32 %v7143, %v7151
        %v7182 = vadd.f32 %v7144, %v7151
        %v7183 = vadd.f32 %v7145, %v7151
        %v7184 = vadd.f32 %v7146, %v7151
        %v7185 = vpack.c.bf16 %v7154, %v7153
        %v7186 = vpack.c.bf16 %v7156, %v7155
        %v7187 = vpack.c.bf16 %v7158, %v7157
        %v7188 = vpack.c.bf16 %v7160, %v7159
        %v7189 = vpack.c.bf16 %v7162, %v7161
        %v7190 = vpack.c.bf16 %v7164, %v7163
        %v7191 = vpack.c.bf16 %v7166, %v7165
        %v7192 = vpack.c.bf16 %v7168, %v7167
        %v7193 = vpack.c.bf16 %v7170, %v7169
        %v7194 = vpack.c.bf16 %v7172, %v7171
        %v7195 = vpack.c.bf16 %v7174, %v7173
        %v7196 = vpack.c.bf16 %v7176, %v7175
        %v7197 = vpack.c.bf16 %v7178, %v7177
        %v7198 = vpack.c.bf16 %v7180, %v7179
        %v7199 = vpack.c.bf16 %v7182, %v7181
        %v7200 = vpack.c.bf16 %v7184, %v7183
        %v7201 = vld [vmem:[%s719] sm:$0xff]
        %v7202 = vld [vmem:[%s719 + $0x8] sm:$0xff]
        %v7203 = vld [vmem:[%s719 + $0x10] sm:$0xff]
        %v7204 = vld [vmem:[%s719 + $0x18] sm:$0xff]
        %v7205 = vld [vmem:[%s719 + $0x20] sm:$0xff]
        %v7206 = vld [vmem:[%s719 + $0x28] sm:$0xff]
        %v7207 = vld [vmem:[%s719 + $0x30] sm:$0xff]
        %v7208 = vld [vmem:[%s719 + $0x38] sm:$0xff]
        %v7209 = vld [vmem:[%s719 + $0x40] sm:$0xff]
        %v7210 = vld [vmem:[%s719 + $0x48] sm:$0xff]
        %v7211 = vld [vmem:[%s719 + $0x50] sm:$0xff]
        %v7212 = vld [vmem:[%s719 + $0x58] sm:$0xff]
        %v7213 = vld [vmem:[%s719 + $0x60] sm:$0xff]
        %v7214 = vld [vmem:[%s719 + $0x68] sm:$0xff]
        %v7215 = vld [vmem:[%s719 + $0x70] sm:$0xff]
        %v7216 = vld [vmem:[%s719 + $0x78] sm:$0xff]
        %v7217 = vld [vmem:[%s864] sm:$0x3]
        %v7219 = vlaneseq
        %v7220 = vshrl.u32 %v7219, 7
        %v7221 = vsub.s32 0, %v7220
        %v7222 = vrot.slane %v7217, %v7221
        %v7223 = vlaneseq
        %v7224 = vshrl.u32 %v7223, 7
        %v7225 = vsub.s32 1, %v7224
        %v7226 = vrot.slane %v7217, %v7225
        %v7245 = vunpack.c.l.b16 %v7201
        %v7246 = vunpack.c.h.b16 %v7201
        %v7247 = vunpack.c.l.b16 %v7202
        %v7248 = vunpack.c.h.b16 %v7202
        %v7249 = vunpack.c.l.b16 %v7203
        %v7250 = vunpack.c.h.b16 %v7203
        %v7251 = vunpack.c.l.b16 %v7204
        %v7252 = vunpack.c.h.b16 %v7204
        %v7253 = vunpack.c.l.b16 %v7205
        %v7254 = vunpack.c.h.b16 %v7205
        %v7255 = vunpack.c.l.b16 %v7206
        %v7256 = vunpack.c.h.b16 %v7206
        %v7257 = vunpack.c.l.b16 %v7207
        %v7258 = vunpack.c.h.b16 %v7207
        %v7259 = vunpack.c.l.b16 %v7208
        %v7260 = vunpack.c.h.b16 %v7208
        %v7261 = vunpack.c.l.b16 %v7209
        %v7262 = vunpack.c.h.b16 %v7209
        %v7263 = vunpack.c.l.b16 %v7210
        %v7264 = vunpack.c.h.b16 %v7210
        %v7265 = vunpack.c.l.b16 %v7211
        %v7266 = vunpack.c.h.b16 %v7211
        %v7267 = vunpack.c.l.b16 %v7212
        %v7268 = vunpack.c.h.b16 %v7212
        %v7269 = vunpack.c.l.b16 %v7213
        %v7270 = vunpack.c.h.b16 %v7213
        %v7271 = vunpack.c.l.b16 %v7214
        %v7272 = vunpack.c.h.b16 %v7214
        %v7273 = vunpack.c.l.b16 %v7215
        %v7274 = vunpack.c.h.b16 %v7215
        %v7275 = vunpack.c.l.b16 %v7216
        %v7276 = vunpack.c.h.b16 %v7216
        %v7277 = vpack.c.b16 %v7247, %v7245
        %v7278 = vpack.c.b16 %v7248, %v7246
        %v7279 = vpack.c.b16 %v7251, %v7249
        %v7280 = vpack.c.b16 %v7252, %v7250
        %v7281 = vpack.c.b16 %v7255, %v7253
        %v7282 = vpack.c.b16 %v7256, %v7254
        %v7283 = vpack.c.b16 %v7259, %v7257
        %v7284 = vpack.c.b16 %v7260, %v7258
        %v7285 = vpack.c.b16 %v7263, %v7261
        %v7286 = vpack.c.b16 %v7264, %v7262
        %v7287 = vpack.c.b16 %v7267, %v7265
        %v7288 = vpack.c.b16 %v7268, %v7266
        %v7289 = vpack.c.b16 %v7271, %v7269
        %v7290 = vpack.c.b16 %v7272, %v7270
        %v7291 = vpack.c.b16 %v7275, %v7273
        %v7292 = vpack.c.b16 %v7276, %v7274
        %7309 = vmatprep.subr.bf16.mxu0 %v7278
        %7310 = vmatpush1.bf16.msra.mxu0 %v7277
        %7311 = vmatprep.subr.bf16.mxu0 %v7280
        %7312 = vmatpush1.bf16.msra.mxu0 %v7279
        %7313 = vmatprep.subr.bf16.mxu0 %v7282
        %7314 = vmatpush1.bf16.msra.mxu0 %v7281
        %7315 = vmatprep.subr.bf16.mxu0 %v7284
        %7316 = vmatpush1.bf16.msra.mxu0 %v7283
        %7317 = vmatprep.subr.bf16.mxu0 %v7286
        %7318 = vmatpush1.bf16.msra.mxu0 %v7285
        %7319 = vmatprep.subr.bf16.mxu0 %v7288
        %7320 = vmatpush1.bf16.msra.mxu0 %v7287
        %7321 = vmatprep.subr.bf16.mxu0 %v7290
        %7322 = vmatpush1.bf16.msra.mxu0 %v7289
        %7323 = vmatprep.subr.bf16.mxu0 %v7292
        %7324 = vmatpush1.bf16.msra.mxu0 %v7291
        %7325 = vmatprep.subr.bf16.mxu0 0
        %7326 = vmatpush1.bf16.msra.mxu0 0
        %7327 = vmatprep.subr.bf16.mxu0 0
        %7328 = vmatpush1.bf16.msra.mxu0 0
        %7329 = vmatprep.subr.bf16.mxu0 0
        %7330 = vmatpush1.bf16.msra.mxu0 0
        %7331 = vmatprep.subr.bf16.mxu0 0
        %7332 = vmatpush1.bf16.msra.mxu0 0
        %7333 = vmatprep.subr.bf16.mxu0 0
        %7334 = vmatpush1.bf16.msra.mxu0 0
        %7335 = vmatprep.subr.bf16.mxu0 0
        %7336 = vmatpush1.bf16.msra.mxu0 0
        %7337 = vmatprep.subr.bf16.mxu0 0
        %7338 = vmatpush1.bf16.msra.mxu0 0
        %7339 = vmatprep.subr.bf16.mxu0 0
        %7340 = vmatpush1.bf16.msra.mxu0 0
        %7341 = vmatprep.mubr.bf16.mxu0 0
        %7342 = vmatmul.mubr.bf16.gmra.mrb[0].mxu0 %v7185
        %v7343 = vpop.f32.mrb[0].mxu0
        %v7344 = vadd.f32 %v7222, %v7343
        %v7345 = vpop.f32.mrb[0].mxu0
        %v7346 = vadd.f32 %v7226, %v7345
        %v7347 = vpop.f32.mrb[0].mxu0
        %v7348 = vadd.f32 %v7222, %v7347
        %v7349 = vpop.f32.mrb[0].mxu0
        %v7350 = vadd.f32 %v7226, %v7349
        %7351 = vmatprep.mubr.bf16.mxu0 0
        %7352 = vmatmul.mubr.bf16.gmra.mrb[0].mxu0 %v7186
        %v7353 = vpop.f32.mrb[0].mxu0
        %v7354 = vadd.f32 %v7222, %v7353
        %v7355 = vpop.f32.mrb[0].mxu0
        %v7356 = vadd.f32 %v7226, %v7355
        %v7357 = vpop.f32.mrb[0].mxu0
        %v7358 = vadd.f32 %v7222, %v7357
        %v7359 = vpop.f32.mrb[0].mxu0
        %v7360 = vadd.f32 %v7226, %v7359
        %7361 = vmatprep.mubr.bf16.mxu0 0
        %7362 = vmatmul.mubr.bf16.gmra.mrb[0].mxu0 %v7187
        %v7363 = vpop.f32.mrb[0].mxu0
        %v7364 = vadd.f32 %v7222, %v7363
        %v7365 = vpop.f32.mrb[0].mxu0
        %v7366 = vadd.f32 %v7226, %v7365
        %v7367 = vpop.f32.mrb[0].mxu0
        %v7368 = vadd.f32 %v7222, %v7367
        %v7369 = vpop.f32.mrb[0].mxu0
        %v7370 = vadd.f32 %v7226, %v7369
        %7371 = vmatprep.mubr.bf16.mxu0 0
        %7372 = vmatmul.mubr.bf16.gmra.mrb[0].mxu0 %v7188
        %v7373 = vpop.f32.mrb[0].mxu0
        %v7374 = vadd.f32 %v7222, %v7373
        %v7375 = vpop.f32.mrb[0].mxu0
        %v7376 = vadd.f32 %v7226, %v7375
        %v7377 = vpop.f32.mrb[0].mxu0
        %v7378 = vadd.f32 %v7222, %v7377
        %v7379 = vpop.f32.mrb[0].mxu0
        %v7380 = vadd.f32 %v7226, %v7379
        %7381 = vmatprep.mubr.bf16.mxu0 0
        %7382 = vmatmul.mubr.bf16.gmra.mrb[0].mxu0 %v7189
        %v7383 = vpop.f32.mrb[0].mxu0
        %v7384 = vadd.f32 %v7222, %v7383
        %v7385 = vpop.f32.mrb[0].mxu0
        %v7386 = vadd.f32 %v7226, %v7385
        %v7387 = vpop.f32.mrb[0].mxu0
        %v7388 = vadd.f32 %v7222, %v7387
        %v7389 = vpop.f32.mrb[0].mxu0
        %v7390 = vadd.f32 %v7226, %v7389
        %7391 = vmatprep.mubr.bf16.mxu0 0
        %7392 = vmatmul.mubr.bf16.gmra.mrb[0].mxu0 %v7190
        %v7393 = vpop.f32.mrb[0].mxu0
        %v7394 = vadd.f32 %v7222, %v7393
        %v7395 = vpop.f32.mrb[0].mxu0
        %v7396 = vadd.f32 %v7226, %v7395
        %v7397 = vpop.f32.mrb[0].mxu0
        %v7398 = vadd.f32 %v7222, %v7397
        %v7399 = vpop.f32.mrb[0].mxu0
        %v7400 = vadd.f32 %v7226, %v7399
        %7401 = vmatprep.mubr.bf16.mxu0 0
        %7402 = vmatmul.mubr.bf16.gmra.mrb[0].mxu0 %v7191
        %v7403 = vpop.f32.mrb[0].mxu0
        %v7404 = vadd.f32 %v7222, %v7403
        %v7405 = vpop.f32.mrb[0].mxu0
        %v7406 = vadd.f32 %v7226, %v7405
        %v7407 = vpop.f32.mrb[0].mxu0
        %v7408 = vadd.f32 %v7222, %v7407
        %v7409 = vpop.f32.mrb[0].mxu0
        %v7410 = vadd.f32 %v7226, %v7409
        %7411 = vmatprep.mubr.bf16.mxu0 0
        %7412 = vmatmul.mubr.bf16.gmra.mrb[0].mxu0 %v7192
        %v7413 = vpop.f32.mrb[0].mxu0
        %v7414 = vadd.f32 %v7222, %v7413
        %v7415 = vpop.f32.mrb[0].mxu0
        %v7416 = vadd.f32 %v7226, %v7415
        %v7417 = vpop.f32.mrb[0].mxu0
        %v7418 = vadd.f32 %v7222, %v7417
        %v7419 = vpop.f32.mrb[0].mxu0
        %v7420 = vadd.f32 %v7226, %v7419
        %7421 = vmatprep.mubr.bf16.mxu0 0
        %7422 = vmatmul.mubr.bf16.gmra.mrb[0].mxu0 %v7193
        %v7423 = vpop.f32.mrb[0].mxu0
        %v7424 = vadd.f32 %v7222, %v7423
        %v7425 = vpop.f32.mrb[0].mxu0
        %v7426 = vadd.f32 %v7226, %v7425
        %v7427 = vpop.f32.mrb[0].mxu0
        %v7428 = vadd.f32 %v7222, %v7427
        %v7429 = vpop.f32.mrb[0].mxu0
        %v7430 = vadd.f32 %v7226, %v7429
        %7431 = vmatprep.mubr.bf16.mxu0 0
        %7432 = vmatmul.mubr.bf16.gmra.mrb[0].mxu0 %v7194
        %v7433 = vpop.f32.mrb[0].mxu0
        %v7434 = vadd.f32 %v7222, %v7433
        %v7435 = vpop.f32.mrb[0].mxu0
        %v7436 = vadd.f32 %v7226, %v7435
        %v7437 = vpop.f32.mrb[0].mxu0
        %v7438 = vadd.f32 %v7222, %v7437
        %v7439 = vpop.f32.mrb[0].mxu0
        %v7440 = vadd.f32 %v7226, %v7439
        %7441 = vmatprep.mubr.bf16.mxu0 0
        %7442 = vmatmul.mubr.bf16.gmra.mrb[0].mxu0 %v7195
        %v7443 = vpop.f32.mrb[0].mxu0
        %v7444 = vadd.f32 %v7222, %v7443
        %v7445 = vpop.f32.mrb[0].mxu0
        %v7446 = vadd.f32 %v7226, %v7445
        %v7447 = vpop.f32.mrb[0].mxu0
        %v7448 = vadd.f32 %v7222, %v7447
        %v7449 = vpop.f32.mrb[0].mxu0
        %v7450 = vadd.f32 %v7226, %v7449
        %7451 = vmatprep.mubr.bf16.mxu0 0
        %7452 = vmatmul.mubr.bf16.gmra.mrb[0].mxu0 %v7196
        %v7453 = vpop.f32.mrb[0].mxu0
        %v7454 = vadd.f32 %v7222, %v7453
        %v7455 = vpop.f32.mrb[0].mxu0
        %v7456 = vadd.f32 %v7226, %v7455
        %v7457 = vpop.f32.mrb[0].mxu0
        %v7458 = vadd.f32 %v7222, %v7457
        %v7459 = vpop.f32.mrb[0].mxu0
        %v7460 = vadd.f32 %v7226, %v7459
        %7461 = vmatprep.mubr.bf16.mxu0 0
        %7462 = vmatmul.mubr.bf16.gmra.mrb[0].mxu0 %v7197
        %v7463 = vpop.f32.mrb[0].mxu0
        %v7464 = vadd.f32 %v7222, %v7463
        %v7465 = vpop.f32.mrb[0].mxu0
        %v7466 = vadd.f32 %v7226, %v7465
        %v7467 = vpop.f32.mrb[0].mxu0
        %v7468 = vadd.f32 %v7222, %v7467
        %v7469 = vpop.f32.mrb[0].mxu0
        %v7470 = vadd.f32 %v7226, %v7469
        %7471 = vmatprep.mubr.bf16.mxu0 0
        %7472 = vmatmul.mubr.bf16.gmra.mrb[0].mxu0 %v7198
        %v7473 = vpop.f32.mrb[0].mxu0
        %v7474 = vadd.f32 %v7222, %v7473
        %v7475 = vpop.f32.mrb[0].mxu0
        %v7476 = vadd.f32 %v7226, %v7475
        %v7477 = vpop.f32.mrb[0].mxu0
        %v7478 = vadd.f32 %v7222, %v7477
        %v7479 = vpop.f32.mrb[0].mxu0
        %v7480 = vadd.f32 %v7226, %v7479
        %7481 = vmatprep.mubr.bf16.mxu0 0
        %7482 = vmatmul.mubr.bf16.gmra.mrb[0].mxu0 %v7199
        %v7483 = vpop.f32.mrb[0].mxu0
        %v7484 = vadd.f32 %v7222, %v7483
        %v7485 = vpop.f32.mrb[0].mxu0
        %v7486 = vadd.f32 %v7226, %v7485
        %v7487 = vpop.f32.mrb[0].mxu0
        %v7488 = vadd.f32 %v7222, %v7487
        %v7489 = vpop.f32.mrb[0].mxu0
        %v7490 = vadd.f32 %v7226, %v7489
        %7491 = vmatprep.mubr.bf16.mxu0 0
        %7492 = vmatmul.mubr.bf16.gmra.mrb[0].mxu0 %v7200
        %v7493 = vpop.f32.mrb[0].mxu0
        %v7494 = vadd.f32 %v7222, %v7493
        %v7495 = vpop.f32.mrb[0].mxu0
        %v7496 = vadd.f32 %v7226, %v7495
        %v7497 = vpop.f32.mrb[0].mxu0
        %v7498 = vadd.f32 %v7222, %v7497
        %v7499 = vpop.f32.mrb[0].mxu0
        %v7500 = vadd.f32 %v7226, %v7499
        %7501 = vdwg.mxu0
        %v7502 = vmax.f32 %v7344, 0.0
        %v7503 = vmax.f32 %v7346, 0.0
        %v7504 = vmax.f32 %v7348, 0.0
        %v7505 = vmax.f32 %v7350, 0.0
        %v7506 = vmax.f32 %v7354, 0.0
        %v7507 = vmax.f32 %v7356, 0.0
        %v7508 = vmax.f32 %v7358, 0.0
        %v7509 = vmax.f32 %v7360, 0.0
        %v7510 = vmax.f32 %v7364, 0.0
        %v7511 = vmax.f32 %v7366, 0.0
        %v7512 = vmax.f32 %v7368, 0.0
        %v7513 = vmax.f32 %v7370, 0.0
        %v7514 = vmax.f32 %v7374, 0.0
        %v7515 = vmax.f32 %v7376, 0.0
        %v7516 = vmax.f32 %v7378, 0.0
        %v7517 = vmax.f32 %v7380, 0.0
        %v7518 = vmax.f32 %v7384, 0.0
        %v7519 = vmax.f32 %v7386, 0.0
        %v7520 = vmax.f32 %v7388, 0.0
        %v7521 = vmax.f32 %v7390, 0.0
        %v7522 = vmax.f32 %v7394, 0.0
        %v7523 = vmax.f32 %v7396, 0.0
        %v7524 = vmax.f32 %v7398, 0.0
        %v7525 = vmax.f32 %v7400, 0.0
        %v7526 = vmax.f32 %v7404, 0.0
        %v7527 = vmax.f32 %v7406, 0.0
        %v7528 = vmax.f32 %v7408, 0.0
        %v7529 = vmax.f32 %v7410, 0.0
        %v7530 = vmax.f32 %v7414, 0.0
        %v7531 = vmax.f32 %v7416, 0.0
        %v7532 = vmax.f32 %v7418, 0.0
        %v7533 = vmax.f32 %v7420, 0.0
        %v7534 = vmax.f32 %v7424, 0.0
        %v7535 = vmax.f32 %v7426, 0.0
        %v7536 = vmax.f32 %v7428, 0.0
        %v7537 = vmax.f32 %v7430, 0.0
        %v7538 = vmax.f32 %v7434, 0.0
        %v7539 = vmax.f32 %v7436, 0.0
        %v7540 = vmax.f32 %v7438, 0.0
        %v7541 = vmax.f32 %v7440, 0.0
        %v7542 = vmax.f32 %v7444, 0.0
        %v7543 = vmax.f32 %v7446, 0.0
        %v7544 = vmax.f32 %v7448, 0.0
        %v7545 = vmax.f32 %v7450, 0.0
        %v7546 = vmax.f32 %v7454, 0.0
        %v7547 = vmax.f32 %v7456, 0.0
        %v7548 = vmax.f32 %v7458, 0.0
        %v7549 = vmax.f32 %v7460, 0.0
        %v7550 = vmax.f32 %v7464, 0.0
        %v7551 = vmax.f32 %v7466, 0.0
        %v7552 = vmax.f32 %v7468, 0.0
        %v7553 = vmax.f32 %v7470, 0.0
        %v7554 = vmax.f32 %v7474, 0.0
        %v7555 = vmax.f32 %v7476, 0.0
        %v7556 = vmax.f32 %v7478, 0.0
        %v7557 = vmax.f32 %v7480, 0.0
        %v7558 = vmax.f32 %v7484, 0.0
        %v7559 = vmax.f32 %v7486, 0.0
        %v7560 = vmax.f32 %v7488, 0.0
        %v7561 = vmax.f32 %v7490, 0.0
        %v7562 = vmax.f32 %v7494, 0.0
        %v7563 = vmax.f32 %v7496, 0.0
        %v7564 = vmax.f32 %v7498, 0.0
        %v7565 = vmax.f32 %v7500, 0.0
        %v7566 = vpack.c.bf16 %v7504, %v7502
        %v7567 = vpack.c.bf16 %v7505, %v7503
        %v7568 = vpack.c.bf16 %v7508, %v7506
        %v7569 = vpack.c.bf16 %v7509, %v7507
        %v7570 = vpack.c.bf16 %v7512, %v7510
        %v7571 = vpack.c.bf16 %v7513, %v7511
        %v7572 = vpack.c.bf16 %v7516, %v7514
        %v7573 = vpack.c.bf16 %v7517, %v7515
        %v7574 = vpack.c.bf16 %v7520, %v7518
        %v7575 = vpack.c.bf16 %v7521, %v7519
        %v7576 = vpack.c.bf16 %v7524, %v7522
        %v7577 = vpack.c.bf16 %v7525, %v7523
        %v7578 = vpack.c.bf16 %v7528, %v7526
        %v7579 = vpack.c.bf16 %v7529, %v7527
        %v7580 = vpack.c.bf16 %v7532, %v7530
        %v7581 = vpack.c.bf16 %v7533, %v7531
        %v7582 = vpack.c.bf16 %v7536, %v7534
        %v7583 = vpack.c.bf16 %v7537, %v7535
        %v7584 = vpack.c.bf16 %v7540, %v7538
        %v7585 = vpack.c.bf16 %v7541, %v7539
        %v7586 = vpack.c.bf16 %v7544, %v7542
        %v7587 = vpack.c.bf16 %v7545, %v7543
        %v7588 = vpack.c.bf16 %v7548, %v7546
        %v7589 = vpack.c.bf16 %v7549, %v7547
        %v7590 = vpack.c.bf16 %v7552, %v7550
        %v7591 = vpack.c.bf16 %v7553, %v7551
        %v7592 = vpack.c.bf16 %v7556, %v7554
        %v7593 = vpack.c.bf16 %v7557, %v7555
        %v7594 = vpack.c.bf16 %v7560, %v7558
        %v7595 = vpack.c.bf16 %v7561, %v7559
        %v7596 = vpack.c.bf16 %v7564, %v7562
        %v7597 = vpack.c.bf16 %v7565, %v7563
        %v7598 = vld [vmem:[%s728] sm:$0xf]
        %v7599 = vld [vmem:[%s728 + $0x4] sm:$0xf]
        %v7600 = vld [vmem:[%s728 + $0x8] sm:$0xf]
        %v7601 = vld [vmem:[%s728 + $0xc] sm:$0xf]
        %v7602 = vld [vmem:[%s728 + $0x10] sm:$0xf]
        %v7603 = vld [vmem:[%s728 + $0x14] sm:$0xf]
        %v7604 = vld [vmem:[%s728 + $0x18] sm:$0xf]
        %v7605 = vld [vmem:[%s728 + $0x1c] sm:$0xf]
        %v7606 = vld [vmem:[%s728 + $0x20] sm:$0xf]
        %v7607 = vld [vmem:[%s728 + $0x24] sm:$0xf]
        %v7608 = vld [vmem:[%s728 + $0x28] sm:$0xf]
        %v7609 = vld [vmem:[%s728 + $0x2c] sm:$0xf]
        %v7610 = vld [vmem:[%s728 + $0x30] sm:$0xf]
        %v7611 = vld [vmem:[%s728 + $0x34] sm:$0xf]
        %v7612 = vld [vmem:[%s728 + $0x38] sm:$0xf]
        %v7613 = vld [vmem:[%s728 + $0x3c] sm:$0xf]
        %v7614 = vld [vmem:[%s728 + $0x40] sm:$0xf]
        %v7615 = vld [vmem:[%s728 + $0x44] sm:$0xf]
        %v7616 = vld [vmem:[%s728 + $0x48] sm:$0xf]
        %v7617 = vld [vmem:[%s728 + $0x4c] sm:$0xf]
        %v7618 = vld [vmem:[%s728 + $0x50] sm:$0xf]
        %v7619 = vld [vmem:[%s728 + $0x54] sm:$0xf]
        %v7620 = vld [vmem:[%s728 + $0x58] sm:$0xf]
        %v7621 = vld [vmem:[%s728 + $0x5c] sm:$0xf]
        %v7622 = vld [vmem:[%s728 + $0x60] sm:$0xf]
        %v7623 = vld [vmem:[%s728 + $0x64] sm:$0xf]
        %v7624 = vld [vmem:[%s728 + $0x68] sm:$0xf]
        %v7625 = vld [vmem:[%s728 + $0x6c] sm:$0xf]
        %v7626 = vld [vmem:[%s728 + $0x70] sm:$0xf]
        %v7627 = vld [vmem:[%s728 + $0x74] sm:$0xf]
        %v7628 = vld [vmem:[%s728 + $0x78] sm:$0xf]
        %v7629 = vld [vmem:[%s728 + $0x7c] sm:$0xf]
        %v7630 = vld [vmem:[%s736] sm:$0x1]
        %v7632 = vlaneseq
        %v7633 = vshrl.u32 %v7632, 7
        %v7634 = vsub.s32 0, %v7633
        %v7635 = vrot.slane %v7630, %v7634
        %v7669 = vunpack.c.l.b16 %v7598
        %v7670 = vunpack.c.l.b16 %v7599
        %v7671 = vunpack.c.l.b16 %v7600
        %v7672 = vunpack.c.l.b16 %v7601
        %v7673 = vunpack.c.l.b16 %v7602
        %v7674 = vunpack.c.l.b16 %v7603
        %v7675 = vunpack.c.l.b16 %v7604
        %v7676 = vunpack.c.l.b16 %v7605
        %v7677 = vunpack.c.l.b16 %v7606
        %v7678 = vunpack.c.l.b16 %v7607
        %v7679 = vunpack.c.l.b16 %v7608
        %v7680 = vunpack.c.l.b16 %v7609
        %v7681 = vunpack.c.l.b16 %v7610
        %v7682 = vunpack.c.l.b16 %v7611
        %v7683 = vunpack.c.l.b16 %v7612
        %v7684 = vunpack.c.l.b16 %v7613
        %v7685 = vunpack.c.l.b16 %v7614
        %v7686 = vunpack.c.l.b16 %v7615
        %v7687 = vunpack.c.l.b16 %v7616
        %v7688 = vunpack.c.l.b16 %v7617
        %v7689 = vunpack.c.l.b16 %v7618
        %v7690 = vunpack.c.l.b16 %v7619
        %v7691 = vunpack.c.l.b16 %v7620
        %v7692 = vunpack.c.l.b16 %v7621
        %v7693 = vunpack.c.l.b16 %v7622
        %v7694 = vunpack.c.l.b16 %v7623
        %v7695 = vunpack.c.l.b16 %v7624
        %v7696 = vunpack.c.l.b16 %v7625
        %v7697 = vunpack.c.l.b16 %v7626
        %v7698 = vunpack.c.l.b16 %v7627
        %v7699 = vunpack.c.l.b16 %v7628
        %v7700 = vunpack.c.l.b16 %v7629
        %v7701 = vpack.c.b16 %v7670, %v7669
        %v7702 = vpack.c.b16 %v7672, %v7671
        %v7703 = vpack.c.b16 %v7674, %v7673
        %v7704 = vpack.c.b16 %v7676, %v7675
        %v7705 = vpack.c.b16 %v7678, %v7677
        %v7706 = vpack.c.b16 %v7680, %v7679
        %v7707 = vpack.c.b16 %v7682, %v7681
        %v7708 = vpack.c.b16 %v7684, %v7683
        %v7709 = vpack.c.b16 %v7686, %v7685
        %v7710 = vpack.c.b16 %v7688, %v7687
        %v7711 = vpack.c.b16 %v7690, %v7689
        %v7712 = vpack.c.b16 %v7692, %v7691
        %v7713 = vpack.c.b16 %v7694, %v7693
        %v7714 = vpack.c.b16 %v7696, %v7695
        %v7715 = vpack.c.b16 %v7698, %v7697
        %v7716 = vpack.c.b16 %v7700, %v7699
        %7733 = vmatprep.subr.bf16.mxu0 0
        %7734 = vmatpush1.bf16.msra.mxu0 %v7701
        %7735 = vmatprep.subr.bf16.mxu0 0
        %7736 = vmatpush1.bf16.msra.mxu0 %v7702
        %7737 = vmatprep.subr.bf16.mxu0 0
        %7738 = vmatpush1.bf16.msra.mxu0 %v7703
        %7739 = vmatprep.subr.bf16.mxu0 0
        %7740 = vmatpush1.bf16.msra.mxu0 %v7704
        %7741 = vmatprep.subr.bf16.mxu0 0
        %7742 = vmatpush1.bf16.msra.mxu0 %v7705
        %7743 = vmatprep.subr.bf16.mxu0 0
        %7744 = vmatpush1.bf16.msra.mxu0 %v7706
        %7745 = vmatprep.subr.bf16.mxu0 0
        %7746 = vmatpush1.bf16.msra.mxu0 %v7707
        %7747 = vmatprep.subr.bf16.mxu0 0
        %7748 = vmatpush1.bf16.msra.mxu0 %v7708
        %7749 = vmatprep.subr.bf16.mxu0 0
        %7750 = vmatpush1.bf16.msra.mxu0 %v7709
        %7751 = vmatprep.subr.bf16.mxu0 0
        %7752 = vmatpush1.bf16.msra.mxu0 %v7710
        %7753 = vmatprep.subr.bf16.mxu0 0
        %7754 = vmatpush1.bf16.msra.mxu0 %v7711
        %7755 = vmatprep.subr.bf16.mxu0 0
        %7756 = vmatpush1.bf16.msra.mxu0 %v7712
        %7757 = vmatprep.subr.bf16.mxu0 0
        %7758 = vmatpush1.bf16.msra.mxu0 %v7713
        %7759 = vmatprep.subr.bf16.mxu0 0
        %7760 = vmatpush1.bf16.msra.mxu0 %v7714
        %7761 = vmatprep.subr.bf16.mxu0 0
        %7762 = vmatpush1.bf16.msra.mxu0 %v7715
        %7763 = vmatprep.subr.bf16.mxu0 0
        %7764 = vmatpush1.bf16.msra.mxu0 %v7716
        %7765 = vmatprep.mubr.bf16.mxu0 %v7567
        %7766 = vmatmul.mubr.bf16.gmra.mrb[0].mxu0 %v7566
        %v7767 = vpop.f32.mrb[0].mxu0
        %v7768 = vadd.f32 %v7635, %v7767
        %v7769 = vpop.f32.mrb[0].mxu0
        %v7770 = vpop.f32.mrb[0].mxu0
        %v7771 = vadd.f32 %v7635, %v7770
        %v7772 = vpop.f32.mrb[0].mxu0
        %7773 = vmatprep.mubr.bf16.mxu0 %v7569
        %7774 = vmatmul.mubr.bf16.gmra.mrb[0].mxu0 %v7568
        %v7775 = vpop.f32.mrb[0].mxu0
        %v7776 = vadd.f32 %v7635, %v7775
        %v7777 = vpop.f32.mrb[0].mxu0
        %v7778 = vpop.f32.mrb[0].mxu0
        %v7779 = vadd.f32 %v7635, %v7778
        %v7780 = vpop.f32.mrb[0].mxu0
        %7781 = vmatprep.mubr.bf16.mxu0 %v7571
        %7782 = vmatmul.mubr.bf16.gmra.mrb[0].mxu0 %v7570
        %v7783 = vpop.f32.mrb[0].mxu0
        %v7784 = vadd.f32 %v7635, %v7783
        %v7785 = vpop.f32.mrb[0].mxu0
        %v7786 = vpop.f32.mrb[0].mxu0
        %v7787 = vadd.f32 %v7635, %v7786
        %v7788 = vpop.f32.mrb[0].mxu0
        %7789 = vmatprep.mubr.bf16.mxu0 %v7573
        %7790 = vmatmul.mubr.bf16.gmra.mrb[0].mxu0 %v7572
        %v7791 = vpop.f32.mrb[0].mxu0
        %v7792 = vadd.f32 %v7635, %v7791
        %v7793 = vpop.f32.mrb[0].mxu0
        %v7794 = vpop.f32.mrb[0].mxu0
        %v7795 = vadd.f32 %v7635, %v7794
        %v7796 = vpop.f32.mrb[0].mxu0
        %7797 = vmatprep.mubr.bf16.mxu0 %v7575
        %7798 = vmatmul.mubr.bf16.gmra.mrb[0].mxu0 %v7574
        %v7799 = vpop.f32.mrb[0].mxu0
        %v7800 = vadd.f32 %v7635, %v7799
        %v7801 = vpop.f32.mrb[0].mxu0
        %v7802 = vpop.f32.mrb[0].mxu0
        %v7803 = vadd.f32 %v7635, %v7802
        %v7804 = vpop.f32.mrb[0].mxu0
        %7805 = vmatprep.mubr.bf16.mxu0 %v7577
        %7806 = vmatmul.mubr.bf16.gmra.mrb[0].mxu0 %v7576
        %v7807 = vpop.f32.mrb[0].mxu0
        %v7808 = vadd.f32 %v7635, %v7807
        %v7809 = vpop.f32.mrb[0].mxu0
        %v7810 = vpop.f32.mrb[0].mxu0
        %v7811 = vadd.f32 %v7635, %v7810
        %v7812 = vpop.f32.mrb[0].mxu0
        %7813 = vmatprep.mubr.bf16.mxu0 %v7579
        %7814 = vmatmul.mubr.bf16.gmra.mrb[0].mxu0 %v7578
        %v7815 = vpop.f32.mrb[0].mxu0
        %v7816 = vadd.f32 %v7635, %v7815
        %v7817 = vpop.f32.mrb[0].mxu0
        %v7818 = vpop.f32.mrb[0].mxu0
        %v7819 = vadd.f32 %v7635, %v7818
        %v7820 = vpop.f32.mrb[0].mxu0
        %7821 = vmatprep.mubr.bf16.mxu0 %v7581
        %7822 = vmatmul.mubr.bf16.gmra.mrb[0].mxu0 %v7580
        %v7823 = vpop.f32.mrb[0].mxu0
        %v7824 = vadd.f32 %v7635, %v7823
        %v7825 = vpop.f32.mrb[0].mxu0
        %v7826 = vpop.f32.mrb[0].mxu0
        %v7827 = vadd.f32 %v7635, %v7826
        %v7828 = vpop.f32.mrb[0].mxu0
        %7829 = vmatprep.mubr.bf16.mxu0 %v7583
        %7830 = vmatmul.mubr.bf16.gmra.mrb[0].mxu0 %v7582
        %v7831 = vpop.f32.mrb[0].mxu0
        %v7832 = vadd.f32 %v7635, %v7831
        %v7833 = vpop.f32.mrb[0].mxu0
        %v7834 = vpop.f32.mrb[0].mxu0
        %v7835 = vadd.f32 %v7635, %v7834
        %v7836 = vpop.f32.mrb[0].mxu0
        %7837 = vmatprep.mubr.bf16.mxu0 %v7585
        %7838 = vmatmul.mubr.bf16.gmra.mrb[0].mxu0 %v7584
        %v7839 = vpop.f32.mrb[0].mxu0
        %v7840 = vadd.f32 %v7635, %v7839
        %v7841 = vpop.f32.mrb[0].mxu0
        %v7842 = vpop.f32.mrb[0].mxu0
        %v7843 = vadd.f32 %v7635, %v7842
        %v7844 = vpop.f32.mrb[0].mxu0
        %7845 = vmatprep.mubr.bf16.mxu0 %v7587
        %7846 = vmatmul.mubr.bf16.gmra.mrb[0].mxu0 %v7586
        %v7847 = vpop.f32.mrb[0].mxu0
        %v7848 = vadd.f32 %v7635, %v7847
        %v7849 = vpop.f32.mrb[0].mxu0
        %v7850 = vpop.f32.mrb[0].mxu0
        %v7851 = vadd.f32 %v7635, %v7850
        %v7852 = vpop.f32.mrb[0].mxu0
        %7853 = vmatprep.mubr.bf16.mxu0 %v7589
        %7854 = vmatmul.mubr.bf16.gmra.mrb[0].mxu0 %v7588
        %v7855 = vpop.f32.mrb[0].mxu0
        %v7856 = vadd.f32 %v7635, %v7855
        %v7857 = vpop.f32.mrb[0].mxu0
        %v7858 = vpop.f32.mrb[0].mxu0
        %v7859 = vadd.f32 %v7635, %v7858
        %v7860 = vpop.f32.mrb[0].mxu0
        %7861 = vmatprep.mubr.bf16.mxu0 %v7591
        %7862 = vmatmul.mubr.bf16.gmra.mrb[0].mxu0 %v7590
        %v7863 = vpop.f32.mrb[0].mxu0
        %v7864 = vadd.f32 %v7635, %v7863
        %v7865 = vpop.f32.mrb[0].mxu0
        %v7866 = vpop.f32.mrb[0].mxu0
        %v7867 = vadd.f32 %v7635, %v7866
        %v7868 = vpop.f32.mrb[0].mxu0
        %7869 = vmatprep.mubr.bf16.mxu0 %v7593
        %7870 = vmatmul.mubr.bf16.gmra.mrb[0].mxu0 %v7592
        %v7871 = vpop.f32.mrb[0].mxu0
        %v7872 = vadd.f32 %v7635, %v7871
        %v7873 = vpop.f32.mrb[0].mxu0
        %v7874 = vpop.f32.mrb[0].mxu0
        %v7875 = vadd.f32 %v7635, %v7874
        %v7876 = vpop.f32.mrb[0].mxu0
        %7877 = vmatprep.mubr.bf16.mxu0 %v7595
        %7878 = vmatmul.mubr.bf16.gmra.mrb[0].mxu0 %v7594
        %v7879 = vpop.f32.mrb[0].mxu0
        %v7880 = vadd.f32 %v7635, %v7879
        %v7881 = vpop.f32.mrb[0].mxu0
        %v7882 = vpop.f32.mrb[0].mxu0
        %v7883 = vadd.f32 %v7635, %v7882
        %v7884 = vpop.f32.mrb[0].mxu0
        %7885 = vmatprep.mubr.bf16.mxu0 %v7597
        %7886 = vmatmul.mubr.bf16.gmra.mrb[0].mxu0 %v7596
        %v7887 = vpop.f32.mrb[0].mxu0
        %v7888 = vadd.f32 %v7635, %v7887
        %v7889 = vpop.f32.mrb[0].mxu0
        %v7890 = vpop.f32.mrb[0].mxu0
        %v7891 = vadd.f32 %v7635, %v7890
        %v7892 = vpop.f32.mrb[0].mxu0
        %7893 = vdwg.mxu0
        %v7894 = vadd.f32 %v6499, %v7768
        %v7895 = vadd.f32 %v6500, %v7771
        %v7896 = vadd.f32 %v6501, %v7776
        %v7897 = vadd.f32 %v6502, %v7779
        %v7898 = vadd.f32 %v6503, %v7784
        %v7899 = vadd.f32 %v6504, %v7787
        %v7900 = vadd.f32 %v6505, %v7792
        %v7901 = vadd.f32 %v6506, %v7795
        %v7902 = vadd.f32 %v6507, %v7800
        %v7903 = vadd.f32 %v6508, %v7803
        %v7904 = vadd.f32 %v6509, %v7808
        %v7905 = vadd.f32 %v6510, %v7811
        %v7906 = vadd.f32 %v6511, %v7816
        %v7907 = vadd.f32 %v6512, %v7819
        %v7908 = vadd.f32 %v6513, %v7824
        %v7909 = vadd.f32 %v6514, %v7827
        %v7910 = vadd.f32 %v6515, %v7832
        %v7911 = vadd.f32 %v6516, %v7835
        %v7912 = vadd.f32 %v6517, %v7840
        %v7913 = vadd.f32 %v6518, %v7843
        %v7914 = vadd.f32 %v6519, %v7848
        %v7915 = vadd.f32 %v6520, %v7851
        %v7916 = vadd.f32 %v6521, %v7856
        %v7917 = vadd.f32 %v6522, %v7859
        %v7918 = vadd.f32 %v6523, %v7864
        %v7919 = vadd.f32 %v6524, %v7867
        %v7920 = vadd.f32 %v6525, %v7872
        %v7921 = vadd.f32 %v6526, %v7875
        %v7922 = vadd.f32 %v6527, %v7880
        %v7923 = vadd.f32 %v6528, %v7883
        %v7924 = vadd.f32 %v6529, %v7888
        %v7925 = vadd.f32 %v6530, %v7891
        %7926 = vst [vmem:[#allocation2] sm:$0xff] %v7894
        %7927 = vst [vmem:[#allocation2 + $0x8] sm:$0xff] %v7895
        %7928 = vst [vmem:[#allocation2 + $0x10] sm:$0xff] %v7896
        %7929 = vst [vmem:[#allocation2 + $0x18] sm:$0xff] %v7897
        %7930 = vst [vmem:[#allocation2 + $0x20] sm:$0xff] %v7898
        %7931 = vst [vmem:[#allocation2 + $0x28] sm:$0xff] %v7899
        %7932 = vst [vmem:[#allocation2 + $0x30] sm:$0xff] %v7900
        %7933 = vst [vmem:[#allocation2 + $0x38] sm:$0xff] %v7901
        %7934 = vst [vmem:[#allocation2 + $0x40] sm:$0xff] %v7902
        %7935 = vst [vmem:[#allocation2 + $0x48] sm:$0xff] %v7903
        %7936 = vst [vmem:[#allocation2 + $0x50] sm:$0xff] %v7904
        %7937 = vst [vmem:[#allocation2 + $0x58] sm:$0xff] %v7905
        %7938 = vst [vmem:[#allocation2 + $0x60] sm:$0xff] %v7906
        %7939 = vst [vmem:[#allocation2 + $0x68] sm:$0xff] %v7907
        %7940 = vst [vmem:[#allocation2 + $0x70] sm:$0xff] %v7908
        %7941 = vst [vmem:[#allocation2 + $0x78] sm:$0xff] %v7909
        %7942 = vst [vmem:[#allocation2 + $0x80] sm:$0xff] %v7910
        %7943 = vst [vmem:[#allocation2 + $0x88] sm:$0xff] %v7911
        %7944 = vst [vmem:[#allocation2 + $0x90] sm:$0xff] %v7912
        %7945 = vst [vmem:[#allocation2 + $0x98] sm:$0xff] %v7913
        %7946 = vst [vmem:[#allocation2 + $0xa0] sm:$0xff] %v7914
        %7947 = vst [vmem:[#allocation2 + $0xa8] sm:$0xff] %v7915
        %7948 = vst [vmem:[#allocation2 + $0xb0] sm:$0xff] %v7916
        %7949 = vst [vmem:[#allocation2 + $0xb8] sm:$0xff] %v7917
        %7950 = vst [vmem:[#allocation2 + $0xc0] sm:$0xff] %v7918
        %7951 = vst [vmem:[#allocation2 + $0xc8] sm:$0xff] %v7919
        %7952 = vst [vmem:[#allocation2 + $0xd0] sm:$0xff] %v7920
        %7953 = vst [vmem:[#allocation2 + $0xd8] sm:$0xff] %v7921
        %7954 = vst [vmem:[#allocation2 + $0xe0] sm:$0xff] %v7922
        %7955 = vst [vmem:[#allocation2 + $0xe8] sm:$0xff] %v7923
        %7956 = vst [vmem:[#allocation2 + $0xf0] sm:$0xff] %v7924
        %7957 = vst [vmem:[#allocation2 + $0xf8] sm:$0xff] %v7925
        %p7958 = scmp.eq.s32.totalorder %s47, 1
        // Predicated region
        $region113: #{transformer_encoder.1} parent=83 // pred_check
          %p7959 = pneg %p7958
        $region114: #{transformer_encoder.1} parent=83 // pred_check_branch
          %7961 = sbr.rel (%p7959) target = $region116
        $region115: #{transformer_encoder.1} parent=83 // pred_region
          %v7962 = vld [vmem:[%s14] sm:$0x1]
          %v7963 = vld [vmem:[%s15] sm:$0x1]
          %7964 = vadd.xlane.f32.xlu0 %v7894
          %v7965 = vpop.xlane.xlu0 %7964
          %7966 = vadd.xlane.f32.xlu0 %v7895
          %v7967 = vpop.xlane.xlu0 %7966
          %7968 = vadd.xlane.f32.xlu0 %v7896
          %v7969 = vpop.xlane.xlu0 %7968
          %7970 = vadd.xlane.f32.xlu0 %v7897
          %v7971 = vpop.xlane.xlu0 %7970
          %7972 = vadd.xlane.f32.xlu0 %v7898
          %v7973 = vpop.xlane.xlu0 %7972
          %7974 = vadd.xlane.f32.xlu0 %v7899
          %v7975 = vpop.xlane.xlu0 %7974
          %7976 = vadd.xlane.f32.xlu0 %v7900
          %v7977 = vpop.xlane.xlu0 %7976
          %7978 = vadd.xlane.f32.xlu0 %v7901
          %v7979 = vpop.xlane.xlu0 %7978
          %7980 = vadd.xlane.f32.xlu0 %v7902
          %v7981 = vpop.xlane.xlu0 %7980
          %7982 = vadd.xlane.f32.xlu0 %v7903
          %v7983 = vpop.xlane.xlu0 %7982
          %7984 = vadd.xlane.f32.xlu0 %v7904
          %v7985 = vpop.xlane.xlu0 %7984
          %7986 = vadd.xlane.f32.xlu0 %v7905
          %v7987 = vpop.xlane.xlu0 %7986
          %7988 = vadd.xlane.f32.xlu0 %v7906
          %v7989 = vpop.xlane.xlu0 %7988
          %7990 = vadd.xlane.f32.xlu0 %v7907
          %v7991 = vpop.xlane.xlu0 %7990
          %7992 = vadd.xlane.f32.xlu0 %v7908
          %v7993 = vpop.xlane.xlu0 %7992
          %7994 = vadd.xlane.f32.xlu0 %v7909
          %v7995 = vpop.xlane.xlu0 %7994
          %7996 = vadd.xlane.f32.xlu0 %v7910
          %v7997 = vpop.xlane.xlu0 %7996
          %7998 = vadd.xlane.f32.xlu0 %v7911
          %v7999 = vpop.xlane.xlu0 %7998
          %8000 = vadd.xlane.f32.xlu0 %v7912
          %v8001 = vpop.xlane.xlu0 %8000
          %8002 = vadd.xlane.f32.xlu0 %v7913
          %v8003 = vpop.xlane.xlu0 %8002
          %8004 = vadd.xlane.f32.xlu0 %v7914
          %v8005 = vpop.xlane.xlu0 %8004
          %8006 = vadd.xlane.f32.xlu0 %v7915
          %v8007 = vpop.xlane.xlu0 %8006
          %8008 = vadd.xlane.f32.xlu0 %v7916
          %v8009 = vpop.xlane.xlu0 %8008
          %8010 = vadd.xlane.f32.xlu0 %v7917
          %v8011 = vpop.xlane.xlu0 %8010
          %8012 = vadd.xlane.f32.xlu0 %v7918
          %v8013 = vpop.xlane.xlu0 %8012
          %8014 = vadd.xlane.f32.xlu0 %v7919
          %v8015 = vpop.xlane.xlu0 %8014
          %8016 = vadd.xlane.f32.xlu0 %v7920
          %v8017 = vpop.xlane.xlu0 %8016
          %8018 = vadd.xlane.f32.xlu0 %v7921
          %v8019 = vpop.xlane.xlu0 %8018
          %8020 = vadd.xlane.f32.xlu0 %v7922
          %v8021 = vpop.xlane.xlu0 %8020
          %8022 = vadd.xlane.f32.xlu0 %v7923
          %v8023 = vpop.xlane.xlu0 %8022
          %8024 = vadd.xlane.f32.xlu0 %v7924
          %v8025 = vpop.xlane.xlu0 %8024
          %8026 = vadd.xlane.f32.xlu0 %v7925
          %v8027 = vpop.xlane.xlu0 %8026
          %v8028 = vmul.f32 %v7965, %v1033
          %v8029 = vmul.f32 %v7967, %v1033
          %v8030 = vmul.f32 %v7969, %v1033
          %v8031 = vmul.f32 %v7971, %v1033
          %v8032 = vmul.f32 %v7973, %v1033
          %v8033 = vmul.f32 %v7975, %v1033
          %v8034 = vmul.f32 %v7977, %v1033
          %v8035 = vmul.f32 %v7979, %v1033
          %v8036 = vmul.f32 %v7981, %v1033
          %v8037 = vmul.f32 %v7983, %v1033
          %v8038 = vmul.f32 %v7985, %v1033
          %v8039 = vmul.f32 %v7987, %v1033
          %v8040 = vmul.f32 %v7989, %v1033
          %v8041 = vmul.f32 %v7991, %v1033
          %v8042 = vmul.f32 %v7993, %v1033
          %v8043 = vmul.f32 %v7995, %v1033
          %v8044 = vmul.f32 %v7997, %v1033
          %v8045 = vmul.f32 %v7999, %v1033
          %v8046 = vmul.f32 %v8001, %v1033
          %v8047 = vmul.f32 %v8003, %v1033
          %v8048 = vmul.f32 %v8005, %v1033
          %v8049 = vmul.f32 %v8007, %v1033
          %v8050 = vmul.f32 %v8009, %v1033
          %v8051 = vmul.f32 %v8011, %v1033
          %v8052 = vmul.f32 %v8013, %v1033
          %v8053 = vmul.f32 %v8015, %v1033
          %v8054 = vmul.f32 %v8017, %v1033
          %v8055 = vmul.f32 %v8019, %v1033
          %v8056 = vmul.f32 %v8021, %v1033
          %v8057 = vmul.f32 %v8023, %v1033
          %v8058 = vmul.f32 %v8025, %v1033
          %v8059 = vmul.f32 %v8027, %v1033
          %v8060 = vsub.f32 %v7894, %v8028
          %v8061 = vsub.f32 %v7895, %v8029
          %v8062 = vsub.f32 %v7896, %v8030
          %v8063 = vsub.f32 %v7897, %v8031
          %v8064 = vsub.f32 %v7898, %v8032
          %v8065 = vsub.f32 %v7899, %v8033
          %v8066 = vsub.f32 %v7900, %v8034
          %v8067 = vsub.f32 %v7901, %v8035
          %v8068 = vsub.f32 %v7902, %v8036
          %v8069 = vsub.f32 %v7903, %v8037
          %v8070 = vsub.f32 %v7904, %v8038
          %v8071 = vsub.f32 %v7905, %v8039
          %v8072 = vsub.f32 %v7906, %v8040
          %v8073 = vsub.f32 %v7907, %v8041
          %v8074 = vsub.f32 %v7908, %v8042
          %v8075 = vsub.f32 %v7909, %v8043
          %v8076 = vsub.f32 %v7910, %v8044
          %v8077 = vsub.f32 %v7911, %v8045
          %v8078 = vsub.f32 %v7912, %v8046
          %v8079 = vsub.f32 %v7913, %v8047
          %v8080 = vsub.f32 %v7914, %v8048
          %v8081 = vsub.f32 %v7915, %v8049
          %v8082 = vsub.f32 %v7916, %v8050
          %v8083 = vsub.f32 %v7917, %v8051
          %v8084 = vsub.f32 %v7918, %v8052
          %v8085 = vsub.f32 %v7919, %v8053
          %v8086 = vsub.f32 %v7920, %v8054
          %v8087 = vsub.f32 %v7921, %v8055
          %v8088 = vsub.f32 %v7922, %v8056
          %v8089 = vsub.f32 %v7923, %v8057
          %v8090 = vsub.f32 %v7924, %v8058
          %v8091 = vsub.f32 %v7925, %v8059
          %v8092 = vmul.f32 %v8060, %v8060
          %v8093 = vmul.f32 %v8061, %v8061
          %v8094 = vmul.f32 %v8062, %v8062
          %v8095 = vmul.f32 %v8063, %v8063
          %v8096 = vmul.f32 %v8064, %v8064
          %v8097 = vmul.f32 %v8065, %v8065
          %v8098 = vmul.f32 %v8066, %v8066
          %v8099 = vmul.f32 %v8067, %v8067
          %v8100 = vmul.f32 %v8068, %v8068
          %v8101 = vmul.f32 %v8069, %v8069
          %v8102 = vmul.f32 %v8070, %v8070
          %v8103 = vmul.f32 %v8071, %v8071
          %v8104 = vmul.f32 %v8072, %v8072
          %v8105 = vmul.f32 %v8073, %v8073
          %v8106 = vmul.f32 %v8074, %v8074
          %v8107 = vmul.f32 %v8075, %v8075
          %v8108 = vmul.f32 %v8076, %v8076
          %v8109 = vmul.f32 %v8077, %v8077
          %v8110 = vmul.f32 %v8078, %v8078
          %v8111 = vmul.f32 %v8079, %v8079
          %v8112 = vmul.f32 %v8080, %v8080
          %v8113 = vmul.f32 %v8081, %v8081
          %v8114 = vmul.f32 %v8082, %v8082
          %v8115 = vmul.f32 %v8083, %v8083
          %v8116 = vmul.f32 %v8084, %v8084
          %v8117 = vmul.f32 %v8085, %v8085
          %v8118 = vmul.f32 %v8086, %v8086
          %v8119 = vmul.f32 %v8087, %v8087
          %v8120 = vmul.f32 %v8088, %v8088
          %v8121 = vmul.f32 %v8089, %v8089
          %v8122 = vmul.f32 %v8090, %v8090
          %v8123 = vmul.f32 %v8091, %v8091
          %8124 = vadd.xlane.f32.xlu0 %v8092
          %v8125 = vpop.xlane.xlu0 %8124
          %8126 = vadd.xlane.f32.xlu0 %v8093
          %v8127 = vpop.xlane.xlu0 %8126
          %8128 = vadd.xlane.f32.xlu0 %v8094
          %v8129 = vpop.xlane.xlu0 %8128
          %8130 = vadd.xlane.f32.xlu0 %v8095
          %v8131 = vpop.xlane.xlu0 %8130
          %8132 = vadd.xlane.f32.xlu0 %v8096
          %v8133 = vpop.xlane.xlu0 %8132
          %8134 = vadd.xlane.f32.xlu0 %v8097
          %v8135 = vpop.xlane.xlu0 %8134
          %8136 = vadd.xlane.f32.xlu0 %v8098
          %v8137 = vpop.xlane.xlu0 %8136
          %8138 = vadd.xlane.f32.xlu0 %v8099
          %v8139 = vpop.xlane.xlu0 %8138
          %8140 = vadd.xlane.f32.xlu0 %v8100
          %v8141 = vpop.xlane.xlu0 %8140
          %8142 = vadd.xlane.f32.xlu0 %v8101
          %v8143 = vpop.xlane.xlu0 %8142
          %8144 = vadd.xlane.f32.xlu0 %v8102
          %v8145 = vpop.xlane.xlu0 %8144
          %8146 = vadd.xlane.f32.xlu0 %v8103
          %v8147 = vpop.xlane.xlu0 %8146
          %8148 = vadd.xlane.f32.xlu0 %v8104
          %v8149 = vpop.xlane.xlu0 %8148
          %8150 = vadd.xlane.f32.xlu0 %v8105
          %v8151 = vpop.xlane.xlu0 %8150
          %8152 = vadd.xlane.f32.xlu0 %v8106
          %v8153 = vpop.xlane.xlu0 %8152
          %8154 = vadd.xlane.f32.xlu0 %v8107
          %v8155 = vpop.xlane.xlu0 %8154
          %8156 = vadd.xlane.f32.xlu0 %v8108
          %v8157 = vpop.xlane.xlu0 %8156
          %8158 = vadd.xlane.f32.xlu0 %v8109
          %v8159 = vpop.xlane.xlu0 %8158
          %8160 = vadd.xlane.f32.xlu0 %v8110
          %v8161 = vpop.xlane.xlu0 %8160
          %8162 = vadd.xlane.f32.xlu0 %v8111
          %v8163 = vpop.xlane.xlu0 %8162
          %8164 = vadd.xlane.f32.xlu0 %v8112
          %v8165 = vpop.xlane.xlu0 %8164
          %8166 = vadd.xlane.f32.xlu0 %v8113
          %v8167 = vpop.xlane.xlu0 %8166
          %8168 = vadd.xlane.f32.xlu0 %v8114
          %v8169 = vpop.xlane.xlu0 %8168
          %8170 = vadd.xlane.f32.xlu0 %v8115
          %v8171 = vpop.xlane.xlu0 %8170
          %8172 = vadd.xlane.f32.xlu0 %v8116
          %v8173 = vpop.xlane.xlu0 %8172
          %8174 = vadd.xlane.f32.xlu0 %v8117
          %v8175 = vpop.xlane.xlu0 %8174
          %8176 = vadd.xlane.f32.xlu0 %v8118
          %v8177 = vpop.xlane.xlu0 %8176
          %8178 = vadd.xlane.f32.xlu0 %v8119
          %v8179 = vpop.xlane.xlu0 %8178
          %8180 = vadd.xlane.f32.xlu0 %v8120
          %v8181 = vpop.xlane.xlu0 %8180
          %8182 = vadd.xlane.f32.xlu0 %v8121
          %v8183 = vpop.xlane.xlu0 %8182
          %8184 = vadd.xlane.f32.xlu0 %v8122
          %v8185 = vpop.xlane.xlu0 %8184
          %8186 = vadd.xlane.f32.xlu0 %v8123
          %v8187 = vpop.xlane.xlu0 %8186
          %v8188 = vmul.f32 %v8125, 0.007874016
          %v8189 = vmul.f32 %v8127, 0.007874016
          %v8190 = vmul.f32 %v8129, 0.007874016
          %v8191 = vmul.f32 %v8131, 0.007874016
          %v8192 = vmul.f32 %v8133, 0.007874016
          %v8193 = vmul.f32 %v8135, 0.007874016
          %v8194 = vmul.f32 %v8137, 0.007874016
          %v8195 = vmul.f32 %v8139, 0.007874016
          %v8196 = vmul.f32 %v8141, 0.007874016
          %v8197 = vmul.f32 %v8143, 0.007874016
          %v8198 = vmul.f32 %v8145, 0.007874016
          %v8199 = vmul.f32 %v8147, 0.007874016
          %v8200 = vmul.f32 %v8149, 0.007874016
          %v8201 = vmul.f32 %v8151, 0.007874016
          %v8202 = vmul.f32 %v8153, 0.007874016
          %v8203 = vmul.f32 %v8155, 0.007874016
          %v8204 = vmul.f32 %v8157, 0.007874016
          %v8205 = vmul.f32 %v8159, 0.007874016
          %v8206 = vmul.f32 %v8161, 0.007874016
          %v8207 = vmul.f32 %v8163, 0.007874016
          %v8208 = vmul.f32 %v8165, 0.007874016
          %v8209 = vmul.f32 %v8167, 0.007874016
          %v8210 = vmul.f32 %v8169, 0.007874016
          %v8211 = vmul.f32 %v8171, 0.007874016
          %v8212 = vmul.f32 %v8173, 0.007874016
          %v8213 = vmul.f32 %v8175, 0.007874016
          %v8214 = vmul.f32 %v8177, 0.007874016
          %v8215 = vmul.f32 %v8179, 0.007874016
          %v8216 = vmul.f32 %v8181, 0.007874016
          %v8217 = vmul.f32 %v8183, 0.007874016
          %v8218 = vmul.f32 %v8185, 0.007874016
          %v8219 = vmul.f32 %v8187, 0.007874016
          %v8220 = vrsqrt.pop %v8188
          %v8221 = vmul.f32 %v8188, %v8220
          %vm8222 = vcmp.eq.f32.partialorder %v8188, inf
          %v8223 = vsel %vm8222, %v8188, %v8221
          %vm8224 = vcmp.eq.f32.partialorder %v8188, 0.0
          %v8225 = vand.u32 %v8188, 2147483648
          %v8226 = vsel %vm8224, %v8225, %v8223
          %v8227 = vrsqrt.pop %v8189
          %v8228 = vmul.f32 %v8189, %v8227
          %vm8229 = vcmp.eq.f32.partialorder %v8189, inf
          %v8230 = vsel %vm8229, %v8189, %v8228
          %vm8231 = vcmp.eq.f32.partialorder %v8189, 0.0
          %v8232 = vand.u32 %v8189, 2147483648
          %v8233 = vsel %vm8231, %v8232, %v8230
          %v8234 = vrsqrt.pop %v8190
          %v8235 = vmul.f32 %v8190, %v8234
          %vm8236 = vcmp.eq.f32.partialorder %v8190, inf
          %v8237 = vsel %vm8236, %v8190, %v8235
          %vm8238 = vcmp.eq.f32.partialorder %v8190, 0.0
          %v8239 = vand.u32 %v8190, 2147483648
          %v8240 = vsel %vm8238, %v8239, %v8237
          %v8241 = vrsqrt.pop %v8191
          %v8242 = vmul.f32 %v8191, %v8241
          %vm8243 = vcmp.eq.f32.partialorder %v8191, inf
          %v8244 = vsel %vm8243, %v8191, %v8242
          %vm8245 = vcmp.eq.f32.partialorder %v8191, 0.0
          %v8246 = vand.u32 %v8191, 2147483648
          %v8247 = vsel %vm8245, %v8246, %v8244
          %v8248 = vrsqrt.pop %v8192
          %v8249 = vmul.f32 %v8192, %v8248
          %vm8250 = vcmp.eq.f32.partialorder %v8192, inf
          %v8251 = vsel %vm8250, %v8192, %v8249
          %vm8252 = vcmp.eq.f32.partialorder %v8192, 0.0
          %v8253 = vand.u32 %v8192, 2147483648
          %v8254 = vsel %vm8252, %v8253, %v8251
          %v8255 = vrsqrt.pop %v8193
          %v8256 = vmul.f32 %v8193, %v8255
          %vm8257 = vcmp.eq.f32.partialorder %v8193, inf
          %v8258 = vsel %vm8257, %v8193, %v8256
          %vm8259 = vcmp.eq.f32.partialorder %v8193, 0.0
          %v8260 = vand.u32 %v8193, 2147483648
          %v8261 = vsel %vm8259, %v8260, %v8258
          %v8262 = vrsqrt.pop %v8194
          %v8263 = vmul.f32 %v8194, %v8262
          %vm8264 = vcmp.eq.f32.partialorder %v8194, inf
          %v8265 = vsel %vm8264, %v8194, %v8263
          %vm8266 = vcmp.eq.f32.partialorder %v8194, 0.0
          %v8267 = vand.u32 %v8194, 2147483648
          %v8268 = vsel %vm8266, %v8267, %v8265
          %v8269 = vrsqrt.pop %v8195
          %v8270 = vmul.f32 %v8195, %v8269
          %vm8271 = vcmp.eq.f32.partialorder %v8195, inf
          %v8272 = vsel %vm8271, %v8195, %v8270
          %vm8273 = vcmp.eq.f32.partialorder %v8195, 0.0
          %v8274 = vand.u32 %v8195, 2147483648
          %v8275 = vsel %vm8273, %v8274, %v8272
          %v8276 = vrsqrt.pop %v8196
          %v8277 = vmul.f32 %v8196, %v8276
          %vm8278 = vcmp.eq.f32.partialorder %v8196, inf
          %v8279 = vsel %vm8278, %v8196, %v8277
          %vm8280 = vcmp.eq.f32.partialorder %v8196, 0.0
          %v8281 = vand.u32 %v8196, 2147483648
          %v8282 = vsel %vm8280, %v8281, %v8279
          %v8283 = vrsqrt.pop %v8197
          %v8284 = vmul.f32 %v8197, %v8283
          %vm8285 = vcmp.eq.f32.partialorder %v8197, inf
          %v8286 = vsel %vm8285, %v8197, %v8284
          %vm8287 = vcmp.eq.f32.partialorder %v8197, 0.0
          %v8288 = vand.u32 %v8197, 2147483648
          %v8289 = vsel %vm8287, %v8288, %v8286
          %v8290 = vrsqrt.pop %v8198
          %v8291 = vmul.f32 %v8198, %v8290
          %vm8292 = vcmp.eq.f32.partialorder %v8198, inf
          %v8293 = vsel %vm8292, %v8198, %v8291
          %vm8294 = vcmp.eq.f32.partialorder %v8198, 0.0
          %v8295 = vand.u32 %v8198, 2147483648
          %v8296 = vsel %vm8294, %v8295, %v8293
          %v8297 = vrsqrt.pop %v8199
          %v8298 = vmul.f32 %v8199, %v8297
          %vm8299 = vcmp.eq.f32.partialorder %v8199, inf
          %v8300 = vsel %vm8299, %v8199, %v8298
          %vm8301 = vcmp.eq.f32.partialorder %v8199, 0.0
          %v8302 = vand.u32 %v8199, 2147483648
          %v8303 = vsel %vm8301, %v8302, %v8300
          %v8304 = vrsqrt.pop %v8200
          %v8305 = vmul.f32 %v8200, %v8304
          %vm8306 = vcmp.eq.f32.partialorder %v8200, inf
          %v8307 = vsel %vm8306, %v8200, %v8305
          %vm8308 = vcmp.eq.f32.partialorder %v8200, 0.0
          %v8309 = vand.u32 %v8200, 2147483648
          %v8310 = vsel %vm8308, %v8309, %v8307
          %v8311 = vrsqrt.pop %v8201
          %v8312 = vmul.f32 %v8201, %v8311
          %vm8313 = vcmp.eq.f32.partialorder %v8201, inf
          %v8314 = vsel %vm8313, %v8201, %v8312
          %vm8315 = vcmp.eq.f32.partialorder %v8201, 0.0
          %v8316 = vand.u32 %v8201, 2147483648
          %v8317 = vsel %vm8315, %v8316, %v8314
          %v8318 = vrsqrt.pop %v8202
          %v8319 = vmul.f32 %v8202, %v8318
          %vm8320 = vcmp.eq.f32.partialorder %v8202, inf
          %v8321 = vsel %vm8320, %v8202, %v8319
          %vm8322 = vcmp.eq.f32.partialorder %v8202, 0.0
          %v8323 = vand.u32 %v8202, 2147483648
          %v8324 = vsel %vm8322, %v8323, %v8321
          %v8325 = vrsqrt.pop %v8203
          %v8326 = vmul.f32 %v8203, %v8325
          %vm8327 = vcmp.eq.f32.partialorder %v8203, inf
          %v8328 = vsel %vm8327, %v8203, %v8326
          %vm8329 = vcmp.eq.f32.partialorder %v8203, 0.0
          %v8330 = vand.u32 %v8203, 2147483648
          %v8331 = vsel %vm8329, %v8330, %v8328
          %v8332 = vrsqrt.pop %v8204
          %v8333 = vmul.f32 %v8204, %v8332
          %vm8334 = vcmp.eq.f32.partialorder %v8204, inf
          %v8335 = vsel %vm8334, %v8204, %v8333
          %vm8336 = vcmp.eq.f32.partialorder %v8204, 0.0
          %v8337 = vand.u32 %v8204, 2147483648
          %v8338 = vsel %vm8336, %v8337, %v8335
          %v8339 = vrsqrt.pop %v8205
          %v8340 = vmul.f32 %v8205, %v8339
          %vm8341 = vcmp.eq.f32.partialorder %v8205, inf
          %v8342 = vsel %vm8341, %v8205, %v8340
          %vm8343 = vcmp.eq.f32.partialorder %v8205, 0.0
          %v8344 = vand.u32 %v8205, 2147483648
          %v8345 = vsel %vm8343, %v8344, %v8342
          %v8346 = vrsqrt.pop %v8206
          %v8347 = vmul.f32 %v8206, %v8346
          %vm8348 = vcmp.eq.f32.partialorder %v8206, inf
          %v8349 = vsel %vm8348, %v8206, %v8347
          %vm8350 = vcmp.eq.f32.partialorder %v8206, 0.0
          %v8351 = vand.u32 %v8206, 2147483648
          %v8352 = vsel %vm8350, %v8351, %v8349
          %v8353 = vrsqrt.pop %v8207
          %v8354 = vmul.f32 %v8207, %v8353
          %vm8355 = vcmp.eq.f32.partialorder %v8207, inf
          %v8356 = vsel %vm8355, %v8207, %v8354
          %vm8357 = vcmp.eq.f32.partialorder %v8207, 0.0
          %v8358 = vand.u32 %v8207, 2147483648
          %v8359 = vsel %vm8357, %v8358, %v8356
          %v8360 = vrsqrt.pop %v8208
          %v8361 = vmul.f32 %v8208, %v8360
          %vm8362 = vcmp.eq.f32.partialorder %v8208, inf
          %v8363 = vsel %vm8362, %v8208, %v8361
          %vm8364 = vcmp.eq.f32.partialorder %v8208, 0.0
          %v8365 = vand.u32 %v8208, 2147483648
          %v8366 = vsel %vm8364, %v8365, %v8363
          %v8367 = vrsqrt.pop %v8209
          %v8368 = vmul.f32 %v8209, %v8367
          %vm8369 = vcmp.eq.f32.partialorder %v8209, inf
          %v8370 = vsel %vm8369, %v8209, %v8368
          %vm8371 = vcmp.eq.f32.partialorder %v8209, 0.0
          %v8372 = vand.u32 %v8209, 2147483648
          %v8373 = vsel %vm8371, %v8372, %v8370
          %v8374 = vrsqrt.pop %v8210
          %v8375 = vmul.f32 %v8210, %v8374
          %vm8376 = vcmp.eq.f32.partialorder %v8210, inf
          %v8377 = vsel %vm8376, %v8210, %v8375
          %vm8378 = vcmp.eq.f32.partialorder %v8210, 0.0
          %v8379 = vand.u32 %v8210, 2147483648
          %v8380 = vsel %vm8378, %v8379, %v8377
          %v8381 = vrsqrt.pop %v8211
          %v8382 = vmul.f32 %v8211, %v8381
          %vm8383 = vcmp.eq.f32.partialorder %v8211, inf
          %v8384 = vsel %vm8383, %v8211, %v8382
          %vm8385 = vcmp.eq.f32.partialorder %v8211, 0.0
          %v8386 = vand.u32 %v8211, 2147483648
          %v8387 = vsel %vm8385, %v8386, %v8384
          %v8388 = vrsqrt.pop %v8212
          %v8389 = vmul.f32 %v8212, %v8388
          %vm8390 = vcmp.eq.f32.partialorder %v8212, inf
          %v8391 = vsel %vm8390, %v8212, %v8389
          %vm8392 = vcmp.eq.f32.partialorder %v8212, 0.0
          %v8393 = vand.u32 %v8212, 2147483648
          %v8394 = vsel %vm8392, %v8393, %v8391
          %v8395 = vrsqrt.pop %v8213
          %v8396 = vmul.f32 %v8213, %v8395
          %vm8397 = vcmp.eq.f32.partialorder %v8213, inf
          %v8398 = vsel %vm8397, %v8213, %v8396
          %vm8399 = vcmp.eq.f32.partialorder %v8213, 0.0
          %v8400 = vand.u32 %v8213, 2147483648
          %v8401 = vsel %vm8399, %v8400, %v8398
          %v8402 = vrsqrt.pop %v8214
          %v8403 = vmul.f32 %v8214, %v8402
          %vm8404 = vcmp.eq.f32.partialorder %v8214, inf
          %v8405 = vsel %vm8404, %v8214, %v8403
          %vm8406 = vcmp.eq.f32.partialorder %v8214, 0.0
          %v8407 = vand.u32 %v8214, 2147483648
          %v8408 = vsel %vm8406, %v8407, %v8405
          %v8409 = vrsqrt.pop %v8215
          %v8410 = vmul.f32 %v8215, %v8409
          %vm8411 = vcmp.eq.f32.partialorder %v8215, inf
          %v8412 = vsel %vm8411, %v8215, %v8410
          %vm8413 = vcmp.eq.f32.partialorder %v8215, 0.0
          %v8414 = vand.u32 %v8215, 2147483648
          %v8415 = vsel %vm8413, %v8414, %v8412
          %v8416 = vrsqrt.pop %v8216
          %v8417 = vmul.f32 %v8216, %v8416
          %vm8418 = vcmp.eq.f32.partialorder %v8216, inf
          %v8419 = vsel %vm8418, %v8216, %v8417
          %vm8420 = vcmp.eq.f32.partialorder %v8216, 0.0
          %v8421 = vand.u32 %v8216, 2147483648
          %v8422 = vsel %vm8420, %v8421, %v8419
          %v8423 = vrsqrt.pop %v8217
          %v8424 = vmul.f32 %v8217, %v8423
          %vm8425 = vcmp.eq.f32.partialorder %v8217, inf
          %v8426 = vsel %vm8425, %v8217, %v8424
          %vm8427 = vcmp.eq.f32.partialorder %v8217, 0.0
          %v8428 = vand.u32 %v8217, 2147483648
          %v8429 = vsel %vm8427, %v8428, %v8426
          %v8430 = vrsqrt.pop %v8218
          %v8431 = vmul.f32 %v8218, %v8430
          %vm8432 = vcmp.eq.f32.partialorder %v8218, inf
          %v8433 = vsel %vm8432, %v8218, %v8431
          %vm8434 = vcmp.eq.f32.partialorder %v8218, 0.0
          %v8435 = vand.u32 %v8218, 2147483648
          %v8436 = vsel %vm8434, %v8435, %v8433
          %v8437 = vrsqrt.pop %v8219
          %v8438 = vmul.f32 %v8219, %v8437
          %vm8439 = vcmp.eq.f32.partialorder %v8219, inf
          %v8440 = vsel %vm8439, %v8219, %v8438
          %vm8441 = vcmp.eq.f32.partialorder %v8219, 0.0
          %v8442 = vand.u32 %v8219, 2147483648
          %v8443 = vsel %vm8441, %v8442, %v8440
          %v8444 = vadd.f32 %v8226, 1e-06
          %v8445 = vadd.f32 %v8233, 1e-06
          %v8446 = vadd.f32 %v8240, 1e-06
          %v8447 = vadd.f32 %v8247, 1e-06
          %v8448 = vadd.f32 %v8254, 1e-06
          %v8449 = vadd.f32 %v8261, 1e-06
          %v8450 = vadd.f32 %v8268, 1e-06
          %v8451 = vadd.f32 %v8275, 1e-06
          %v8452 = vadd.f32 %v8282, 1e-06
          %v8453 = vadd.f32 %v8289, 1e-06
          %v8454 = vadd.f32 %v8296, 1e-06
          %v8455 = vadd.f32 %v8303, 1e-06
          %v8456 = vadd.f32 %v8310, 1e-06
          %v8457 = vadd.f32 %v8317, 1e-06
          %v8458 = vadd.f32 %v8324, 1e-06
          %v8459 = vadd.f32 %v8331, 1e-06
          %v8460 = vadd.f32 %v8338, 1e-06
          %v8461 = vadd.f32 %v8345, 1e-06
          %v8462 = vadd.f32 %v8352, 1e-06
          %v8463 = vadd.f32 %v8359, 1e-06
          %v8464 = vadd.f32 %v8366, 1e-06
          %v8465 = vadd.f32 %v8373, 1e-06
          %v8466 = vadd.f32 %v8380, 1e-06
          %v8467 = vadd.f32 %v8387, 1e-06
          %v8468 = vadd.f32 %v8394, 1e-06
          %v8469 = vadd.f32 %v8401, 1e-06
          %v8470 = vadd.f32 %v8408, 1e-06
          %v8471 = vadd.f32 %v8415, 1e-06
          %v8472 = vadd.f32 %v8422, 1e-06
          %v8473 = vadd.f32 %v8429, 1e-06
          %v8474 = vadd.f32 %v8436, 1e-06
          %v8475 = vadd.f32 %v8443, 1e-06
          %v8476 = vrcp.pop %v8444
          %v8477 = vrcp.pop %v8445
          %v8478 = vrcp.pop %v8446
          %v8479 = vrcp.pop %v8447
          %v8480 = vrcp.pop %v8448
          %v8481 = vrcp.pop %v8449
          %v8482 = vrcp.pop %v8450
          %v8483 = vrcp.pop %v8451
          %v8484 = vrcp.pop %v8452
          %v8485 = vrcp.pop %v8453
          %v8486 = vrcp.pop %v8454
          %v8487 = vrcp.pop %v8455
          %v8488 = vrcp.pop %v8456
          %v8489 = vrcp.pop %v8457
          %v8490 = vrcp.pop %v8458
          %v8491 = vrcp.pop %v8459
          %v8492 = vrcp.pop %v8460
          %v8493 = vrcp.pop %v8461
          %v8494 = vrcp.pop %v8462
          %v8495 = vrcp.pop %v8463
          %v8496 = vrcp.pop %v8464
          %v8497 = vrcp.pop %v8465
          %v8498 = vrcp.pop %v8466
          %v8499 = vrcp.pop %v8467
          %v8500 = vrcp.pop %v8468
          %v8501 = vrcp.pop %v8469
          %v8502 = vrcp.pop %v8470
          %v8503 = vrcp.pop %v8471
          %v8504 = vrcp.pop %v8472
          %v8505 = vrcp.pop %v8473
          %v8506 = vrcp.pop %v8474
          %v8507 = vrcp.pop %v8475
          %v8509 = vlaneseq
          %v8510 = vshrl.u32 %v8509, 7
          %v8511 = vsub.s32 0, %v8510
          %v8512 = vrot.slane %v7962, %v8511
          %v8514 = vmul.f32 %v8512, %v8060
          %v8515 = vmul.f32 %v8512, %v8061
          %v8516 = vmul.f32 %v8512, %v8062
          %v8517 = vmul.f32 %v8512, %v8063
          %v8518 = vmul.f32 %v8512, %v8064
          %v8519 = vmul.f32 %v8512, %v8065
          %v8520 = vmul.f32 %v8512, %v8066
          %v8521 = vmul.f32 %v8512, %v8067
          %v8522 = vmul.f32 %v8512, %v8068
          %v8523 = vmul.f32 %v8512, %v8069
          %v8524 = vmul.f32 %v8512, %v8070
          %v8525 = vmul.f32 %v8512, %v8071
          %v8526 = vmul.f32 %v8512, %v8072
          %v8527 = vmul.f32 %v8512, %v8073
          %v8528 = vmul.f32 %v8512, %v8074
          %v8529 = vmul.f32 %v8512, %v8075
          %v8530 = vmul.f32 %v8512, %v8076
          %v8531 = vmul.f32 %v8512, %v8077
          %v8532 = vmul.f32 %v8512, %v8078
          %v8533 = vmul.f32 %v8512, %v8079
          %v8534 = vmul.f32 %v8512, %v8080
          %v8535 = vmul.f32 %v8512, %v8081
          %v8536 = vmul.f32 %v8512, %v8082
          %v8537 = vmul.f32 %v8512, %v8083
          %v8538 = vmul.f32 %v8512, %v8084
          %v8539 = vmul.f32 %v8512, %v8085
          %v8540 = vmul.f32 %v8512, %v8086
          %v8541 = vmul.f32 %v8512, %v8087
          %v8542 = vmul.f32 %v8512, %v8088
          %v8543 = vmul.f32 %v8512, %v8089
          %v8544 = vmul.f32 %v8512, %v8090
          %v8545 = vmul.f32 %v8512, %v8091
          %v8546 = vmul.f32 %v8514, %v8476
          %v8547 = vmul.f32 %v8515, %v8477
          %v8548 = vmul.f32 %v8516, %v8478
          %v8549 = vmul.f32 %v8517, %v8479
          %v8550 = vmul.f32 %v8518, %v8480
          %v8551 = vmul.f32 %v8519, %v8481
          %v8552 = vmul.f32 %v8520, %v8482
          %v8553 = vmul.f32 %v8521, %v8483
          %v8554 = vmul.f32 %v8522, %v8484
          %v8555 = vmul.f32 %v8523, %v8485
          %v8556 = vmul.f32 %v8524, %v8486
          %v8557 = vmul.f32 %v8525, %v8487
          %v8558 = vmul.f32 %v8526, %v8488
          %v8559 = vmul.f32 %v8527, %v8489
          %v8560 = vmul.f32 %v8528, %v8490
          %v8561 = vmul.f32 %v8529, %v8491
          %v8562 = vmul.f32 %v8530, %v8492
          %v8563 = vmul.f32 %v8531, %v8493
          %v8564 = vmul.f32 %v8532, %v8494
          %v8565 = vmul.f32 %v8533, %v8495
          %v8566 = vmul.f32 %v8534, %v8496
          %v8567 = vmul.f32 %v8535, %v8497
          %v8568 = vmul.f32 %v8536, %v8498
          %v8569 = vmul.f32 %v8537, %v8499
          %v8570 = vmul.f32 %v8538, %v8500
          %v8571 = vmul.f32 %v8539, %v8501
          %v8572 = vmul.f32 %v8540, %v8502
          %v8573 = vmul.f32 %v8541, %v8503
          %v8574 = vmul.f32 %v8542, %v8504
          %v8575 = vmul.f32 %v8543, %v8505
          %v8576 = vmul.f32 %v8544, %v8506
          %v8577 = vmul.f32 %v8545, %v8507
          %v8579 = vlaneseq
          %v8580 = vshrl.u32 %v8579, 7
          %v8581 = vsub.s32 0, %v8580
          %v8582 = vrot.slane %v7963, %v8581
          %v8584 = vadd.f32 %v8546, %v8582
          %v8585 = vadd.f32 %v8547, %v8582
          %v8586 = vadd.f32 %v8548, %v8582
          %v8587 = vadd.f32 %v8549, %v8582
          %v8588 = vadd.f32 %v8550, %v8582
          %v8589 = vadd.f32 %v8551, %v8582
          %v8590 = vadd.f32 %v8552, %v8582
          %v8591 = vadd.f32 %v8553, %v8582
          %v8592 = vadd.f32 %v8554, %v8582
          %v8593 = vadd.f32 %v8555, %v8582
          %v8594 = vadd.f32 %v8556, %v8582
          %v8595 = vadd.f32 %v8557, %v8582
          %v8596 = vadd.f32 %v8558, %v8582
          %v8597 = vadd.f32 %v8559, %v8582
          %v8598 = vadd.f32 %v8560, %v8582
          %v8599 = vadd.f32 %v8561, %v8582
          %v8600 = vadd.f32 %v8562, %v8582
          %v8601 = vadd.f32 %v8563, %v8582
          %v8602 = vadd.f32 %v8564, %v8582
          %v8603 = vadd.f32 %v8565, %v8582
          %v8604 = vadd.f32 %v8566, %v8582
          %v8605 = vadd.f32 %v8567, %v8582
          %v8606 = vadd.f32 %v8568, %v8582
          %v8607 = vadd.f32 %v8569, %v8582
          %v8608 = vadd.f32 %v8570, %v8582
          %v8609 = vadd.f32 %v8571, %v8582
          %v8610 = vadd.f32 %v8572, %v8582
          %v8611 = vadd.f32 %v8573, %v8582
          %v8612 = vadd.f32 %v8574, %v8582
          %v8613 = vadd.f32 %v8575, %v8582
          %v8614 = vadd.f32 %v8576, %v8582
          %v8615 = vadd.f32 %v8577, %v8582
          %8616 = vst [vmem:[%s835] sm:$0xff] %v8584
          %8617 = vst [vmem:[%s835 + $0x8] sm:$0xff] %v8585
          %8618 = vst [vmem:[%s835 + $0x10] sm:$0xff] %v8586
          %8619 = vst [vmem:[%s835 + $0x18] sm:$0xff] %v8587
          %8620 = vst [vmem:[%s835 + $0x20] sm:$0xff] %v8588
          %8621 = vst [vmem:[%s835 + $0x28] sm:$0xff] %v8589
          %8622 = vst [vmem:[%s835 + $0x30] sm:$0xff] %v8590
          %8623 = vst [vmem:[%s835 + $0x38] sm:$0xff] %v8591
          %8624 = vst [vmem:[%s835 + $0x40] sm:$0xff] %v8592
          %8625 = vst [vmem:[%s835 + $0x48] sm:$0xff] %v8593
          %8626 = vst [vmem:[%s835 + $0x50] sm:$0xff] %v8594
          %8627 = vst [vmem:[%s835 + $0x58] sm:$0xff] %v8595
          %8628 = vst [vmem:[%s835 + $0x60] sm:$0xff] %v8596
          %8629 = vst [vmem:[%s835 + $0x68] sm:$0xff] %v8597
          %8630 = vst [vmem:[%s835 + $0x70] sm:$0xff] %v8598
          %8631 = vst [vmem:[%s835 + $0x78] sm:$0xff] %v8599
          %8632 = vst [vmem:[%s835 + $0x80] sm:$0xff] %v8600
          %8633 = vst [vmem:[%s835 + $0x88] sm:$0xff] %v8601
          %8634 = vst [vmem:[%s835 + $0x90] sm:$0xff] %v8602
          %8635 = vst [vmem:[%s835 + $0x98] sm:$0xff] %v8603
          %8636 = vst [vmem:[%s835 + $0xa0] sm:$0xff] %v8604
          %8637 = vst [vmem:[%s835 + $0xa8] sm:$0xff] %v8605
          %8638 = vst [vmem:[%s835 + $0xb0] sm:$0xff] %v8606
          %8639 = vst [vmem:[%s835 + $0xb8] sm:$0xff] %v8607
          %8640 = vst [vmem:[%s835 + $0xc0] sm:$0xff] %v8608
          %8641 = vst [vmem:[%s835 + $0xc8] sm:$0xff] %v8609
          %8642 = vst [vmem:[%s835 + $0xd0] sm:$0xff] %v8610
          %8643 = vst [vmem:[%s835 + $0xd8] sm:$0xff] %v8611
          %8644 = vst [vmem:[%s835 + $0xe0] sm:$0xff] %v8612
          %8645 = vst [vmem:[%s835 + $0xe8] sm:$0xff] %v8613
          %8646 = vst [vmem:[%s835 + $0xf0] sm:$0xff] %v8614
          %8647 = vst [vmem:[%s835 + $0xf8] sm:$0xff] %v8615
        $region116: #{transformer_encoder.1} parent=83 // pred_fallthru
          _
        %s8648 = sand.u32 %s468, 1
        %s8649 = scalar_lea.sflag [#allocation5], %s8648
        %s8650 = sand.u32 %s468, 1
        %s8651 = smul.addr %s8650, 256
        %s8652 = scalar_lea.vmem [#allocation14], %s8651
        // Predicated region
        $region117: #{transformer_encoder.1} parent=83 // pred_check
          %p8653 = pneg %p478
        $region118: #{transformer_encoder.1} parent=83 // pred_check_branch
          %8655 = sbr.rel (%p8653) target = $region120
        $region119: #{transformer_encoder.1} parent=83 // pred_region
          %s8656 = smul.u32 2, %s46
          %s8658 = ssub.s32 4096, 4096
          %8659 = vsyncadd %s8649, %s8658
          %s8660 = smul.addr %s8656, 16
          %s8661 = smul.addr %s8660, 128
          %s8662 = scalar_lea.hbm %s16, %s8661
          %s8663 = sshll.u32 %s8652, 4
          %s8664 = int_to_ptr.vmem [resolvable:$true] %s8663
          %8669 = dma.vmem_to_hbm [thread:$0]  %s8664, 4096, %s8662, %s8649, 128, 128, 8
        $region120: #{transformer_encoder.1} parent=83 // pred_fallthru
          _
      $region84: #{transformer_encoder.1} parent=5 // pred_fallthru
        _
      %p8670 = scmp.le.s32.totalorder 2, %s37
      // Predicated region
      $region121: #{transformer_encoder.1} parent=5 // pred_check
        %p8671 = pneg %p8670
      $region122: #{transformer_encoder.1} parent=5 // pred_check_branch
        %8673 = sbr.rel (%p8671) target = $region124
      $region123: #{transformer_encoder.1} parent=5 // pred_region
        %s8674 = ssub.s32 %s37, 2
        // Predicated region
        $region125: #{transformer_encoder.1} parent=123 // pred_check
          %p8675 = pneg %p484
        $region126: #{transformer_encoder.1} parent=123 // pred_check_branch
          %8677 = sbr.rel (%p8675) target = $region128
        $region127: #{transformer_encoder.1} parent=123 // pred_region
          %s8678 = sand.u32 %s469, 1
          %s8679 = scalar_lea.sflag [#allocation5], %s8678
          %s8680 = sand.u32 %s469, 1
          %s8681 = smul.addr %s8680, 256
          %s8682 = scalar_lea.vmem [#allocation14], %s8681
          %8683 = dma.done %s8679, 4096
        $region128: #{transformer_encoder.1} parent=123 // pred_fallthru
          _
      $region124: #{transformer_encoder.1} parent=5 // pred_fallthru
        _
    $region6: #{transformer_encoder.1} parent=1 // loop_footer
      %s41 = sadd.s32 1, %s37
    $region7: #{transformer_encoder.1} parent=1 // loop_footer_branch
      %36 = sbr.rel target = $region3
    $region8: #{transformer_encoder.1} parent=1 // loop_exit
      _
    %8684 = vsyncpa [#allocation4], 1
    %s8685 = scalar_lea.sflag [#allocation4], 1
    %8686 = vsyncpa %s8685, 1
    %8687 = vsyncpa [#allocation7], 1
    %s8688 = scalar_lea.sflag [#allocation7], 1
    %8689 = vsyncpa %s8688, 1
    %8690 = vsyncpa [#allocation10], 1
    %s8691 = scalar_lea.sflag [#allocation10], 1
    %8692 = vsyncpa %s8691, 1
    %8693 = vsyncpa [#allocation13], 1
    %s8694 = scalar_lea.sflag [#allocation13], 1
    %8695 = vsyncpa %s8694, 1
    %8696 = vsyncpa [#allocation5], 1
    %s8697 = scalar_lea.sflag [#allocation5], 1
    %8698 = vsyncpa %s8697, 1

</llo_original>
